<compile_context>
chip_gen: v6e
topology: v6e:2x2x1
jax: 0.10.0
libtpu: 0.0.40
codegen_flags: <defaults>
</compile_context>

<pallas_src>
import functools

import jax
import jax.numpy as jnp
from jax.experimental import pallas as pl
from jax.experimental.pallas import tpu as pltpu


# ----------------------------------------------------------------------------
# BlockSpec helpers (weights are replicated across the batch grid)
# ----------------------------------------------------------------------------
def _full_spec(arr):
    if arr.ndim == 2:
        return pl.BlockSpec(arr.shape, lambda b: (0, 0))
    if arr.ndim == 3:
        return pl.BlockSpec(arr.shape, lambda b: (0, 0, 0))
    raise ValueError(f"unexpected weight rank {arr.ndim}")


def _smem_spec():
    return pl.BlockSpec(memory_space=pltpu.MemorySpace.SMEM)


# ----------------------------------------------------------------------------
# Single fused kernel: conv stack + SelfAttention + GRU + TemporalAttention + classifier
# ----------------------------------------------------------------------------
def attend_discriminate_fused(x_btsc, perm, conv_ws, conv_bs, wq_t, wk_t, wv_t, gamma,
                              gru_layers, ta_w, ta_b, cls_w_t, cls_b, *, use_relu=True):
    """x_btsc: (B, T, S, C) channels-last input.

    perm       : (S*T', S*T') 0/1 permutation matrix, perm[s*T'+t, t*S+s] = 1
    conv_ws[i] : (K, C_i, F)   == torch conv_i.weight[f, c, k, 0] transposed to [k, c, f]
    conv_bs[i] : (1, F)
    wq_t/wk_t  : (F, Fq), wv_t: (F, F)   (transposed 1x1-conv weights)
    gamma/ta_b : (1, 1) scalars (SMEM)
    gru_layers : [(wih, whh (H,3H), bih (1,3H), bhh (1,3H))]; layer-0 wih is (S, F, 3H)
    """
    B, T, S, C = x_btsc.shape
    K, _, F = conv_ws[0].shape
    Fq = wq_t.shape[1]
    Tp = T - 4 * (K - 1)
    L = len(gru_layers)
    H = gru_layers[0][1].shape[0]
    NC = cls_w_t.shape[1]

    def act(v):
        return jnp.maximum(v, 0.0) if use_relu else jnp.tanh(v)

    def gru_scan(gi, whh, bhh):
        # gi: (T', 3H) precomputed input gates; recurrence unrolled (T' small & static).
        h_st = jnp.zeros((1, H), jnp.float32)
        outs = []
        for t in range(Tp):
            gh = jnp.dot(h_st, whh, preferred_element_type=jnp.float32) + bhh
            gi_t = gi[t:t + 1, :]
            r = jax.nn.sigmoid(gi_t[:, 0:H] + gh[:, 0:H])
            z = jax.nn.sigmoid(gi_t[:, H:2 * H] + gh[:, H:2 * H])
            n = jnp.tanh(gi_t[:, 2 * H:3 * H] + r * gh[:, 2 * H:3 * H])
            h_st = (1.0 - z) * n + z * h_st
            outs.append(h_st)
        return jnp.concatenate(outs, axis=0)                                 # (T', H)

    def kernel(*refs):
        x_ref, perm_ref = refs[0], refs[1]
        conv_refs = refs[2:10]
        wq_ref, wk_ref, wv_ref, gamma_ref = refs[10:14]
        gru_refs = refs[14:14 + 4 * L]
        ta_w_ref, ta_b_ref, cls_w_ref, cls_b_ref, out_ref = refs[14 + 4 * L:]

        # ---- conv stack (4 x Conv2d((K,1)) + activation); activations never leave VMEM ----
        h = x_ref[...]                                                       # (T, S, C)
        for i in range(4):
            w_ref, b_ref = conv_refs[2 * i], conv_refs[2 * i + 1]
            Kk, Cin, Fo = w_ref.shape
            Tcur, Sn, _ = h.shape
            Tout = Tcur - Kk + 1
            # conv(K,1) as sum_k x[t+k] @ W_k (leading-dim reshapes only; lane dim fixed)
            acc = jnp.dot(h[0:Tout].reshape(Tout * Sn, Cin), w_ref[0],
                          preferred_element_type=jnp.float32)
            for k in range(1, Kk):
                acc = acc + jnp.dot(h[k:k + Tout].reshape(Tout * Sn, Cin), w_ref[k],
                                    preferred_element_type=jnp.float32)
            h = act(acc + b_ref[...]).reshape(Tout, Sn, Fo)

        # ---- fastai SelfAttention, batched over all T' time slabs ----
        h2 = h.reshape(Tp * S, F)
        f3 = jnp.dot(h2, wq_ref[...], preferred_element_type=jnp.float32).reshape(Tp, S, Fq)
        g3 = jnp.dot(h2, wk_ref[...], preferred_element_type=jnp.float32).reshape(Tp, S, Fq)
        v3 = jnp.dot(h2, wv_ref[...], preferred_element_type=jnp.float32).reshape(Tp, S, F)
        # logits[t, j, i] == torch bmm(f^T, g)[t, i, j]; torch's dim=1 softmax becomes a
        # lane-axis softmax here.
        logits = jax.lax.dot_general(g3, f3, (((2,), (2,)), ((0,), (0,))),
                                     preferred_element_type=jnp.float32)     # (T', S, S)
        m = jnp.max(logits, axis=-1, keepdims=True)
        e = jnp.exp(logits - m)
        beta = e * pl.reciprocal(jnp.sum(e, axis=-1, keepdims=True), approx=True)
        o = jax.lax.dot_general(beta, v3, (((2,), (1,)), ((0,), (0,))),
                                preferred_element_type=jnp.float32)          # (T', S, F)
        sa3 = gamma_ref[0, 0] * o + h                                        # (T', S, F)

        # ---- (t, s)-transpose of the SA output done as a permutation matmul on the MXU
        #      (avoids sublane relayouts); a3[s, t, :] == sa3[t, s, :] ----
        sa2d = sa3.reshape(Tp * S, F)
        a3 = jnp.dot(perm_ref[...], sa2d,
                     preferred_element_type=jnp.float32).reshape(S, Tp, F)

        # ---- GRU layer 0 input projection, hoisted out of the recurrence; the (T', S*F)
        #      RNN input slab is never materialized ----
        wih0_ref, whh0_ref, bih0_ref, bhh0_ref = gru_refs[0:4]
        tmp = jax.lax.dot_general(a3, wih0_ref[...], (((2,), (1,)), ((0,), (0,))),
                                  preferred_element_type=jnp.float32)        # (S, T', 3H)
        gi = jnp.sum(tmp, axis=0) + bih0_ref[...]                            # (T', 3H)
        seq = gru_scan(gi, whh0_ref[...], bhh0_ref[...])
        for l in range(1, L):
            wih_ref, whh_ref, bih_ref, bhh_ref = gru_refs[4 * l:4 * l + 4]
            gi = jnp.dot(seq, wih_ref[...], preferred_element_type=jnp.float32) + bih_ref[...]
            seq = gru_scan(gi, whh_ref[...], bhh_ref[...])

        # ---- TemporalAttention (softmax over time) + classifier ----
        scores = jnp.sum(seq * ta_w_ref[...], axis=1, keepdims=True) + ta_b_ref[0, 0]
        ms = jnp.max(scores, axis=0, keepdims=True)
        es = jnp.exp(scores - ms)
        wts = es * pl.reciprocal(jnp.sum(es, axis=0, keepdims=True), approx=True)
        context = jnp.sum(wts * seq, axis=0, keepdims=True)                  # (1, H)
        # TODO(synk): torch also computes z = feature / ||feature||_2 but never returns it.
        out_ref[...] = (jnp.dot(context, cls_w_ref[...], preferred_element_type=jnp.float32)
                        + cls_b_ref[...])

    in_specs = [pl.BlockSpec((None, T, S, C), lambda b: (b, 0, 0, 0)),
                _full_spec(perm)]
    operands = [x_btsc, perm]
    for w, bias in zip(conv_ws, conv_bs):
        in_specs += [_full_spec(w), _full_spec(bias)]
        operands += [w, bias]
    in_specs += [_full_spec(wq_t), _full_spec(wk_t), _full_spec(wv_t), _smem_spec()]
    operands += [wq_t, wk_t, wv_t, gamma]
    for (wih, whh, bih, bhh) in gru_layers:
        in_specs += [_full_spec(wih), _full_spec(whh), _full_spec(bih), _full_spec(bhh)]
        operands += [wih, whh, bih, bhh]
    in_specs += [_full_spec(ta_w), _smem_spec(), _full_spec(cls_w_t), _full_spec(cls_b)]
    operands += [ta_w, ta_b, cls_w_t, cls_b]

    out = pl.pallas_call(
        kernel,
        out_shape=jax.ShapeDtypeStruct((B, 1, NC), jnp.float32),
        grid=(B,),
        in_specs=in_specs,
        out_specs=pl.BlockSpec((None, 1, NC), lambda b: (b, 0, 0)),
        compiler_params=pltpu.CompilerParams(dimension_semantics=("parallel",)),
    )(*operands)
    return out.reshape(B, NC)


# ----------------------------------------------------------------------------
# Full forward (wrapper glue is weight plumbing + one tiny input transpose only)
# ----------------------------------------------------------------------------
def attend_discriminate_forward(x_nchw, params, cfg):
    H = cfg['hidden_dim']
    L = cfg['enc_num_layers']
    F = cfg['filter_num']
    K = cfg['filter_size']
    B, C_in, T, S = x_nchw.shape
    Tp = T - 4 * (K - 1)

    # NCHW -> channels-last (B, T, S, C): one tiny transpose of the raw input only.
    x_btsc = jnp.transpose(x_nchw, (0, 2, 3, 1)).astype(jnp.float32)

    conv_ws = [params[f'conv{i+1}_w'] for i in range(4)]
    conv_bs = [params[f'conv{i+1}_b'].reshape(1, -1) for i in range(4)]
    wq_t = params['sa_wq'].T
    wk_t = params['sa_wk'].T
    wv_t = params['sa_wv'].T

    # Static permutation used in-kernel to transpose the (t, s) structure on the MXU:
    # perm[s*T' + t, t*S + s] = 1.
    r = jnp.arange(S * Tp)
    perm = jax.nn.one_hot((r % Tp) * S + (r // Tp), S * Tp, dtype=jnp.float32)

    # torch GRU layer-0 input feature index is d = f*S + s (F-major); expose the weight as
    # (s, f, 3H) for the in-kernel batched-over-s contraction (pure weight plumbing).
    gru_layers = []
    for l in range(L):
        wih = params[f'gru_wih_t_{l}']
        if l == 0:
            wih = wih.reshape(F, S, 3 * H).transpose(1, 0, 2)
        gru_layers.append((wih, params[f'gru_whh_t_{l}'],
                           params[f'gru_bih_{l}'], params[f'gru_bhh_{l}']))

    # dropout / dropout_rnn / dropout_cls: inference mode -> identity.
    return attend_discriminate_fused(
        x_btsc, perm, conv_ws, conv_bs, wq_t, wk_t, wv_t, params['sa_gamma'],
        gru_layers, params['ta_w'], params['ta_b'], params['cls_w_t'], params['cls_b'],
        use_relu=(cfg['activation'] == 'ReLU'))


# ----------------------------------------------------------------------------
# Deterministic parameter init (shapes follow the torch module __init__)
# ----------------------------------------------------------------------------
def init_params(key, input_shape, cfg):
    B, C_in, T, S = input_shape
    F = cfg['filter_num']
    K = cfg['filter_size']
    H = cfg['hidden_dim']
    NC = cfg['num_class']
    Fq = F // cfg['sa_div'] if F > 1 else F
    keys = jax.random.split(key, 32)
    p = {}

    ci = C_in
    for i in range(4):
        # torch Conv2d weight is (F, C, K, 1); stored here pre-transposed to (K, C, F).
        fan_in = ci * K
        p[f'conv{i+1}_w'] = (2.0 / fan_in) ** 0.5 * jax.random.normal(
            keys[i], (K, ci, F), jnp.float32)
        p[f'conv{i+1}_b'] = 0.01 * jax.random.normal(keys[4 + i], (F,), jnp.float32)
        ci = F

    p['sa_wq'] = (2.0 / F) ** 0.5 * jax.random.normal(keys[8], (Fq, F), jnp.float32)
    p['sa_wk'] = (2.0 / F) ** 0.5 * jax.random.normal(keys[9], (Fq, F), jnp.float32)
    p['sa_wv'] = (2.0 / F) ** 0.5 * jax.random.normal(keys[10], (F, F), jnp.float32)
    # torch inits gamma = 0.0 (SA residual starts as identity); match it exactly.
    p['sa_gamma'] = jnp.zeros((1, 1), jnp.float32)

    D = F * S
    s = 1.0 / (H ** 0.5)
    for l in range(cfg['enc_num_layers']):
        d_in = D if l == 0 else H
        p[f'gru_wih_t_{l}'] = s * jax.random.normal(keys[11 + 4 * l], (d_in, 3 * H), jnp.float32)
        p[f'gru_whh_t_{l}'] = s * jax.random.normal(keys[12 + 4 * l], (H, 3 * H), jnp.float32)
        p[f'gru_bih_{l}'] = s * jax.random.normal(keys[13 + 4 * l], (1, 3 * H), jnp.float32)
        p[f'gru_bhh_{l}'] = s * jax.random.normal(keys[14 + 4 * l], (1, 3 * H), jnp.float32)

    p['ta_w'] = s * jax.random.normal(keys[27], (1, H), jnp.float32)
    p['ta_b'] = jnp.zeros((1, 1), jnp.float32)
    p['cls_w_t'] = s * jax.random.normal(keys[28], (H, NC), jnp.float32)
    p['cls_b'] = jnp.zeros((1, NC), jnp.float32)
    return p


if __name__ == "__main__":
    cfg = dict(hidden_dim=32, filter_num=16, filter_size=3, enc_num_layers=1,
               dropout=0.1, dropout_rnn=0.1, dropout_cls=0.1,
               activation='ReLU', sa_div=2, num_class=6)
    # input_shape = (B, C_in, T, S); T' = 16 - 4*(3-1) = 8; RNN feature dim = F*S = 128.
    B, C_in, T, S = 2, 4, 16, 8

    key = jax.random.PRNGKey(0)
    kx, kp = jax.random.split(key)
    x = jax.random.normal(kx, (B, C_in, T, S), dtype=jnp.float32)
    params = init_params(kp, (B, C_in, T, S), cfg)

    fwd = jax.jit(functools.partial(attend_discriminate_forward, cfg=cfg))
    logits = fwd(x, params)
    jax.block_until_ready(logits)
    assert logits.shape == (B, cfg['num_class']), logits.shape
    print("KERNEL_OK")
</pallas_src>

<mosaic_0001>
module attributes {stable_mosaic.version = 11 : i64} {
  func.func @kernel(%arg0: i32, %arg1: memref<1x16x8x4xf32, #tpu.memory_space<vmem>>, %arg2: memref<64x64xf32, #tpu.memory_space<vmem>>, %arg3: memref<3x4x16xf32, #tpu.memory_space<vmem>>, %arg4: memref<1x16xf32, #tpu.memory_space<vmem>>, %arg5: memref<3x16x16xf32, #tpu.memory_space<vmem>>, %arg6: memref<1x16xf32, #tpu.memory_space<vmem>>, %arg7: memref<3x16x16xf32, #tpu.memory_space<vmem>>, %arg8: memref<1x16xf32, #tpu.memory_space<vmem>>, %arg9: memref<3x16x16xf32, #tpu.memory_space<vmem>>, %arg10: memref<1x16xf32, #tpu.memory_space<vmem>>, %arg11: memref<16x8xf32, #tpu.memory_space<vmem>>, %arg12: memref<16x8xf32, #tpu.memory_space<vmem>>, %arg13: memref<16x16xf32, #tpu.memory_space<vmem>>, %arg14: memref<1x1xf32, #tpu.memory_space<smem>>, %arg15: memref<8x16x96xf32, #tpu.memory_space<vmem>>, %arg16: memref<32x96xf32, #tpu.memory_space<vmem>>, %arg17: memref<1x96xf32, #tpu.memory_space<vmem>>, %arg18: memref<1x96xf32, #tpu.memory_space<vmem>>, %arg19: memref<1x32xf32, #tpu.memory_space<vmem>>, %arg20: memref<1x1xf32, #tpu.memory_space<smem>>, %arg21: memref<32x6xf32, #tpu.memory_space<vmem>>, %arg22: memref<1x6xf32, #tpu.memory_space<vmem>>, %arg23: memref<1x1x6xf32, #tpu.memory_space<vmem>>) attributes {dimension_semantics = [#tpu.dimension_semantics<parallel>], iteration_bounds = array<i64: 2>, scalar_prefetch = 0 : i64, scratch_operands = 0 : i64, tpu.core_type = #tpu.core_type<tc>, window_params = [{transform_indices = @transform_0, window_bounds = array<i64: 1, 16, 8, 4>}, {pipeline_mode = #tpu.pipeline_mode<synchronous>, transform_indices = @transform_1, window_bounds = array<i64: 64, 64>}, {pipeline_mode = #tpu.pipeline_mode<synchronous>, transform_indices = @transform_2, window_bounds = array<i64: 3, 4, 16>}, {pipeline_mode = #tpu.pipeline_mode<synchronous>, transform_indices = @transform_3, window_bounds = array<i64: 1, 16>}, {pipeline_mode = #tpu.pipeline_mode<synchronous>, transform_indices = @transform_4, window_bounds = array<i64: 3, 16, 16>}, {pipeline_mode = #tpu.pipeline_mode<synchronous>, transform_indices = @transform_5, window_bounds = array<i64: 1, 16>}, {pipeline_mode = #tpu.pipeline_mode<synchronous>, transform_indices = @transform_6, window_bounds = array<i64: 3, 16, 16>}, {pipeline_mode = #tpu.pipeline_mode<synchronous>, transform_indices = @transform_7, window_bounds = array<i64: 1, 16>}, {pipeline_mode = #tpu.pipeline_mode<synchronous>, transform_indices = @transform_8, window_bounds = array<i64: 3, 16, 16>}, {pipeline_mode = #tpu.pipeline_mode<synchronous>, transform_indices = @transform_9, window_bounds = array<i64: 1, 16>}, {pipeline_mode = #tpu.pipeline_mode<synchronous>, transform_indices = @transform_10, window_bounds = array<i64: 16, 8>}, {pipeline_mode = #tpu.pipeline_mode<synchronous>, transform_indices = @transform_11, window_bounds = array<i64: 16, 8>}, {pipeline_mode = #tpu.pipeline_mode<synchronous>, transform_indices = @transform_12, window_bounds = array<i64: 16, 16>}, {transform_indices = @transform_13, window_bounds = array<i64: 1, 1>}, {pipeline_mode = #tpu.pipeline_mode<synchronous>, transform_indices = @transform_14, window_bounds = array<i64: 8, 16, 96>}, {pipeline_mode = #tpu.pipeline_mode<synchronous>, transform_indices = @transform_15, window_bounds = array<i64: 32, 96>}, {pipeline_mode = #tpu.pipeline_mode<synchronous>, transform_indices = @transform_16, window_bounds = array<i64: 1, 96>}, {pipeline_mode = #tpu.pipeline_mode<synchronous>, transform_indices = @transform_17, window_bounds = array<i64: 1, 96>}, {pipeline_mode = #tpu.pipeline_mode<synchronous>, transform_indices = @transform_18, window_bounds = array<i64: 1, 32>}, {transform_indices = @transform_19, window_bounds = array<i64: 1, 1>}, {pipeline_mode = #tpu.pipeline_mode<synchronous>, transform_indices = @transform_20, window_bounds = array<i64: 32, 6>}, {pipeline_mode = #tpu.pipeline_mode<synchronous>, transform_indices = @transform_21, window_bounds = array<i64: 1, 6>}, {transform_indices = @transform_22, window_bounds = array<i64: 1, 1, 6>}]} {
    %c0 = arith.constant 0 : index
    %c0_0 = arith.constant 0 : index
    %c0_1 = arith.constant 0 : index
    %c0_2 = arith.constant 0 : index
    %0 = vector.load %arg1[%c0, %c0_0, %c0_1, %c0_2] : memref<1x16x8x4xf32, #tpu.memory_space<vmem>>, vector<1x16x8x4xf32>
    %1 = vector.shape_cast %0 : vector<1x16x8x4xf32> to vector<16x8x4xf32>
    %2 = vector.extract_strided_slice %1 {offsets = [0, 0, 0], sizes = [14, 8, 4], strides = [1, 1, 1]} : vector<16x8x4xf32> to vector<14x8x4xf32>
    %3 = vector.shape_cast %2 : vector<14x8x4xf32> to vector<112x4xf32>
    %c0_3 = arith.constant 0 : index
    %c0_4 = arith.constant 0 : index
    %c0_5 = arith.constant 0 : index
    %4 = vector.load %arg3[%c0_3, %c0_4, %c0_5] : memref<3x4x16xf32, #tpu.memory_space<vmem>>, vector<1x4x16xf32>
    %5 = vector.shape_cast %4 : vector<1x4x16xf32> to vector<4x16xf32>
    %cst = arith.constant dense<0.000000e+00> : vector<112x16xf32>
    %6 = tpu.matmul %3, %5, %cst {dimension_numbers = #tpu.dot_dimension_numbers<[1], [0], [0], [1], [0, 0, 1, 1], [], []>} : vector<112x4xf32>, vector<4x16xf32>, vector<112x16xf32> -> vector<112x16xf32>
    %7 = vector.extract_strided_slice %1 {offsets = [1, 0, 0], sizes = [14, 8, 4], strides = [1, 1, 1]} : vector<16x8x4xf32> to vector<14x8x4xf32>
    %8 = vector.shape_cast %7 : vector<14x8x4xf32> to vector<112x4xf32>
    %c1 = arith.constant 1 : index
    %c0_6 = arith.constant 0 : index
    %c0_7 = arith.constant 0 : index
    %9 = vector.load %arg3[%c1, %c0_6, %c0_7] : memref<3x4x16xf32, #tpu.memory_space<vmem>>, vector<1x4x16xf32>
    %10 = vector.shape_cast %9 : vector<1x4x16xf32> to vector<4x16xf32>
    %cst_8 = arith.constant dense<0.000000e+00> : vector<112x16xf32>
    %11 = tpu.matmul %8, %10, %cst_8 {dimension_numbers = #tpu.dot_dimension_numbers<[1], [0], [0], [1], [0, 0, 1, 1], [], []>} : vector<112x4xf32>, vector<4x16xf32>, vector<112x16xf32> -> vector<112x16xf32>
    %12 = arith.addf %6, %11 : vector<112x16xf32>
    %13 = vector.extract_strided_slice %1 {offsets = [2, 0, 0], sizes = [14, 8, 4], strides = [1, 1, 1]} : vector<16x8x4xf32> to vector<14x8x4xf32>
    %14 = vector.shape_cast %13 : vector<14x8x4xf32> to vector<112x4xf32>
    %c2 = arith.constant 2 : index
    %c0_9 = arith.constant 0 : index
    %c0_10 = arith.constant 0 : index
    %15 = vector.load %arg3[%c2, %c0_9, %c0_10] : memref<3x4x16xf32, #tpu.memory_space<vmem>>, vector<1x4x16xf32>
    %16 = vector.shape_cast %15 : vector<1x4x16xf32> to vector<4x16xf32>
    %cst_11 = arith.constant dense<0.000000e+00> : vector<112x16xf32>
    %17 = tpu.matmul %14, %16, %cst_11 {dimension_numbers = #tpu.dot_dimension_numbers<[1], [0], [0], [1], [0, 0, 1, 1], [], []>} : vector<112x4xf32>, vector<4x16xf32>, vector<112x16xf32> -> vector<112x16xf32>
    %18 = arith.addf %12, %17 : vector<112x16xf32>
    %c0_12 = arith.constant 0 : index
    %c0_13 = arith.constant 0 : index
    %19 = vector.load %arg4[%c0_12, %c0_13] : memref<1x16xf32, #tpu.memory_space<vmem>>, vector<1x16xf32>
    %20 = vector.broadcast %19 : vector<1x16xf32> to vector<112x16xf32>
    %21 = arith.addf %18, %20 : vector<112x16xf32>
    %cst_14 = arith.constant 0.000000e+00 : f32
    %22 = vector.broadcast %cst_14 : f32 to vector<112x16xf32>
    %23 = arith.maximumf %21, %22 : vector<112x16xf32>
    %24 = vector.shape_cast %23 : vector<112x16xf32> to vector<14x8x16xf32>
    %25 = vector.extract_strided_slice %24 {offsets = [0, 0, 0], sizes = [12, 8, 16], strides = [1, 1, 1]} : vector<14x8x16xf32> to vector<12x8x16xf32>
    %26 = vector.shape_cast %25 : vector<12x8x16xf32> to vector<96x16xf32>
    %c0_15 = arith.constant 0 : index
    %c0_16 = arith.constant 0 : index
    %c0_17 = arith.constant 0 : index
    %27 = vector.load %arg5[%c0_15, %c0_16, %c0_17] : memref<3x16x16xf32, #tpu.memory_space<vmem>>, vector<1x16x16xf32>
    %28 = vector.shape_cast %27 : vector<1x16x16xf32> to vector<16x16xf32>
    %cst_18 = arith.constant dense<0.000000e+00> : vector<96x16xf32>
    %29 = tpu.matmul %26, %28, %cst_18 {dimension_numbers = #tpu.dot_dimension_numbers<[1], [0], [0], [1], [0, 0, 1, 1], [], []>} : vector<96x16xf32>, vector<16x16xf32>, vector<96x16xf32> -> vector<96x16xf32>
    %30 = vector.extract_strided_slice %24 {offsets = [1, 0, 0], sizes = [12, 8, 16], strides = [1, 1, 1]} : vector<14x8x16xf32> to vector<12x8x16xf32>
    %31 = vector.shape_cast %30 : vector<12x8x16xf32> to vector<96x16xf32>
    %c1_19 = arith.constant 1 : index
    %c0_20 = arith.constant 0 : index
    %c0_21 = arith.constant 0 : index
    %32 = vector.load %arg5[%c1_19, %c0_20, %c0_21] : memref<3x16x16xf32, #tpu.memory_space<vmem>>, vector<1x16x16xf32>
    %33 = vector.shape_cast %32 : vector<1x16x16xf32> to vector<16x16xf32>
    %cst_22 = arith.constant dense<0.000000e+00> : vector<96x16xf32>
    %34 = tpu.matmul %31, %33, %cst_22 {dimension_numbers = #tpu.dot_dimension_numbers<[1], [0], [0], [1], [0, 0, 1, 1], [], []>} : vector<96x16xf32>, vector<16x16xf32>, vector<96x16xf32> -> vector<96x16xf32>
    %35 = arith.addf %29, %34 : vector<96x16xf32>
    %36 = vector.extract_strided_slice %24 {offsets = [2, 0, 0], sizes = [12, 8, 16], strides = [1, 1, 1]} : vector<14x8x16xf32> to vector<12x8x16xf32>
    %37 = vector.shape_cast %36 : vector<12x8x16xf32> to vector<96x16xf32>
    %c2_23 = arith.constant 2 : index
    %c0_24 = arith.constant 0 : index
    %c0_25 = arith.constant 0 : index
    %38 = vector.load %arg5[%c2_23, %c0_24, %c0_25] : memref<3x16x16xf32, #tpu.memory_space<vmem>>, vector<1x16x16xf32>
    %39 = vector.shape_cast %38 : vector<1x16x16xf32> to vector<16x16xf32>
    %cst_26 = arith.constant dense<0.000000e+00> : vector<96x16xf32>
    %40 = tpu.matmul %37, %39, %cst_26 {dimension_numbers = #tpu.dot_dimension_numbers<[1], [0], [0], [1], [0, 0, 1, 1], [], []>} : vector<96x16xf32>, vector<16x16xf32>, vector<96x16xf32> -> vector<96x16xf32>
    %41 = arith.addf %35, %40 : vector<96x16xf32>
    %c0_27 = arith.constant 0 : index
    %c0_28 = arith.constant 0 : index
    %42 = vector.load %arg6[%c0_27, %c0_28] : memref<1x16xf32, #tpu.memory_space<vmem>>, vector<1x16xf32>
    %43 = vector.broadcast %42 : vector<1x16xf32> to vector<96x16xf32>
    %44 = arith.addf %41, %43 : vector<96x16xf32>
    %cst_29 = arith.constant 0.000000e+00 : f32
    %45 = vector.broadcast %cst_29 : f32 to vector<96x16xf32>
    %46 = arith.maximumf %44, %45 : vector<96x16xf32>
    %47 = vector.shape_cast %46 : vector<96x16xf32> to vector<12x8x16xf32>
    %48 = vector.extract_strided_slice %47 {offsets = [0, 0, 0], sizes = [10, 8, 16], strides = [1, 1, 1]} : vector<12x8x16xf32> to vector<10x8x16xf32>
    %49 = vector.shape_cast %48 : vector<10x8x16xf32> to vector<80x16xf32>
    %c0_30 = arith.constant 0 : index
    %c0_31 = arith.constant 0 : index
    %c0_32 = arith.constant 0 : index
    %50 = vector.load %arg7[%c0_30, %c0_31, %c0_32] : memref<3x16x16xf32, #tpu.memory_space<vmem>>, vector<1x16x16xf32>
    %51 = vector.shape_cast %50 : vector<1x16x16xf32> to vector<16x16xf32>
    %cst_33 = arith.constant dense<0.000000e+00> : vector<80x16xf32>
    %52 = tpu.matmul %49, %51, %cst_33 {dimension_numbers = #tpu.dot_dimension_numbers<[1], [0], [0], [1], [0, 0, 1, 1], [], []>} : vector<80x16xf32>, vector<16x16xf32>, vector<80x16xf32> -> vector<80x16xf32>
    %53 = vector.extract_strided_slice %47 {offsets = [1, 0, 0], sizes = [10, 8, 16], strides = [1, 1, 1]} : vector<12x8x16xf32> to vector<10x8x16xf32>
    %54 = vector.shape_cast %53 : vector<10x8x16xf32> to vector<80x16xf32>
    %c1_34 = arith.constant 1 : index
    %c0_35 = arith.constant 0 : index
    %c0_36 = arith.constant 0 : index
    %55 = vector.load %arg7[%c1_34, %c0_35, %c0_36] : memref<3x16x16xf32, #tpu.memory_space<vmem>>, vector<1x16x16xf32>
    %56 = vector.shape_cast %55 : vector<1x16x16xf32> to vector<16x16xf32>
    %cst_37 = arith.constant dense<0.000000e+00> : vector<80x16xf32>
    %57 = tpu.matmul %54, %56, %cst_37 {dimension_numbers = #tpu.dot_dimension_numbers<[1], [0], [0], [1], [0, 0, 1, 1], [], []>} : vector<80x16xf32>, vector<16x16xf32>, vector<80x16xf32> -> vector<80x16xf32>
    %58 = arith.addf %52, %57 : vector<80x16xf32>
    %59 = vector.extract_strided_slice %47 {offsets = [2, 0, 0], sizes = [10, 8, 16], strides = [1, 1, 1]} : vector<12x8x16xf32> to vector<10x8x16xf32>
    %60 = vector.shape_cast %59 : vector<10x8x16xf32> to vector<80x16xf32>
    %c2_38 = arith.constant 2 : index
    %c0_39 = arith.constant 0 : index
    %c0_40 = arith.constant 0 : index
    %61 = vector.load %arg7[%c2_38, %c0_39, %c0_40] : memref<3x16x16xf32, #tpu.memory_space<vmem>>, vector<1x16x16xf32>
    %62 = vector.shape_cast %61 : vector<1x16x16xf32> to vector<16x16xf32>
    %cst_41 = arith.constant dense<0.000000e+00> : vector<80x16xf32>
    %63 = tpu.matmul %60, %62, %cst_41 {dimension_numbers = #tpu.dot_dimension_numbers<[1], [0], [0], [1], [0, 0, 1, 1], [], []>} : vector<80x16xf32>, vector<16x16xf32>, vector<80x16xf32> -> vector<80x16xf32>
    %64 = arith.addf %58, %63 : vector<80x16xf32>
    %c0_42 = arith.constant 0 : index
    %c0_43 = arith.constant 0 : index
    %65 = vector.load %arg8[%c0_42, %c0_43] : memref<1x16xf32, #tpu.memory_space<vmem>>, vector<1x16xf32>
    %66 = vector.broadcast %65 : vector<1x16xf32> to vector<80x16xf32>
    %67 = arith.addf %64, %66 : vector<80x16xf32>
    %cst_44 = arith.constant 0.000000e+00 : f32
    %68 = vector.broadcast %cst_44 : f32 to vector<80x16xf32>
    %69 = arith.maximumf %67, %68 : vector<80x16xf32>
    %70 = vector.shape_cast %69 : vector<80x16xf32> to vector<10x8x16xf32>
    %71 = vector.extract_strided_slice %70 {offsets = [0, 0, 0], sizes = [8, 8, 16], strides = [1, 1, 1]} : vector<10x8x16xf32> to vector<8x8x16xf32>
    %72 = vector.shape_cast %71 : vector<8x8x16xf32> to vector<64x16xf32>
    %c0_45 = arith.constant 0 : index
    %c0_46 = arith.constant 0 : index
    %c0_47 = arith.constant 0 : index
    %73 = vector.load %arg9[%c0_45, %c0_46, %c0_47] : memref<3x16x16xf32, #tpu.memory_space<vmem>>, vector<1x16x16xf32>
    %74 = vector.shape_cast %73 : vector<1x16x16xf32> to vector<16x16xf32>
    %cst_48 = arith.constant dense<0.000000e+00> : vector<64x16xf32>
    %75 = tpu.matmul %72, %74, %cst_48 {dimension_numbers = #tpu.dot_dimension_numbers<[1], [0], [0], [1], [0, 0, 1, 1], [], []>} : vector<64x16xf32>, vector<16x16xf32>, vector<64x16xf32> -> vector<64x16xf32>
    %76 = vector.extract_strided_slice %70 {offsets = [1, 0, 0], sizes = [8, 8, 16], strides = [1, 1, 1]} : vector<10x8x16xf32> to vector<8x8x16xf32>
    %77 = vector.shape_cast %76 : vector<8x8x16xf32> to vector<64x16xf32>
    %c1_49 = arith.constant 1 : index
    %c0_50 = arith.constant 0 : index
    %c0_51 = arith.constant 0 : index
    %78 = vector.load %arg9[%c1_49, %c0_50, %c0_51] : memref<3x16x16xf32, #tpu.memory_space<vmem>>, vector<1x16x16xf32>
    %79 = vector.shape_cast %78 : vector<1x16x16xf32> to vector<16x16xf32>
    %cst_52 = arith.constant dense<0.000000e+00> : vector<64x16xf32>
    %80 = tpu.matmul %77, %79, %cst_52 {dimension_numbers = #tpu.dot_dimension_numbers<[1], [0], [0], [1], [0, 0, 1, 1], [], []>} : vector<64x16xf32>, vector<16x16xf32>, vector<64x16xf32> -> vector<64x16xf32>
    %81 = arith.addf %75, %80 : vector<64x16xf32>
    %82 = vector.extract_strided_slice %70 {offsets = [2, 0, 0], sizes = [8, 8, 16], strides = [1, 1, 1]} : vector<10x8x16xf32> to vector<8x8x16xf32>
    %83 = vector.shape_cast %82 : vector<8x8x16xf32> to vector<64x16xf32>
    %c2_53 = arith.constant 2 : index
    %c0_54 = arith.constant 0 : index
    %c0_55 = arith.constant 0 : index
    %84 = vector.load %arg9[%c2_53, %c0_54, %c0_55] : memref<3x16x16xf32, #tpu.memory_space<vmem>>, vector<1x16x16xf32>
    %85 = vector.shape_cast %84 : vector<1x16x16xf32> to vector<16x16xf32>
    %cst_56 = arith.constant dense<0.000000e+00> : vector<64x16xf32>
    %86 = tpu.matmul %83, %85, %cst_56 {dimension_numbers = #tpu.dot_dimension_numbers<[1], [0], [0], [1], [0, 0, 1, 1], [], []>} : vector<64x16xf32>, vector<16x16xf32>, vector<64x16xf32> -> vector<64x16xf32>
    %87 = arith.addf %81, %86 : vector<64x16xf32>
    %c0_57 = arith.constant 0 : index
    %c0_58 = arith.constant 0 : index
    %88 = vector.load %arg10[%c0_57, %c0_58] : memref<1x16xf32, #tpu.memory_space<vmem>>, vector<1x16xf32>
    %89 = vector.broadcast %88 : vector<1x16xf32> to vector<64x16xf32>
    %90 = arith.addf %87, %89 : vector<64x16xf32>
    %cst_59 = arith.constant 0.000000e+00 : f32
    %91 = vector.broadcast %cst_59 : f32 to vector<64x16xf32>
    %92 = arith.maximumf %90, %91 : vector<64x16xf32>
    %93 = vector.shape_cast %92 : vector<64x16xf32> to vector<8x8x16xf32>
    %94 = vector.shape_cast %93 : vector<8x8x16xf32> to vector<64x16xf32>
    %c0_60 = arith.constant 0 : index
    %c0_61 = arith.constant 0 : index
    %95 = vector.load %arg11[%c0_60, %c0_61] : memref<16x8xf32, #tpu.memory_space<vmem>>, vector<16x8xf32>
    %cst_62 = arith.constant dense<0.000000e+00> : vector<64x8xf32>
    %96 = tpu.matmul %94, %95, %cst_62 {dimension_numbers = #tpu.dot_dimension_numbers<[1], [0], [0], [1], [0, 0, 1, 1], [], []>} : vector<64x16xf32>, vector<16x8xf32>, vector<64x8xf32> -> vector<64x8xf32>
    %97 = vector.shape_cast %96 : vector<64x8xf32> to vector<8x8x8xf32>
    %c0_63 = arith.constant 0 : index
    %c0_64 = arith.constant 0 : index
    %98 = vector.load %arg12[%c0_63, %c0_64] : memref<16x8xf32, #tpu.memory_space<vmem>>, vector<16x8xf32>
    %cst_65 = arith.constant dense<0.000000e+00> : vector<64x8xf32>
    %99 = tpu.matmul %94, %98, %cst_65 {dimension_numbers = #tpu.dot_dimension_numbers<[1], [0], [0], [1], [0, 0, 1, 1], [], []>} : vector<64x16xf32>, vector<16x8xf32>, vector<64x8xf32> -> vector<64x8xf32>
    %100 = vector.shape_cast %99 : vector<64x8xf32> to vector<8x8x8xf32>
    %c0_66 = arith.constant 0 : index
    %c0_67 = arith.constant 0 : index
    %101 = vector.load %arg13[%c0_66, %c0_67] : memref<16x16xf32, #tpu.memory_space<vmem>>, vector<16x16xf32>
    %cst_68 = arith.constant dense<0.000000e+00> : vector<64x16xf32>
    %102 = tpu.matmul %94, %101, %cst_68 {dimension_numbers = #tpu.dot_dimension_numbers<[1], [0], [0], [1], [0, 0, 1, 1], [], []>} : vector<64x16xf32>, vector<16x16xf32>, vector<64x16xf32> -> vector<64x16xf32>
    %103 = vector.shape_cast %102 : vector<64x16xf32> to vector<8x8x16xf32>
    %cst_69 = arith.constant dense<0.000000e+00> : vector<8x8x8xf32>
    %104 = tpu.matmul %100, %97, %cst_69 {dimension_numbers = #tpu.dot_dimension_numbers<[2], [2], [1], [1], [0, 0, 0, 1, 1, 1], [0], [0]>} : vector<8x8x8xf32>, vector<8x8x8xf32>, vector<8x8x8xf32> -> vector<8x8x8xf32>
    %cst_70 = arith.constant dense<0xFF800000> : vector<8x8xf32>
    %105 = vector.multi_reduction <maximumf>, %104, %cst_70 [2] : vector<8x8x8xf32> to vector<8x8xf32>
    %106 = vector.shape_cast %105 : vector<8x8xf32> to vector<8x8x1xf32>
    %107 = vector.broadcast %106 : vector<8x8x1xf32> to vector<8x8x8xf32>
    %108 = arith.subf %104, %107 : vector<8x8x8xf32>
    %109 = math.exp %108 : vector<8x8x8xf32>
    %cst_71 = arith.constant dense<0.000000e+00> : vector<8x8xf32>
    %110 = vector.multi_reduction <add>, %109, %cst_71 [2] : vector<8x8x8xf32> to vector<8x8xf32>
    %111 = vector.shape_cast %110 : vector<8x8xf32> to vector<8x8x1xf32>
    %112 = tpu.reciprocal %111 {approx = true} : vector<8x8x1xf32> -> vector<8x8x1xf32>
    %113 = vector.broadcast %112 : vector<8x8x1xf32> to vector<8x8x8xf32>
    %114 = arith.mulf %109, %113 : vector<8x8x8xf32>
    %cst_72 = arith.constant dense<0.000000e+00> : vector<8x8x16xf32>
    %115 = tpu.matmul %114, %103, %cst_72 {dimension_numbers = #tpu.dot_dimension_numbers<[2], [1], [1], [2], [0, 0, 0, 1, 1, 2], [0], [0]>} : vector<8x8x8xf32>, vector<8x8x16xf32>, vector<8x8x16xf32> -> vector<8x8x16xf32>
    %c0_73 = arith.constant 0 : index
    %c0_74 = arith.constant 0 : index
    %116 = memref.load %arg14[%c0_73, %c0_74] : memref<1x1xf32, #tpu.memory_space<smem>>
    %117 = vector.broadcast %116 : f32 to vector<8x8x16xf32>
    %118 = arith.mulf %117, %115 : vector<8x8x16xf32>
    %119 = arith.addf %118, %93 : vector<8x8x16xf32>
    %120 = vector.shape_cast %119 : vector<8x8x16xf32> to vector<64x16xf32>
    %c0_75 = arith.constant 0 : index
    %c0_76 = arith.constant 0 : index
    %121 = vector.load %arg2[%c0_75, %c0_76] : memref<64x64xf32, #tpu.memory_space<vmem>>, vector<64x64xf32>
    %cst_77 = arith.constant dense<0.000000e+00> : vector<64x16xf32>
    %122 = tpu.matmul %121, %120, %cst_77 {dimension_numbers = #tpu.dot_dimension_numbers<[1], [0], [0], [1], [0, 0, 1, 1], [], []>} : vector<64x64xf32>, vector<64x16xf32>, vector<64x16xf32> -> vector<64x16xf32>
    %123 = vector.shape_cast %122 : vector<64x16xf32> to vector<8x8x16xf32>
    %c0_78 = arith.constant 0 : index
    %c0_79 = arith.constant 0 : index
    %c0_80 = arith.constant 0 : index
    %124 = vector.load %arg15[%c0_78, %c0_79, %c0_80] : memref<8x16x96xf32, #tpu.memory_space<vmem>>, vector<8x16x96xf32>
    %cst_81 = arith.constant dense<0.000000e+00> : vector<8x8x96xf32>
    %125 = tpu.matmul %123, %124, %cst_81 {dimension_numbers = #tpu.dot_dimension_numbers<[2], [1], [1], [2], [0, 0, 0, 1, 1, 2], [0], [0]>} : vector<8x8x16xf32>, vector<8x16x96xf32>, vector<8x8x96xf32> -> vector<8x8x96xf32>
    %cst_82 = arith.constant dense<0.000000e+00> : vector<8x96xf32>
    %126 = vector.multi_reduction <add>, %125, %cst_82 [0] : vector<8x8x96xf32> to vector<8x96xf32>
    %c0_83 = arith.constant 0 : index
    %c0_84 = arith.constant 0 : index
    %127 = vector.load %arg17[%c0_83, %c0_84] : memref<1x96xf32, #tpu.memory_space<vmem>>, vector<1x96xf32>
    %128 = vector.broadcast %127 : vector<1x96xf32> to vector<8x96xf32>
    %129 = arith.addf %126, %128 : vector<8x96xf32>
    %c0_85 = arith.constant 0 : index
    %c0_86 = arith.constant 0 : index
    %130 = vector.load %arg16[%c0_85, %c0_86] : memref<32x96xf32, #tpu.memory_space<vmem>>, vector<32x96xf32>
    %c0_87 = arith.constant 0 : index
    %c0_88 = arith.constant 0 : index
    %131 = vector.load %arg18[%c0_87, %c0_88] : memref<1x96xf32, #tpu.memory_space<vmem>>, vector<1x96xf32>
    %cst_89 = arith.constant 0.000000e+00 : f32
    %132 = vector.broadcast %cst_89 : f32 to vector<1x32xf32>
    %cst_90 = arith.constant dense<0.000000e+00> : vector<1x96xf32>
    %133 = tpu.matmul %132, %130, %cst_90 {dimension_numbers = #tpu.dot_dimension_numbers<[1], [0], [0], [1], [0, 0, 1, 1], [], []>} : vector<1x32xf32>, vector<32x96xf32>, vector<1x96xf32> -> vector<1x96xf32>
    %134 = arith.addf %133, %131 : vector<1x96xf32>
    %135 = vector.extract_strided_slice %129 {offsets = [0, 0], sizes = [1, 96], strides = [1, 1]} : vector<8x96xf32> to vector<1x96xf32>
    %136 = vector.extract_strided_slice %135 {offsets = [0, 0], sizes = [1, 32], strides = [1, 1]} : vector<1x96xf32> to vector<1x32xf32>
    %137 = vector.extract_strided_slice %134 {offsets = [0, 0], sizes = [1, 32], strides = [1, 1]} : vector<1x96xf32> to vector<1x32xf32>
    %138 = arith.addf %136, %137 : vector<1x32xf32>
    %139 = arith.negf %138 : vector<1x32xf32>
    %140 = math.exp %139 : vector<1x32xf32>
    %cst_91 = arith.constant 1.000000e+00 : f32
    %141 = vector.broadcast %cst_91 : f32 to vector<1x32xf32>
    %142 = arith.addf %141, %140 : vector<1x32xf32>
    %143 = arith.divf %141, %142 : vector<1x32xf32>
    %144 = vector.extract_strided_slice %135 {offsets = [0, 32], sizes = [1, 32], strides = [1, 1]} : vector<1x96xf32> to vector<1x32xf32>
    %145 = vector.extract_strided_slice %134 {offsets = [0, 32], sizes = [1, 32], strides = [1, 1]} : vector<1x96xf32> to vector<1x32xf32>
    %146 = arith.addf %144, %145 : vector<1x32xf32>
    %147 = arith.negf %146 : vector<1x32xf32>
    %148 = math.exp %147 : vector<1x32xf32>
    %cst_92 = arith.constant 1.000000e+00 : f32
    %149 = vector.broadcast %cst_92 : f32 to vector<1x32xf32>
    %150 = arith.addf %149, %148 : vector<1x32xf32>
    %151 = arith.divf %149, %150 : vector<1x32xf32>
    %152 = vector.extract_strided_slice %135 {offsets = [0, 64], sizes = [1, 32], strides = [1, 1]} : vector<1x96xf32> to vector<1x32xf32>
    %153 = vector.extract_strided_slice %134 {offsets = [0, 64], sizes = [1, 32], strides = [1, 1]} : vector<1x96xf32> to vector<1x32xf32>
    %154 = arith.mulf %143, %153 : vector<1x32xf32>
    %155 = arith.addf %152, %154 : vector<1x32xf32>
    %156 = math.tanh %155 : vector<1x32xf32>
    %cst_93 = arith.constant 1.000000e+00 : f32
    %157 = vector.broadcast %cst_93 : f32 to vector<1x32xf32>
    %158 = arith.subf %157, %151 : vector<1x32xf32>
    %159 = arith.mulf %158, %156 : vector<1x32xf32>
    %160 = arith.mulf %151, %132 : vector<1x32xf32>
    %161 = arith.addf %159, %160 : vector<1x32xf32>
    %cst_94 = arith.constant dense<0.000000e+00> : vector<1x96xf32>
    %162 = tpu.matmul %161, %130, %cst_94 {dimension_numbers = #tpu.dot_dimension_numbers<[1], [0], [0], [1], [0, 0, 1, 1], [], []>} : vector<1x32xf32>, vector<32x96xf32>, vector<1x96xf32> -> vector<1x96xf32>
    %163 = arith.addf %162, %131 : vector<1x96xf32>
    %164 = vector.extract_strided_slice %129 {offsets = [1, 0], sizes = [1, 96], strides = [1, 1]} : vector<8x96xf32> to vector<1x96xf32>
    %165 = vector.extract_strided_slice %164 {offsets = [0, 0], sizes = [1, 32], strides = [1, 1]} : vector<1x96xf32> to vector<1x32xf32>
    %166 = vector.extract_strided_slice %163 {offsets = [0, 0], sizes = [1, 32], strides = [1, 1]} : vector<1x96xf32> to vector<1x32xf32>
    %167 = arith.addf %165, %166 : vector<1x32xf32>
    %168 = arith.negf %167 : vector<1x32xf32>
    %169 = math.exp %168 : vector<1x32xf32>
    %cst_95 = arith.constant 1.000000e+00 : f32
    %170 = vector.broadcast %cst_95 : f32 to vector<1x32xf32>
    %171 = arith.addf %170, %169 : vector<1x32xf32>
    %172 = arith.divf %170, %171 : vector<1x32xf32>
    %173 = vector.extract_strided_slice %164 {offsets = [0, 32], sizes = [1, 32], strides = [1, 1]} : vector<1x96xf32> to vector<1x32xf32>
    %174 = vector.extract_strided_slice %163 {offsets = [0, 32], sizes = [1, 32], strides = [1, 1]} : vector<1x96xf32> to vector<1x32xf32>
    %175 = arith.addf %173, %174 : vector<1x32xf32>
    %176 = arith.negf %175 : vector<1x32xf32>
    %177 = math.exp %176 : vector<1x32xf32>
    %cst_96 = arith.constant 1.000000e+00 : f32
    %178 = vector.broadcast %cst_96 : f32 to vector<1x32xf32>
    %179 = arith.addf %178, %177 : vector<1x32xf32>
    %180 = arith.divf %178, %179 : vector<1x32xf32>
    %181 = vector.extract_strided_slice %164 {offsets = [0, 64], sizes = [1, 32], strides = [1, 1]} : vector<1x96xf32> to vector<1x32xf32>
    %182 = vector.extract_strided_slice %163 {offsets = [0, 64], sizes = [1, 32], strides = [1, 1]} : vector<1x96xf32> to vector<1x32xf32>
    %183 = arith.mulf %172, %182 : vector<1x32xf32>
    %184 = arith.addf %181, %183 : vector<1x32xf32>
    %185 = math.tanh %184 : vector<1x32xf32>
    %cst_97 = arith.constant 1.000000e+00 : f32
    %186 = vector.broadcast %cst_97 : f32 to vector<1x32xf32>
    %187 = arith.subf %186, %180 : vector<1x32xf32>
    %188 = arith.mulf %187, %185 : vector<1x32xf32>
    %189 = arith.mulf %180, %161 : vector<1x32xf32>
    %190 = arith.addf %188, %189 : vector<1x32xf32>
    %cst_98 = arith.constant dense<0.000000e+00> : vector<1x96xf32>
    %191 = tpu.matmul %190, %130, %cst_98 {dimension_numbers = #tpu.dot_dimension_numbers<[1], [0], [0], [1], [0, 0, 1, 1], [], []>} : vector<1x32xf32>, vector<32x96xf32>, vector<1x96xf32> -> vector<1x96xf32>
    %192 = arith.addf %191, %131 : vector<1x96xf32>
    %193 = vector.extract_strided_slice %129 {offsets = [2, 0], sizes = [1, 96], strides = [1, 1]} : vector<8x96xf32> to vector<1x96xf32>
    %194 = vector.extract_strided_slice %193 {offsets = [0, 0], sizes = [1, 32], strides = [1, 1]} : vector<1x96xf32> to vector<1x32xf32>
    %195 = vector.extract_strided_slice %192 {offsets = [0, 0], sizes = [1, 32], strides = [1, 1]} : vector<1x96xf32> to vector<1x32xf32>
    %196 = arith.addf %194, %195 : vector<1x32xf32>
    %197 = arith.negf %196 : vector<1x32xf32>
    %198 = math.exp %197 : vector<1x32xf32>
    %cst_99 = arith.constant 1.000000e+00 : f32
    %199 = vector.broadcast %cst_99 : f32 to vector<1x32xf32>
    %200 = arith.addf %199, %198 : vector<1x32xf32>
    %201 = arith.divf %199, %200 : vector<1x32xf32>
    %202 = vector.extract_strided_slice %193 {offsets = [0, 32], sizes = [1, 32], strides = [1, 1]} : vector<1x96xf32> to vector<1x32xf32>
    %203 = vector.extract_strided_slice %192 {offsets = [0, 32], sizes = [1, 32], strides = [1, 1]} : vector<1x96xf32> to vector<1x32xf32>
    %204 = arith.addf %202, %203 : vector<1x32xf32>
    %205 = arith.negf %204 : vector<1x32xf32>
    %206 = math.exp %205 : vector<1x32xf32>
    %cst_100 = arith.constant 1.000000e+00 : f32
    %207 = vector.broadcast %cst_100 : f32 to vector<1x32xf32>
    %208 = arith.addf %207, %206 : vector<1x32xf32>
    %209 = arith.divf %207, %208 : vector<1x32xf32>
    %210 = vector.extract_strided_slice %193 {offsets = [0, 64], sizes = [1, 32], strides = [1, 1]} : vector<1x96xf32> to vector<1x32xf32>
    %211 = vector.extract_strided_slice %192 {offsets = [0, 64], sizes = [1, 32], strides = [1, 1]} : vector<1x96xf32> to vector<1x32xf32>
    %212 = arith.mulf %201, %211 : vector<1x32xf32>
    %213 = arith.addf %210, %212 : vector<1x32xf32>
    %214 = math.tanh %213 : vector<1x32xf32>
    %cst_101 = arith.constant 1.000000e+00 : f32
    %215 = vector.broadcast %cst_101 : f32 to vector<1x32xf32>
    %216 = arith.subf %215, %209 : vector<1x32xf32>
    %217 = arith.mulf %216, %214 : vector<1x32xf32>
    %218 = arith.mulf %209, %190 : vector<1x32xf32>
    %219 = arith.addf %217, %218 : vector<1x32xf32>
    %cst_102 = arith.constant dense<0.000000e+00> : vector<1x96xf32>
    %220 = tpu.matmul %219, %130, %cst_102 {dimension_numbers = #tpu.dot_dimension_numbers<[1], [0], [0], [1], [0, 0, 1, 1], [], []>} : vector<1x32xf32>, vector<32x96xf32>, vector<1x96xf32> -> vector<1x96xf32>
    %221 = arith.addf %220, %131 : vector<1x96xf32>
    %222 = vector.extract_strided_slice %129 {offsets = [3, 0], sizes = [1, 96], strides = [1, 1]} : vector<8x96xf32> to vector<1x96xf32>
    %223 = vector.extract_strided_slice %222 {offsets = [0, 0], sizes = [1, 32], strides = [1, 1]} : vector<1x96xf32> to vector<1x32xf32>
    %224 = vector.extract_strided_slice %221 {offsets = [0, 0], sizes = [1, 32], strides = [1, 1]} : vector<1x96xf32> to vector<1x32xf32>
    %225 = arith.addf %223, %224 : vector<1x32xf32>
    %226 = arith.negf %225 : vector<1x32xf32>
    %227 = math.exp %226 : vector<1x32xf32>
    %cst_103 = arith.constant 1.000000e+00 : f32
    %228 = vector.broadcast %cst_103 : f32 to vector<1x32xf32>
    %229 = arith.addf %228, %227 : vector<1x32xf32>
    %230 = arith.divf %228, %229 : vector<1x32xf32>
    %231 = vector.extract_strided_slice %222 {offsets = [0, 32], sizes = [1, 32], strides = [1, 1]} : vector<1x96xf32> to vector<1x32xf32>
    %232 = vector.extract_strided_slice %221 {offsets = [0, 32], sizes = [1, 32], strides = [1, 1]} : vector<1x96xf32> to vector<1x32xf32>
    %233 = arith.addf %231, %232 : vector<1x32xf32>
    %234 = arith.negf %233 : vector<1x32xf32>
    %235 = math.exp %234 : vector<1x32xf32>
    %cst_104 = arith.constant 1.000000e+00 : f32
    %236 = vector.broadcast %cst_104 : f32 to vector<1x32xf32>
    %237 = arith.addf %236, %235 : vector<1x32xf32>
    %238 = arith.divf %236, %237 : vector<1x32xf32>
    %239 = vector.extract_strided_slice %222 {offsets = [0, 64], sizes = [1, 32], strides = [1, 1]} : vector<1x96xf32> to vector<1x32xf32>
    %240 = vector.extract_strided_slice %221 {offsets = [0, 64], sizes = [1, 32], strides = [1, 1]} : vector<1x96xf32> to vector<1x32xf32>
    %241 = arith.mulf %230, %240 : vector<1x32xf32>
    %242 = arith.addf %239, %241 : vector<1x32xf32>
    %243 = math.tanh %242 : vector<1x32xf32>
    %cst_105 = arith.constant 1.000000e+00 : f32
    %244 = vector.broadcast %cst_105 : f32 to vector<1x32xf32>
    %245 = arith.subf %244, %238 : vector<1x32xf32>
    %246 = arith.mulf %245, %243 : vector<1x32xf32>
    %247 = arith.mulf %238, %219 : vector<1x32xf32>
    %248 = arith.addf %246, %247 : vector<1x32xf32>
    %cst_106 = arith.constant dense<0.000000e+00> : vector<1x96xf32>
    %249 = tpu.matmul %248, %130, %cst_106 {dimension_numbers = #tpu.dot_dimension_numbers<[1], [0], [0], [1], [0, 0, 1, 1], [], []>} : vector<1x32xf32>, vector<32x96xf32>, vector<1x96xf32> -> vector<1x96xf32>
    %250 = arith.addf %249, %131 : vector<1x96xf32>
    %251 = vector.extract_strided_slice %129 {offsets = [4, 0], sizes = [1, 96], strides = [1, 1]} : vector<8x96xf32> to vector<1x96xf32>
    %252 = vector.extract_strided_slice %251 {offsets = [0, 0], sizes = [1, 32], strides = [1, 1]} : vector<1x96xf32> to vector<1x32xf32>
    %253 = vector.extract_strided_slice %250 {offsets = [0, 0], sizes = [1, 32], strides = [1, 1]} : vector<1x96xf32> to vector<1x32xf32>
    %254 = arith.addf %252, %253 : vector<1x32xf32>
    %255 = arith.negf %254 : vector<1x32xf32>
    %256 = math.exp %255 : vector<1x32xf32>
    %cst_107 = arith.constant 1.000000e+00 : f32
    %257 = vector.broadcast %cst_107 : f32 to vector<1x32xf32>
    %258 = arith.addf %257, %256 : vector<1x32xf32>
    %259 = arith.divf %257, %258 : vector<1x32xf32>
    %260 = vector.extract_strided_slice %251 {offsets = [0, 32], sizes = [1, 32], strides = [1, 1]} : vector<1x96xf32> to vector<1x32xf32>
    %261 = vector.extract_strided_slice %250 {offsets = [0, 32], sizes = [1, 32], strides = [1, 1]} : vector<1x96xf32> to vector<1x32xf32>
    %262 = arith.addf %260, %261 : vector<1x32xf32>
    %263 = arith.negf %262 : vector<1x32xf32>
    %264 = math.exp %263 : vector<1x32xf32>
    %cst_108 = arith.constant 1.000000e+00 : f32
    %265 = vector.broadcast %cst_108 : f32 to vector<1x32xf32>
    %266 = arith.addf %265, %264 : vector<1x32xf32>
    %267 = arith.divf %265, %266 : vector<1x32xf32>
    %268 = vector.extract_strided_slice %251 {offsets = [0, 64], sizes = [1, 32], strides = [1, 1]} : vector<1x96xf32> to vector<1x32xf32>
    %269 = vector.extract_strided_slice %250 {offsets = [0, 64], sizes = [1, 32], strides = [1, 1]} : vector<1x96xf32> to vector<1x32xf32>
    %270 = arith.mulf %259, %269 : vector<1x32xf32>
    %271 = arith.addf %268, %270 : vector<1x32xf32>
    %272 = math.tanh %271 : vector<1x32xf32>
    %cst_109 = arith.constant 1.000000e+00 : f32
    %273 = vector.broadcast %cst_109 : f32 to vector<1x32xf32>
    %274 = arith.subf %273, %267 : vector<1x32xf32>
    %275 = arith.mulf %274, %272 : vector<1x32xf32>
    %276 = arith.mulf %267, %248 : vector<1x32xf32>
    %277 = arith.addf %275, %276 : vector<1x32xf32>
    %cst_110 = arith.constant dense<0.000000e+00> : vector<1x96xf32>
    %278 = tpu.matmul %277, %130, %cst_110 {dimension_numbers = #tpu.dot_dimension_numbers<[1], [0], [0], [1], [0, 0, 1, 1], [], []>} : vector<1x32xf32>, vector<32x96xf32>, vector<1x96xf32> -> vector<1x96xf32>
    %279 = arith.addf %278, %131 : vector<1x96xf32>
    %280 = vector.extract_strided_slice %129 {offsets = [5, 0], sizes = [1, 96], strides = [1, 1]} : vector<8x96xf32> to vector<1x96xf32>
    %281 = vector.extract_strided_slice %280 {offsets = [0, 0], sizes = [1, 32], strides = [1, 1]} : vector<1x96xf32> to vector<1x32xf32>
    %282 = vector.extract_strided_slice %279 {offsets = [0, 0], sizes = [1, 32], strides = [1, 1]} : vector<1x96xf32> to vector<1x32xf32>
    %283 = arith.addf %281, %282 : vector<1x32xf32>
    %284 = arith.negf %283 : vector<1x32xf32>
    %285 = math.exp %284 : vector<1x32xf32>
    %cst_111 = arith.constant 1.000000e+00 : f32
    %286 = vector.broadcast %cst_111 : f32 to vector<1x32xf32>
    %287 = arith.addf %286, %285 : vector<1x32xf32>
    %288 = arith.divf %286, %287 : vector<1x32xf32>
    %289 = vector.extract_strided_slice %280 {offsets = [0, 32], sizes = [1, 32], strides = [1, 1]} : vector<1x96xf32> to vector<1x32xf32>
    %290 = vector.extract_strided_slice %279 {offsets = [0, 32], sizes = [1, 32], strides = [1, 1]} : vector<1x96xf32> to vector<1x32xf32>
    %291 = arith.addf %289, %290 : vector<1x32xf32>
    %292 = arith.negf %291 : vector<1x32xf32>
    %293 = math.exp %292 : vector<1x32xf32>
    %cst_112 = arith.constant 1.000000e+00 : f32
    %294 = vector.broadcast %cst_112 : f32 to vector<1x32xf32>
    %295 = arith.addf %294, %293 : vector<1x32xf32>
    %296 = arith.divf %294, %295 : vector<1x32xf32>
    %297 = vector.extract_strided_slice %280 {offsets = [0, 64], sizes = [1, 32], strides = [1, 1]} : vector<1x96xf32> to vector<1x32xf32>
    %298 = vector.extract_strided_slice %279 {offsets = [0, 64], sizes = [1, 32], strides = [1, 1]} : vector<1x96xf32> to vector<1x32xf32>
    %299 = arith.mulf %288, %298 : vector<1x32xf32>
    %300 = arith.addf %297, %299 : vector<1x32xf32>
    %301 = math.tanh %300 : vector<1x32xf32>
    %cst_113 = arith.constant 1.000000e+00 : f32
    %302 = vector.broadcast %cst_113 : f32 to vector<1x32xf32>
    %303 = arith.subf %302, %296 : vector<1x32xf32>
    %304 = arith.mulf %303, %301 : vector<1x32xf32>
    %305 = arith.mulf %296, %277 : vector<1x32xf32>
    %306 = arith.addf %304, %305 : vector<1x32xf32>
    %cst_114 = arith.constant dense<0.000000e+00> : vector<1x96xf32>
    %307 = tpu.matmul %306, %130, %cst_114 {dimension_numbers = #tpu.dot_dimension_numbers<[1], [0], [0], [1], [0, 0, 1, 1], [], []>} : vector<1x32xf32>, vector<32x96xf32>, vector<1x96xf32> -> vector<1x96xf32>
    %308 = arith.addf %307, %131 : vector<1x96xf32>
    %309 = vector.extract_strided_slice %129 {offsets = [6, 0], sizes = [1, 96], strides = [1, 1]} : vector<8x96xf32> to vector<1x96xf32>
    %310 = vector.extract_strided_slice %309 {offsets = [0, 0], sizes = [1, 32], strides = [1, 1]} : vector<1x96xf32> to vector<1x32xf32>
    %311 = vector.extract_strided_slice %308 {offsets = [0, 0], sizes = [1, 32], strides = [1, 1]} : vector<1x96xf32> to vector<1x32xf32>
    %312 = arith.addf %310, %311 : vector<1x32xf32>
    %313 = arith.negf %312 : vector<1x32xf32>
    %314 = math.exp %313 : vector<1x32xf32>
    %cst_115 = arith.constant 1.000000e+00 : f32
    %315 = vector.broadcast %cst_115 : f32 to vector<1x32xf32>
    %316 = arith.addf %315, %314 : vector<1x32xf32>
    %317 = arith.divf %315, %316 : vector<1x32xf32>
    %318 = vector.extract_strided_slice %309 {offsets = [0, 32], sizes = [1, 32], strides = [1, 1]} : vector<1x96xf32> to vector<1x32xf32>
    %319 = vector.extract_strided_slice %308 {offsets = [0, 32], sizes = [1, 32], strides = [1, 1]} : vector<1x96xf32> to vector<1x32xf32>
    %320 = arith.addf %318, %319 : vector<1x32xf32>
    %321 = arith.negf %320 : vector<1x32xf32>
    %322 = math.exp %321 : vector<1x32xf32>
    %cst_116 = arith.constant 1.000000e+00 : f32
    %323 = vector.broadcast %cst_116 : f32 to vector<1x32xf32>
    %324 = arith.addf %323, %322 : vector<1x32xf32>
    %325 = arith.divf %323, %324 : vector<1x32xf32>
    %326 = vector.extract_strided_slice %309 {offsets = [0, 64], sizes = [1, 32], strides = [1, 1]} : vector<1x96xf32> to vector<1x32xf32>
    %327 = vector.extract_strided_slice %308 {offsets = [0, 64], sizes = [1, 32], strides = [1, 1]} : vector<1x96xf32> to vector<1x32xf32>
    %328 = arith.mulf %317, %327 : vector<1x32xf32>
    %329 = arith.addf %326, %328 : vector<1x32xf32>
    %330 = math.tanh %329 : vector<1x32xf32>
    %cst_117 = arith.constant 1.000000e+00 : f32
    %331 = vector.broadcast %cst_117 : f32 to vector<1x32xf32>
    %332 = arith.subf %331, %325 : vector<1x32xf32>
    %333 = arith.mulf %332, %330 : vector<1x32xf32>
    %334 = arith.mulf %325, %306 : vector<1x32xf32>
    %335 = arith.addf %333, %334 : vector<1x32xf32>
    %cst_118 = arith.constant dense<0.000000e+00> : vector<1x96xf32>
    %336 = tpu.matmul %335, %130, %cst_118 {dimension_numbers = #tpu.dot_dimension_numbers<[1], [0], [0], [1], [0, 0, 1, 1], [], []>} : vector<1x32xf32>, vector<32x96xf32>, vector<1x96xf32> -> vector<1x96xf32>
    %337 = arith.addf %336, %131 : vector<1x96xf32>
    %338 = vector.extract_strided_slice %129 {offsets = [7, 0], sizes = [1, 96], strides = [1, 1]} : vector<8x96xf32> to vector<1x96xf32>
    %339 = vector.extract_strided_slice %338 {offsets = [0, 0], sizes = [1, 32], strides = [1, 1]} : vector<1x96xf32> to vector<1x32xf32>
    %340 = vector.extract_strided_slice %337 {offsets = [0, 0], sizes = [1, 32], strides = [1, 1]} : vector<1x96xf32> to vector<1x32xf32>
    %341 = arith.addf %339, %340 : vector<1x32xf32>
    %342 = arith.negf %341 : vector<1x32xf32>
    %343 = math.exp %342 : vector<1x32xf32>
    %cst_119 = arith.constant 1.000000e+00 : f32
    %344 = vector.broadcast %cst_119 : f32 to vector<1x32xf32>
    %345 = arith.addf %344, %343 : vector<1x32xf32>
    %346 = arith.divf %344, %345 : vector<1x32xf32>
    %347 = vector.extract_strided_slice %338 {offsets = [0, 32], sizes = [1, 32], strides = [1, 1]} : vector<1x96xf32> to vector<1x32xf32>
    %348 = vector.extract_strided_slice %337 {offsets = [0, 32], sizes = [1, 32], strides = [1, 1]} : vector<1x96xf32> to vector<1x32xf32>
    %349 = arith.addf %347, %348 : vector<1x32xf32>
    %350 = arith.negf %349 : vector<1x32xf32>
    %351 = math.exp %350 : vector<1x32xf32>
    %cst_120 = arith.constant 1.000000e+00 : f32
    %352 = vector.broadcast %cst_120 : f32 to vector<1x32xf32>
    %353 = arith.addf %352, %351 : vector<1x32xf32>
    %354 = arith.divf %352, %353 : vector<1x32xf32>
    %355 = vector.extract_strided_slice %338 {offsets = [0, 64], sizes = [1, 32], strides = [1, 1]} : vector<1x96xf32> to vector<1x32xf32>
    %356 = vector.extract_strided_slice %337 {offsets = [0, 64], sizes = [1, 32], strides = [1, 1]} : vector<1x96xf32> to vector<1x32xf32>
    %357 = arith.mulf %346, %356 : vector<1x32xf32>
    %358 = arith.addf %355, %357 : vector<1x32xf32>
    %359 = math.tanh %358 : vector<1x32xf32>
    %cst_121 = arith.constant 1.000000e+00 : f32
    %360 = vector.broadcast %cst_121 : f32 to vector<1x32xf32>
    %361 = arith.subf %360, %354 : vector<1x32xf32>
    %362 = arith.mulf %361, %359 : vector<1x32xf32>
    %363 = arith.mulf %354, %335 : vector<1x32xf32>
    %364 = arith.addf %362, %363 : vector<1x32xf32>
    %365 = tpu.concatenate %161, %190, %219, %248, %277, %306, %335, %364 in 0 : vector<1x32xf32>, vector<1x32xf32>, vector<1x32xf32>, vector<1x32xf32>, vector<1x32xf32>, vector<1x32xf32>, vector<1x32xf32>, vector<1x32xf32> -> vector<8x32xf32>
    %c0_122 = arith.constant 0 : index
    %c0_123 = arith.constant 0 : index
    %366 = vector.load %arg19[%c0_122, %c0_123] : memref<1x32xf32, #tpu.memory_space<vmem>>, vector<1x32xf32>
    %367 = vector.broadcast %366 : vector<1x32xf32> to vector<8x32xf32>
    %368 = arith.mulf %365, %367 : vector<8x32xf32>
    %cst_124 = arith.constant dense<0.000000e+00> : vector<8xf32>
    %369 = vector.multi_reduction <add>, %368, %cst_124 [1] : vector<8x32xf32> to vector<8xf32>
    %370 = vector.shape_cast %369 : vector<8xf32> to vector<8x1xf32>
    %c0_125 = arith.constant 0 : index
    %c0_126 = arith.constant 0 : index
    %371 = memref.load %arg20[%c0_125, %c0_126] : memref<1x1xf32, #tpu.memory_space<smem>>
    %372 = vector.broadcast %371 : f32 to vector<8x1xf32>
    %373 = arith.addf %370, %372 : vector<8x1xf32>
    %cst_127 = arith.constant dense<0xFF800000> : vector<1xf32>
    %374 = vector.multi_reduction <maximumf>, %373, %cst_127 [0] : vector<8x1xf32> to vector<1xf32>
    %375 = vector.shape_cast %374 : vector<1xf32> to vector<1x1xf32>
    %376 = vector.broadcast %375 : vector<1x1xf32> to vector<8x1xf32>
    %377 = arith.subf %373, %376 : vector<8x1xf32>
    %378 = math.exp %377 : vector<8x1xf32>
    %cst_128 = arith.constant dense<0.000000e+00> : vector<1xf32>
    %379 = vector.multi_reduction <add>, %378, %cst_128 [0] : vector<8x1xf32> to vector<1xf32>
    %380 = vector.shape_cast %379 : vector<1xf32> to vector<1x1xf32>
    %381 = tpu.reciprocal %380 {approx = true} : vector<1x1xf32> -> vector<1x1xf32>
    %382 = vector.broadcast %381 : vector<1x1xf32> to vector<8x1xf32>
    %383 = arith.mulf %378, %382 : vector<8x1xf32>
    %384 = vector.broadcast %383 : vector<8x1xf32> to vector<8x32xf32>
    %385 = arith.mulf %384, %365 : vector<8x32xf32>
    %cst_129 = arith.constant dense<0.000000e+00> : vector<32xf32>
    %386 = vector.multi_reduction <add>, %385, %cst_129 [0] : vector<8x32xf32> to vector<32xf32>
    %387 = vector.shape_cast %386 : vector<32xf32> to vector<1x32xf32>
    %c0_130 = arith.constant 0 : index
    %c0_131 = arith.constant 0 : index
    %388 = vector.load %arg21[%c0_130, %c0_131] : memref<32x6xf32, #tpu.memory_space<vmem>>, vector<32x6xf32>
    %cst_132 = arith.constant dense<0.000000e+00> : vector<1x6xf32>
    %389 = tpu.matmul %387, %388, %cst_132 {dimension_numbers = #tpu.dot_dimension_numbers<[1], [0], [0], [1], [0, 0, 1, 1], [], []>} : vector<1x32xf32>, vector<32x6xf32>, vector<1x6xf32> -> vector<1x6xf32>
    %c0_133 = arith.constant 0 : index
    %c0_134 = arith.constant 0 : index
    %390 = vector.load %arg22[%c0_133, %c0_134] : memref<1x6xf32, #tpu.memory_space<vmem>>, vector<1x6xf32>
    %391 = arith.addf %389, %390 : vector<1x6xf32>
    %c0_135 = arith.constant 0 : index
    %c0_136 = arith.constant 0 : index
    %c0_137 = arith.constant 0 : index
    %392 = vector.load %arg23[%c0_135, %c0_136, %c0_137] : memref<1x1x6xf32, #tpu.memory_space<vmem>>, vector<1x1x6xf32>
    %393 = vector.shape_cast %392 : vector<1x1x6xf32> to vector<1x6xf32>
    %394 = vector.shape_cast %391 : vector<1x6xf32> to vector<1x1x6xf32>
    tpu.vector_store %arg23[%c0_135, %c0_136, %c0_137], %394 {strides = array<i32>} : memref<1x1x6xf32, #tpu.memory_space<vmem>>, vector<1x1x6xf32>,
    return
  }
  func.func @transform_0(%arg0: i32) -> (i32, i32, i32, i32) {
    %c0_i32 = arith.constant 0 : i32
    %c0_i32_0 = arith.constant 0 : i32
    %c0_i32_1 = arith.constant 0 : i32
    %c0_i32_2 = arith.constant 0 : i32
    return %arg0, %c0_i32, %c0_i32_0, %c0_i32_1 : i32, i32, i32, i32
  }
  func.func @transform_1(%arg0: i32) -> (i32, i32) {
    %c0_i32 = arith.constant 0 : i32
    %c0_i32_0 = arith.constant 0 : i32
    %c0_i32_1 = arith.constant 0 : i32
    return %c0_i32, %c0_i32_0 : i32, i32
  }
  func.func @transform_2(%arg0: i32) -> (i32, i32, i32) {
    %c0_i32 = arith.constant 0 : i32
    %c0_i32_0 = arith.constant 0 : i32
    %c0_i32_1 = arith.constant 0 : i32
    %c0_i32_2 = arith.constant 0 : i32
    return %c0_i32, %c0_i32_0, %c0_i32_1 : i32, i32, i32
  }
  func.func @transform_3(%arg0: i32) -> (i32, i32) {
    %c0_i32 = arith.constant 0 : i32
    %c0_i32_0 = arith.constant 0 : i32
    %c0_i32_1 = arith.constant 0 : i32
    return %c0_i32, %c0_i32_0 : i32, i32
  }
  func.func @transform_4(%arg0: i32) -> (i32, i32, i32) {
    %c0_i32 = arith.constant 0 : i32
    %c0_i32_0 = arith.constant 0 : i32
    %c0_i32_1 = arith.constant 0 : i32
    %c0_i32_2 = arith.constant 0 : i32
    return %c0_i32, %c0_i32_0, %c0_i32_1 : i32, i32, i32
  }
  func.func @transform_5(%arg0: i32) -> (i32, i32) {
    %c0_i32 = arith.constant 0 : i32
    %c0_i32_0 = arith.constant 0 : i32
    %c0_i32_1 = arith.constant 0 : i32
    return %c0_i32, %c0_i32_0 : i32, i32
  }
  func.func @transform_6(%arg0: i32) -> (i32, i32, i32) {
    %c0_i32 = arith.constant 0 : i32
    %c0_i32_0 = arith.constant 0 : i32
    %c0_i32_1 = arith.constant 0 : i32
    %c0_i32_2 = arith.constant 0 : i32
    return %c0_i32, %c0_i32_0, %c0_i32_1 : i32, i32, i32
  }
  func.func @transform_7(%arg0: i32) -> (i32, i32) {
    %c0_i32 = arith.constant 0 : i32
    %c0_i32_0 = arith.constant 0 : i32
    %c0_i32_1 = arith.constant 0 : i32
    return %c0_i32, %c0_i32_0 : i32, i32
  }
  func.func @transform_8(%arg0: i32) -> (i32, i32, i32) {
    %c0_i32 = arith.constant 0 : i32
    %c0_i32_0 = arith.constant 0 : i32
    %c0_i32_1 = arith.constant 0 : i32
    %c0_i32_2 = arith.constant 0 : i32
    return %c0_i32, %c0_i32_0, %c0_i32_1 : i32, i32, i32
  }
  func.func @transform_9(%arg0: i32) -> (i32, i32) {
    %c0_i32 = arith.constant 0 : i32
    %c0_i32_0 = arith.constant 0 : i32
    %c0_i32_1 = arith.constant 0 : i32
    return %c0_i32, %c0_i32_0 : i32, i32
  }
  func.func @transform_10(%arg0: i32) -> (i32, i32) {
    %c0_i32 = arith.constant 0 : i32
    %c0_i32_0 = arith.constant 0 : i32
    %c0_i32_1 = arith.constant 0 : i32
    return %c0_i32, %c0_i32_0 : i32, i32
  }
  func.func @transform_11(%arg0: i32) -> (i32, i32) {
    %c0_i32 = arith.constant 0 : i32
    %c0_i32_0 = arith.constant 0 : i32
    %c0_i32_1 = arith.constant 0 : i32
    return %c0_i32, %c0_i32_0 : i32, i32
  }
  func.func @transform_12(%arg0: i32) -> (i32, i32) {
    %c0_i32 = arith.constant 0 : i32
    %c0_i32_0 = arith.constant 0 : i32
    %c0_i32_1 = arith.constant 0 : i32
    return %c0_i32, %c0_i32_0 : i32, i32
  }
  func.func @transform_13(%arg0: i32) -> (i32, i32) {
    %c0_i32 = arith.constant 0 : i32
    %c0_i32_0 = arith.constant 0 : i32
    %c0_i32_1 = arith.constant 0 : i32
    return %c0_i32, %c0_i32_0 : i32, i32
  }
  func.func @transform_14(%arg0: i32) -> (i32, i32, i32) {
    %c0_i32 = arith.constant 0 : i32
    %c0_i32_0 = arith.constant 0 : i32
    %c0_i32_1 = arith.constant 0 : i32
    %c0_i32_2 = arith.constant 0 : i32
    return %c0_i32, %c0_i32_0, %c0_i32_1 : i32, i32, i32
  }
  func.func @transform_15(%arg0: i32) -> (i32, i32) {
    %c0_i32 = arith.constant 0 : i32
    %c0_i32_0 = arith.constant 0 : i32
    %c0_i32_1 = arith.constant 0 : i32
    return %c0_i32, %c0_i32_0 : i32, i32
  }
  func.func @transform_16(%arg0: i32) -> (i32, i32) {
    %c0_i32 = arith.constant 0 : i32
    %c0_i32_0 = arith.constant 0 : i32
    %c0_i32_1 = arith.constant 0 : i32
    return %c0_i32, %c0_i32_0 : i32, i32
  }
  func.func @transform_17(%arg0: i32) -> (i32, i32) {
    %c0_i32 = arith.constant 0 : i32
    %c0_i32_0 = arith.constant 0 : i32
    %c0_i32_1 = arith.constant 0 : i32
    return %c0_i32, %c0_i32_0 : i32, i32
  }
  func.func @transform_18(%arg0: i32) -> (i32, i32) {
    %c0_i32 = arith.constant 0 : i32
    %c0_i32_0 = arith.constant 0 : i32
    %c0_i32_1 = arith.constant 0 : i32
    return %c0_i32, %c0_i32_0 : i32, i32
  }
  func.func @transform_19(%arg0: i32) -> (i32, i32) {
    %c0_i32 = arith.constant 0 : i32
    %c0_i32_0 = arith.constant 0 : i32
    %c0_i32_1 = arith.constant 0 : i32
    return %c0_i32, %c0_i32_0 : i32, i32
  }
  func.func @transform_20(%arg0: i32) -> (i32, i32) {
    %c0_i32 = arith.constant 0 : i32
    %c0_i32_0 = arith.constant 0 : i32
    %c0_i32_1 = arith.constant 0 : i32
    return %c0_i32, %c0_i32_0 : i32, i32
  }
  func.func @transform_21(%arg0: i32) -> (i32, i32) {
    %c0_i32 = arith.constant 0 : i32
    %c0_i32_0 = arith.constant 0 : i32
    %c0_i32_1 = arith.constant 0 : i32
    return %c0_i32, %c0_i32_0 : i32, i32
  }
  func.func @transform_22(%arg0: i32) -> (i32, i32, i32) {
    %c0_i32 = arith.constant 0 : i32
    %c0_i32_0 = arith.constant 0 : i32
    %c0_i32_1 = arith.constant 0 : i32
    return %arg0, %c0_i32, %c0_i32_0 : i32, i32, i32
  }
}

</mosaic_0001>

<llo_original>
// kernel: attend_discriminate_forward.1
$region0: #{attend_discriminate_forward.1}
  #allocation0 [shape = 'u32[]', space=smem, size = 0x4, offset = 0x4, fixed_abs, tag = 'smem constant byte address 0x4 - core index']
  #allocation1 [shape = 'u32[144,128]{1,0:T(1,128)}', space=vmem, size = 0x12000, scoped, tag = 'internal scratch']
  #allocation2 [shape = 'f32[1,1]{1,0:T(1,128)S(6)}', space=smem, size = 0x200, scoped, tag = 'scoped memory for attend_discriminate_forward.1']
  #allocation3 [shape = 'f32[1,1]{1,0:T(1,128)S(6)}', space=smem, size = 0x200, scoped, tag = 'scoped memory for attend_discriminate_forward.1']
  %s0 = inlined_call_operand.vmem [shape: f32[2,16,8,4], index: 0, kind: input, shape index: {}]
  %s1 = inlined_call_operand.vmem [shape: f32[64,64], index: 1, kind: input, shape index: {}]
  %s2 = inlined_call_operand.vmem [shape: f32[3,4,16], index: 2, kind: input, shape index: {}]
  %s3 = inlined_call_operand.vmem [shape: f32[1,16], index: 3, kind: input, shape index: {}]
  %s4 = inlined_call_operand.vmem [shape: f32[3,16,16], index: 4, kind: input, shape index: {}]
  %s5 = inlined_call_operand.vmem [shape: f32[1,16], index: 5, kind: input, shape index: {}]
  %s6 = inlined_call_operand.vmem [shape: f32[3,16,16], index: 6, kind: input, shape index: {}]
  %s7 = inlined_call_operand.vmem [shape: f32[1,16], index: 7, kind: input, shape index: {}]
  %s8 = inlined_call_operand.vmem [shape: f32[3,16,16], index: 8, kind: input, shape index: {}]
  %s9 = inlined_call_operand.vmem [shape: f32[1,16], index: 9, kind: input, shape index: {}]
  %s10 = inlined_call_operand.vmem [shape: f32[16,8], index: 10, kind: input, shape index: {}]
  %s11 = inlined_call_operand.vmem [shape: f32[16,8], index: 11, kind: input, shape index: {}]
  %s12 = inlined_call_operand.vmem [shape: f32[16,16], index: 12, kind: input, shape index: {}]
  %s13 = inlined_call_operand.<no memory space> [shape: f32[1,1], index: 13, kind: input, shape index: {}]
  %s14 = inlined_call_operand.vmem [shape: f32[8,16,96], index: 14, kind: input, shape index: {}]
  %s15 = inlined_call_operand.vmem [shape: f32[32,96], index: 15, kind: input, shape index: {}]
  %s16 = inlined_call_operand.vmem [shape: f32[1,96], index: 16, kind: input, shape index: {}]
  %s17 = inlined_call_operand.vmem [shape: f32[1,96], index: 17, kind: input, shape index: {}]
  %s18 = inlined_call_operand.vmem [shape: f32[1,32], index: 18, kind: input, shape index: {}]
  %s19 = inlined_call_operand.<no memory space> [shape: f32[1,1], index: 19, kind: input, shape index: {}]
  %s20 = inlined_call_operand.vmem [shape: f32[32,6], index: 20, kind: input, shape index: {}]
  %s21 = inlined_call_operand.vmem [shape: f32[1,6], index: 21, kind: input, shape index: {}]
  %s22 = inlined_call_operand.hbm [shape: f32[2,1,6], index: 22, kind: output, shape index: {}]
  %s23 = sld [smem:[#allocation0]]
  $region121: #{attend_discriminate_forward.1} parent=0
    _
  %s25 = ssub.s32 1, %s23
  %s26 = scalar_select 0, %s25, %s23
  %27 = sst [smem:[#allocation2]] %s13
  %28 = sst [smem:[#allocation3]] %s19
  $region1: #{attend_discriminate_forward.1} parent=0
    #allocation4 [shape = 'u8[1024]{0}', space=vmem, size = 0x400, scoped, tag = 'output window, operand 0']
    #allocation5 [shape = 's32[2]{0}', space=sflag, size = 0x8, scoped, tag = 'scoped memory for attend_discriminate_forward.1']
    %29 = vsyncpa [#allocation5], 0
    %s30 = scalar_lea.sflag [#allocation5], 1
    %31 = vsyncpa %s30, 0
    loop: start=0, step=1, limit=4
    $region2: #{attend_discriminate_forward.1} parent=1 // loop_pre_header
      _
    $region3: #{attend_discriminate_forward.1} parent=1 // loop_header
      %s33 = sphi 0, %s37
      %p34 = scmp.ge.s32.totalorder %s33, 4
      %s43 = sphi 0, %s45
      %s46 = sphi 0, %s43
      %s47 = sphi 0, %s46
      %s63 = sphi 0, %s47
      %s67 = sphi 0, %s67
      %s69 = sphi 0, %s67
      %s70 = sphi 0, %s69
      %s84 = sphi 0, %s70
      %s88 = sphi 0, %s88
      %s90 = sphi 0, %s88
      %s91 = sphi 0, %s90
      %s105 = sphi 0, %s91
      %s109 = sphi 0, %s109
      %s111 = sphi 0, %s109
      %s112 = sphi 0, %s111
      %s126 = sphi 0, %s112
      %s130 = sphi 0, %s130
      %s132 = sphi 0, %s130
      %s133 = sphi 0, %s132
      %s147 = sphi 0, %s133
      %s151 = sphi 0, %s151
      %s153 = sphi 0, %s151
      %s154 = sphi 0, %s153
      %s168 = sphi 0, %s154
      %s172 = sphi 0, %s172
      %s174 = sphi 0, %s172
      %s175 = sphi 0, %s174
      %s189 = sphi 0, %s175
      %s193 = sphi 0, %s193
      %s195 = sphi 0, %s193
      %s196 = sphi 0, %s195
      %s210 = sphi 0, %s196
      %s214 = sphi 0, %s214
      %s216 = sphi 0, %s214
      %s217 = sphi 0, %s216
      %s231 = sphi 0, %s217
      %s235 = sphi 0, %s235
      %s237 = sphi 0, %s235
      %s238 = sphi 0, %s237
      %s252 = sphi 0, %s238
      %s256 = sphi 0, %s256
      %s258 = sphi 0, %s256
      %s259 = sphi 0, %s258
      %s273 = sphi 0, %s259
      %s277 = sphi 0, %s277
      %s279 = sphi 0, %s277
      %s280 = sphi 0, %s279
      %s294 = sphi 0, %s280
      %s298 = sphi 0, %s298
      %s300 = sphi 0, %s298
      %s301 = sphi 0, %s300
      %s315 = sphi 0, %s301
      %s319 = sphi 0, %s319
      %s321 = sphi 0, %s319
      %s322 = sphi 0, %s321
      %s336 = sphi 0, %s322
      %s340 = sphi 0, %s340
      %s342 = sphi 0, %s340
      %s343 = sphi 0, %s342
      %s357 = sphi 0, %s343
      %s361 = sphi 0, %s361
      %s363 = sphi 0, %s361
      %s364 = sphi 0, %s363
      %s378 = sphi 0, %s364
      %s382 = sphi 0, %s382
      %s384 = sphi 0, %s382
      %s385 = sphi 0, %s384
      %s399 = sphi 0, %s385
      %s403 = sphi 0, %s403
      %s405 = sphi 0, %s403
      %s406 = sphi 0, %s405
      %s420 = sphi 0, %s406
      %s424 = sphi 0, %s424
      %s426 = sphi 0, %s424
      %s427 = sphi 0, %s426
      %s441 = sphi 0, %s427
      %s445 = sphi 0, %s445
      %s447 = sphi 0, %s445
      %s448 = sphi 0, %s447
      %s462 = sphi 0, %s448
      %s466 = sphi 0, %s466
      %s468 = sphi 0, %s466
      %s469 = sphi 0, %s468
      %s483 = sphi 0, %s469
      %s487 = sphi 0, %s487
      %s489 = sphi 0, %s487
      %s490 = sphi 0, %s489
      %s504 = sphi 0, %s490
      %s510 = sphi 0, %s512
      %s513 = sphi 0, %s510
      %s514 = sphi 0, %s513
      %s530 = sphi 0, %s514
    $region4: #{attend_discriminate_forward.1} parent=1 // loop_header_branch
      %36 = sbr.rel (%p34) target = $region8
    $region5: #{attend_discriminate_forward.1} parent=1 // loop_body
      %s38 = ssub.s32 %s33, 1
      %s39 = ssub.s32 %s33, 2
      %s40 = sadd.s32 %s33, 1
      %s41 = ssub.s32 %s33, %s40
      %p42 = scmp.eq.s32.totalorder %s41, 0
      %s44 = sadd.s32 %s43, 1
      %s45 = scalar_select %p42, %s43, %s44
      %p48 = pneg %p42
      %p49 = scmp.eq.s32.totalorder %s33, 1
      %p50 = por %p48, %p49
      %p51 = scmp.ne.s32.totalorder %s43, %s46
      %p52 = scmp.eq.s32.totalorder %s33, 0
      %p53 = por %p51, %p52
      %p54 = scmp.ne.s32.totalorder %s43, %s46
      %p55 = scmp.eq.s32.totalorder %s38, 1
      %p56 = por %p54, %p55
      %p57 = scmp.ne.s32.totalorder %s46, %s47
      %p58 = scmp.eq.s32.totalorder %s38, 0
      %p59 = por %p57, %p58
      %p60 = scmp.ne.s32.totalorder %s46, %s47
      %p61 = scmp.eq.s32.totalorder %s39, 1
      %p62 = por %p60, %p61
      %p64 = scmp.ne.s32.totalorder %s47, %s63
      %p65 = scmp.eq.s32.totalorder %s39, 0
      %p66 = por %p64, %p65
      %s68 = sadd.s32 %s67, 1
      %p71 = scmp.eq.s32.totalorder %s33, 1
      %p72 = scmp.ne.s32.totalorder %s67, %s69
      %p73 = scmp.eq.s32.totalorder %s33, 0
      %p74 = por %p72, %p73
      %p75 = scmp.ne.s32.totalorder %s67, %s69
      %p76 = scmp.eq.s32.totalorder %s38, 1
      %p77 = por %p75, %p76
      %p78 = scmp.ne.s32.totalorder %s69, %s70
      %p79 = scmp.eq.s32.totalorder %s38, 0
      %p80 = por %p78, %p79
      %p81 = scmp.ne.s32.totalorder %s69, %s70
      %p82 = scmp.eq.s32.totalorder %s39, 1
      %p83 = por %p81, %p82
      %p85 = scmp.ne.s32.totalorder %s70, %s84
      %p86 = scmp.eq.s32.totalorder %s39, 0
      %p87 = por %p85, %p86
      %s89 = sadd.s32 %s88, 1
      %p92 = scmp.eq.s32.totalorder %s33, 1
      %p93 = scmp.ne.s32.totalorder %s88, %s90
      %p94 = scmp.eq.s32.totalorder %s33, 0
      %p95 = por %p93, %p94
      %p96 = scmp.ne.s32.totalorder %s88, %s90
      %p97 = scmp.eq.s32.totalorder %s38, 1
      %p98 = por %p96, %p97
      %p99 = scmp.ne.s32.totalorder %s90, %s91
      %p100 = scmp.eq.s32.totalorder %s38, 0
      %p101 = por %p99, %p100
      %p102 = scmp.ne.s32.totalorder %s90, %s91
      %p103 = scmp.eq.s32.totalorder %s39, 1
      %p104 = por %p102, %p103
      %p106 = scmp.ne.s32.totalorder %s91, %s105
      %p107 = scmp.eq.s32.totalorder %s39, 0
      %p108 = por %p106, %p107
      %s110 = sadd.s32 %s109, 1
      %p113 = scmp.eq.s32.totalorder %s33, 1
      %p114 = scmp.ne.s32.totalorder %s109, %s111
      %p115 = scmp.eq.s32.totalorder %s33, 0
      %p116 = por %p114, %p115
      %p117 = scmp.ne.s32.totalorder %s109, %s111
      %p118 = scmp.eq.s32.totalorder %s38, 1
      %p119 = por %p117, %p118
      %p120 = scmp.ne.s32.totalorder %s111, %s112
      %p121 = scmp.eq.s32.totalorder %s38, 0
      %p122 = por %p120, %p121
      %p123 = scmp.ne.s32.totalorder %s111, %s112
      %p124 = scmp.eq.s32.totalorder %s39, 1
      %p125 = por %p123, %p124
      %p127 = scmp.ne.s32.totalorder %s112, %s126
      %p128 = scmp.eq.s32.totalorder %s39, 0
      %p129 = por %p127, %p128
      %s131 = sadd.s32 %s130, 1
      %p134 = scmp.eq.s32.totalorder %s33, 1
      %p135 = scmp.ne.s32.totalorder %s130, %s132
      %p136 = scmp.eq.s32.totalorder %s33, 0
      %p137 = por %p135, %p136
      %p138 = scmp.ne.s32.totalorder %s130, %s132
      %p139 = scmp.eq.s32.totalorder %s38, 1
      %p140 = por %p138, %p139
      %p141 = scmp.ne.s32.totalorder %s132, %s133
      %p142 = scmp.eq.s32.totalorder %s38, 0
      %p143 = por %p141, %p142
      %p144 = scmp.ne.s32.totalorder %s132, %s133
      %p145 = scmp.eq.s32.totalorder %s39, 1
      %p146 = por %p144, %p145
      %p148 = scmp.ne.s32.totalorder %s133, %s147
      %p149 = scmp.eq.s32.totalorder %s39, 0
      %p150 = por %p148, %p149
      %s152 = sadd.s32 %s151, 1
      %p155 = scmp.eq.s32.totalorder %s33, 1
      %p156 = scmp.ne.s32.totalorder %s151, %s153
      %p157 = scmp.eq.s32.totalorder %s33, 0
      %p158 = por %p156, %p157
      %p159 = scmp.ne.s32.totalorder %s151, %s153
      %p160 = scmp.eq.s32.totalorder %s38, 1
      %p161 = por %p159, %p160
      %p162 = scmp.ne.s32.totalorder %s153, %s154
      %p163 = scmp.eq.s32.totalorder %s38, 0
      %p164 = por %p162, %p163
      %p165 = scmp.ne.s32.totalorder %s153, %s154
      %p166 = scmp.eq.s32.totalorder %s39, 1
      %p167 = por %p165, %p166
      %p169 = scmp.ne.s32.totalorder %s154, %s168
      %p170 = scmp.eq.s32.totalorder %s39, 0
      %p171 = por %p169, %p170
      %s173 = sadd.s32 %s172, 1
      %p176 = scmp.eq.s32.totalorder %s33, 1
      %p177 = scmp.ne.s32.totalorder %s172, %s174
      %p178 = scmp.eq.s32.totalorder %s33, 0
      %p179 = por %p177, %p178
      %p180 = scmp.ne.s32.totalorder %s172, %s174
      %p181 = scmp.eq.s32.totalorder %s38, 1
      %p182 = por %p180, %p181
      %p183 = scmp.ne.s32.totalorder %s174, %s175
      %p184 = scmp.eq.s32.totalorder %s38, 0
      %p185 = por %p183, %p184
      %p186 = scmp.ne.s32.totalorder %s174, %s175
      %p187 = scmp.eq.s32.totalorder %s39, 1
      %p188 = por %p186, %p187
      %p190 = scmp.ne.s32.totalorder %s175, %s189
      %p191 = scmp.eq.s32.totalorder %s39, 0
      %p192 = por %p190, %p191
      %s194 = sadd.s32 %s193, 1
      %p197 = scmp.eq.s32.totalorder %s33, 1
      %p198 = scmp.ne.s32.totalorder %s193, %s195
      %p199 = scmp.eq.s32.totalorder %s33, 0
      %p200 = por %p198, %p199
      %p201 = scmp.ne.s32.totalorder %s193, %s195
      %p202 = scmp.eq.s32.totalorder %s38, 1
      %p203 = por %p201, %p202
      %p204 = scmp.ne.s32.totalorder %s195, %s196
      %p205 = scmp.eq.s32.totalorder %s38, 0
      %p206 = por %p204, %p205
      %p207 = scmp.ne.s32.totalorder %s195, %s196
      %p208 = scmp.eq.s32.totalorder %s39, 1
      %p209 = por %p207, %p208
      %p211 = scmp.ne.s32.totalorder %s196, %s210
      %p212 = scmp.eq.s32.totalorder %s39, 0
      %p213 = por %p211, %p212
      %s215 = sadd.s32 %s214, 1
      %p218 = scmp.eq.s32.totalorder %s33, 1
      %p219 = scmp.ne.s32.totalorder %s214, %s216
      %p220 = scmp.eq.s32.totalorder %s33, 0
      %p221 = por %p219, %p220
      %p222 = scmp.ne.s32.totalorder %s214, %s216
      %p223 = scmp.eq.s32.totalorder %s38, 1
      %p224 = por %p222, %p223
      %p225 = scmp.ne.s32.totalorder %s216, %s217
      %p226 = scmp.eq.s32.totalorder %s38, 0
      %p227 = por %p225, %p226
      %p228 = scmp.ne.s32.totalorder %s216, %s217
      %p229 = scmp.eq.s32.totalorder %s39, 1
      %p230 = por %p228, %p229
      %p232 = scmp.ne.s32.totalorder %s217, %s231
      %p233 = scmp.eq.s32.totalorder %s39, 0
      %p234 = por %p232, %p233
      %s236 = sadd.s32 %s235, 1
      %p239 = scmp.eq.s32.totalorder %s33, 1
      %p240 = scmp.ne.s32.totalorder %s235, %s237
      %p241 = scmp.eq.s32.totalorder %s33, 0
      %p242 = por %p240, %p241
      %p243 = scmp.ne.s32.totalorder %s235, %s237
      %p244 = scmp.eq.s32.totalorder %s38, 1
      %p245 = por %p243, %p244
      %p246 = scmp.ne.s32.totalorder %s237, %s238
      %p247 = scmp.eq.s32.totalorder %s38, 0
      %p248 = por %p246, %p247
      %p249 = scmp.ne.s32.totalorder %s237, %s238
      %p250 = scmp.eq.s32.totalorder %s39, 1
      %p251 = por %p249, %p250
      %p253 = scmp.ne.s32.totalorder %s238, %s252
      %p254 = scmp.eq.s32.totalorder %s39, 0
      %p255 = por %p253, %p254
      %s257 = sadd.s32 %s256, 1
      %p260 = scmp.eq.s32.totalorder %s33, 1
      %p261 = scmp.ne.s32.totalorder %s256, %s258
      %p262 = scmp.eq.s32.totalorder %s33, 0
      %p263 = por %p261, %p262
      %p264 = scmp.ne.s32.totalorder %s256, %s258
      %p265 = scmp.eq.s32.totalorder %s38, 1
      %p266 = por %p264, %p265
      %p267 = scmp.ne.s32.totalorder %s258, %s259
      %p268 = scmp.eq.s32.totalorder %s38, 0
      %p269 = por %p267, %p268
      %p270 = scmp.ne.s32.totalorder %s258, %s259
      %p271 = scmp.eq.s32.totalorder %s39, 1
      %p272 = por %p270, %p271
      %p274 = scmp.ne.s32.totalorder %s259, %s273
      %p275 = scmp.eq.s32.totalorder %s39, 0
      %p276 = por %p274, %p275
      %s278 = sadd.s32 %s277, 1
      %p281 = scmp.eq.s32.totalorder %s33, 1
      %p282 = scmp.ne.s32.totalorder %s277, %s279
      %p283 = scmp.eq.s32.totalorder %s33, 0
      %p284 = por %p282, %p283
      %p285 = scmp.ne.s32.totalorder %s277, %s279
      %p286 = scmp.eq.s32.totalorder %s38, 1
      %p287 = por %p285, %p286
      %p288 = scmp.ne.s32.totalorder %s279, %s280
      %p289 = scmp.eq.s32.totalorder %s38, 0
      %p290 = por %p288, %p289
      %p291 = scmp.ne.s32.totalorder %s279, %s280
      %p292 = scmp.eq.s32.totalorder %s39, 1
      %p293 = por %p291, %p292
      %p295 = scmp.ne.s32.totalorder %s280, %s294
      %p296 = scmp.eq.s32.totalorder %s39, 0
      %p297 = por %p295, %p296
      %s299 = sadd.s32 %s298, 1
      %p302 = scmp.eq.s32.totalorder %s33, 1
      %p303 = scmp.ne.s32.totalorder %s298, %s300
      %p304 = scmp.eq.s32.totalorder %s33, 0
      %p305 = por %p303, %p304
      %p306 = scmp.ne.s32.totalorder %s298, %s300
      %p307 = scmp.eq.s32.totalorder %s38, 1
      %p308 = por %p306, %p307
      %p309 = scmp.ne.s32.totalorder %s300, %s301
      %p310 = scmp.eq.s32.totalorder %s38, 0
      %p311 = por %p309, %p310
      %p312 = scmp.ne.s32.totalorder %s300, %s301
      %p313 = scmp.eq.s32.totalorder %s39, 1
      %p314 = por %p312, %p313
      %p316 = scmp.ne.s32.totalorder %s301, %s315
      %p317 = scmp.eq.s32.totalorder %s39, 0
      %p318 = por %p316, %p317
      %s320 = sadd.s32 %s319, 1
      %p323 = scmp.eq.s32.totalorder %s33, 1
      %p324 = scmp.ne.s32.totalorder %s319, %s321
      %p325 = scmp.eq.s32.totalorder %s33, 0
      %p326 = por %p324, %p325
      %p327 = scmp.ne.s32.totalorder %s319, %s321
      %p328 = scmp.eq.s32.totalorder %s38, 1
      %p329 = por %p327, %p328
      %p330 = scmp.ne.s32.totalorder %s321, %s322
      %p331 = scmp.eq.s32.totalorder %s38, 0
      %p332 = por %p330, %p331
      %p333 = scmp.ne.s32.totalorder %s321, %s322
      %p334 = scmp.eq.s32.totalorder %s39, 1
      %p335 = por %p333, %p334
      %p337 = scmp.ne.s32.totalorder %s322, %s336
      %p338 = scmp.eq.s32.totalorder %s39, 0
      %p339 = por %p337, %p338
      %s341 = sadd.s32 %s340, 1
      %p344 = scmp.eq.s32.totalorder %s33, 1
      %p345 = scmp.ne.s32.totalorder %s340, %s342
      %p346 = scmp.eq.s32.totalorder %s33, 0
      %p347 = por %p345, %p346
      %p348 = scmp.ne.s32.totalorder %s340, %s342
      %p349 = scmp.eq.s32.totalorder %s38, 1
      %p350 = por %p348, %p349
      %p351 = scmp.ne.s32.totalorder %s342, %s343
      %p352 = scmp.eq.s32.totalorder %s38, 0
      %p353 = por %p351, %p352
      %p354 = scmp.ne.s32.totalorder %s342, %s343
      %p355 = scmp.eq.s32.totalorder %s39, 1
      %p356 = por %p354, %p355
      %p358 = scmp.ne.s32.totalorder %s343, %s357
      %p359 = scmp.eq.s32.totalorder %s39, 0
      %p360 = por %p358, %p359
      %s362 = sadd.s32 %s361, 1
      %p365 = scmp.eq.s32.totalorder %s33, 1
      %p366 = scmp.ne.s32.totalorder %s361, %s363
      %p367 = scmp.eq.s32.totalorder %s33, 0
      %p368 = por %p366, %p367
      %p369 = scmp.ne.s32.totalorder %s361, %s363
      %p370 = scmp.eq.s32.totalorder %s38, 1
      %p371 = por %p369, %p370
      %p372 = scmp.ne.s32.totalorder %s363, %s364
      %p373 = scmp.eq.s32.totalorder %s38, 0
      %p374 = por %p372, %p373
      %p375 = scmp.ne.s32.totalorder %s363, %s364
      %p376 = scmp.eq.s32.totalorder %s39, 1
      %p377 = por %p375, %p376
      %p379 = scmp.ne.s32.totalorder %s364, %s378
      %p380 = scmp.eq.s32.totalorder %s39, 0
      %p381 = por %p379, %p380
      %s383 = sadd.s32 %s382, 1
      %p386 = scmp.eq.s32.totalorder %s33, 1
      %p387 = scmp.ne.s32.totalorder %s382, %s384
      %p388 = scmp.eq.s32.totalorder %s33, 0
      %p389 = por %p387, %p388
      %p390 = scmp.ne.s32.totalorder %s382, %s384
      %p391 = scmp.eq.s32.totalorder %s38, 1
      %p392 = por %p390, %p391
      %p393 = scmp.ne.s32.totalorder %s384, %s385
      %p394 = scmp.eq.s32.totalorder %s38, 0
      %p395 = por %p393, %p394
      %p396 = scmp.ne.s32.totalorder %s384, %s385
      %p397 = scmp.eq.s32.totalorder %s39, 1
      %p398 = por %p396, %p397
      %p400 = scmp.ne.s32.totalorder %s385, %s399
      %p401 = scmp.eq.s32.totalorder %s39, 0
      %p402 = por %p400, %p401
      %s404 = sadd.s32 %s403, 1
      %p407 = scmp.eq.s32.totalorder %s33, 1
      %p408 = scmp.ne.s32.totalorder %s403, %s405
      %p409 = scmp.eq.s32.totalorder %s33, 0
      %p410 = por %p408, %p409
      %p411 = scmp.ne.s32.totalorder %s403, %s405
      %p412 = scmp.eq.s32.totalorder %s38, 1
      %p413 = por %p411, %p412
      %p414 = scmp.ne.s32.totalorder %s405, %s406
      %p415 = scmp.eq.s32.totalorder %s38, 0
      %p416 = por %p414, %p415
      %p417 = scmp.ne.s32.totalorder %s405, %s406
      %p418 = scmp.eq.s32.totalorder %s39, 1
      %p419 = por %p417, %p418
      %p421 = scmp.ne.s32.totalorder %s406, %s420
      %p422 = scmp.eq.s32.totalorder %s39, 0
      %p423 = por %p421, %p422
      %s425 = sadd.s32 %s424, 1
      %p428 = scmp.eq.s32.totalorder %s33, 1
      %p429 = scmp.ne.s32.totalorder %s424, %s426
      %p430 = scmp.eq.s32.totalorder %s33, 0
      %p431 = por %p429, %p430
      %p432 = scmp.ne.s32.totalorder %s424, %s426
      %p433 = scmp.eq.s32.totalorder %s38, 1
      %p434 = por %p432, %p433
      %p435 = scmp.ne.s32.totalorder %s426, %s427
      %p436 = scmp.eq.s32.totalorder %s38, 0
      %p437 = por %p435, %p436
      %p438 = scmp.ne.s32.totalorder %s426, %s427
      %p439 = scmp.eq.s32.totalorder %s39, 1
      %p440 = por %p438, %p439
      %p442 = scmp.ne.s32.totalorder %s427, %s441
      %p443 = scmp.eq.s32.totalorder %s39, 0
      %p444 = por %p442, %p443
      %s446 = sadd.s32 %s445, 1
      %p449 = scmp.eq.s32.totalorder %s33, 1
      %p450 = scmp.ne.s32.totalorder %s445, %s447
      %p451 = scmp.eq.s32.totalorder %s33, 0
      %p452 = por %p450, %p451
      %p453 = scmp.ne.s32.totalorder %s445, %s447
      %p454 = scmp.eq.s32.totalorder %s38, 1
      %p455 = por %p453, %p454
      %p456 = scmp.ne.s32.totalorder %s447, %s448
      %p457 = scmp.eq.s32.totalorder %s38, 0
      %p458 = por %p456, %p457
      %p459 = scmp.ne.s32.totalorder %s447, %s448
      %p460 = scmp.eq.s32.totalorder %s39, 1
      %p461 = por %p459, %p460
      %p463 = scmp.ne.s32.totalorder %s448, %s462
      %p464 = scmp.eq.s32.totalorder %s39, 0
      %p465 = por %p463, %p464
      %s467 = sadd.s32 %s466, 1
      %p470 = scmp.eq.s32.totalorder %s33, 1
      %p471 = scmp.ne.s32.totalorder %s466, %s468
      %p472 = scmp.eq.s32.totalorder %s33, 0
      %p473 = por %p471, %p472
      %p474 = scmp.ne.s32.totalorder %s466, %s468
      %p475 = scmp.eq.s32.totalorder %s38, 1
      %p476 = por %p474, %p475
      %p477 = scmp.ne.s32.totalorder %s468, %s469
      %p478 = scmp.eq.s32.totalorder %s38, 0
      %p479 = por %p477, %p478
      %p480 = scmp.ne.s32.totalorder %s468, %s469
      %p481 = scmp.eq.s32.totalorder %s39, 1
      %p482 = por %p480, %p481
      %p484 = scmp.ne.s32.totalorder %s469, %s483
      %p485 = scmp.eq.s32.totalorder %s39, 0
      %p486 = por %p484, %p485
      %s488 = sadd.s32 %s487, 1
      %p491 = scmp.eq.s32.totalorder %s33, 1
      %p492 = scmp.ne.s32.totalorder %s487, %s489
      %p493 = scmp.eq.s32.totalorder %s33, 0
      %p494 = por %p492, %p493
      %p495 = scmp.ne.s32.totalorder %s487, %s489
      %p496 = scmp.eq.s32.totalorder %s38, 1
      %p497 = por %p495, %p496
      %p498 = scmp.ne.s32.totalorder %s489, %s490
      %p499 = scmp.eq.s32.totalorder %s38, 0
      %p500 = por %p498, %p499
      %p501 = scmp.ne.s32.totalorder %s489, %s490
      %p502 = scmp.eq.s32.totalorder %s39, 1
      %p503 = por %p501, %p502
      %p505 = scmp.ne.s32.totalorder %s490, %s504
      %p506 = scmp.eq.s32.totalorder %s39, 0
      %p507 = por %p505, %p506
      %s508 = ssub.s32 %s33, %s40
      %p509 = scmp.eq.s32.totalorder %s508, 0
      %s511 = sadd.s32 %s510, 1
      %s512 = scalar_select %p509, %s510, %s511
      %p515 = pneg %p509
      %p516 = scmp.eq.s32.totalorder %s33, 1
      %p517 = por %p515, %p516
      %p518 = scmp.ne.s32.totalorder %s510, %s513
      %p519 = scmp.eq.s32.totalorder %s33, 0
      %p520 = por %p518, %p519
      %p521 = scmp.ne.s32.totalorder %s510, %s513
      %p522 = scmp.eq.s32.totalorder %s38, 1
      %p523 = por %p521, %p522
      %p524 = scmp.ne.s32.totalorder %s513, %s514
      %p525 = scmp.eq.s32.totalorder %s38, 0
      %p526 = por %p524, %p525
      %p527 = scmp.ne.s32.totalorder %s513, %s514
      %p528 = scmp.eq.s32.totalorder %s39, 1
      %p529 = por %p527, %p528
      %p531 = scmp.ne.s32.totalorder %s514, %s530
      %p532 = scmp.eq.s32.totalorder %s39, 0
      %p533 = por %p531, %p532
      %p534 = scmp.le.s32.totalorder 1, %s33
      %p535 = scmp.lt.s32.totalorder %s33, 3
      %p536 = pnand %p534, %p535
      %p537 = pneg %p536
      // Predicated region
      $region9: #{attend_discriminate_forward.1} parent=5 // pred_check
        _
      $region10: #{attend_discriminate_forward.1} parent=5 // pred_check_branch
        %539 = sbr.rel (%p536) target = $region12
      $region11: #{attend_discriminate_forward.1} parent=5 // pred_region
        %s540 = ssub.s32 %s33, 1
        // Predicated region
        $region13: #{attend_discriminate_forward.1} parent=11 // pred_check
          %p541 = pneg %p80
        $region14: #{attend_discriminate_forward.1} parent=11 // pred_check_branch
          %543 = sbr.rel (%p541) target = $region16
        $region15: #{attend_discriminate_forward.1} parent=11 // pred_region
          _
        $region16: #{attend_discriminate_forward.1} parent=11 // pred_fallthru
          _
        // Predicated region
        $region17: #{attend_discriminate_forward.1} parent=11 // pred_check
          %p544 = pneg %p101
        $region18: #{attend_discriminate_forward.1} parent=11 // pred_check_branch
          %546 = sbr.rel (%p544) target = $region20
        $region19: #{attend_discriminate_forward.1} parent=11 // pred_region
          _
        $region20: #{attend_discriminate_forward.1} parent=11 // pred_fallthru
          _
        // Predicated region
        $region21: #{attend_discriminate_forward.1} parent=11 // pred_check
          %p547 = pneg %p122
        $region22: #{attend_discriminate_forward.1} parent=11 // pred_check_branch
          %549 = sbr.rel (%p547) target = $region24
        $region23: #{attend_discriminate_forward.1} parent=11 // pred_region
          _
        $region24: #{attend_discriminate_forward.1} parent=11 // pred_fallthru
          _
        // Predicated region
        $region25: #{attend_discriminate_forward.1} parent=11 // pred_check
          %p550 = pneg %p143
        $region26: #{attend_discriminate_forward.1} parent=11 // pred_check_branch
          %552 = sbr.rel (%p550) target = $region28
        $region27: #{attend_discriminate_forward.1} parent=11 // pred_region
          _
        $region28: #{attend_discriminate_forward.1} parent=11 // pred_fallthru
          _
        // Predicated region
        $region29: #{attend_discriminate_forward.1} parent=11 // pred_check
          %p553 = pneg %p164
        $region30: #{attend_discriminate_forward.1} parent=11 // pred_check_branch
          %555 = sbr.rel (%p553) target = $region32
        $region31: #{attend_discriminate_forward.1} parent=11 // pred_region
          _
        $region32: #{attend_discriminate_forward.1} parent=11 // pred_fallthru
          _
        // Predicated region
        $region33: #{attend_discriminate_forward.1} parent=11 // pred_check
          %p556 = pneg %p185
        $region34: #{attend_discriminate_forward.1} parent=11 // pred_check_branch
          %558 = sbr.rel (%p556) target = $region36
        $region35: #{attend_discriminate_forward.1} parent=11 // pred_region
          _
        $region36: #{attend_discriminate_forward.1} parent=11 // pred_fallthru
          _
        // Predicated region
        $region37: #{attend_discriminate_forward.1} parent=11 // pred_check
          %p559 = pneg %p206
        $region38: #{attend_discriminate_forward.1} parent=11 // pred_check_branch
          %561 = sbr.rel (%p559) target = $region40
        $region39: #{attend_discriminate_forward.1} parent=11 // pred_region
          _
        $region40: #{attend_discriminate_forward.1} parent=11 // pred_fallthru
          _
        // Predicated region
        $region41: #{attend_discriminate_forward.1} parent=11 // pred_check
          %p562 = pneg %p227
        $region42: #{attend_discriminate_forward.1} parent=11 // pred_check_branch
          %564 = sbr.rel (%p562) target = $region44
        $region43: #{attend_discriminate_forward.1} parent=11 // pred_region
          _
        $region44: #{attend_discriminate_forward.1} parent=11 // pred_fallthru
          _
        // Predicated region
        $region45: #{attend_discriminate_forward.1} parent=11 // pred_check
          %p565 = pneg %p248
        $region46: #{attend_discriminate_forward.1} parent=11 // pred_check_branch
          %567 = sbr.rel (%p565) target = $region48
        $region47: #{attend_discriminate_forward.1} parent=11 // pred_region
          _
        $region48: #{attend_discriminate_forward.1} parent=11 // pred_fallthru
          _
        // Predicated region
        $region49: #{attend_discriminate_forward.1} parent=11 // pred_check
          %p568 = pneg %p269
        $region50: #{attend_discriminate_forward.1} parent=11 // pred_check_branch
          %570 = sbr.rel (%p568) target = $region52
        $region51: #{attend_discriminate_forward.1} parent=11 // pred_region
          _
        $region52: #{attend_discriminate_forward.1} parent=11 // pred_fallthru
          _
        // Predicated region
        $region53: #{attend_discriminate_forward.1} parent=11 // pred_check
          %p571 = pneg %p290
        $region54: #{attend_discriminate_forward.1} parent=11 // pred_check_branch
          %573 = sbr.rel (%p571) target = $region56
        $region55: #{attend_discriminate_forward.1} parent=11 // pred_region
          _
        $region56: #{attend_discriminate_forward.1} parent=11 // pred_fallthru
          _
        // Predicated region
        $region57: #{attend_discriminate_forward.1} parent=11 // pred_check
          %p574 = pneg %p311
        $region58: #{attend_discriminate_forward.1} parent=11 // pred_check_branch
          %576 = sbr.rel (%p574) target = $region60
        $region59: #{attend_discriminate_forward.1} parent=11 // pred_region
          _
        $region60: #{attend_discriminate_forward.1} parent=11 // pred_fallthru
          _
        // Predicated region
        $region61: #{attend_discriminate_forward.1} parent=11 // pred_check
          %p577 = pneg %p332
        $region62: #{attend_discriminate_forward.1} parent=11 // pred_check_branch
          %579 = sbr.rel (%p577) target = $region64
        $region63: #{attend_discriminate_forward.1} parent=11 // pred_region
          _
        $region64: #{attend_discriminate_forward.1} parent=11 // pred_fallthru
          _
        // Predicated region
        $region65: #{attend_discriminate_forward.1} parent=11 // pred_check
          %p580 = pneg %p353
        $region66: #{attend_discriminate_forward.1} parent=11 // pred_check_branch
          %582 = sbr.rel (%p580) target = $region68
        $region67: #{attend_discriminate_forward.1} parent=11 // pred_region
          _
        $region68: #{attend_discriminate_forward.1} parent=11 // pred_fallthru
          _
        // Predicated region
        $region69: #{attend_discriminate_forward.1} parent=11 // pred_check
          %p583 = pneg %p374
        $region70: #{attend_discriminate_forward.1} parent=11 // pred_check_branch
          %585 = sbr.rel (%p583) target = $region72
        $region71: #{attend_discriminate_forward.1} parent=11 // pred_region
          _
        $region72: #{attend_discriminate_forward.1} parent=11 // pred_fallthru
          _
        // Predicated region
        $region73: #{attend_discriminate_forward.1} parent=11 // pred_check
          %p586 = pneg %p395
        $region74: #{attend_discriminate_forward.1} parent=11 // pred_check_branch
          %588 = sbr.rel (%p586) target = $region76
        $region75: #{attend_discriminate_forward.1} parent=11 // pred_region
          _
        $region76: #{attend_discriminate_forward.1} parent=11 // pred_fallthru
          _
        // Predicated region
        $region77: #{attend_discriminate_forward.1} parent=11 // pred_check
          %p589 = pneg %p416
        $region78: #{attend_discriminate_forward.1} parent=11 // pred_check_branch
          %591 = sbr.rel (%p589) target = $region80
        $region79: #{attend_discriminate_forward.1} parent=11 // pred_region
          _
        $region80: #{attend_discriminate_forward.1} parent=11 // pred_fallthru
          _
        // Predicated region
        $region81: #{attend_discriminate_forward.1} parent=11 // pred_check
          %p592 = pneg %p437
        $region82: #{attend_discriminate_forward.1} parent=11 // pred_check_branch
          %594 = sbr.rel (%p592) target = $region84
        $region83: #{attend_discriminate_forward.1} parent=11 // pred_region
          _
        $region84: #{attend_discriminate_forward.1} parent=11 // pred_fallthru
          _
        // Predicated region
        $region85: #{attend_discriminate_forward.1} parent=11 // pred_check
          %p595 = pneg %p458
        $region86: #{attend_discriminate_forward.1} parent=11 // pred_check_branch
          %597 = sbr.rel (%p595) target = $region88
        $region87: #{attend_discriminate_forward.1} parent=11 // pred_region
          _
        $region88: #{attend_discriminate_forward.1} parent=11 // pred_fallthru
          _
        // Predicated region
        $region89: #{attend_discriminate_forward.1} parent=11 // pred_check
          %p598 = pneg %p479
        $region90: #{attend_discriminate_forward.1} parent=11 // pred_check_branch
          %600 = sbr.rel (%p598) target = $region92
        $region91: #{attend_discriminate_forward.1} parent=11 // pred_region
          _
        $region92: #{attend_discriminate_forward.1} parent=11 // pred_fallthru
          _
        // Predicated region
        $region93: #{attend_discriminate_forward.1} parent=11 // pred_check
          %p601 = pneg %p500
        $region94: #{attend_discriminate_forward.1} parent=11 // pred_check_branch
          %603 = sbr.rel (%p601) target = $region96
        $region95: #{attend_discriminate_forward.1} parent=11 // pred_region
          _
        $region96: #{attend_discriminate_forward.1} parent=11 // pred_fallthru
          _
      $region12: #{attend_discriminate_forward.1} parent=5 // pred_fallthru
        _
      %p604 = scmp.lt.s32.totalorder %s33, 2
      // Predicated region
      $region97: #{attend_discriminate_forward.1} parent=5 // pred_check
        %p605 = pneg %p604
      $region98: #{attend_discriminate_forward.1} parent=5 // pred_check_branch
        %607 = sbr.rel (%p605) target = $region100
      $region99: #{attend_discriminate_forward.1} parent=5 // pred_region
        // Predicated region
        $region101: #{attend_discriminate_forward.1} parent=99 // pred_check
          %p608 = pneg %p53
        $region102: #{attend_discriminate_forward.1} parent=99 // pred_check_branch
          %610 = sbr.rel (%p608) target = $region104
        $region103: #{attend_discriminate_forward.1} parent=99 // pred_region
          %p611 = scmp.lt.s32.totalorder %s33, 1
          %s612 = scalar_select %p611, %s33, 1
          %s613 = smul.addr %s612, 16
          %s614 = smul.addr %s613, 8
          %s615 = scalar_lea.vmem %s0, %s614
        $region104: #{attend_discriminate_forward.1} parent=99 // pred_fallthru
          _
      $region100: #{attend_discriminate_forward.1} parent=5 // pred_fallthru
        _
      %p616 = scmp.le.s32.totalorder 1, %s33
      %p617 = scmp.lt.s32.totalorder %s33, 3
      %p618 = pnand %p616, %p617
      %p619 = pneg %p618
      // Predicated region
      $region105: #{attend_discriminate_forward.1} parent=5 // pred_check
        _
      $region106: #{attend_discriminate_forward.1} parent=5 // pred_check_branch
        %621 = sbr.rel (%p618) target = $region108
      $region107: #{attend_discriminate_forward.1} parent=5 // pred_region
        %s622 = ssub.s32 %s33, 1
        %p623 = scmp.lt.s32.totalorder %s38, 1
        %s624 = scalar_select %p623, %s38, 1
        %s625 = smul.addr %s624, 16
        %s626 = smul.addr %s625, 8
        %s627 = scalar_lea.vmem %s0, %s626
        %p628 = pneg %p59
        %p629 = pneg %p56
        %p630 = pneg %p80
        %p631 = pneg %p77
        %p632 = pneg %p101
        %p633 = pneg %p98
        %p634 = pneg %p122
        %p635 = pneg %p119
        %p636 = pneg %p143
        %p637 = pneg %p140
        %p638 = pneg %p164
        %p639 = pneg %p161
        %p640 = pneg %p185
        %p641 = pneg %p182
        %p642 = pneg %p206
        %p643 = pneg %p203
        %p644 = pneg %p227
        %p645 = pneg %p224
        %p646 = pneg %p248
        %p647 = pneg %p245
        %p648 = pneg %p269
        %p649 = pneg %p266
        %p650 = pneg %p290
        %p651 = pneg %p287
        %p652 = pneg %p311
        %p653 = pneg %p308
        %p654 = pneg %p332
        %p655 = pneg %p329
        %p656 = pneg %p353
        %p657 = pneg %p350
        %p658 = pneg %p374
        %p659 = pneg %p371
        %p660 = pneg %p395
        %p661 = pneg %p392
        %p662 = pneg %p416
        %p663 = pneg %p413
        %p664 = pneg %p437
        %p665 = pneg %p434
        %p666 = pneg %p458
        %p667 = pneg %p455
        %p668 = pneg %p479
        %p669 = pneg %p476
        %p670 = pneg %p500
        %p671 = pneg %p497
        %p672 = pneg %p526
        %p673 = pneg %p523
        %s674 = sand.u32 %s513, 1
        %s675 = scalar_lea.sflag [#allocation5], %s674
        %s676 = sand.u32 %s513, 1
        %s677 = scalar_lea.vmem [#allocation4], %s676
        %p678 = scmp.lt.s32.totalorder %s38, 1
        %s679 = scalar_select %p678, %s38, 1
        %s680 = smul.addr %s679, 16
        %s681 = smul.addr %s680, 8
        %s682 = scalar_lea.vmem %s0, %s681
        %v683 = vld [vmem:[%s682] sm:$0xff]
        %v684 = vld [vmem:[%s682 + $0x8] sm:$0xff]
        %v685 = vld [vmem:[%s682 + $0x10] sm:$0xff]
        %v686 = vld [vmem:[%s682 + $0x18] sm:$0xff]
        %v687 = vld [vmem:[%s682 + $0x20] sm:$0xff]
        %v688 = vld [vmem:[%s682 + $0x28] sm:$0xff]
        %v689 = vld [vmem:[%s682 + $0x30] sm:$0xff]
        %v690 = vld [vmem:[%s682 + $0x38] sm:$0xff]
        %v691 = vld [vmem:[%s682 + $0x40] sm:$0xff]
        %v692 = vld [vmem:[%s682 + $0x48] sm:$0xff]
        %v693 = vld [vmem:[%s682 + $0x50] sm:$0xff]
        %v694 = vld [vmem:[%s682 + $0x58] sm:$0xff]
        %v695 = vld [vmem:[%s682 + $0x60] sm:$0xff]
        %v696 = vld [vmem:[%s682 + $0x68] sm:$0xff]
        %v697 = vld [vmem:[%s682 + $0x70] sm:$0xff]
        %v698 = vld [vmem:[%s682 + $0x78] sm:$0xff]
        %v699 = vld [vmem:[%s2] sm:$0xf]
        %s700 = scalar_lea.vmem %s2, 4
        %v701 = vld [vmem:[%s700] sm:$0xf]
        %vm702 = vcmask 31744
        %v704 = vsel %vm702, %v684, 0
        %v707 = vsel %vm702, %v685, 0
        %v710 = vsel %vm702, %v686, 0
        %v713 = vsel %vm702, %v687, 0
        %v716 = vsel %vm702, %v688, 0
        %v719 = vsel %vm702, %v689, 0
        %v722 = vsel %vm702, %v690, 0
        %v725 = vsel %vm702, %v691, 0
        %v728 = vsel %vm702, %v692, 0
        %v731 = vsel %vm702, %v693, 0
        %v734 = vsel %vm702, %v694, 0
        %v737 = vsel %vm702, %v695, 0
        %v740 = vsel %vm702, %v696, 0
        %v743 = vsel %vm702, %v697, 0
        %vm745 = vcmask 1043456
        %v747 = vsel %vm745, %v701, 0
        %749 = vmatprep.subr.mxu0 0.0
        %750 = vmatpush1.msra.mxu0 0.0
        %751 = vmatprep.subr.mxu0 0.0
        %752 = vmatpush1.msra.mxu0 0.0
        %753 = vmatprep.subr.mxu0 0.0
        %754 = vmatpush1.msra.mxu0 0.0
        %755 = vmatprep.subr.mxu0 0.0
        %756 = vmatpush1.msra.mxu0 0.0
        %757 = vmatprep.subr.mxu0 0.0
        %758 = vmatpush1.msra.mxu0 0.0
        %759 = vmatprep.subr.mxu0 0.0
        %760 = vmatpush1.msra.mxu0 0.0
        %761 = vmatprep.subr.mxu0 0.0
        %762 = vmatpush1.msra.mxu0 0.0
        %763 = vmatprep.subr.mxu0 0.0
        %764 = vmatpush1.msra.mxu0 0.0
        %765 = vmatprep.subr.mxu0 0.0
        %766 = vmatpush1.msra.mxu0 0.0
        %767 = vmatprep.subr.mxu0 0.0
        %768 = vmatpush1.msra.mxu0 0.0
        %769 = vmatprep.subr.mxu0 0.0
        %770 = vmatpush1.msra.mxu0 0.0
        %771 = vmatprep.subr.mxu0 0.0
        %772 = vmatpush1.msra.mxu0 0.0
        %773 = vmatprep.subr.mxu0 0.0
        %774 = vmatpush1.msra.mxu0 0.0
        %775 = vmatprep.subr.mxu0 0.0
        %776 = vmatpush1.msra.mxu0 0.0
        %777 = vmatprep.subr.mxu0 0.0
        %778 = vmatpush1.msra.mxu0 0.0
        %779 = vmatprep.subr.mxu0 0.0
        %780 = vmatpush1.msra.mxu0 %v747
        %781 = vmatprep.subr.mxu0 0.0
        %782 = vmatpush2.msra.mxu0 0.0
        %783 = vmatprep.subr.mxu0 0.0
        %784 = vmatpush2.msra.mxu0 0.0
        %785 = vmatprep.subr.mxu0 0.0
        %786 = vmatpush2.msra.mxu0 0.0
        %787 = vmatprep.subr.mxu0 0.0
        %788 = vmatpush2.msra.mxu0 0.0
        %789 = vmatprep.subr.mxu0 0.0
        %790 = vmatpush2.msra.mxu0 0.0
        %791 = vmatprep.subr.mxu0 0.0
        %792 = vmatpush2.msra.mxu0 0.0
        %793 = vmatprep.subr.mxu0 0.0
        %794 = vmatpush2.msra.mxu0 0.0
        %795 = vmatprep.subr.mxu0 0.0
        %796 = vmatpush2.msra.mxu0 0.0
        %797 = vmatprep.subr.mxu0 0.0
        %798 = vmatpush2.msra.mxu0 0.0
        %799 = vmatprep.subr.mxu0 0.0
        %800 = vmatpush2.msra.mxu0 0.0
        %801 = vmatprep.subr.mxu0 0.0
        %802 = vmatpush2.msra.mxu0 0.0
        %803 = vmatprep.subr.mxu0 0.0
        %804 = vmatpush2.msra.mxu0 0.0
        %805 = vmatprep.subr.mxu0 0.0
        %806 = vmatpush2.msra.mxu0 0.0
        %807 = vmatprep.subr.mxu0 0.0
        %808 = vmatpush2.msra.mxu0 0.0
        %809 = vmatprep.subr.mxu0 0.0
        %810 = vmatpush2.msra.mxu0 0.0
        %811 = vmatprep.subr.mxu0 0.0
        %812 = vmatpush2.msra.mxu0 0.0
        %813 = vmatprep.mubr.f32.mxu0 0.0
        %814 = vmatmul.mubr.f32.gmra.mxu0 %v704
        %v815 = vpop.f32.mrf.mxu0
        %v816 = vadd.f32 0.0, %v815
        %v817 = vpop.f32.mrf.mxu0
        %818 = vmatprep.mubr.f32.mxu0 0.0
        %819 = vmatmul.mubr.f32.gmra.mxu0 %v707
        %v820 = vpop.f32.mrf.mxu0
        %v821 = vadd.f32 0.0, %v820
        %v822 = vpop.f32.mrf.mxu0
        %823 = vmatprep.mubr.f32.mxu0 0.0
        %824 = vmatmul.mubr.f32.gmra.mxu0 %v710
        %v825 = vpop.f32.mrf.mxu0
        %v826 = vadd.f32 0.0, %v825
        %v827 = vpop.f32.mrf.mxu0
        %828 = vmatprep.mubr.f32.mxu0 0.0
        %829 = vmatmul.mubr.f32.gmra.mxu0 %v713
        %v830 = vpop.f32.mrf.mxu0
        %v831 = vadd.f32 0.0, %v830
        %v832 = vpop.f32.mrf.mxu0
        %833 = vmatprep.mubr.f32.mxu0 0.0
        %834 = vmatmul.mubr.f32.gmra.mxu0 %v716
        %v835 = vpop.f32.mrf.mxu0
        %v836 = vadd.f32 0.0, %v835
        %v837 = vpop.f32.mrf.mxu0
        %838 = vmatprep.mubr.f32.mxu0 0.0
        %839 = vmatmul.mubr.f32.gmra.mxu0 %v719
        %v840 = vpop.f32.mrf.mxu0
        %v841 = vadd.f32 0.0, %v840
        %v842 = vpop.f32.mrf.mxu0
        %843 = vmatprep.mubr.f32.mxu0 0.0
        %844 = vmatmul.mubr.f32.gmra.mxu0 %v722
        %v845 = vpop.f32.mrf.mxu0
        %v846 = vadd.f32 0.0, %v845
        %v847 = vpop.f32.mrf.mxu0
        %848 = vmatprep.mubr.f32.mxu0 0.0
        %849 = vmatmul.mubr.f32.gmra.mxu0 %v725
        %v850 = vpop.f32.mrf.mxu0
        %v851 = vadd.f32 0.0, %v850
        %v852 = vpop.f32.mrf.mxu0
        %853 = vmatprep.mubr.f32.mxu0 0.0
        %854 = vmatmul.mubr.f32.gmra.mxu0 %v728
        %v855 = vpop.f32.mrf.mxu0
        %v856 = vadd.f32 0.0, %v855
        %v857 = vpop.f32.mrf.mxu0
        %858 = vmatprep.mubr.f32.mxu0 0.0
        %859 = vmatmul.mubr.f32.gmra.mxu0 %v731
        %v860 = vpop.f32.mrf.mxu0
        %v861 = vadd.f32 0.0, %v860
        %v862 = vpop.f32.mrf.mxu0
        %863 = vmatprep.mubr.f32.mxu0 0.0
        %864 = vmatmul.mubr.f32.gmra.mxu0 %v734
        %v865 = vpop.f32.mrf.mxu0
        %v866 = vadd.f32 0.0, %v865
        %v867 = vpop.f32.mrf.mxu0
        %868 = vmatprep.mubr.f32.mxu0 0.0
        %869 = vmatmul.mubr.f32.gmra.mxu0 %v737
        %v870 = vpop.f32.mrf.mxu0
        %v871 = vadd.f32 0.0, %v870
        %v872 = vpop.f32.mrf.mxu0
        %873 = vmatprep.mubr.f32.mxu0 0.0
        %874 = vmatmul.mubr.f32.gmra.mxu0 %v740
        %v875 = vpop.f32.mrf.mxu0
        %v876 = vadd.f32 0.0, %v875
        %v877 = vpop.f32.mrf.mxu0
        %878 = vmatprep.mubr.f32.mxu0 0.0
        %879 = vmatmul.mubr.f32.gmra.mxu0 %v743
        %v880 = vpop.f32.mrf.mxu0
        %v881 = vadd.f32 0.0, %v880
        %v882 = vpop.f32.mrf.mxu0
        %883 = vdwg.mxu0
        %v885 = vsel %vm702, %v683, 0
        %v888 = vsel %vm745, %v699, 0
        %890 = vmatprep.subr.mxu0 0.0
        %891 = vmatpush1.msra.mxu0 0.0
        %892 = vmatprep.subr.mxu0 0.0
        %893 = vmatpush1.msra.mxu0 0.0
        %894 = vmatprep.subr.mxu0 0.0
        %895 = vmatpush1.msra.mxu0 0.0
        %896 = vmatprep.subr.mxu0 0.0
        %897 = vmatpush1.msra.mxu0 0.0
        %898 = vmatprep.subr.mxu0 0.0
        %899 = vmatpush1.msra.mxu0 0.0
        %900 = vmatprep.subr.mxu0 0.0
        %901 = vmatpush1.msra.mxu0 0.0
        %902 = vmatprep.subr.mxu0 0.0
        %903 = vmatpush1.msra.mxu0 0.0
        %904 = vmatprep.subr.mxu0 0.0
        %905 = vmatpush1.msra.mxu0 0.0
        %906 = vmatprep.subr.mxu0 0.0
        %907 = vmatpush1.msra.mxu0 0.0
        %908 = vmatprep.subr.mxu0 0.0
        %909 = vmatpush1.msra.mxu0 0.0
        %910 = vmatprep.subr.mxu0 0.0
        %911 = vmatpush1.msra.mxu0 0.0
        %912 = vmatprep.subr.mxu0 0.0
        %913 = vmatpush1.msra.mxu0 0.0
        %914 = vmatprep.subr.mxu0 0.0
        %915 = vmatpush1.msra.mxu0 0.0
        %916 = vmatprep.subr.mxu0 0.0
        %917 = vmatpush1.msra.mxu0 0.0
        %918 = vmatprep.subr.mxu0 0.0
        %919 = vmatpush1.msra.mxu0 0.0
        %920 = vmatprep.subr.mxu0 0.0
        %921 = vmatpush1.msra.mxu0 %v888
        %922 = vmatprep.subr.mxu0 0.0
        %923 = vmatpush2.msra.mxu0 0.0
        %924 = vmatprep.subr.mxu0 0.0
        %925 = vmatpush2.msra.mxu0 0.0
        %926 = vmatprep.subr.mxu0 0.0
        %927 = vmatpush2.msra.mxu0 0.0
        %928 = vmatprep.subr.mxu0 0.0
        %929 = vmatpush2.msra.mxu0 0.0
        %930 = vmatprep.subr.mxu0 0.0
        %931 = vmatpush2.msra.mxu0 0.0
        %932 = vmatprep.subr.mxu0 0.0
        %933 = vmatpush2.msra.mxu0 0.0
        %934 = vmatprep.subr.mxu0 0.0
        %935 = vmatpush2.msra.mxu0 0.0
        %936 = vmatprep.subr.mxu0 0.0
        %937 = vmatpush2.msra.mxu0 0.0
        %938 = vmatprep.subr.mxu0 0.0
        %939 = vmatpush2.msra.mxu0 0.0
        %940 = vmatprep.subr.mxu0 0.0
        %941 = vmatpush2.msra.mxu0 0.0
        %942 = vmatprep.subr.mxu0 0.0
        %943 = vmatpush2.msra.mxu0 0.0
        %944 = vmatprep.subr.mxu0 0.0
        %945 = vmatpush2.msra.mxu0 0.0
        %946 = vmatprep.subr.mxu0 0.0
        %947 = vmatpush2.msra.mxu0 0.0
        %948 = vmatprep.subr.mxu0 0.0
        %949 = vmatpush2.msra.mxu0 0.0
        %950 = vmatprep.subr.mxu0 0.0
        %951 = vmatpush2.msra.mxu0 0.0
        %952 = vmatprep.subr.mxu0 0.0
        %953 = vmatpush2.msra.mxu0 0.0
        %954 = vmatprep.mubr.f32.mxu0 0.0
        %955 = vmatmul.mubr.f32.gmra.mxu0 %v885
        %v956 = vpop.f32.mrf.mxu0
        %v957 = vadd.f32 %v816, %v956
        %v958 = vpop.f32.mrf.mxu0
        %959 = vmatprep.mubr.f32.mxu0 0.0
        %960 = vmatmul.mubr.f32.gmra.mxu0 %v704
        %v961 = vpop.f32.mrf.mxu0
        %v962 = vadd.f32 %v821, %v961
        %v963 = vpop.f32.mrf.mxu0
        %964 = vmatprep.mubr.f32.mxu0 0.0
        %965 = vmatmul.mubr.f32.gmra.mxu0 %v707
        %v966 = vpop.f32.mrf.mxu0
        %v967 = vadd.f32 %v826, %v966
        %v968 = vpop.f32.mrf.mxu0
        %969 = vmatprep.mubr.f32.mxu0 0.0
        %970 = vmatmul.mubr.f32.gmra.mxu0 %v710
        %v971 = vpop.f32.mrf.mxu0
        %v972 = vadd.f32 %v831, %v971
        %v973 = vpop.f32.mrf.mxu0
        %974 = vmatprep.mubr.f32.mxu0 0.0
        %975 = vmatmul.mubr.f32.gmra.mxu0 %v713
        %v976 = vpop.f32.mrf.mxu0
        %v977 = vadd.f32 %v836, %v976
        %v978 = vpop.f32.mrf.mxu0
        %979 = vmatprep.mubr.f32.mxu0 0.0
        %980 = vmatmul.mubr.f32.gmra.mxu0 %v716
        %v981 = vpop.f32.mrf.mxu0
        %v982 = vadd.f32 %v841, %v981
        %v983 = vpop.f32.mrf.mxu0
        %984 = vmatprep.mubr.f32.mxu0 0.0
        %985 = vmatmul.mubr.f32.gmra.mxu0 %v719
        %v986 = vpop.f32.mrf.mxu0
        %v987 = vadd.f32 %v846, %v986
        %v988 = vpop.f32.mrf.mxu0
        %989 = vmatprep.mubr.f32.mxu0 0.0
        %990 = vmatmul.mubr.f32.gmra.mxu0 %v722
        %v991 = vpop.f32.mrf.mxu0
        %v992 = vadd.f32 %v851, %v991
        %v993 = vpop.f32.mrf.mxu0
        %994 = vmatprep.mubr.f32.mxu0 0.0
        %995 = vmatmul.mubr.f32.gmra.mxu0 %v725
        %v996 = vpop.f32.mrf.mxu0
        %v997 = vadd.f32 %v856, %v996
        %v998 = vpop.f32.mrf.mxu0
        %999 = vmatprep.mubr.f32.mxu0 0.0
        %1000 = vmatmul.mubr.f32.gmra.mxu0 %v728
        %v1001 = vpop.f32.mrf.mxu0
        %v1002 = vadd.f32 %v861, %v1001
        %v1003 = vpop.f32.mrf.mxu0
        %1004 = vmatprep.mubr.f32.mxu0 0.0
        %1005 = vmatmul.mubr.f32.gmra.mxu0 %v731
        %v1006 = vpop.f32.mrf.mxu0
        %v1007 = vadd.f32 %v866, %v1006
        %v1008 = vpop.f32.mrf.mxu0
        %1009 = vmatprep.mubr.f32.mxu0 0.0
        %1010 = vmatmul.mubr.f32.gmra.mxu0 %v734
        %v1011 = vpop.f32.mrf.mxu0
        %v1012 = vadd.f32 %v871, %v1011
        %v1013 = vpop.f32.mrf.mxu0
        %1014 = vmatprep.mubr.f32.mxu0 0.0
        %1015 = vmatmul.mubr.f32.gmra.mxu0 %v737
        %v1016 = vpop.f32.mrf.mxu0
        %v1017 = vadd.f32 %v876, %v1016
        %v1018 = vpop.f32.mrf.mxu0
        %1019 = vmatprep.mubr.f32.mxu0 0.0
        %1020 = vmatmul.mubr.f32.gmra.mxu0 %v740
        %v1021 = vpop.f32.mrf.mxu0
        %v1022 = vadd.f32 %v881, %v1021
        %v1023 = vpop.f32.mrf.mxu0
        %1024 = vdwg.mxu0
        %s1025 = scalar_lea.vmem %s2, 8
        %v1026 = vld [vmem:[%s1025] sm:$0xf]
        %v1028 = vsel %vm702, %v698, 0
        %v1031 = vsel %vm745, %v1026, 0
        %1033 = vmatprep.subr.mxu0 0.0
        %1034 = vmatpush1.msra.mxu0 0.0
        %1035 = vmatprep.subr.mxu0 0.0
        %1036 = vmatpush1.msra.mxu0 0.0
        %1037 = vmatprep.subr.mxu0 0.0
        %1038 = vmatpush1.msra.mxu0 0.0
        %1039 = vmatprep.subr.mxu0 0.0
        %1040 = vmatpush1.msra.mxu0 0.0
        %1041 = vmatprep.subr.mxu0 0.0
        %1042 = vmatpush1.msra.mxu0 0.0
        %1043 = vmatprep.subr.mxu0 0.0
        %1044 = vmatpush1.msra.mxu0 0.0
        %1045 = vmatprep.subr.mxu0 0.0
        %1046 = vmatpush1.msra.mxu0 0.0
        %1047 = vmatprep.subr.mxu0 0.0
        %1048 = vmatpush1.msra.mxu0 0.0
        %1049 = vmatprep.subr.mxu0 0.0
        %1050 = vmatpush1.msra.mxu0 0.0
        %1051 = vmatprep.subr.mxu0 0.0
        %1052 = vmatpush1.msra.mxu0 0.0
        %1053 = vmatprep.subr.mxu0 0.0
        %1054 = vmatpush1.msra.mxu0 0.0
        %1055 = vmatprep.subr.mxu0 0.0
        %1056 = vmatpush1.msra.mxu0 0.0
        %1057 = vmatprep.subr.mxu0 0.0
        %1058 = vmatpush1.msra.mxu0 0.0
        %1059 = vmatprep.subr.mxu0 0.0
        %1060 = vmatpush1.msra.mxu0 0.0
        %1061 = vmatprep.subr.mxu0 0.0
        %1062 = vmatpush1.msra.mxu0 0.0
        %1063 = vmatprep.subr.mxu0 0.0
        %1064 = vmatpush1.msra.mxu0 %v1031
        %1065 = vmatprep.subr.mxu0 0.0
        %1066 = vmatpush2.msra.mxu0 0.0
        %1067 = vmatprep.subr.mxu0 0.0
        %1068 = vmatpush2.msra.mxu0 0.0
        %1069 = vmatprep.subr.mxu0 0.0
        %1070 = vmatpush2.msra.mxu0 0.0
        %1071 = vmatprep.subr.mxu0 0.0
        %1072 = vmatpush2.msra.mxu0 0.0
        %1073 = vmatprep.subr.mxu0 0.0
        %1074 = vmatpush2.msra.mxu0 0.0
        %1075 = vmatprep.subr.mxu0 0.0
        %1076 = vmatpush2.msra.mxu0 0.0
        %1077 = vmatprep.subr.mxu0 0.0
        %1078 = vmatpush2.msra.mxu0 0.0
        %1079 = vmatprep.subr.mxu0 0.0
        %1080 = vmatpush2.msra.mxu0 0.0
        %1081 = vmatprep.subr.mxu0 0.0
        %1082 = vmatpush2.msra.mxu0 0.0
        %1083 = vmatprep.subr.mxu0 0.0
        %1084 = vmatpush2.msra.mxu0 0.0
        %1085 = vmatprep.subr.mxu0 0.0
        %1086 = vmatpush2.msra.mxu0 0.0
        %1087 = vmatprep.subr.mxu0 0.0
        %1088 = vmatpush2.msra.mxu0 0.0
        %1089 = vmatprep.subr.mxu0 0.0
        %1090 = vmatpush2.msra.mxu0 0.0
        %1091 = vmatprep.subr.mxu0 0.0
        %1092 = vmatpush2.msra.mxu0 0.0
        %1093 = vmatprep.subr.mxu0 0.0
        %1094 = vmatpush2.msra.mxu0 0.0
        %1095 = vmatprep.subr.mxu0 0.0
        %1096 = vmatpush2.msra.mxu0 0.0
        %1097 = vmatprep.mubr.f32.mxu0 0.0
        %1098 = vmatmul.mubr.f32.gmra.mxu0 %v707
        %v1099 = vpop.f32.mrf.mxu0
        %v1100 = vadd.f32 0.0, %v1099
        %v1101 = vpop.f32.mrf.mxu0
        %1102 = vmatprep.mubr.f32.mxu0 0.0
        %1103 = vmatmul.mubr.f32.gmra.mxu0 %v710
        %v1104 = vpop.f32.mrf.mxu0
        %v1105 = vadd.f32 0.0, %v1104
        %v1106 = vpop.f32.mrf.mxu0
        %1107 = vmatprep.mubr.f32.mxu0 0.0
        %1108 = vmatmul.mubr.f32.gmra.mxu0 %v713
        %v1109 = vpop.f32.mrf.mxu0
        %v1110 = vadd.f32 0.0, %v1109
        %v1111 = vpop.f32.mrf.mxu0
        %1112 = vmatprep.mubr.f32.mxu0 0.0
        %1113 = vmatmul.mubr.f32.gmra.mxu0 %v716
        %v1114 = vpop.f32.mrf.mxu0
        %v1115 = vadd.f32 0.0, %v1114
        %v1116 = vpop.f32.mrf.mxu0
        %1117 = vmatprep.mubr.f32.mxu0 0.0
        %1118 = vmatmul.mubr.f32.gmra.mxu0 %v719
        %v1119 = vpop.f32.mrf.mxu0
        %v1120 = vadd.f32 0.0, %v1119
        %v1121 = vpop.f32.mrf.mxu0
        %1122 = vmatprep.mubr.f32.mxu0 0.0
        %1123 = vmatmul.mubr.f32.gmra.mxu0 %v722
        %v1124 = vpop.f32.mrf.mxu0
        %v1125 = vadd.f32 0.0, %v1124
        %v1126 = vpop.f32.mrf.mxu0
        %1127 = vmatprep.mubr.f32.mxu0 0.0
        %1128 = vmatmul.mubr.f32.gmra.mxu0 %v725
        %v1129 = vpop.f32.mrf.mxu0
        %v1130 = vadd.f32 0.0, %v1129
        %v1131 = vpop.f32.mrf.mxu0
        %1132 = vmatprep.mubr.f32.mxu0 0.0
        %1133 = vmatmul.mubr.f32.gmra.mxu0 %v728
        %v1134 = vpop.f32.mrf.mxu0
        %v1135 = vadd.f32 0.0, %v1134
        %v1136 = vpop.f32.mrf.mxu0
        %1137 = vmatprep.mubr.f32.mxu0 0.0
        %1138 = vmatmul.mubr.f32.gmra.mxu0 %v731
        %v1139 = vpop.f32.mrf.mxu0
        %v1140 = vadd.f32 0.0, %v1139
        %v1141 = vpop.f32.mrf.mxu0
        %1142 = vmatprep.mubr.f32.mxu0 0.0
        %1143 = vmatmul.mubr.f32.gmra.mxu0 %v734
        %v1144 = vpop.f32.mrf.mxu0
        %v1145 = vadd.f32 0.0, %v1144
        %v1146 = vpop.f32.mrf.mxu0
        %1147 = vmatprep.mubr.f32.mxu0 0.0
        %1148 = vmatmul.mubr.f32.gmra.mxu0 %v737
        %v1149 = vpop.f32.mrf.mxu0
        %v1150 = vadd.f32 0.0, %v1149
        %v1151 = vpop.f32.mrf.mxu0
        %1152 = vmatprep.mubr.f32.mxu0 0.0
        %1153 = vmatmul.mubr.f32.gmra.mxu0 %v740
        %v1154 = vpop.f32.mrf.mxu0
        %v1155 = vadd.f32 0.0, %v1154
        %v1156 = vpop.f32.mrf.mxu0
        %1157 = vmatprep.mubr.f32.mxu0 0.0
        %1158 = vmatmul.mubr.f32.gmra.mxu0 %v743
        %v1159 = vpop.f32.mrf.mxu0
        %v1160 = vadd.f32 0.0, %v1159
        %v1161 = vpop.f32.mrf.mxu0
        %1162 = vmatprep.mubr.f32.mxu0 0.0
        %1163 = vmatmul.mubr.f32.gmra.mxu0 %v1028
        %v1164 = vpop.f32.mrf.mxu0
        %v1165 = vadd.f32 0.0, %v1164
        %v1166 = vpop.f32.mrf.mxu0
        %1167 = vdwg.mxu0
        %v1168 = vadd.f32 %v957, %v1100
        %v1169 = vadd.f32 %v962, %v1105
        %v1170 = vadd.f32 %v967, %v1110
        %v1171 = vadd.f32 %v972, %v1115
        %v1172 = vadd.f32 %v977, %v1120
        %v1173 = vadd.f32 %v982, %v1125
        %v1174 = vadd.f32 %v987, %v1130
        %v1175 = vadd.f32 %v992, %v1135
        %v1176 = vadd.f32 %v997, %v1140
        %v1177 = vadd.f32 %v1002, %v1145
        %v1178 = vadd.f32 %v1007, %v1150
        %v1179 = vadd.f32 %v1012, %v1155
        %v1180 = vadd.f32 %v1017, %v1160
        %v1181 = vadd.f32 %v1022, %v1165
        %v1182 = vld [vmem:[%s3] sm:$0x1]
        %v1184 = vlaneseq
        %v1185 = vshrl.u32 %v1184, 7
        %v1186 = vsub.s32 0, %v1185
        %v1187 = vrot.slane %v1182, %v1186
        %v1189 = vadd.f32 %v1168, %v1187
        %v1190 = vadd.f32 %v1169, %v1187
        %v1191 = vadd.f32 %v1170, %v1187
        %v1192 = vadd.f32 %v1171, %v1187
        %v1193 = vadd.f32 %v1172, %v1187
        %v1194 = vadd.f32 %v1173, %v1187
        %v1195 = vadd.f32 %v1174, %v1187
        %v1196 = vadd.f32 %v1175, %v1187
        %v1197 = vadd.f32 %v1176, %v1187
        %v1198 = vadd.f32 %v1177, %v1187
        %v1199 = vadd.f32 %v1178, %v1187
        %v1200 = vadd.f32 %v1179, %v1187
        %v1201 = vadd.f32 %v1180, %v1187
        %v1202 = vadd.f32 %v1181, %v1187
        %v1203 = vmax.f32 %v1189, 0.0
        %v1204 = vmax.f32 %v1190, 0.0
        %v1205 = vmax.f32 %v1191, 0.0
        %v1206 = vmax.f32 %v1192, 0.0
        %v1207 = vmax.f32 %v1193, 0.0
        %v1208 = vmax.f32 %v1194, 0.0
        %v1209 = vmax.f32 %v1195, 0.0
        %v1210 = vmax.f32 %v1196, 0.0
        %v1211 = vmax.f32 %v1197, 0.0
        %v1212 = vmax.f32 %v1198, 0.0
        %v1213 = vmax.f32 %v1199, 0.0
        %v1214 = vmax.f32 %v1200, 0.0
        %v1215 = vmax.f32 %v1201, 0.0
        %v1216 = vmax.f32 %v1202, 0.0
        %v1217 = vld [vmem:[%s4] sm:$0xff]
        %v1218 = vld [vmem:[%s4 + $0x8] sm:$0xff]
        %s1219 = scalar_lea.vmem %s4, 16
        %v1220 = vld [vmem:[%s1219] sm:$0xff]
        %v1221 = vld [vmem:[%s1219 + $0x8] sm:$0xff]
        %vm1222 = vcmask 130048
        %v1224 = vsel %vm1222, %v1204, 0
        %v1227 = vsel %vm1222, %v1205, 0
        %v1230 = vsel %vm1222, %v1206, 0
        %v1233 = vsel %vm1222, %v1207, 0
        %v1236 = vsel %vm1222, %v1208, 0
        %v1239 = vsel %vm1222, %v1209, 0
        %v1242 = vsel %vm1222, %v1210, 0
        %v1245 = vsel %vm1222, %v1211, 0
        %v1248 = vsel %vm1222, %v1212, 0
        %v1251 = vsel %vm1222, %v1213, 0
        %v1254 = vsel %vm1222, %v1214, 0
        %v1257 = vsel %vm1222, %v1215, 0
        %1259 = vmatprep.subr.mxu0 0.0
        %1260 = vmatpush1.msra.mxu0 0.0
        %1261 = vmatprep.subr.mxu0 0.0
        %1262 = vmatpush1.msra.mxu0 0.0
        %1263 = vmatprep.subr.mxu0 0.0
        %1264 = vmatpush1.msra.mxu0 0.0
        %1265 = vmatprep.subr.mxu0 0.0
        %1266 = vmatpush1.msra.mxu0 0.0
        %1267 = vmatprep.subr.mxu0 0.0
        %1268 = vmatpush1.msra.mxu0 0.0
        %1269 = vmatprep.subr.mxu0 0.0
        %1270 = vmatpush1.msra.mxu0 0.0
        %1271 = vmatprep.subr.mxu0 0.0
        %1272 = vmatpush1.msra.mxu0 0.0
        %1273 = vmatprep.subr.mxu0 0.0
        %1274 = vmatpush1.msra.mxu0 0.0
        %1275 = vmatprep.subr.mxu0 0.0
        %1276 = vmatpush1.msra.mxu0 0.0
        %1277 = vmatprep.subr.mxu0 0.0
        %1278 = vmatpush1.msra.mxu0 0.0
        %1279 = vmatprep.subr.mxu0 0.0
        %1280 = vmatpush1.msra.mxu0 0.0
        %1281 = vmatprep.subr.mxu0 0.0
        %1282 = vmatpush1.msra.mxu0 0.0
        %1283 = vmatprep.subr.mxu0 0.0
        %1284 = vmatpush1.msra.mxu0 0.0
        %1285 = vmatprep.subr.mxu0 0.0
        %1286 = vmatpush1.msra.mxu0 0.0
        %1287 = vmatprep.subr.mxu0 0.0
        %1288 = vmatpush1.msra.mxu0 %v1221
        %1289 = vmatprep.subr.mxu0 0.0
        %1290 = vmatpush1.msra.mxu0 %v1220
        %1291 = vmatprep.subr.mxu0 0.0
        %1292 = vmatpush2.msra.mxu0 0.0
        %1293 = vmatprep.subr.mxu0 0.0
        %1294 = vmatpush2.msra.mxu0 0.0
        %1295 = vmatprep.subr.mxu0 0.0
        %1296 = vmatpush2.msra.mxu0 0.0
        %1297 = vmatprep.subr.mxu0 0.0
        %1298 = vmatpush2.msra.mxu0 0.0
        %1299 = vmatprep.subr.mxu0 0.0
        %1300 = vmatpush2.msra.mxu0 0.0
        %1301 = vmatprep.subr.mxu0 0.0
        %1302 = vmatpush2.msra.mxu0 0.0
        %1303 = vmatprep.subr.mxu0 0.0
        %1304 = vmatpush2.msra.mxu0 0.0
        %1305 = vmatprep.subr.mxu0 0.0
        %1306 = vmatpush2.msra.mxu0 0.0
        %1307 = vmatprep.subr.mxu0 0.0
        %1308 = vmatpush2.msra.mxu0 0.0
        %1309 = vmatprep.subr.mxu0 0.0
        %1310 = vmatpush2.msra.mxu0 0.0
        %1311 = vmatprep.subr.mxu0 0.0
        %1312 = vmatpush2.msra.mxu0 0.0
        %1313 = vmatprep.subr.mxu0 0.0
        %1314 = vmatpush2.msra.mxu0 0.0
        %1315 = vmatprep.subr.mxu0 0.0
        %1316 = vmatpush2.msra.mxu0 0.0
        %1317 = vmatprep.subr.mxu0 0.0
        %1318 = vmatpush2.msra.mxu0 0.0
        %1319 = vmatprep.subr.mxu0 0.0
        %1320 = vmatpush2.msra.mxu0 0.0
        %1321 = vmatprep.subr.mxu0 0.0
        %1322 = vmatpush2.msra.mxu0 0.0
        %1323 = vmatprep.mubr.f32.mxu0 0.0
        %1324 = vmatmul.mubr.f32.gmra.mxu0 %v1224
        %v1325 = vpop.f32.mrf.mxu0
        %v1326 = vadd.f32 0.0, %v1325
        %v1327 = vpop.f32.mrf.mxu0
        %1328 = vmatprep.mubr.f32.mxu0 0.0
        %1329 = vmatmul.mubr.f32.gmra.mxu0 %v1227
        %v1330 = vpop.f32.mrf.mxu0
        %v1331 = vadd.f32 0.0, %v1330
        %v1332 = vpop.f32.mrf.mxu0
        %1333 = vmatprep.mubr.f32.mxu0 0.0
        %1334 = vmatmul.mubr.f32.gmra.mxu0 %v1230
        %v1335 = vpop.f32.mrf.mxu0
        %v1336 = vadd.f32 0.0, %v1335
        %v1337 = vpop.f32.mrf.mxu0
        %1338 = vmatprep.mubr.f32.mxu0 0.0
        %1339 = vmatmul.mubr.f32.gmra.mxu0 %v1233
        %v1340 = vpop.f32.mrf.mxu0
        %v1341 = vadd.f32 0.0, %v1340
        %v1342 = vpop.f32.mrf.mxu0
        %1343 = vmatprep.mubr.f32.mxu0 0.0
        %1344 = vmatmul.mubr.f32.gmra.mxu0 %v1236
        %v1345 = vpop.f32.mrf.mxu0
        %v1346 = vadd.f32 0.0, %v1345
        %v1347 = vpop.f32.mrf.mxu0
        %1348 = vmatprep.mubr.f32.mxu0 0.0
        %1349 = vmatmul.mubr.f32.gmra.mxu0 %v1239
        %v1350 = vpop.f32.mrf.mxu0
        %v1351 = vadd.f32 0.0, %v1350
        %v1352 = vpop.f32.mrf.mxu0
        %1353 = vmatprep.mubr.f32.mxu0 0.0
        %1354 = vmatmul.mubr.f32.gmra.mxu0 %v1242
        %v1355 = vpop.f32.mrf.mxu0
        %v1356 = vadd.f32 0.0, %v1355
        %v1357 = vpop.f32.mrf.mxu0
        %1358 = vmatprep.mubr.f32.mxu0 0.0
        %1359 = vmatmul.mubr.f32.gmra.mxu0 %v1245
        %v1360 = vpop.f32.mrf.mxu0
        %v1361 = vadd.f32 0.0, %v1360
        %v1362 = vpop.f32.mrf.mxu0
        %1363 = vmatprep.mubr.f32.mxu0 0.0
        %1364 = vmatmul.mubr.f32.gmra.mxu0 %v1248
        %v1365 = vpop.f32.mrf.mxu0
        %v1366 = vadd.f32 0.0, %v1365
        %v1367 = vpop.f32.mrf.mxu0
        %1368 = vmatprep.mubr.f32.mxu0 0.0
        %1369 = vmatmul.mubr.f32.gmra.mxu0 %v1251
        %v1370 = vpop.f32.mrf.mxu0
        %v1371 = vadd.f32 0.0, %v1370
        %v1372 = vpop.f32.mrf.mxu0
        %1373 = vmatprep.mubr.f32.mxu0 0.0
        %1374 = vmatmul.mubr.f32.gmra.mxu0 %v1254
        %v1375 = vpop.f32.mrf.mxu0
        %v1376 = vadd.f32 0.0, %v1375
        %v1377 = vpop.f32.mrf.mxu0
        %1378 = vmatprep.mubr.f32.mxu0 0.0
        %1379 = vmatmul.mubr.f32.gmra.mxu0 %v1257
        %v1380 = vpop.f32.mrf.mxu0
        %v1381 = vadd.f32 0.0, %v1380
        %v1382 = vpop.f32.mrf.mxu0
        %1383 = vdwg.mxu0
        %v1385 = vsel %vm1222, %v1203, 0
        %1387 = vmatprep.subr.mxu0 0.0
        %1388 = vmatpush1.msra.mxu0 0.0
        %1389 = vmatprep.subr.mxu0 0.0
        %1390 = vmatpush1.msra.mxu0 0.0
        %1391 = vmatprep.subr.mxu0 0.0
        %1392 = vmatpush1.msra.mxu0 0.0
        %1393 = vmatprep.subr.mxu0 0.0
        %1394 = vmatpush1.msra.mxu0 0.0
        %1395 = vmatprep.subr.mxu0 0.0
        %1396 = vmatpush1.msra.mxu0 0.0
        %1397 = vmatprep.subr.mxu0 0.0
        %1398 = vmatpush1.msra.mxu0 0.0
        %1399 = vmatprep.subr.mxu0 0.0
        %1400 = vmatpush1.msra.mxu0 0.0
        %1401 = vmatprep.subr.mxu0 0.0
        %1402 = vmatpush1.msra.mxu0 0.0
        %1403 = vmatprep.subr.mxu0 0.0
        %1404 = vmatpush1.msra.mxu0 0.0
        %1405 = vmatprep.subr.mxu0 0.0
        %1406 = vmatpush1.msra.mxu0 0.0
        %1407 = vmatprep.subr.mxu0 0.0
        %1408 = vmatpush1.msra.mxu0 0.0
        %1409 = vmatprep.subr.mxu0 0.0
        %1410 = vmatpush1.msra.mxu0 0.0
        %1411 = vmatprep.subr.mxu0 0.0
        %1412 = vmatpush1.msra.mxu0 0.0
        %1413 = vmatprep.subr.mxu0 0.0
        %1414 = vmatpush1.msra.mxu0 0.0
        %1415 = vmatprep.subr.mxu0 0.0
        %1416 = vmatpush1.msra.mxu0 %v1218
        %1417 = vmatprep.subr.mxu0 0.0
        %1418 = vmatpush1.msra.mxu0 %v1217
        %1419 = vmatprep.subr.mxu0 0.0
        %1420 = vmatpush2.msra.mxu0 0.0
        %1421 = vmatprep.subr.mxu0 0.0
        %1422 = vmatpush2.msra.mxu0 0.0
        %1423 = vmatprep.subr.mxu0 0.0
        %1424 = vmatpush2.msra.mxu0 0.0
        %1425 = vmatprep.subr.mxu0 0.0
        %1426 = vmatpush2.msra.mxu0 0.0
        %1427 = vmatprep.subr.mxu0 0.0
        %1428 = vmatpush2.msra.mxu0 0.0
        %1429 = vmatprep.subr.mxu0 0.0
        %1430 = vmatpush2.msra.mxu0 0.0
        %1431 = vmatprep.subr.mxu0 0.0
        %1432 = vmatpush2.msra.mxu0 0.0
        %1433 = vmatprep.subr.mxu0 0.0
        %1434 = vmatpush2.msra.mxu0 0.0
        %1435 = vmatprep.subr.mxu0 0.0
        %1436 = vmatpush2.msra.mxu0 0.0
        %1437 = vmatprep.subr.mxu0 0.0
        %1438 = vmatpush2.msra.mxu0 0.0
        %1439 = vmatprep.subr.mxu0 0.0
        %1440 = vmatpush2.msra.mxu0 0.0
        %1441 = vmatprep.subr.mxu0 0.0
        %1442 = vmatpush2.msra.mxu0 0.0
        %1443 = vmatprep.subr.mxu0 0.0
        %1444 = vmatpush2.msra.mxu0 0.0
        %1445 = vmatprep.subr.mxu0 0.0
        %1446 = vmatpush2.msra.mxu0 0.0
        %1447 = vmatprep.subr.mxu0 0.0
        %1448 = vmatpush2.msra.mxu0 0.0
        %1449 = vmatprep.subr.mxu0 0.0
        %1450 = vmatpush2.msra.mxu0 0.0
        %1451 = vmatprep.mubr.f32.mxu0 0.0
        %1452 = vmatmul.mubr.f32.gmra.mxu0 %v1385
        %v1453 = vpop.f32.mrf.mxu0
        %v1454 = vadd.f32 %v1326, %v1453
        %v1455 = vpop.f32.mrf.mxu0
        %1456 = vmatprep.mubr.f32.mxu0 0.0
        %1457 = vmatmul.mubr.f32.gmra.mxu0 %v1224
        %v1458 = vpop.f32.mrf.mxu0
        %v1459 = vadd.f32 %v1331, %v1458
        %v1460 = vpop.f32.mrf.mxu0
        %1461 = vmatprep.mubr.f32.mxu0 0.0
        %1462 = vmatmul.mubr.f32.gmra.mxu0 %v1227
        %v1463 = vpop.f32.mrf.mxu0
        %v1464 = vadd.f32 %v1336, %v1463
        %v1465 = vpop.f32.mrf.mxu0
        %1466 = vmatprep.mubr.f32.mxu0 0.0
        %1467 = vmatmul.mubr.f32.gmra.mxu0 %v1230
        %v1468 = vpop.f32.mrf.mxu0
        %v1469 = vadd.f32 %v1341, %v1468
        %v1470 = vpop.f32.mrf.mxu0
        %1471 = vmatprep.mubr.f32.mxu0 0.0
        %1472 = vmatmul.mubr.f32.gmra.mxu0 %v1233
        %v1473 = vpop.f32.mrf.mxu0
        %v1474 = vadd.f32 %v1346, %v1473
        %v1475 = vpop.f32.mrf.mxu0
        %1476 = vmatprep.mubr.f32.mxu0 0.0
        %1477 = vmatmul.mubr.f32.gmra.mxu0 %v1236
        %v1478 = vpop.f32.mrf.mxu0
        %v1479 = vadd.f32 %v1351, %v1478
        %v1480 = vpop.f32.mrf.mxu0
        %1481 = vmatprep.mubr.f32.mxu0 0.0
        %1482 = vmatmul.mubr.f32.gmra.mxu0 %v1239
        %v1483 = vpop.f32.mrf.mxu0
        %v1484 = vadd.f32 %v1356, %v1483
        %v1485 = vpop.f32.mrf.mxu0
        %1486 = vmatprep.mubr.f32.mxu0 0.0
        %1487 = vmatmul.mubr.f32.gmra.mxu0 %v1242
        %v1488 = vpop.f32.mrf.mxu0
        %v1489 = vadd.f32 %v1361, %v1488
        %v1490 = vpop.f32.mrf.mxu0
        %1491 = vmatprep.mubr.f32.mxu0 0.0
        %1492 = vmatmul.mubr.f32.gmra.mxu0 %v1245
        %v1493 = vpop.f32.mrf.mxu0
        %v1494 = vadd.f32 %v1366, %v1493
        %v1495 = vpop.f32.mrf.mxu0
        %1496 = vmatprep.mubr.f32.mxu0 0.0
        %1497 = vmatmul.mubr.f32.gmra.mxu0 %v1248
        %v1498 = vpop.f32.mrf.mxu0
        %v1499 = vadd.f32 %v1371, %v1498
        %v1500 = vpop.f32.mrf.mxu0
        %1501 = vmatprep.mubr.f32.mxu0 0.0
        %1502 = vmatmul.mubr.f32.gmra.mxu0 %v1251
        %v1503 = vpop.f32.mrf.mxu0
        %v1504 = vadd.f32 %v1376, %v1503
        %v1505 = vpop.f32.mrf.mxu0
        %1506 = vmatprep.mubr.f32.mxu0 0.0
        %1507 = vmatmul.mubr.f32.gmra.mxu0 %v1254
        %v1508 = vpop.f32.mrf.mxu0
        %v1509 = vadd.f32 %v1381, %v1508
        %v1510 = vpop.f32.mrf.mxu0
        %1511 = vdwg.mxu0
        %s1512 = scalar_lea.vmem %s4, 32
        %v1513 = vld [vmem:[%s1512] sm:$0xff]
        %v1514 = vld [vmem:[%s1512 + $0x8] sm:$0xff]
        %v1516 = vsel %vm1222, %v1216, 0
        %1518 = vmatprep.subr.mxu0 0.0
        %1519 = vmatpush1.msra.mxu0 0.0
        %1520 = vmatprep.subr.mxu0 0.0
        %1521 = vmatpush1.msra.mxu0 0.0
        %1522 = vmatprep.subr.mxu0 0.0
        %1523 = vmatpush1.msra.mxu0 0.0
        %1524 = vmatprep.subr.mxu0 0.0
        %1525 = vmatpush1.msra.mxu0 0.0
        %1526 = vmatprep.subr.mxu0 0.0
        %1527 = vmatpush1.msra.mxu0 0.0
        %1528 = vmatprep.subr.mxu0 0.0
        %1529 = vmatpush1.msra.mxu0 0.0
        %1530 = vmatprep.subr.mxu0 0.0
        %1531 = vmatpush1.msra.mxu0 0.0
        %1532 = vmatprep.subr.mxu0 0.0
        %1533 = vmatpush1.msra.mxu0 0.0
        %1534 = vmatprep.subr.mxu0 0.0
        %1535 = vmatpush1.msra.mxu0 0.0
        %1536 = vmatprep.subr.mxu0 0.0
        %1537 = vmatpush1.msra.mxu0 0.0
        %1538 = vmatprep.subr.mxu0 0.0
        %1539 = vmatpush1.msra.mxu0 0.0
        %1540 = vmatprep.subr.mxu0 0.0
        %1541 = vmatpush1.msra.mxu0 0.0
        %1542 = vmatprep.subr.mxu0 0.0
        %1543 = vmatpush1.msra.mxu0 0.0
        %1544 = vmatprep.subr.mxu0 0.0
        %1545 = vmatpush1.msra.mxu0 0.0
        %1546 = vmatprep.subr.mxu0 0.0
        %1547 = vmatpush1.msra.mxu0 %v1514
        %1548 = vmatprep.subr.mxu0 0.0
        %1549 = vmatpush1.msra.mxu0 %v1513
        %1550 = vmatprep.subr.mxu0 0.0
        %1551 = vmatpush2.msra.mxu0 0.0
        %1552 = vmatprep.subr.mxu0 0.0
        %1553 = vmatpush2.msra.mxu0 0.0
        %1554 = vmatprep.subr.mxu0 0.0
        %1555 = vmatpush2.msra.mxu0 0.0
        %1556 = vmatprep.subr.mxu0 0.0
        %1557 = vmatpush2.msra.mxu0 0.0
        %1558 = vmatprep.subr.mxu0 0.0
        %1559 = vmatpush2.msra.mxu0 0.0
        %1560 = vmatprep.subr.mxu0 0.0
        %1561 = vmatpush2.msra.mxu0 0.0
        %1562 = vmatprep.subr.mxu0 0.0
        %1563 = vmatpush2.msra.mxu0 0.0
        %1564 = vmatprep.subr.mxu0 0.0
        %1565 = vmatpush2.msra.mxu0 0.0
        %1566 = vmatprep.subr.mxu0 0.0
        %1567 = vmatpush2.msra.mxu0 0.0
        %1568 = vmatprep.subr.mxu0 0.0
        %1569 = vmatpush2.msra.mxu0 0.0
        %1570 = vmatprep.subr.mxu0 0.0
        %1571 = vmatpush2.msra.mxu0 0.0
        %1572 = vmatprep.subr.mxu0 0.0
        %1573 = vmatpush2.msra.mxu0 0.0
        %1574 = vmatprep.subr.mxu0 0.0
        %1575 = vmatpush2.msra.mxu0 0.0
        %1576 = vmatprep.subr.mxu0 0.0
        %1577 = vmatpush2.msra.mxu0 0.0
        %1578 = vmatprep.subr.mxu0 0.0
        %1579 = vmatpush2.msra.mxu0 0.0
        %1580 = vmatprep.subr.mxu0 0.0
        %1581 = vmatpush2.msra.mxu0 0.0
        %1582 = vmatprep.mubr.f32.mxu0 0.0
        %1583 = vmatmul.mubr.f32.gmra.mxu0 %v1227
        %v1584 = vpop.f32.mrf.mxu0
        %v1585 = vadd.f32 0.0, %v1584
        %v1586 = vpop.f32.mrf.mxu0
        %1587 = vmatprep.mubr.f32.mxu0 0.0
        %1588 = vmatmul.mubr.f32.gmra.mxu0 %v1230
        %v1589 = vpop.f32.mrf.mxu0
        %v1590 = vadd.f32 0.0, %v1589
        %v1591 = vpop.f32.mrf.mxu0
        %1592 = vmatprep.mubr.f32.mxu0 0.0
        %1593 = vmatmul.mubr.f32.gmra.mxu0 %v1233
        %v1594 = vpop.f32.mrf.mxu0
        %v1595 = vadd.f32 0.0, %v1594
        %v1596 = vpop.f32.mrf.mxu0
        %1597 = vmatprep.mubr.f32.mxu0 0.0
        %1598 = vmatmul.mubr.f32.gmra.mxu0 %v1236
        %v1599 = vpop.f32.mrf.mxu0
        %v1600 = vadd.f32 0.0, %v1599
        %v1601 = vpop.f32.mrf.mxu0
        %1602 = vmatprep.mubr.f32.mxu0 0.0
        %1603 = vmatmul.mubr.f32.gmra.mxu0 %v1239
        %v1604 = vpop.f32.mrf.mxu0
        %v1605 = vadd.f32 0.0, %v1604
        %v1606 = vpop.f32.mrf.mxu0
        %1607 = vmatprep.mubr.f32.mxu0 0.0
        %1608 = vmatmul.mubr.f32.gmra.mxu0 %v1242
        %v1609 = vpop.f32.mrf.mxu0
        %v1610 = vadd.f32 0.0, %v1609
        %v1611 = vpop.f32.mrf.mxu0
        %1612 = vmatprep.mubr.f32.mxu0 0.0
        %1613 = vmatmul.mubr.f32.gmra.mxu0 %v1245
        %v1614 = vpop.f32.mrf.mxu0
        %v1615 = vadd.f32 0.0, %v1614
        %v1616 = vpop.f32.mrf.mxu0
        %1617 = vmatprep.mubr.f32.mxu0 0.0
        %1618 = vmatmul.mubr.f32.gmra.mxu0 %v1248
        %v1619 = vpop.f32.mrf.mxu0
        %v1620 = vadd.f32 0.0, %v1619
        %v1621 = vpop.f32.mrf.mxu0
        %1622 = vmatprep.mubr.f32.mxu0 0.0
        %1623 = vmatmul.mubr.f32.gmra.mxu0 %v1251
        %v1624 = vpop.f32.mrf.mxu0
        %v1625 = vadd.f32 0.0, %v1624
        %v1626 = vpop.f32.mrf.mxu0
        %1627 = vmatprep.mubr.f32.mxu0 0.0
        %1628 = vmatmul.mubr.f32.gmra.mxu0 %v1254
        %v1629 = vpop.f32.mrf.mxu0
        %v1630 = vadd.f32 0.0, %v1629
        %v1631 = vpop.f32.mrf.mxu0
        %1632 = vmatprep.mubr.f32.mxu0 0.0
        %1633 = vmatmul.mubr.f32.gmra.mxu0 %v1257
        %v1634 = vpop.f32.mrf.mxu0
        %v1635 = vadd.f32 0.0, %v1634
        %v1636 = vpop.f32.mrf.mxu0
        %1637 = vmatprep.mubr.f32.mxu0 0.0
        %1638 = vmatmul.mubr.f32.gmra.mxu0 %v1516
        %v1639 = vpop.f32.mrf.mxu0
        %v1640 = vadd.f32 0.0, %v1639
        %v1641 = vpop.f32.mrf.mxu0
        %1642 = vdwg.mxu0
        %v1643 = vadd.f32 %v1454, %v1585
        %v1644 = vadd.f32 %v1459, %v1590
        %v1645 = vadd.f32 %v1464, %v1595
        %v1646 = vadd.f32 %v1469, %v1600
        %v1647 = vadd.f32 %v1474, %v1605
        %v1648 = vadd.f32 %v1479, %v1610
        %v1649 = vadd.f32 %v1484, %v1615
        %v1650 = vadd.f32 %v1489, %v1620
        %v1651 = vadd.f32 %v1494, %v1625
        %v1652 = vadd.f32 %v1499, %v1630
        %v1653 = vadd.f32 %v1504, %v1635
        %v1654 = vadd.f32 %v1509, %v1640
        %v1655 = vld [vmem:[%s5] sm:$0x1]
        %v1657 = vlaneseq
        %v1658 = vshrl.u32 %v1657, 7
        %v1659 = vsub.s32 0, %v1658
        %v1660 = vrot.slane %v1655, %v1659
        %v1662 = vadd.f32 %v1643, %v1660
        %v1663 = vadd.f32 %v1644, %v1660
        %v1664 = vadd.f32 %v1645, %v1660
        %v1665 = vadd.f32 %v1646, %v1660
        %v1666 = vadd.f32 %v1647, %v1660
        %v1667 = vadd.f32 %v1648, %v1660
        %v1668 = vadd.f32 %v1649, %v1660
        %v1669 = vadd.f32 %v1650, %v1660
        %v1670 = vadd.f32 %v1651, %v1660
        %v1671 = vadd.f32 %v1652, %v1660
        %v1672 = vadd.f32 %v1653, %v1660
        %v1673 = vadd.f32 %v1654, %v1660
        %v1674 = vmax.f32 %v1662, 0.0
        %v1675 = vmax.f32 %v1663, 0.0
        %v1676 = vmax.f32 %v1664, 0.0
        %v1677 = vmax.f32 %v1665, 0.0
        %v1678 = vmax.f32 %v1666, 0.0
        %v1679 = vmax.f32 %v1667, 0.0
        %v1680 = vmax.f32 %v1668, 0.0
        %v1681 = vmax.f32 %v1669, 0.0
        %v1682 = vmax.f32 %v1670, 0.0
        %v1683 = vmax.f32 %v1671, 0.0
        %v1684 = vmax.f32 %v1672, 0.0
        %v1685 = vmax.f32 %v1673, 0.0
        %v1686 = vld [vmem:[%s6] sm:$0xff]
        %v1687 = vld [vmem:[%s6 + $0x8] sm:$0xff]
        %s1688 = scalar_lea.vmem %s6, 16
        %v1689 = vld [vmem:[%s1688] sm:$0xff]
        %v1690 = vld [vmem:[%s1688 + $0x8] sm:$0xff]
        %v1692 = vsel %vm1222, %v1675, 0
        %v1695 = vsel %vm1222, %v1676, 0
        %v1698 = vsel %vm1222, %v1677, 0
        %v1701 = vsel %vm1222, %v1678, 0
        %v1704 = vsel %vm1222, %v1679, 0
        %v1707 = vsel %vm1222, %v1680, 0
        %v1710 = vsel %vm1222, %v1681, 0
        %v1713 = vsel %vm1222, %v1682, 0
        %v1716 = vsel %vm1222, %v1683, 0
        %v1719 = vsel %vm1222, %v1684, 0
        %1721 = vmatprep.subr.mxu0 0.0
        %1722 = vmatpush1.msra.mxu0 0.0
        %1723 = vmatprep.subr.mxu0 0.0
        %1724 = vmatpush1.msra.mxu0 0.0
        %1725 = vmatprep.subr.mxu0 0.0
        %1726 = vmatpush1.msra.mxu0 0.0
        %1727 = vmatprep.subr.mxu0 0.0
        %1728 = vmatpush1.msra.mxu0 0.0
        %1729 = vmatprep.subr.mxu0 0.0
        %1730 = vmatpush1.msra.mxu0 0.0
        %1731 = vmatprep.subr.mxu0 0.0
        %1732 = vmatpush1.msra.mxu0 0.0
        %1733 = vmatprep.subr.mxu0 0.0
        %1734 = vmatpush1.msra.mxu0 0.0
        %1735 = vmatprep.subr.mxu0 0.0
        %1736 = vmatpush1.msra.mxu0 0.0
        %1737 = vmatprep.subr.mxu0 0.0
        %1738 = vmatpush1.msra.mxu0 0.0
        %1739 = vmatprep.subr.mxu0 0.0
        %1740 = vmatpush1.msra.mxu0 0.0
        %1741 = vmatprep.subr.mxu0 0.0
        %1742 = vmatpush1.msra.mxu0 0.0
        %1743 = vmatprep.subr.mxu0 0.0
        %1744 = vmatpush1.msra.mxu0 0.0
        %1745 = vmatprep.subr.mxu0 0.0
        %1746 = vmatpush1.msra.mxu0 0.0
        %1747 = vmatprep.subr.mxu0 0.0
        %1748 = vmatpush1.msra.mxu0 0.0
        %1749 = vmatprep.subr.mxu0 0.0
        %1750 = vmatpush1.msra.mxu0 %v1690
        %1751 = vmatprep.subr.mxu0 0.0
        %1752 = vmatpush1.msra.mxu0 %v1689
        %1753 = vmatprep.subr.mxu0 0.0
        %1754 = vmatpush2.msra.mxu0 0.0
        %1755 = vmatprep.subr.mxu0 0.0
        %1756 = vmatpush2.msra.mxu0 0.0
        %1757 = vmatprep.subr.mxu0 0.0
        %1758 = vmatpush2.msra.mxu0 0.0
        %1759 = vmatprep.subr.mxu0 0.0
        %1760 = vmatpush2.msra.mxu0 0.0
        %1761 = vmatprep.subr.mxu0 0.0
        %1762 = vmatpush2.msra.mxu0 0.0
        %1763 = vmatprep.subr.mxu0 0.0
        %1764 = vmatpush2.msra.mxu0 0.0
        %1765 = vmatprep.subr.mxu0 0.0
        %1766 = vmatpush2.msra.mxu0 0.0
        %1767 = vmatprep.subr.mxu0 0.0
        %1768 = vmatpush2.msra.mxu0 0.0
        %1769 = vmatprep.subr.mxu0 0.0
        %1770 = vmatpush2.msra.mxu0 0.0
        %1771 = vmatprep.subr.mxu0 0.0
        %1772 = vmatpush2.msra.mxu0 0.0
        %1773 = vmatprep.subr.mxu0 0.0
        %1774 = vmatpush2.msra.mxu0 0.0
        %1775 = vmatprep.subr.mxu0 0.0
        %1776 = vmatpush2.msra.mxu0 0.0
        %1777 = vmatprep.subr.mxu0 0.0
        %1778 = vmatpush2.msra.mxu0 0.0
        %1779 = vmatprep.subr.mxu0 0.0
        %1780 = vmatpush2.msra.mxu0 0.0
        %1781 = vmatprep.subr.mxu0 0.0
        %1782 = vmatpush2.msra.mxu0 0.0
        %1783 = vmatprep.subr.mxu0 0.0
        %1784 = vmatpush2.msra.mxu0 0.0
        %1785 = vmatprep.mubr.f32.mxu0 0.0
        %1786 = vmatmul.mubr.f32.gmra.mxu0 %v1692
        %v1787 = vpop.f32.mrf.mxu0
        %v1788 = vadd.f32 0.0, %v1787
        %v1789 = vpop.f32.mrf.mxu0
        %1790 = vmatprep.mubr.f32.mxu0 0.0
        %1791 = vmatmul.mubr.f32.gmra.mxu0 %v1695
        %v1792 = vpop.f32.mrf.mxu0
        %v1793 = vadd.f32 0.0, %v1792
        %v1794 = vpop.f32.mrf.mxu0
        %1795 = vmatprep.mubr.f32.mxu0 0.0
        %1796 = vmatmul.mubr.f32.gmra.mxu0 %v1698
        %v1797 = vpop.f32.mrf.mxu0
        %v1798 = vadd.f32 0.0, %v1797
        %v1799 = vpop.f32.mrf.mxu0
        %1800 = vmatprep.mubr.f32.mxu0 0.0
        %1801 = vmatmul.mubr.f32.gmra.mxu0 %v1701
        %v1802 = vpop.f32.mrf.mxu0
        %v1803 = vadd.f32 0.0, %v1802
        %v1804 = vpop.f32.mrf.mxu0
        %1805 = vmatprep.mubr.f32.mxu0 0.0
        %1806 = vmatmul.mubr.f32.gmra.mxu0 %v1704
        %v1807 = vpop.f32.mrf.mxu0
        %v1808 = vadd.f32 0.0, %v1807
        %v1809 = vpop.f32.mrf.mxu0
        %1810 = vmatprep.mubr.f32.mxu0 0.0
        %1811 = vmatmul.mubr.f32.gmra.mxu0 %v1707
        %v1812 = vpop.f32.mrf.mxu0
        %v1813 = vadd.f32 0.0, %v1812
        %v1814 = vpop.f32.mrf.mxu0
        %1815 = vmatprep.mubr.f32.mxu0 0.0
        %1816 = vmatmul.mubr.f32.gmra.mxu0 %v1710
        %v1817 = vpop.f32.mrf.mxu0
        %v1818 = vadd.f32 0.0, %v1817
        %v1819 = vpop.f32.mrf.mxu0
        %1820 = vmatprep.mubr.f32.mxu0 0.0
        %1821 = vmatmul.mubr.f32.gmra.mxu0 %v1713
        %v1822 = vpop.f32.mrf.mxu0
        %v1823 = vadd.f32 0.0, %v1822
        %v1824 = vpop.f32.mrf.mxu0
        %1825 = vmatprep.mubr.f32.mxu0 0.0
        %1826 = vmatmul.mubr.f32.gmra.mxu0 %v1716
        %v1827 = vpop.f32.mrf.mxu0
        %v1828 = vadd.f32 0.0, %v1827
        %v1829 = vpop.f32.mrf.mxu0
        %1830 = vmatprep.mubr.f32.mxu0 0.0
        %1831 = vmatmul.mubr.f32.gmra.mxu0 %v1719
        %v1832 = vpop.f32.mrf.mxu0
        %v1833 = vadd.f32 0.0, %v1832
        %v1834 = vpop.f32.mrf.mxu0
        %1835 = vdwg.mxu0
        %v1837 = vsel %vm1222, %v1674, 0
        %1839 = vmatprep.subr.mxu0 0.0
        %1840 = vmatpush1.msra.mxu0 0.0
        %1841 = vmatprep.subr.mxu0 0.0
        %1842 = vmatpush1.msra.mxu0 0.0
        %1843 = vmatprep.subr.mxu0 0.0
        %1844 = vmatpush1.msra.mxu0 0.0
        %1845 = vmatprep.subr.mxu0 0.0
        %1846 = vmatpush1.msra.mxu0 0.0
        %1847 = vmatprep.subr.mxu0 0.0
        %1848 = vmatpush1.msra.mxu0 0.0
        %1849 = vmatprep.subr.mxu0 0.0
        %1850 = vmatpush1.msra.mxu0 0.0
        %1851 = vmatprep.subr.mxu0 0.0
        %1852 = vmatpush1.msra.mxu0 0.0
        %1853 = vmatprep.subr.mxu0 0.0
        %1854 = vmatpush1.msra.mxu0 0.0
        %1855 = vmatprep.subr.mxu0 0.0
        %1856 = vmatpush1.msra.mxu0 0.0
        %1857 = vmatprep.subr.mxu0 0.0
        %1858 = vmatpush1.msra.mxu0 0.0
        %1859 = vmatprep.subr.mxu0 0.0
        %1860 = vmatpush1.msra.mxu0 0.0
        %1861 = vmatprep.subr.mxu0 0.0
        %1862 = vmatpush1.msra.mxu0 0.0
        %1863 = vmatprep.subr.mxu0 0.0
        %1864 = vmatpush1.msra.mxu0 0.0
        %1865 = vmatprep.subr.mxu0 0.0
        %1866 = vmatpush1.msra.mxu0 0.0
        %1867 = vmatprep.subr.mxu0 0.0
        %1868 = vmatpush1.msra.mxu0 %v1687
        %1869 = vmatprep.subr.mxu0 0.0
        %1870 = vmatpush1.msra.mxu0 %v1686
        %1871 = vmatprep.subr.mxu0 0.0
        %1872 = vmatpush2.msra.mxu0 0.0
        %1873 = vmatprep.subr.mxu0 0.0
        %1874 = vmatpush2.msra.mxu0 0.0
        %1875 = vmatprep.subr.mxu0 0.0
        %1876 = vmatpush2.msra.mxu0 0.0
        %1877 = vmatprep.subr.mxu0 0.0
        %1878 = vmatpush2.msra.mxu0 0.0
        %1879 = vmatprep.subr.mxu0 0.0
        %1880 = vmatpush2.msra.mxu0 0.0
        %1881 = vmatprep.subr.mxu0 0.0
        %1882 = vmatpush2.msra.mxu0 0.0
        %1883 = vmatprep.subr.mxu0 0.0
        %1884 = vmatpush2.msra.mxu0 0.0
        %1885 = vmatprep.subr.mxu0 0.0
        %1886 = vmatpush2.msra.mxu0 0.0
        %1887 = vmatprep.subr.mxu0 0.0
        %1888 = vmatpush2.msra.mxu0 0.0
        %1889 = vmatprep.subr.mxu0 0.0
        %1890 = vmatpush2.msra.mxu0 0.0
        %1891 = vmatprep.subr.mxu0 0.0
        %1892 = vmatpush2.msra.mxu0 0.0
        %1893 = vmatprep.subr.mxu0 0.0
        %1894 = vmatpush2.msra.mxu0 0.0
        %1895 = vmatprep.subr.mxu0 0.0
        %1896 = vmatpush2.msra.mxu0 0.0
        %1897 = vmatprep.subr.mxu0 0.0
        %1898 = vmatpush2.msra.mxu0 0.0
        %1899 = vmatprep.subr.mxu0 0.0
        %1900 = vmatpush2.msra.mxu0 0.0
        %1901 = vmatprep.subr.mxu0 0.0
        %1902 = vmatpush2.msra.mxu0 0.0
        %1903 = vmatprep.mubr.f32.mxu0 0.0
        %1904 = vmatmul.mubr.f32.gmra.mxu0 %v1837
        %v1905 = vpop.f32.mrf.mxu0
        %v1906 = vadd.f32 %v1788, %v1905
        %v1907 = vpop.f32.mrf.mxu0
        %1908 = vmatprep.mubr.f32.mxu0 0.0
        %1909 = vmatmul.mubr.f32.gmra.mxu0 %v1692
        %v1910 = vpop.f32.mrf.mxu0
        %v1911 = vadd.f32 %v1793, %v1910
        %v1912 = vpop.f32.mrf.mxu0
        %1913 = vmatprep.mubr.f32.mxu0 0.0
        %1914 = vmatmul.mubr.f32.gmra.mxu0 %v1695
        %v1915 = vpop.f32.mrf.mxu0
        %v1916 = vadd.f32 %v1798, %v1915
        %v1917 = vpop.f32.mrf.mxu0
        %1918 = vmatprep.mubr.f32.mxu0 0.0
        %1919 = vmatmul.mubr.f32.gmra.mxu0 %v1698
        %v1920 = vpop.f32.mrf.mxu0
        %v1921 = vadd.f32 %v1803, %v1920
        %v1922 = vpop.f32.mrf.mxu0
        %1923 = vmatprep.mubr.f32.mxu0 0.0
        %1924 = vmatmul.mubr.f32.gmra.mxu0 %v1701
        %v1925 = vpop.f32.mrf.mxu0
        %v1926 = vadd.f32 %v1808, %v1925
        %v1927 = vpop.f32.mrf.mxu0
        %1928 = vmatprep.mubr.f32.mxu0 0.0
        %1929 = vmatmul.mubr.f32.gmra.mxu0 %v1704
        %v1930 = vpop.f32.mrf.mxu0
        %v1931 = vadd.f32 %v1813, %v1930
        %v1932 = vpop.f32.mrf.mxu0
        %1933 = vmatprep.mubr.f32.mxu0 0.0
        %1934 = vmatmul.mubr.f32.gmra.mxu0 %v1707
        %v1935 = vpop.f32.mrf.mxu0
        %v1936 = vadd.f32 %v1818, %v1935
        %v1937 = vpop.f32.mrf.mxu0
        %1938 = vmatprep.mubr.f32.mxu0 0.0
        %1939 = vmatmul.mubr.f32.gmra.mxu0 %v1710
        %v1940 = vpop.f32.mrf.mxu0
        %v1941 = vadd.f32 %v1823, %v1940
        %v1942 = vpop.f32.mrf.mxu0
        %1943 = vmatprep.mubr.f32.mxu0 0.0
        %1944 = vmatmul.mubr.f32.gmra.mxu0 %v1713
        %v1945 = vpop.f32.mrf.mxu0
        %v1946 = vadd.f32 %v1828, %v1945
        %v1947 = vpop.f32.mrf.mxu0
        %1948 = vmatprep.mubr.f32.mxu0 0.0
        %1949 = vmatmul.mubr.f32.gmra.mxu0 %v1716
        %v1950 = vpop.f32.mrf.mxu0
        %v1951 = vadd.f32 %v1833, %v1950
        %v1952 = vpop.f32.mrf.mxu0
        %1953 = vdwg.mxu0
        %s1954 = scalar_lea.vmem %s6, 32
        %v1955 = vld [vmem:[%s1954] sm:$0xff]
        %v1956 = vld [vmem:[%s1954 + $0x8] sm:$0xff]
        %v1958 = vsel %vm1222, %v1685, 0
        %1960 = vmatprep.subr.mxu0 0.0
        %1961 = vmatpush1.msra.mxu0 0.0
        %1962 = vmatprep.subr.mxu0 0.0
        %1963 = vmatpush1.msra.mxu0 0.0
        %1964 = vmatprep.subr.mxu0 0.0
        %1965 = vmatpush1.msra.mxu0 0.0
        %1966 = vmatprep.subr.mxu0 0.0
        %1967 = vmatpush1.msra.mxu0 0.0
        %1968 = vmatprep.subr.mxu0 0.0
        %1969 = vmatpush1.msra.mxu0 0.0
        %1970 = vmatprep.subr.mxu0 0.0
        %1971 = vmatpush1.msra.mxu0 0.0
        %1972 = vmatprep.subr.mxu0 0.0
        %1973 = vmatpush1.msra.mxu0 0.0
        %1974 = vmatprep.subr.mxu0 0.0
        %1975 = vmatpush1.msra.mxu0 0.0
        %1976 = vmatprep.subr.mxu0 0.0
        %1977 = vmatpush1.msra.mxu0 0.0
        %1978 = vmatprep.subr.mxu0 0.0
        %1979 = vmatpush1.msra.mxu0 0.0
        %1980 = vmatprep.subr.mxu0 0.0
        %1981 = vmatpush1.msra.mxu0 0.0
        %1982 = vmatprep.subr.mxu0 0.0
        %1983 = vmatpush1.msra.mxu0 0.0
        %1984 = vmatprep.subr.mxu0 0.0
        %1985 = vmatpush1.msra.mxu0 0.0
        %1986 = vmatprep.subr.mxu0 0.0
        %1987 = vmatpush1.msra.mxu0 0.0
        %1988 = vmatprep.subr.mxu0 0.0
        %1989 = vmatpush1.msra.mxu0 %v1956
        %1990 = vmatprep.subr.mxu0 0.0
        %1991 = vmatpush1.msra.mxu0 %v1955
        %1992 = vmatprep.subr.mxu0 0.0
        %1993 = vmatpush2.msra.mxu0 0.0
        %1994 = vmatprep.subr.mxu0 0.0
        %1995 = vmatpush2.msra.mxu0 0.0
        %1996 = vmatprep.subr.mxu0 0.0
        %1997 = vmatpush2.msra.mxu0 0.0
        %1998 = vmatprep.subr.mxu0 0.0
        %1999 = vmatpush2.msra.mxu0 0.0
        %2000 = vmatprep.subr.mxu0 0.0
        %2001 = vmatpush2.msra.mxu0 0.0
        %2002 = vmatprep.subr.mxu0 0.0
        %2003 = vmatpush2.msra.mxu0 0.0
        %2004 = vmatprep.subr.mxu0 0.0
        %2005 = vmatpush2.msra.mxu0 0.0
        %2006 = vmatprep.subr.mxu0 0.0
        %2007 = vmatpush2.msra.mxu0 0.0
        %2008 = vmatprep.subr.mxu0 0.0
        %2009 = vmatpush2.msra.mxu0 0.0
        %2010 = vmatprep.subr.mxu0 0.0
        %2011 = vmatpush2.msra.mxu0 0.0
        %2012 = vmatprep.subr.mxu0 0.0
        %2013 = vmatpush2.msra.mxu0 0.0
        %2014 = vmatprep.subr.mxu0 0.0
        %2015 = vmatpush2.msra.mxu0 0.0
        %2016 = vmatprep.subr.mxu0 0.0
        %2017 = vmatpush2.msra.mxu0 0.0
        %2018 = vmatprep.subr.mxu0 0.0
        %2019 = vmatpush2.msra.mxu0 0.0
        %2020 = vmatprep.subr.mxu0 0.0
        %2021 = vmatpush2.msra.mxu0 0.0
        %2022 = vmatprep.subr.mxu0 0.0
        %2023 = vmatpush2.msra.mxu0 0.0
        %2024 = vmatprep.mubr.f32.mxu0 0.0
        %2025 = vmatmul.mubr.f32.gmra.mxu0 %v1695
        %v2026 = vpop.f32.mrf.mxu0
        %v2027 = vadd.f32 0.0, %v2026
        %v2028 = vpop.f32.mrf.mxu0
        %2029 = vmatprep.mubr.f32.mxu0 0.0
        %2030 = vmatmul.mubr.f32.gmra.mxu0 %v1698
        %v2031 = vpop.f32.mrf.mxu0
        %v2032 = vadd.f32 0.0, %v2031
        %v2033 = vpop.f32.mrf.mxu0
        %2034 = vmatprep.mubr.f32.mxu0 0.0
        %2035 = vmatmul.mubr.f32.gmra.mxu0 %v1701
        %v2036 = vpop.f32.mrf.mxu0
        %v2037 = vadd.f32 0.0, %v2036
        %v2038 = vpop.f32.mrf.mxu0
        %2039 = vmatprep.mubr.f32.mxu0 0.0
        %2040 = vmatmul.mubr.f32.gmra.mxu0 %v1704
        %v2041 = vpop.f32.mrf.mxu0
        %v2042 = vadd.f32 0.0, %v2041
        %v2043 = vpop.f32.mrf.mxu0
        %2044 = vmatprep.mubr.f32.mxu0 0.0
        %2045 = vmatmul.mubr.f32.gmra.mxu0 %v1707
        %v2046 = vpop.f32.mrf.mxu0
        %v2047 = vadd.f32 0.0, %v2046
        %v2048 = vpop.f32.mrf.mxu0
        %2049 = vmatprep.mubr.f32.mxu0 0.0
        %2050 = vmatmul.mubr.f32.gmra.mxu0 %v1710
        %v2051 = vpop.f32.mrf.mxu0
        %v2052 = vadd.f32 0.0, %v2051
        %v2053 = vpop.f32.mrf.mxu0
        %2054 = vmatprep.mubr.f32.mxu0 0.0
        %2055 = vmatmul.mubr.f32.gmra.mxu0 %v1713
        %v2056 = vpop.f32.mrf.mxu0
        %v2057 = vadd.f32 0.0, %v2056
        %v2058 = vpop.f32.mrf.mxu0
        %2059 = vmatprep.mubr.f32.mxu0 0.0
        %2060 = vmatmul.mubr.f32.gmra.mxu0 %v1716
        %v2061 = vpop.f32.mrf.mxu0
        %v2062 = vadd.f32 0.0, %v2061
        %v2063 = vpop.f32.mrf.mxu0
        %2064 = vmatprep.mubr.f32.mxu0 0.0
        %2065 = vmatmul.mubr.f32.gmra.mxu0 %v1719
        %v2066 = vpop.f32.mrf.mxu0
        %v2067 = vadd.f32 0.0, %v2066
        %v2068 = vpop.f32.mrf.mxu0
        %2069 = vmatprep.mubr.f32.mxu0 0.0
        %2070 = vmatmul.mubr.f32.gmra.mxu0 %v1958
        %v2071 = vpop.f32.mrf.mxu0
        %v2072 = vadd.f32 0.0, %v2071
        %v2073 = vpop.f32.mrf.mxu0
        %2074 = vdwg.mxu0
        %v2075 = vadd.f32 %v1906, %v2027
        %v2076 = vadd.f32 %v1911, %v2032
        %v2077 = vadd.f32 %v1916, %v2037
        %v2078 = vadd.f32 %v1921, %v2042
        %v2079 = vadd.f32 %v1926, %v2047
        %v2080 = vadd.f32 %v1931, %v2052
        %v2081 = vadd.f32 %v1936, %v2057
        %v2082 = vadd.f32 %v1941, %v2062
        %v2083 = vadd.f32 %v1946, %v2067
        %v2084 = vadd.f32 %v1951, %v2072
        %v2085 = vld [vmem:[%s7] sm:$0x1]
        %v2087 = vlaneseq
        %v2088 = vshrl.u32 %v2087, 7
        %v2089 = vsub.s32 0, %v2088
        %v2090 = vrot.slane %v2085, %v2089
        %v2092 = vadd.f32 %v2075, %v2090
        %v2093 = vadd.f32 %v2076, %v2090
        %v2094 = vadd.f32 %v2077, %v2090
        %v2095 = vadd.f32 %v2078, %v2090
        %v2096 = vadd.f32 %v2079, %v2090
        %v2097 = vadd.f32 %v2080, %v2090
        %v2098 = vadd.f32 %v2081, %v2090
        %v2099 = vadd.f32 %v2082, %v2090
        %v2100 = vadd.f32 %v2083, %v2090
        %v2101 = vadd.f32 %v2084, %v2090
        %v2102 = vmax.f32 %v2092, 0.0
        %v2103 = vmax.f32 %v2093, 0.0
        %v2104 = vmax.f32 %v2094, 0.0
        %v2105 = vmax.f32 %v2095, 0.0
        %v2106 = vmax.f32 %v2096, 0.0
        %v2107 = vmax.f32 %v2097, 0.0
        %v2108 = vmax.f32 %v2098, 0.0
        %v2109 = vmax.f32 %v2099, 0.0
        %v2110 = vmax.f32 %v2100, 0.0
        %v2111 = vmax.f32 %v2101, 0.0
        %v2112 = vld [vmem:[%s8] sm:$0xff]
        %v2113 = vld [vmem:[%s8 + $0x8] sm:$0xff]
        %s2114 = scalar_lea.vmem %s8, 16
        %v2115 = vld [vmem:[%s2114] sm:$0xff]
        %v2116 = vld [vmem:[%s2114 + $0x8] sm:$0xff]
        %v2118 = vsel %vm1222, %v2103, 0
        %v2121 = vsel %vm1222, %v2104, 0
        %v2124 = vsel %vm1222, %v2105, 0
        %v2127 = vsel %vm1222, %v2106, 0
        %v2130 = vsel %vm1222, %v2107, 0
        %v2133 = vsel %vm1222, %v2108, 0
        %v2136 = vsel %vm1222, %v2109, 0
        %v2139 = vsel %vm1222, %v2110, 0
        %2141 = vmatprep.subr.mxu0 0.0
        %2142 = vmatpush1.msra.mxu0 0.0
        %2143 = vmatprep.subr.mxu0 0.0
        %2144 = vmatpush1.msra.mxu0 0.0
        %2145 = vmatprep.subr.mxu0 0.0
        %2146 = vmatpush1.msra.mxu0 0.0
        %2147 = vmatprep.subr.mxu0 0.0
        %2148 = vmatpush1.msra.mxu0 0.0
        %2149 = vmatprep.subr.mxu0 0.0
        %2150 = vmatpush1.msra.mxu0 0.0
        %2151 = vmatprep.subr.mxu0 0.0
        %2152 = vmatpush1.msra.mxu0 0.0
        %2153 = vmatprep.subr.mxu0 0.0
        %2154 = vmatpush1.msra.mxu0 0.0
        %2155 = vmatprep.subr.mxu0 0.0
        %2156 = vmatpush1.msra.mxu0 0.0
        %2157 = vmatprep.subr.mxu0 0.0
        %2158 = vmatpush1.msra.mxu0 0.0
        %2159 = vmatprep.subr.mxu0 0.0
        %2160 = vmatpush1.msra.mxu0 0.0
        %2161 = vmatprep.subr.mxu0 0.0
        %2162 = vmatpush1.msra.mxu0 0.0
        %2163 = vmatprep.subr.mxu0 0.0
        %2164 = vmatpush1.msra.mxu0 0.0
        %2165 = vmatprep.subr.mxu0 0.0
        %2166 = vmatpush1.msra.mxu0 0.0
        %2167 = vmatprep.subr.mxu0 0.0
        %2168 = vmatpush1.msra.mxu0 0.0
        %2169 = vmatprep.subr.mxu0 0.0
        %2170 = vmatpush1.msra.mxu0 %v2116
        %2171 = vmatprep.subr.mxu0 0.0
        %2172 = vmatpush1.msra.mxu0 %v2115
        %2173 = vmatprep.subr.mxu0 0.0
        %2174 = vmatpush2.msra.mxu0 0.0
        %2175 = vmatprep.subr.mxu0 0.0
        %2176 = vmatpush2.msra.mxu0 0.0
        %2177 = vmatprep.subr.mxu0 0.0
        %2178 = vmatpush2.msra.mxu0 0.0
        %2179 = vmatprep.subr.mxu0 0.0
        %2180 = vmatpush2.msra.mxu0 0.0
        %2181 = vmatprep.subr.mxu0 0.0
        %2182 = vmatpush2.msra.mxu0 0.0
        %2183 = vmatprep.subr.mxu0 0.0
        %2184 = vmatpush2.msra.mxu0 0.0
        %2185 = vmatprep.subr.mxu0 0.0
        %2186 = vmatpush2.msra.mxu0 0.0
        %2187 = vmatprep.subr.mxu0 0.0
        %2188 = vmatpush2.msra.mxu0 0.0
        %2189 = vmatprep.subr.mxu0 0.0
        %2190 = vmatpush2.msra.mxu0 0.0
        %2191 = vmatprep.subr.mxu0 0.0
        %2192 = vmatpush2.msra.mxu0 0.0
        %2193 = vmatprep.subr.mxu0 0.0
        %2194 = vmatpush2.msra.mxu0 0.0
        %2195 = vmatprep.subr.mxu0 0.0
        %2196 = vmatpush2.msra.mxu0 0.0
        %2197 = vmatprep.subr.mxu0 0.0
        %2198 = vmatpush2.msra.mxu0 0.0
        %2199 = vmatprep.subr.mxu0 0.0
        %2200 = vmatpush2.msra.mxu0 0.0
        %2201 = vmatprep.subr.mxu0 0.0
        %2202 = vmatpush2.msra.mxu0 0.0
        %2203 = vmatprep.subr.mxu0 0.0
        %2204 = vmatpush2.msra.mxu0 0.0
        %2205 = vmatprep.mubr.f32.mxu0 0.0
        %2206 = vmatmul.mubr.f32.gmra.mxu0 %v2118
        %v2207 = vpop.f32.mrf.mxu0
        %v2208 = vadd.f32 0.0, %v2207
        %v2209 = vpop.f32.mrf.mxu0
        %2210 = vmatprep.mubr.f32.mxu0 0.0
        %2211 = vmatmul.mubr.f32.gmra.mxu0 %v2121
        %v2212 = vpop.f32.mrf.mxu0
        %v2213 = vadd.f32 0.0, %v2212
        %v2214 = vpop.f32.mrf.mxu0
        %2215 = vmatprep.mubr.f32.mxu0 0.0
        %2216 = vmatmul.mubr.f32.gmra.mxu0 %v2124
        %v2217 = vpop.f32.mrf.mxu0
        %v2218 = vadd.f32 0.0, %v2217
        %v2219 = vpop.f32.mrf.mxu0
        %2220 = vmatprep.mubr.f32.mxu0 0.0
        %2221 = vmatmul.mubr.f32.gmra.mxu0 %v2127
        %v2222 = vpop.f32.mrf.mxu0
        %v2223 = vadd.f32 0.0, %v2222
        %v2224 = vpop.f32.mrf.mxu0
        %2225 = vmatprep.mubr.f32.mxu0 0.0
        %2226 = vmatmul.mubr.f32.gmra.mxu0 %v2130
        %v2227 = vpop.f32.mrf.mxu0
        %v2228 = vadd.f32 0.0, %v2227
        %v2229 = vpop.f32.mrf.mxu0
        %2230 = vmatprep.mubr.f32.mxu0 0.0
        %2231 = vmatmul.mubr.f32.gmra.mxu0 %v2133
        %v2232 = vpop.f32.mrf.mxu0
        %v2233 = vadd.f32 0.0, %v2232
        %v2234 = vpop.f32.mrf.mxu0
        %2235 = vmatprep.mubr.f32.mxu0 0.0
        %2236 = vmatmul.mubr.f32.gmra.mxu0 %v2136
        %v2237 = vpop.f32.mrf.mxu0
        %v2238 = vadd.f32 0.0, %v2237
        %v2239 = vpop.f32.mrf.mxu0
        %2240 = vmatprep.mubr.f32.mxu0 0.0
        %2241 = vmatmul.mubr.f32.gmra.mxu0 %v2139
        %v2242 = vpop.f32.mrf.mxu0
        %v2243 = vadd.f32 0.0, %v2242
        %v2244 = vpop.f32.mrf.mxu0
        %2245 = vdwg.mxu0
        %v2247 = vsel %vm1222, %v2102, 0
        %2249 = vmatprep.subr.mxu0 0.0
        %2250 = vmatpush1.msra.mxu0 0.0
        %2251 = vmatprep.subr.mxu0 0.0
        %2252 = vmatpush1.msra.mxu0 0.0
        %2253 = vmatprep.subr.mxu0 0.0
        %2254 = vmatpush1.msra.mxu0 0.0
        %2255 = vmatprep.subr.mxu0 0.0
        %2256 = vmatpush1.msra.mxu0 0.0
        %2257 = vmatprep.subr.mxu0 0.0
        %2258 = vmatpush1.msra.mxu0 0.0
        %2259 = vmatprep.subr.mxu0 0.0
        %2260 = vmatpush1.msra.mxu0 0.0
        %2261 = vmatprep.subr.mxu0 0.0
        %2262 = vmatpush1.msra.mxu0 0.0
        %2263 = vmatprep.subr.mxu0 0.0
        %2264 = vmatpush1.msra.mxu0 0.0
        %2265 = vmatprep.subr.mxu0 0.0
        %2266 = vmatpush1.msra.mxu0 0.0
        %2267 = vmatprep.subr.mxu0 0.0
        %2268 = vmatpush1.msra.mxu0 0.0
        %2269 = vmatprep.subr.mxu0 0.0
        %2270 = vmatpush1.msra.mxu0 0.0
        %2271 = vmatprep.subr.mxu0 0.0
        %2272 = vmatpush1.msra.mxu0 0.0
        %2273 = vmatprep.subr.mxu0 0.0
        %2274 = vmatpush1.msra.mxu0 0.0
        %2275 = vmatprep.subr.mxu0 0.0
        %2276 = vmatpush1.msra.mxu0 0.0
        %2277 = vmatprep.subr.mxu0 0.0
        %2278 = vmatpush1.msra.mxu0 %v2113
        %2279 = vmatprep.subr.mxu0 0.0
        %2280 = vmatpush1.msra.mxu0 %v2112
        %2281 = vmatprep.subr.mxu0 0.0
        %2282 = vmatpush2.msra.mxu0 0.0
        %2283 = vmatprep.subr.mxu0 0.0
        %2284 = vmatpush2.msra.mxu0 0.0
        %2285 = vmatprep.subr.mxu0 0.0
        %2286 = vmatpush2.msra.mxu0 0.0
        %2287 = vmatprep.subr.mxu0 0.0
        %2288 = vmatpush2.msra.mxu0 0.0
        %2289 = vmatprep.subr.mxu0 0.0
        %2290 = vmatpush2.msra.mxu0 0.0
        %2291 = vmatprep.subr.mxu0 0.0
        %2292 = vmatpush2.msra.mxu0 0.0
        %2293 = vmatprep.subr.mxu0 0.0
        %2294 = vmatpush2.msra.mxu0 0.0
        %2295 = vmatprep.subr.mxu0 0.0
        %2296 = vmatpush2.msra.mxu0 0.0
        %2297 = vmatprep.subr.mxu0 0.0
        %2298 = vmatpush2.msra.mxu0 0.0
        %2299 = vmatprep.subr.mxu0 0.0
        %2300 = vmatpush2.msra.mxu0 0.0
        %2301 = vmatprep.subr.mxu0 0.0
        %2302 = vmatpush2.msra.mxu0 0.0
        %2303 = vmatprep.subr.mxu0 0.0
        %2304 = vmatpush2.msra.mxu0 0.0
        %2305 = vmatprep.subr.mxu0 0.0
        %2306 = vmatpush2.msra.mxu0 0.0
        %2307 = vmatprep.subr.mxu0 0.0
        %2308 = vmatpush2.msra.mxu0 0.0
        %2309 = vmatprep.subr.mxu0 0.0
        %2310 = vmatpush2.msra.mxu0 0.0
        %2311 = vmatprep.subr.mxu0 0.0
        %2312 = vmatpush2.msra.mxu0 0.0
        %2313 = vmatprep.mubr.f32.mxu0 0.0
        %2314 = vmatmul.mubr.f32.gmra.mxu0 %v2247
        %v2315 = vpop.f32.mrf.mxu0
        %v2316 = vadd.f32 %v2208, %v2315
        %v2317 = vpop.f32.mrf.mxu0
        %2318 = vmatprep.mubr.f32.mxu0 0.0
        %2319 = vmatmul.mubr.f32.gmra.mxu0 %v2118
        %v2320 = vpop.f32.mrf.mxu0
        %v2321 = vadd.f32 %v2213, %v2320
        %v2322 = vpop.f32.mrf.mxu0
        %2323 = vmatprep.mubr.f32.mxu0 0.0
        %2324 = vmatmul.mubr.f32.gmra.mxu0 %v2121
        %v2325 = vpop.f32.mrf.mxu0
        %v2326 = vadd.f32 %v2218, %v2325
        %v2327 = vpop.f32.mrf.mxu0
        %2328 = vmatprep.mubr.f32.mxu0 0.0
        %2329 = vmatmul.mubr.f32.gmra.mxu0 %v2124
        %v2330 = vpop.f32.mrf.mxu0
        %v2331 = vadd.f32 %v2223, %v2330
        %v2332 = vpop.f32.mrf.mxu0
        %2333 = vmatprep.mubr.f32.mxu0 0.0
        %2334 = vmatmul.mubr.f32.gmra.mxu0 %v2127
        %v2335 = vpop.f32.mrf.mxu0
        %v2336 = vadd.f32 %v2228, %v2335
        %v2337 = vpop.f32.mrf.mxu0
        %2338 = vmatprep.mubr.f32.mxu0 0.0
        %2339 = vmatmul.mubr.f32.gmra.mxu0 %v2130
        %v2340 = vpop.f32.mrf.mxu0
        %v2341 = vadd.f32 %v2233, %v2340
        %v2342 = vpop.f32.mrf.mxu0
        %2343 = vmatprep.mubr.f32.mxu0 0.0
        %2344 = vmatmul.mubr.f32.gmra.mxu0 %v2133
        %v2345 = vpop.f32.mrf.mxu0
        %v2346 = vadd.f32 %v2238, %v2345
        %v2347 = vpop.f32.mrf.mxu0
        %2348 = vmatprep.mubr.f32.mxu0 0.0
        %2349 = vmatmul.mubr.f32.gmra.mxu0 %v2136
        %v2350 = vpop.f32.mrf.mxu0
        %v2351 = vadd.f32 %v2243, %v2350
        %v2352 = vpop.f32.mrf.mxu0
        %2353 = vdwg.mxu0
        %s2354 = scalar_lea.vmem %s8, 32
        %v2355 = vld [vmem:[%s2354] sm:$0xff]
        %v2356 = vld [vmem:[%s2354 + $0x8] sm:$0xff]
        %v2358 = vsel %vm1222, %v2111, 0
        %2360 = vmatprep.subr.mxu0 0.0
        %2361 = vmatpush1.msra.mxu0 0.0
        %2362 = vmatprep.subr.mxu0 0.0
        %2363 = vmatpush1.msra.mxu0 0.0
        %2364 = vmatprep.subr.mxu0 0.0
        %2365 = vmatpush1.msra.mxu0 0.0
        %2366 = vmatprep.subr.mxu0 0.0
        %2367 = vmatpush1.msra.mxu0 0.0
        %2368 = vmatprep.subr.mxu0 0.0
        %2369 = vmatpush1.msra.mxu0 0.0
        %2370 = vmatprep.subr.mxu0 0.0
        %2371 = vmatpush1.msra.mxu0 0.0
        %2372 = vmatprep.subr.mxu0 0.0
        %2373 = vmatpush1.msra.mxu0 0.0
        %2374 = vmatprep.subr.mxu0 0.0
        %2375 = vmatpush1.msra.mxu0 0.0
        %2376 = vmatprep.subr.mxu0 0.0
        %2377 = vmatpush1.msra.mxu0 0.0
        %2378 = vmatprep.subr.mxu0 0.0
        %2379 = vmatpush1.msra.mxu0 0.0
        %2380 = vmatprep.subr.mxu0 0.0
        %2381 = vmatpush1.msra.mxu0 0.0
        %2382 = vmatprep.subr.mxu0 0.0
        %2383 = vmatpush1.msra.mxu0 0.0
        %2384 = vmatprep.subr.mxu0 0.0
        %2385 = vmatpush1.msra.mxu0 0.0
        %2386 = vmatprep.subr.mxu0 0.0
        %2387 = vmatpush1.msra.mxu0 0.0
        %2388 = vmatprep.subr.mxu0 0.0
        %2389 = vmatpush1.msra.mxu0 %v2356
        %2390 = vmatprep.subr.mxu0 0.0
        %2391 = vmatpush1.msra.mxu0 %v2355
        %2392 = vmatprep.subr.mxu0 0.0
        %2393 = vmatpush2.msra.mxu0 0.0
        %2394 = vmatprep.subr.mxu0 0.0
        %2395 = vmatpush2.msra.mxu0 0.0
        %2396 = vmatprep.subr.mxu0 0.0
        %2397 = vmatpush2.msra.mxu0 0.0
        %2398 = vmatprep.subr.mxu0 0.0
        %2399 = vmatpush2.msra.mxu0 0.0
        %2400 = vmatprep.subr.mxu0 0.0
        %2401 = vmatpush2.msra.mxu0 0.0
        %2402 = vmatprep.subr.mxu0 0.0
        %2403 = vmatpush2.msra.mxu0 0.0
        %2404 = vmatprep.subr.mxu0 0.0
        %2405 = vmatpush2.msra.mxu0 0.0
        %2406 = vmatprep.subr.mxu0 0.0
        %2407 = vmatpush2.msra.mxu0 0.0
        %2408 = vmatprep.subr.mxu0 0.0
        %2409 = vmatpush2.msra.mxu0 0.0
        %2410 = vmatprep.subr.mxu0 0.0
        %2411 = vmatpush2.msra.mxu0 0.0
        %2412 = vmatprep.subr.mxu0 0.0
        %2413 = vmatpush2.msra.mxu0 0.0
        %2414 = vmatprep.subr.mxu0 0.0
        %2415 = vmatpush2.msra.mxu0 0.0
        %2416 = vmatprep.subr.mxu0 0.0
        %2417 = vmatpush2.msra.mxu0 0.0
        %2418 = vmatprep.subr.mxu0 0.0
        %2419 = vmatpush2.msra.mxu0 0.0
        %2420 = vmatprep.subr.mxu0 0.0
        %2421 = vmatpush2.msra.mxu0 0.0
        %2422 = vmatprep.subr.mxu0 0.0
        %2423 = vmatpush2.msra.mxu0 0.0
        %2424 = vmatprep.mubr.f32.mxu0 0.0
        %2425 = vmatmul.mubr.f32.gmra.mxu0 %v2121
        %v2426 = vpop.f32.mrf.mxu0
        %v2427 = vadd.f32 0.0, %v2426
        %v2428 = vpop.f32.mrf.mxu0
        %2429 = vmatprep.mubr.f32.mxu0 0.0
        %2430 = vmatmul.mubr.f32.gmra.mxu0 %v2124
        %v2431 = vpop.f32.mrf.mxu0
        %v2432 = vadd.f32 0.0, %v2431
        %v2433 = vpop.f32.mrf.mxu0
        %2434 = vmatprep.mubr.f32.mxu0 0.0
        %2435 = vmatmul.mubr.f32.gmra.mxu0 %v2127
        %v2436 = vpop.f32.mrf.mxu0
        %v2437 = vadd.f32 0.0, %v2436
        %v2438 = vpop.f32.mrf.mxu0
        %2439 = vmatprep.mubr.f32.mxu0 0.0
        %2440 = vmatmul.mubr.f32.gmra.mxu0 %v2130
        %v2441 = vpop.f32.mrf.mxu0
        %v2442 = vadd.f32 0.0, %v2441
        %v2443 = vpop.f32.mrf.mxu0
        %2444 = vmatprep.mubr.f32.mxu0 0.0
        %2445 = vmatmul.mubr.f32.gmra.mxu0 %v2133
        %v2446 = vpop.f32.mrf.mxu0
        %v2447 = vadd.f32 0.0, %v2446
        %v2448 = vpop.f32.mrf.mxu0
        %2449 = vmatprep.mubr.f32.mxu0 0.0
        %2450 = vmatmul.mubr.f32.gmra.mxu0 %v2136
        %v2451 = vpop.f32.mrf.mxu0
        %v2452 = vadd.f32 0.0, %v2451
        %v2453 = vpop.f32.mrf.mxu0
        %2454 = vmatprep.mubr.f32.mxu0 0.0
        %2455 = vmatmul.mubr.f32.gmra.mxu0 %v2139
        %v2456 = vpop.f32.mrf.mxu0
        %v2457 = vadd.f32 0.0, %v2456
        %v2458 = vpop.f32.mrf.mxu0
        %2459 = vmatprep.mubr.f32.mxu0 0.0
        %2460 = vmatmul.mubr.f32.gmra.mxu0 %v2358
        %v2461 = vpop.f32.mrf.mxu0
        %v2462 = vadd.f32 0.0, %v2461
        %v2463 = vpop.f32.mrf.mxu0
        %2464 = vdwg.mxu0
        %v2465 = vadd.f32 %v2316, %v2427
        %v2466 = vadd.f32 %v2321, %v2432
        %v2467 = vadd.f32 %v2326, %v2437
        %v2468 = vadd.f32 %v2331, %v2442
        %v2469 = vadd.f32 %v2336, %v2447
        %v2470 = vadd.f32 %v2341, %v2452
        %v2471 = vadd.f32 %v2346, %v2457
        %v2472 = vadd.f32 %v2351, %v2462
        %v2473 = vld [vmem:[%s9] sm:$0x1]
        %v2475 = vlaneseq
        %v2476 = vshrl.u32 %v2475, 7
        %v2477 = vsub.s32 0, %v2476
        %v2478 = vrot.slane %v2473, %v2477
        %v2480 = vadd.f32 %v2465, %v2478
        %v2481 = vadd.f32 %v2466, %v2478
        %v2482 = vadd.f32 %v2467, %v2478
        %v2483 = vadd.f32 %v2468, %v2478
        %v2484 = vadd.f32 %v2469, %v2478
        %v2485 = vadd.f32 %v2470, %v2478
        %v2486 = vadd.f32 %v2471, %v2478
        %v2487 = vadd.f32 %v2472, %v2478
        %v2488 = vmax.f32 %v2480, 0.0
        %v2489 = vmax.f32 %v2481, 0.0
        %v2490 = vmax.f32 %v2482, 0.0
        %v2491 = vmax.f32 %v2483, 0.0
        %v2492 = vmax.f32 %v2484, 0.0
        %v2493 = vmax.f32 %v2485, 0.0
        %v2494 = vmax.f32 %v2486, 0.0
        %v2495 = vmax.f32 %v2487, 0.0
        %v2496 = vld [vmem:[%s10] sm:$0xff]
        %v2497 = vld [vmem:[%s10 + $0x8] sm:$0xff]
        %v2499 = vsel %vm1222, %v2488, 0
        %v2502 = vsel %vm1222, %v2489, 0
        %v2505 = vsel %vm1222, %v2490, 0
        %v2508 = vsel %vm1222, %v2491, 0
        %v2511 = vsel %vm1222, %v2492, 0
        %v2514 = vsel %vm1222, %v2493, 0
        %v2517 = vsel %vm1222, %v2494, 0
        %v2520 = vsel %vm1222, %v2495, 0
        %2522 = vmatprep.subr.mxu0 0.0
        %2523 = vmatpush1.msra.mxu0 0.0
        %2524 = vmatprep.subr.mxu0 0.0
        %2525 = vmatpush1.msra.mxu0 0.0
        %2526 = vmatprep.subr.mxu0 0.0
        %2527 = vmatpush1.msra.mxu0 0.0
        %2528 = vmatprep.subr.mxu0 0.0
        %2529 = vmatpush1.msra.mxu0 0.0
        %2530 = vmatprep.subr.mxu0 0.0
        %2531 = vmatpush1.msra.mxu0 0.0
        %2532 = vmatprep.subr.mxu0 0.0
        %2533 = vmatpush1.msra.mxu0 0.0
        %2534 = vmatprep.subr.mxu0 0.0
        %2535 = vmatpush1.msra.mxu0 0.0
        %2536 = vmatprep.subr.mxu0 0.0
        %2537 = vmatpush1.msra.mxu0 0.0
        %2538 = vmatprep.subr.mxu0 0.0
        %2539 = vmatpush1.msra.mxu0 0.0
        %2540 = vmatprep.subr.mxu0 0.0
        %2541 = vmatpush1.msra.mxu0 0.0
        %2542 = vmatprep.subr.mxu0 0.0
        %2543 = vmatpush1.msra.mxu0 0.0
        %2544 = vmatprep.subr.mxu0 0.0
        %2545 = vmatpush1.msra.mxu0 0.0
        %2546 = vmatprep.subr.mxu0 0.0
        %2547 = vmatpush1.msra.mxu0 0.0
        %2548 = vmatprep.subr.mxu0 0.0
        %2549 = vmatpush1.msra.mxu0 0.0
        %2550 = vmatprep.subr.mxu0 0.0
        %2551 = vmatpush1.msra.mxu0 %v2497
        %2552 = vmatprep.subr.mxu0 0.0
        %2553 = vmatpush1.msra.mxu0 %v2496
        %2554 = vmatprep.subr.mxu0 0.0
        %2555 = vmatpush2.msra.mxu0 0.0
        %2556 = vmatprep.subr.mxu0 0.0
        %2557 = vmatpush2.msra.mxu0 0.0
        %2558 = vmatprep.subr.mxu0 0.0
        %2559 = vmatpush2.msra.mxu0 0.0
        %2560 = vmatprep.subr.mxu0 0.0
        %2561 = vmatpush2.msra.mxu0 0.0
        %2562 = vmatprep.subr.mxu0 0.0
        %2563 = vmatpush2.msra.mxu0 0.0
        %2564 = vmatprep.subr.mxu0 0.0
        %2565 = vmatpush2.msra.mxu0 0.0
        %2566 = vmatprep.subr.mxu0 0.0
        %2567 = vmatpush2.msra.mxu0 0.0
        %2568 = vmatprep.subr.mxu0 0.0
        %2569 = vmatpush2.msra.mxu0 0.0
        %2570 = vmatprep.subr.mxu0 0.0
        %2571 = vmatpush2.msra.mxu0 0.0
        %2572 = vmatprep.subr.mxu0 0.0
        %2573 = vmatpush2.msra.mxu0 0.0
        %2574 = vmatprep.subr.mxu0 0.0
        %2575 = vmatpush2.msra.mxu0 0.0
        %2576 = vmatprep.subr.mxu0 0.0
        %2577 = vmatpush2.msra.mxu0 0.0
        %2578 = vmatprep.subr.mxu0 0.0
        %2579 = vmatpush2.msra.mxu0 0.0
        %2580 = vmatprep.subr.mxu0 0.0
        %2581 = vmatpush2.msra.mxu0 0.0
        %2582 = vmatprep.subr.mxu0 0.0
        %2583 = vmatpush2.msra.mxu0 0.0
        %2584 = vmatprep.subr.mxu0 0.0
        %2585 = vmatpush2.msra.mxu0 0.0
        %2586 = vmatprep.mubr.f32.mxu0 0.0
        %2587 = vmatmul.mubr.f32.gmra.mxu0 %v2499
        %v2588 = vpop.f32.mrf.mxu0
        %v2589 = vadd.f32 0.0, %v2588
        %v2590 = vpop.f32.mrf.mxu0
        %2591 = vmatprep.mubr.f32.mxu0 0.0
        %2592 = vmatmul.mubr.f32.gmra.mxu0 %v2502
        %v2593 = vpop.f32.mrf.mxu0
        %v2594 = vadd.f32 0.0, %v2593
        %v2595 = vpop.f32.mrf.mxu0
        %2596 = vmatprep.mubr.f32.mxu0 0.0
        %2597 = vmatmul.mubr.f32.gmra.mxu0 %v2505
        %v2598 = vpop.f32.mrf.mxu0
        %v2599 = vadd.f32 0.0, %v2598
        %v2600 = vpop.f32.mrf.mxu0
        %2601 = vmatprep.mubr.f32.mxu0 0.0
        %2602 = vmatmul.mubr.f32.gmra.mxu0 %v2508
        %v2603 = vpop.f32.mrf.mxu0
        %v2604 = vadd.f32 0.0, %v2603
        %v2605 = vpop.f32.mrf.mxu0
        %2606 = vmatprep.mubr.f32.mxu0 0.0
        %2607 = vmatmul.mubr.f32.gmra.mxu0 %v2511
        %v2608 = vpop.f32.mrf.mxu0
        %v2609 = vadd.f32 0.0, %v2608
        %v2610 = vpop.f32.mrf.mxu0
        %2611 = vmatprep.mubr.f32.mxu0 0.0
        %2612 = vmatmul.mubr.f32.gmra.mxu0 %v2514
        %v2613 = vpop.f32.mrf.mxu0
        %v2614 = vadd.f32 0.0, %v2613
        %v2615 = vpop.f32.mrf.mxu0
        %2616 = vmatprep.mubr.f32.mxu0 0.0
        %2617 = vmatmul.mubr.f32.gmra.mxu0 %v2517
        %v2618 = vpop.f32.mrf.mxu0
        %v2619 = vadd.f32 0.0, %v2618
        %v2620 = vpop.f32.mrf.mxu0
        %2621 = vmatprep.mubr.f32.mxu0 0.0
        %2622 = vmatmul.mubr.f32.gmra.mxu0 %v2520
        %v2623 = vpop.f32.mrf.mxu0
        %v2624 = vadd.f32 0.0, %v2623
        %v2625 = vpop.f32.mrf.mxu0
        %2626 = vdwg.mxu0
        %v2627 = vld [vmem:[%s11] sm:$0xff]
        %v2628 = vld [vmem:[%s11 + $0x8] sm:$0xff]
        %2629 = vmatprep.subr.mxu0 0.0
        %2630 = vmatpush1.msra.mxu0 0.0
        %2631 = vmatprep.subr.mxu0 0.0
        %2632 = vmatpush1.msra.mxu0 0.0
        %2633 = vmatprep.subr.mxu0 0.0
        %2634 = vmatpush1.msra.mxu0 0.0
        %2635 = vmatprep.subr.mxu0 0.0
        %2636 = vmatpush1.msra.mxu0 0.0
        %2637 = vmatprep.subr.mxu0 0.0
        %2638 = vmatpush1.msra.mxu0 0.0
        %2639 = vmatprep.subr.mxu0 0.0
        %2640 = vmatpush1.msra.mxu0 0.0
        %2641 = vmatprep.subr.mxu0 0.0
        %2642 = vmatpush1.msra.mxu0 0.0
        %2643 = vmatprep.subr.mxu0 0.0
        %2644 = vmatpush1.msra.mxu0 0.0
        %2645 = vmatprep.subr.mxu0 0.0
        %2646 = vmatpush1.msra.mxu0 0.0
        %2647 = vmatprep.subr.mxu0 0.0
        %2648 = vmatpush1.msra.mxu0 0.0
        %2649 = vmatprep.subr.mxu0 0.0
        %2650 = vmatpush1.msra.mxu0 0.0
        %2651 = vmatprep.subr.mxu0 0.0
        %2652 = vmatpush1.msra.mxu0 0.0
        %2653 = vmatprep.subr.mxu0 0.0
        %2654 = vmatpush1.msra.mxu0 0.0
        %2655 = vmatprep.subr.mxu0 0.0
        %2656 = vmatpush1.msra.mxu0 0.0
        %2657 = vmatprep.subr.mxu0 0.0
        %2658 = vmatpush1.msra.mxu0 %v2628
        %2659 = vmatprep.subr.mxu0 0.0
        %2660 = vmatpush1.msra.mxu0 %v2627
        %2661 = vmatprep.subr.mxu0 0.0
        %2662 = vmatpush2.msra.mxu0 0.0
        %2663 = vmatprep.subr.mxu0 0.0
        %2664 = vmatpush2.msra.mxu0 0.0
        %2665 = vmatprep.subr.mxu0 0.0
        %2666 = vmatpush2.msra.mxu0 0.0
        %2667 = vmatprep.subr.mxu0 0.0
        %2668 = vmatpush2.msra.mxu0 0.0
        %2669 = vmatprep.subr.mxu0 0.0
        %2670 = vmatpush2.msra.mxu0 0.0
        %2671 = vmatprep.subr.mxu0 0.0
        %2672 = vmatpush2.msra.mxu0 0.0
        %2673 = vmatprep.subr.mxu0 0.0
        %2674 = vmatpush2.msra.mxu0 0.0
        %2675 = vmatprep.subr.mxu0 0.0
        %2676 = vmatpush2.msra.mxu0 0.0
        %2677 = vmatprep.subr.mxu0 0.0
        %2678 = vmatpush2.msra.mxu0 0.0
        %2679 = vmatprep.subr.mxu0 0.0
        %2680 = vmatpush2.msra.mxu0 0.0
        %2681 = vmatprep.subr.mxu0 0.0
        %2682 = vmatpush2.msra.mxu0 0.0
        %2683 = vmatprep.subr.mxu0 0.0
        %2684 = vmatpush2.msra.mxu0 0.0
        %2685 = vmatprep.subr.mxu0 0.0
        %2686 = vmatpush2.msra.mxu0 0.0
        %2687 = vmatprep.subr.mxu0 0.0
        %2688 = vmatpush2.msra.mxu0 0.0
        %2689 = vmatprep.subr.mxu0 0.0
        %2690 = vmatpush2.msra.mxu0 0.0
        %2691 = vmatprep.subr.mxu0 0.0
        %2692 = vmatpush2.msra.mxu0 0.0
        %2693 = vmatprep.mubr.f32.mxu0 0.0
        %2694 = vmatmul.mubr.f32.gmra.mxu0 %v2499
        %v2695 = vpop.f32.mrf.mxu0
        %v2696 = vadd.f32 0.0, %v2695
        %v2697 = vpop.f32.mrf.mxu0
        %2698 = vmatprep.mubr.f32.mxu0 0.0
        %2699 = vmatmul.mubr.f32.gmra.mxu0 %v2502
        %v2700 = vpop.f32.mrf.mxu0
        %v2701 = vadd.f32 0.0, %v2700
        %v2702 = vpop.f32.mrf.mxu0
        %2703 = vmatprep.mubr.f32.mxu0 0.0
        %2704 = vmatmul.mubr.f32.gmra.mxu0 %v2505
        %v2705 = vpop.f32.mrf.mxu0
        %v2706 = vadd.f32 0.0, %v2705
        %v2707 = vpop.f32.mrf.mxu0
        %2708 = vmatprep.mubr.f32.mxu0 0.0
        %2709 = vmatmul.mubr.f32.gmra.mxu0 %v2508
        %v2710 = vpop.f32.mrf.mxu0
        %v2711 = vadd.f32 0.0, %v2710
        %v2712 = vpop.f32.mrf.mxu0
        %2713 = vmatprep.mubr.f32.mxu0 0.0
        %2714 = vmatmul.mubr.f32.gmra.mxu0 %v2511
        %v2715 = vpop.f32.mrf.mxu0
        %v2716 = vadd.f32 0.0, %v2715
        %v2717 = vpop.f32.mrf.mxu0
        %2718 = vmatprep.mubr.f32.mxu0 0.0
        %2719 = vmatmul.mubr.f32.gmra.mxu0 %v2514
        %v2720 = vpop.f32.mrf.mxu0
        %v2721 = vadd.f32 0.0, %v2720
        %v2722 = vpop.f32.mrf.mxu0
        %2723 = vmatprep.mubr.f32.mxu0 0.0
        %2724 = vmatmul.mubr.f32.gmra.mxu0 %v2517
        %v2725 = vpop.f32.mrf.mxu0
        %v2726 = vadd.f32 0.0, %v2725
        %v2727 = vpop.f32.mrf.mxu0
        %2728 = vmatprep.mubr.f32.mxu0 0.0
        %2729 = vmatmul.mubr.f32.gmra.mxu0 %v2520
        %v2730 = vpop.f32.mrf.mxu0
        %v2731 = vadd.f32 0.0, %v2730
        %v2732 = vpop.f32.mrf.mxu0
        %2733 = vdwg.mxu0
        %v2734 = vld [vmem:[%s12] sm:$0xff]
        %v2735 = vld [vmem:[%s12 + $0x8] sm:$0xff]
        %2736 = vmatprep.subr.mxu0 0.0
        %2737 = vmatpush1.msra.mxu0 0.0
        %2738 = vmatprep.subr.mxu0 0.0
        %2739 = vmatpush1.msra.mxu0 0.0
        %2740 = vmatprep.subr.mxu0 0.0
        %2741 = vmatpush1.msra.mxu0 0.0
        %2742 = vmatprep.subr.mxu0 0.0
        %2743 = vmatpush1.msra.mxu0 0.0
        %2744 = vmatprep.subr.mxu0 0.0
        %2745 = vmatpush1.msra.mxu0 0.0
        %2746 = vmatprep.subr.mxu0 0.0
        %2747 = vmatpush1.msra.mxu0 0.0
        %2748 = vmatprep.subr.mxu0 0.0
        %2749 = vmatpush1.msra.mxu0 0.0
        %2750 = vmatprep.subr.mxu0 0.0
        %2751 = vmatpush1.msra.mxu0 0.0
        %2752 = vmatprep.subr.mxu0 0.0
        %2753 = vmatpush1.msra.mxu0 0.0
        %2754 = vmatprep.subr.mxu0 0.0
        %2755 = vmatpush1.msra.mxu0 0.0
        %2756 = vmatprep.subr.mxu0 0.0
        %2757 = vmatpush1.msra.mxu0 0.0
        %2758 = vmatprep.subr.mxu0 0.0
        %2759 = vmatpush1.msra.mxu0 0.0
        %2760 = vmatprep.subr.mxu0 0.0
        %2761 = vmatpush1.msra.mxu0 0.0
        %2762 = vmatprep.subr.mxu0 0.0
        %2763 = vmatpush1.msra.mxu0 0.0
        %2764 = vmatprep.subr.mxu0 0.0
        %2765 = vmatpush1.msra.mxu0 %v2735
        %2766 = vmatprep.subr.mxu0 0.0
        %2767 = vmatpush1.msra.mxu0 %v2734
        %2768 = vmatprep.subr.mxu0 0.0
        %2769 = vmatpush2.msra.mxu0 0.0
        %2770 = vmatprep.subr.mxu0 0.0
        %2771 = vmatpush2.msra.mxu0 0.0
        %2772 = vmatprep.subr.mxu0 0.0
        %2773 = vmatpush2.msra.mxu0 0.0
        %2774 = vmatprep.subr.mxu0 0.0
        %2775 = vmatpush2.msra.mxu0 0.0
        %2776 = vmatprep.subr.mxu0 0.0
        %2777 = vmatpush2.msra.mxu0 0.0
        %2778 = vmatprep.subr.mxu0 0.0
        %2779 = vmatpush2.msra.mxu0 0.0
        %2780 = vmatprep.subr.mxu0 0.0
        %2781 = vmatpush2.msra.mxu0 0.0
        %2782 = vmatprep.subr.mxu0 0.0
        %2783 = vmatpush2.msra.mxu0 0.0
        %2784 = vmatprep.subr.mxu0 0.0
        %2785 = vmatpush2.msra.mxu0 0.0
        %2786 = vmatprep.subr.mxu0 0.0
        %2787 = vmatpush2.msra.mxu0 0.0
        %2788 = vmatprep.subr.mxu0 0.0
        %2789 = vmatpush2.msra.mxu0 0.0
        %2790 = vmatprep.subr.mxu0 0.0
        %2791 = vmatpush2.msra.mxu0 0.0
        %2792 = vmatprep.subr.mxu0 0.0
        %2793 = vmatpush2.msra.mxu0 0.0
        %2794 = vmatprep.subr.mxu0 0.0
        %2795 = vmatpush2.msra.mxu0 0.0
        %2796 = vmatprep.subr.mxu0 0.0
        %2797 = vmatpush2.msra.mxu0 0.0
        %2798 = vmatprep.subr.mxu0 0.0
        %2799 = vmatpush2.msra.mxu0 0.0
        %2800 = vmatprep.mubr.f32.mxu0 0.0
        %2801 = vmatmul.mubr.f32.gmra.mxu0 %v2499
        %v2802 = vpop.f32.mrf.mxu0
        %v2803 = vadd.f32 0.0, %v2802
        %v2804 = vpop.f32.mrf.mxu0
        %2805 = vmatprep.mubr.f32.mxu0 0.0
        %2806 = vmatmul.mubr.f32.gmra.mxu0 %v2502
        %v2807 = vpop.f32.mrf.mxu0
        %v2808 = vadd.f32 0.0, %v2807
        %v2809 = vpop.f32.mrf.mxu0
        %2810 = vmatprep.mubr.f32.mxu0 0.0
        %2811 = vmatmul.mubr.f32.gmra.mxu0 %v2505
        %v2812 = vpop.f32.mrf.mxu0
        %v2813 = vadd.f32 0.0, %v2812
        %v2814 = vpop.f32.mrf.mxu0
        %2815 = vmatprep.mubr.f32.mxu0 0.0
        %2816 = vmatmul.mubr.f32.gmra.mxu0 %v2508
        %v2817 = vpop.f32.mrf.mxu0
        %v2818 = vadd.f32 0.0, %v2817
        %v2819 = vpop.f32.mrf.mxu0
        %2820 = vmatprep.mubr.f32.mxu0 0.0
        %2821 = vmatmul.mubr.f32.gmra.mxu0 %v2511
        %v2822 = vpop.f32.mrf.mxu0
        %v2823 = vadd.f32 0.0, %v2822
        %v2824 = vpop.f32.mrf.mxu0
        %2825 = vmatprep.mubr.f32.mxu0 0.0
        %2826 = vmatmul.mubr.f32.gmra.mxu0 %v2514
        %v2827 = vpop.f32.mrf.mxu0
        %v2828 = vadd.f32 0.0, %v2827
        %v2829 = vpop.f32.mrf.mxu0
        %2830 = vmatprep.mubr.f32.mxu0 0.0
        %2831 = vmatmul.mubr.f32.gmra.mxu0 %v2517
        %v2832 = vpop.f32.mrf.mxu0
        %v2833 = vadd.f32 0.0, %v2832
        %v2834 = vpop.f32.mrf.mxu0
        %2835 = vmatprep.mubr.f32.mxu0 0.0
        %2836 = vmatmul.mubr.f32.gmra.mxu0 %v2520
        %v2837 = vpop.f32.mrf.mxu0
        %v2838 = vadd.f32 0.0, %v2837
        %v2839 = vpop.f32.mrf.mxu0
        %2840 = vdwg.mxu0
        %vm2841 = vcmask 64512
        %v2843 = vsel %vm2841, %v2696, 0
        %v2846 = vsel %vm2841, %v2589, 0
        %2848 = vmatprep.subr.mxu0 0.0
        %2849 = vmatpush1.xpose.msra.mxu0 0.0
        %2850 = vmatprep.subr.mxu0 0.0
        %2851 = vmatpush1.xpose.msra.mxu0 0.0
        %2852 = vmatprep.subr.mxu0 0.0
        %2853 = vmatpush1.xpose.msra.mxu0 0.0
        %2854 = vmatprep.subr.mxu0 0.0
        %2855 = vmatpush1.xpose.msra.mxu0 0.0
        %2856 = vmatprep.subr.mxu0 0.0
        %2857 = vmatpush1.xpose.msra.mxu0 0.0
        %2858 = vmatprep.subr.mxu0 0.0
        %2859 = vmatpush1.xpose.msra.mxu0 0.0
        %2860 = vmatprep.subr.mxu0 0.0
        %2861 = vmatpush1.xpose.msra.mxu0 0.0
        %2862 = vmatprep.subr.mxu0 0.0
        %2863 = vmatpush1.xpose.msra.mxu0 0.0
        %2864 = vmatprep.subr.mxu0 0.0
        %2865 = vmatpush1.xpose.msra.mxu0 0.0
        %2866 = vmatprep.subr.mxu0 0.0
        %2867 = vmatpush1.xpose.msra.mxu0 0.0
        %2868 = vmatprep.subr.mxu0 0.0
        %2869 = vmatpush1.xpose.msra.mxu0 0.0
        %2870 = vmatprep.subr.mxu0 0.0
        %2871 = vmatpush1.xpose.msra.mxu0 0.0
        %2872 = vmatprep.subr.mxu0 0.0
        %2873 = vmatpush1.xpose.msra.mxu0 0.0
        %2874 = vmatprep.subr.mxu0 0.0
        %2875 = vmatpush1.xpose.msra.mxu0 0.0
        %2876 = vmatprep.subr.mxu0 0.0
        %2877 = vmatpush1.xpose.msra.mxu0 0.0
        %2878 = vmatprep.subr.mxu0 0.0
        %2879 = vmatpush1.xpose.msra.mxu0 %v2846
        %2880 = vmatprep.subr.mxu0 0.0
        %2881 = vmatpush2.xpose.msra.mxu0 0.0
        %2882 = vmatprep.subr.mxu0 0.0
        %2883 = vmatpush2.xpose.msra.mxu0 0.0
        %2884 = vmatprep.subr.mxu0 0.0
        %2885 = vmatpush2.xpose.msra.mxu0 0.0
        %2886 = vmatprep.subr.mxu0 0.0
        %2887 = vmatpush2.xpose.msra.mxu0 0.0
        %2888 = vmatprep.subr.mxu0 0.0
        %2889 = vmatpush2.xpose.msra.mxu0 0.0
        %2890 = vmatprep.subr.mxu0 0.0
        %2891 = vmatpush2.xpose.msra.mxu0 0.0
        %2892 = vmatprep.subr.mxu0 0.0
        %2893 = vmatpush2.xpose.msra.mxu0 0.0
        %2894 = vmatprep.subr.mxu0 0.0
        %2895 = vmatpush2.xpose.msra.mxu0 0.0
        %2896 = vmatprep.subr.mxu0 0.0
        %2897 = vmatpush2.xpose.msra.mxu0 0.0
        %2898 = vmatprep.subr.mxu0 0.0
        %2899 = vmatpush2.xpose.msra.mxu0 0.0
        %2900 = vmatprep.subr.mxu0 0.0
        %2901 = vmatpush2.xpose.msra.mxu0 0.0
        %2902 = vmatprep.subr.mxu0 0.0
        %2903 = vmatpush2.xpose.msra.mxu0 0.0
        %2904 = vmatprep.subr.mxu0 0.0
        %2905 = vmatpush2.xpose.msra.mxu0 0.0
        %2906 = vmatprep.subr.mxu0 0.0
        %2907 = vmatpush2.xpose.msra.mxu0 0.0
        %2908 = vmatprep.subr.mxu0 0.0
        %2909 = vmatpush2.xpose.msra.mxu0 0.0
        %2910 = vmatprep.subr.mxu0 0.0
        %2911 = vmatpush2.xpose.msra.mxu0 0.0
        %2912 = vmatprep.mubr.f32.mxu0 0.0
        %2913 = vmatmul.mubr.f32.gmra.mxu0 %v2843
        %v2914 = vpop.f32.mrf.mxu0
        %v2915 = vadd.f32 0.0, %v2914
        %v2916 = vpop.f32.mrf.mxu0
        %2917 = vdwg.mxu0
        %v2919 = vsel %vm2841, %v2701, 0
        %v2922 = vsel %vm2841, %v2594, 0
        %2924 = vmatprep.subr.mxu0 0.0
        %2925 = vmatpush1.xpose.msra.mxu0 0.0
        %2926 = vmatprep.subr.mxu0 0.0
        %2927 = vmatpush1.xpose.msra.mxu0 0.0
        %2928 = vmatprep.subr.mxu0 0.0
        %2929 = vmatpush1.xpose.msra.mxu0 0.0
        %2930 = vmatprep.subr.mxu0 0.0
        %2931 = vmatpush1.xpose.msra.mxu0 0.0
        %2932 = vmatprep.subr.mxu0 0.0
        %2933 = vmatpush1.xpose.msra.mxu0 0.0
        %2934 = vmatprep.subr.mxu0 0.0
        %2935 = vmatpush1.xpose.msra.mxu0 0.0
        %2936 = vmatprep.subr.mxu0 0.0
        %2937 = vmatpush1.xpose.msra.mxu0 0.0
        %2938 = vmatprep.subr.mxu0 0.0
        %2939 = vmatpush1.xpose.msra.mxu0 0.0
        %2940 = vmatprep.subr.mxu0 0.0
        %2941 = vmatpush1.xpose.msra.mxu0 0.0
        %2942 = vmatprep.subr.mxu0 0.0
        %2943 = vmatpush1.xpose.msra.mxu0 0.0
        %2944 = vmatprep.subr.mxu0 0.0
        %2945 = vmatpush1.xpose.msra.mxu0 0.0
        %2946 = vmatprep.subr.mxu0 0.0
        %2947 = vmatpush1.xpose.msra.mxu0 0.0
        %2948 = vmatprep.subr.mxu0 0.0
        %2949 = vmatpush1.xpose.msra.mxu0 0.0
        %2950 = vmatprep.subr.mxu0 0.0
        %2951 = vmatpush1.xpose.msra.mxu0 0.0
        %2952 = vmatprep.subr.mxu0 0.0
        %2953 = vmatpush1.xpose.msra.mxu0 0.0
        %2954 = vmatprep.subr.mxu0 0.0
        %2955 = vmatpush1.xpose.msra.mxu0 %v2922
        %2956 = vmatprep.subr.mxu0 0.0
        %2957 = vmatpush2.xpose.msra.mxu0 0.0
        %2958 = vmatprep.subr.mxu0 0.0
        %2959 = vmatpush2.xpose.msra.mxu0 0.0
        %2960 = vmatprep.subr.mxu0 0.0
        %2961 = vmatpush2.xpose.msra.mxu0 0.0
        %2962 = vmatprep.subr.mxu0 0.0
        %2963 = vmatpush2.xpose.msra.mxu0 0.0
        %2964 = vmatprep.subr.mxu0 0.0
        %2965 = vmatpush2.xpose.msra.mxu0 0.0
        %2966 = vmatprep.subr.mxu0 0.0
        %2967 = vmatpush2.xpose.msra.mxu0 0.0
        %2968 = vmatprep.subr.mxu0 0.0
        %2969 = vmatpush2.xpose.msra.mxu0 0.0
        %2970 = vmatprep.subr.mxu0 0.0
        %2971 = vmatpush2.xpose.msra.mxu0 0.0
        %2972 = vmatprep.subr.mxu0 0.0
        %2973 = vmatpush2.xpose.msra.mxu0 0.0
        %2974 = vmatprep.subr.mxu0 0.0
        %2975 = vmatpush2.xpose.msra.mxu0 0.0
        %2976 = vmatprep.subr.mxu0 0.0
        %2977 = vmatpush2.xpose.msra.mxu0 0.0
        %2978 = vmatprep.subr.mxu0 0.0
        %2979 = vmatpush2.xpose.msra.mxu0 0.0
        %2980 = vmatprep.subr.mxu0 0.0
        %2981 = vmatpush2.xpose.msra.mxu0 0.0
        %2982 = vmatprep.subr.mxu0 0.0
        %2983 = vmatpush2.xpose.msra.mxu0 0.0
        %2984 = vmatprep.subr.mxu0 0.0
        %2985 = vmatpush2.xpose.msra.mxu0 0.0
        %2986 = vmatprep.subr.mxu0 0.0
        %2987 = vmatpush2.xpose.msra.mxu0 0.0
        %2988 = vmatprep.mubr.f32.mxu0 0.0
        %2989 = vmatmul.mubr.f32.gmra.mxu0 %v2919
        %v2990 = vpop.f32.mrf.mxu0
        %v2991 = vadd.f32 0.0, %v2990
        %v2992 = vpop.f32.mrf.mxu0
        %2993 = vdwg.mxu0
        %v2995 = vsel %vm2841, %v2706, 0
        %v2998 = vsel %vm2841, %v2599, 0
        %3000 = vmatprep.subr.mxu0 0.0
        %3001 = vmatpush1.xpose.msra.mxu0 0.0
        %3002 = vmatprep.subr.mxu0 0.0
        %3003 = vmatpush1.xpose.msra.mxu0 0.0
        %3004 = vmatprep.subr.mxu0 0.0
        %3005 = vmatpush1.xpose.msra.mxu0 0.0
        %3006 = vmatprep.subr.mxu0 0.0
        %3007 = vmatpush1.xpose.msra.mxu0 0.0
        %3008 = vmatprep.subr.mxu0 0.0
        %3009 = vmatpush1.xpose.msra.mxu0 0.0
        %3010 = vmatprep.subr.mxu0 0.0
        %3011 = vmatpush1.xpose.msra.mxu0 0.0
        %3012 = vmatprep.subr.mxu0 0.0
        %3013 = vmatpush1.xpose.msra.mxu0 0.0
        %3014 = vmatprep.subr.mxu0 0.0
        %3015 = vmatpush1.xpose.msra.mxu0 0.0
        %3016 = vmatprep.subr.mxu0 0.0
        %3017 = vmatpush1.xpose.msra.mxu0 0.0
        %3018 = vmatprep.subr.mxu0 0.0
        %3019 = vmatpush1.xpose.msra.mxu0 0.0
        %3020 = vmatprep.subr.mxu0 0.0
        %3021 = vmatpush1.xpose.msra.mxu0 0.0
        %3022 = vmatprep.subr.mxu0 0.0
        %3023 = vmatpush1.xpose.msra.mxu0 0.0
        %3024 = vmatprep.subr.mxu0 0.0
        %3025 = vmatpush1.xpose.msra.mxu0 0.0
        %3026 = vmatprep.subr.mxu0 0.0
        %3027 = vmatpush1.xpose.msra.mxu0 0.0
        %3028 = vmatprep.subr.mxu0 0.0
        %3029 = vmatpush1.xpose.msra.mxu0 0.0
        %3030 = vmatprep.subr.mxu0 0.0
        %3031 = vmatpush1.xpose.msra.mxu0 %v2998
        %3032 = vmatprep.subr.mxu0 0.0
        %3033 = vmatpush2.xpose.msra.mxu0 0.0
        %3034 = vmatprep.subr.mxu0 0.0
        %3035 = vmatpush2.xpose.msra.mxu0 0.0
        %3036 = vmatprep.subr.mxu0 0.0
        %3037 = vmatpush2.xpose.msra.mxu0 0.0
        %3038 = vmatprep.subr.mxu0 0.0
        %3039 = vmatpush2.xpose.msra.mxu0 0.0
        %3040 = vmatprep.subr.mxu0 0.0
        %3041 = vmatpush2.xpose.msra.mxu0 0.0
        %3042 = vmatprep.subr.mxu0 0.0
        %3043 = vmatpush2.xpose.msra.mxu0 0.0
        %3044 = vmatprep.subr.mxu0 0.0
        %3045 = vmatpush2.xpose.msra.mxu0 0.0
        %3046 = vmatprep.subr.mxu0 0.0
        %3047 = vmatpush2.xpose.msra.mxu0 0.0
        %3048 = vmatprep.subr.mxu0 0.0
        %3049 = vmatpush2.xpose.msra.mxu0 0.0
        %3050 = vmatprep.subr.mxu0 0.0
        %3051 = vmatpush2.xpose.msra.mxu0 0.0
        %3052 = vmatprep.subr.mxu0 0.0
        %3053 = vmatpush2.xpose.msra.mxu0 0.0
        %3054 = vmatprep.subr.mxu0 0.0
        %3055 = vmatpush2.xpose.msra.mxu0 0.0
        %3056 = vmatprep.subr.mxu0 0.0
        %3057 = vmatpush2.xpose.msra.mxu0 0.0
        %3058 = vmatprep.subr.mxu0 0.0
        %3059 = vmatpush2.xpose.msra.mxu0 0.0
        %3060 = vmatprep.subr.mxu0 0.0
        %3061 = vmatpush2.xpose.msra.mxu0 0.0
        %3062 = vmatprep.subr.mxu0 0.0
        %3063 = vmatpush2.xpose.msra.mxu0 0.0
        %3064 = vmatprep.mubr.f32.mxu0 0.0
        %3065 = vmatmul.mubr.f32.gmra.mxu0 %v2995
        %v3066 = vpop.f32.mrf.mxu0
        %v3067 = vadd.f32 0.0, %v3066
        %v3068 = vpop.f32.mrf.mxu0
        %3069 = vdwg.mxu0
        %v3071 = vsel %vm2841, %v2711, 0
        %v3074 = vsel %vm2841, %v2604, 0
        %3076 = vmatprep.subr.mxu0 0.0
        %3077 = vmatpush1.xpose.msra.mxu0 0.0
        %3078 = vmatprep.subr.mxu0 0.0
        %3079 = vmatpush1.xpose.msra.mxu0 0.0
        %3080 = vmatprep.subr.mxu0 0.0
        %3081 = vmatpush1.xpose.msra.mxu0 0.0
        %3082 = vmatprep.subr.mxu0 0.0
        %3083 = vmatpush1.xpose.msra.mxu0 0.0
        %3084 = vmatprep.subr.mxu0 0.0
        %3085 = vmatpush1.xpose.msra.mxu0 0.0
        %3086 = vmatprep.subr.mxu0 0.0
        %3087 = vmatpush1.xpose.msra.mxu0 0.0
        %3088 = vmatprep.subr.mxu0 0.0
        %3089 = vmatpush1.xpose.msra.mxu0 0.0
        %3090 = vmatprep.subr.mxu0 0.0
        %3091 = vmatpush1.xpose.msra.mxu0 0.0
        %3092 = vmatprep.subr.mxu0 0.0
        %3093 = vmatpush1.xpose.msra.mxu0 0.0
        %3094 = vmatprep.subr.mxu0 0.0
        %3095 = vmatpush1.xpose.msra.mxu0 0.0
        %3096 = vmatprep.subr.mxu0 0.0
        %3097 = vmatpush1.xpose.msra.mxu0 0.0
        %3098 = vmatprep.subr.mxu0 0.0
        %3099 = vmatpush1.xpose.msra.mxu0 0.0
        %3100 = vmatprep.subr.mxu0 0.0
        %3101 = vmatpush1.xpose.msra.mxu0 0.0
        %3102 = vmatprep.subr.mxu0 0.0
        %3103 = vmatpush1.xpose.msra.mxu0 0.0
        %3104 = vmatprep.subr.mxu0 0.0
        %3105 = vmatpush1.xpose.msra.mxu0 0.0
        %3106 = vmatprep.subr.mxu0 0.0
        %3107 = vmatpush1.xpose.msra.mxu0 %v3074
        %3108 = vmatprep.subr.mxu0 0.0
        %3109 = vmatpush2.xpose.msra.mxu0 0.0
        %3110 = vmatprep.subr.mxu0 0.0
        %3111 = vmatpush2.xpose.msra.mxu0 0.0
        %3112 = vmatprep.subr.mxu0 0.0
        %3113 = vmatpush2.xpose.msra.mxu0 0.0
        %3114 = vmatprep.subr.mxu0 0.0
        %3115 = vmatpush2.xpose.msra.mxu0 0.0
        %3116 = vmatprep.subr.mxu0 0.0
        %3117 = vmatpush2.xpose.msra.mxu0 0.0
        %3118 = vmatprep.subr.mxu0 0.0
        %3119 = vmatpush2.xpose.msra.mxu0 0.0
        %3120 = vmatprep.subr.mxu0 0.0
        %3121 = vmatpush2.xpose.msra.mxu0 0.0
        %3122 = vmatprep.subr.mxu0 0.0
        %3123 = vmatpush2.xpose.msra.mxu0 0.0
        %3124 = vmatprep.subr.mxu0 0.0
        %3125 = vmatpush2.xpose.msra.mxu0 0.0
        %3126 = vmatprep.subr.mxu0 0.0
        %3127 = vmatpush2.xpose.msra.mxu0 0.0
        %3128 = vmatprep.subr.mxu0 0.0
        %3129 = vmatpush2.xpose.msra.mxu0 0.0
        %3130 = vmatprep.subr.mxu0 0.0
        %3131 = vmatpush2.xpose.msra.mxu0 0.0
        %3132 = vmatprep.subr.mxu0 0.0
        %3133 = vmatpush2.xpose.msra.mxu0 0.0
        %3134 = vmatprep.subr.mxu0 0.0
        %3135 = vmatpush2.xpose.msra.mxu0 0.0
        %3136 = vmatprep.subr.mxu0 0.0
        %3137 = vmatpush2.xpose.msra.mxu0 0.0
        %3138 = vmatprep.subr.mxu0 0.0
        %3139 = vmatpush2.xpose.msra.mxu0 0.0
        %3140 = vmatprep.mubr.f32.mxu0 0.0
        %3141 = vmatmul.mubr.f32.gmra.mxu0 %v3071
        %v3142 = vpop.f32.mrf.mxu0
        %v3143 = vadd.f32 0.0, %v3142
        %v3144 = vpop.f32.mrf.mxu0
        %3145 = vdwg.mxu0
        %v3147 = vsel %vm2841, %v2716, 0
        %v3150 = vsel %vm2841, %v2609, 0
        %3152 = vmatprep.subr.mxu0 0.0
        %3153 = vmatpush1.xpose.msra.mxu0 0.0
        %3154 = vmatprep.subr.mxu0 0.0
        %3155 = vmatpush1.xpose.msra.mxu0 0.0
        %3156 = vmatprep.subr.mxu0 0.0
        %3157 = vmatpush1.xpose.msra.mxu0 0.0
        %3158 = vmatprep.subr.mxu0 0.0
        %3159 = vmatpush1.xpose.msra.mxu0 0.0
        %3160 = vmatprep.subr.mxu0 0.0
        %3161 = vmatpush1.xpose.msra.mxu0 0.0
        %3162 = vmatprep.subr.mxu0 0.0
        %3163 = vmatpush1.xpose.msra.mxu0 0.0
        %3164 = vmatprep.subr.mxu0 0.0
        %3165 = vmatpush1.xpose.msra.mxu0 0.0
        %3166 = vmatprep.subr.mxu0 0.0
        %3167 = vmatpush1.xpose.msra.mxu0 0.0
        %3168 = vmatprep.subr.mxu0 0.0
        %3169 = vmatpush1.xpose.msra.mxu0 0.0
        %3170 = vmatprep.subr.mxu0 0.0
        %3171 = vmatpush1.xpose.msra.mxu0 0.0
        %3172 = vmatprep.subr.mxu0 0.0
        %3173 = vmatpush1.xpose.msra.mxu0 0.0
        %3174 = vmatprep.subr.mxu0 0.0
        %3175 = vmatpush1.xpose.msra.mxu0 0.0
        %3176 = vmatprep.subr.mxu0 0.0
        %3177 = vmatpush1.xpose.msra.mxu0 0.0
        %3178 = vmatprep.subr.mxu0 0.0
        %3179 = vmatpush1.xpose.msra.mxu0 0.0
        %3180 = vmatprep.subr.mxu0 0.0
        %3181 = vmatpush1.xpose.msra.mxu0 0.0
        %3182 = vmatprep.subr.mxu0 0.0
        %3183 = vmatpush1.xpose.msra.mxu0 %v3150
        %3184 = vmatprep.subr.mxu0 0.0
        %3185 = vmatpush2.xpose.msra.mxu0 0.0
        %3186 = vmatprep.subr.mxu0 0.0
        %3187 = vmatpush2.xpose.msra.mxu0 0.0
        %3188 = vmatprep.subr.mxu0 0.0
        %3189 = vmatpush2.xpose.msra.mxu0 0.0
        %3190 = vmatprep.subr.mxu0 0.0
        %3191 = vmatpush2.xpose.msra.mxu0 0.0
        %3192 = vmatprep.subr.mxu0 0.0
        %3193 = vmatpush2.xpose.msra.mxu0 0.0
        %3194 = vmatprep.subr.mxu0 0.0
        %3195 = vmatpush2.xpose.msra.mxu0 0.0
        %3196 = vmatprep.subr.mxu0 0.0
        %3197 = vmatpush2.xpose.msra.mxu0 0.0
        %3198 = vmatprep.subr.mxu0 0.0
        %3199 = vmatpush2.xpose.msra.mxu0 0.0
        %3200 = vmatprep.subr.mxu0 0.0
        %3201 = vmatpush2.xpose.msra.mxu0 0.0
        %3202 = vmatprep.subr.mxu0 0.0
        %3203 = vmatpush2.xpose.msra.mxu0 0.0
        %3204 = vmatprep.subr.mxu0 0.0
        %3205 = vmatpush2.xpose.msra.mxu0 0.0
        %3206 = vmatprep.subr.mxu0 0.0
        %3207 = vmatpush2.xpose.msra.mxu0 0.0
        %3208 = vmatprep.subr.mxu0 0.0
        %3209 = vmatpush2.xpose.msra.mxu0 0.0
        %3210 = vmatprep.subr.mxu0 0.0
        %3211 = vmatpush2.xpose.msra.mxu0 0.0
        %3212 = vmatprep.subr.mxu0 0.0
        %3213 = vmatpush2.xpose.msra.mxu0 0.0
        %3214 = vmatprep.subr.mxu0 0.0
        %3215 = vmatpush2.xpose.msra.mxu0 0.0
        %3216 = vmatprep.mubr.f32.mxu0 0.0
        %3217 = vmatmul.mubr.f32.gmra.mxu0 %v3147
        %v3218 = vpop.f32.mrf.mxu0
        %v3219 = vadd.f32 0.0, %v3218
        %v3220 = vpop.f32.mrf.mxu0
        %3221 = vdwg.mxu0
        %v3223 = vsel %vm2841, %v2721, 0
        %v3226 = vsel %vm2841, %v2614, 0
        %3228 = vmatprep.subr.mxu0 0.0
        %3229 = vmatpush1.xpose.msra.mxu0 0.0
        %3230 = vmatprep.subr.mxu0 0.0
        %3231 = vmatpush1.xpose.msra.mxu0 0.0
        %3232 = vmatprep.subr.mxu0 0.0
        %3233 = vmatpush1.xpose.msra.mxu0 0.0
        %3234 = vmatprep.subr.mxu0 0.0
        %3235 = vmatpush1.xpose.msra.mxu0 0.0
        %3236 = vmatprep.subr.mxu0 0.0
        %3237 = vmatpush1.xpose.msra.mxu0 0.0
        %3238 = vmatprep.subr.mxu0 0.0
        %3239 = vmatpush1.xpose.msra.mxu0 0.0
        %3240 = vmatprep.subr.mxu0 0.0
        %3241 = vmatpush1.xpose.msra.mxu0 0.0
        %3242 = vmatprep.subr.mxu0 0.0
        %3243 = vmatpush1.xpose.msra.mxu0 0.0
        %3244 = vmatprep.subr.mxu0 0.0
        %3245 = vmatpush1.xpose.msra.mxu0 0.0
        %3246 = vmatprep.subr.mxu0 0.0
        %3247 = vmatpush1.xpose.msra.mxu0 0.0
        %3248 = vmatprep.subr.mxu0 0.0
        %3249 = vmatpush1.xpose.msra.mxu0 0.0
        %3250 = vmatprep.subr.mxu0 0.0
        %3251 = vmatpush1.xpose.msra.mxu0 0.0
        %3252 = vmatprep.subr.mxu0 0.0
        %3253 = vmatpush1.xpose.msra.mxu0 0.0
        %3254 = vmatprep.subr.mxu0 0.0
        %3255 = vmatpush1.xpose.msra.mxu0 0.0
        %3256 = vmatprep.subr.mxu0 0.0
        %3257 = vmatpush1.xpose.msra.mxu0 0.0
        %3258 = vmatprep.subr.mxu0 0.0
        %3259 = vmatpush1.xpose.msra.mxu0 %v3226
        %3260 = vmatprep.subr.mxu0 0.0
        %3261 = vmatpush2.xpose.msra.mxu0 0.0
        %3262 = vmatprep.subr.mxu0 0.0
        %3263 = vmatpush2.xpose.msra.mxu0 0.0
        %3264 = vmatprep.subr.mxu0 0.0
        %3265 = vmatpush2.xpose.msra.mxu0 0.0
        %3266 = vmatprep.subr.mxu0 0.0
        %3267 = vmatpush2.xpose.msra.mxu0 0.0
        %3268 = vmatprep.subr.mxu0 0.0
        %3269 = vmatpush2.xpose.msra.mxu0 0.0
        %3270 = vmatprep.subr.mxu0 0.0
        %3271 = vmatpush2.xpose.msra.mxu0 0.0
        %3272 = vmatprep.subr.mxu0 0.0
        %3273 = vmatpush2.xpose.msra.mxu0 0.0
        %3274 = vmatprep.subr.mxu0 0.0
        %3275 = vmatpush2.xpose.msra.mxu0 0.0
        %3276 = vmatprep.subr.mxu0 0.0
        %3277 = vmatpush2.xpose.msra.mxu0 0.0
        %3278 = vmatprep.subr.mxu0 0.0
        %3279 = vmatpush2.xpose.msra.mxu0 0.0
        %3280 = vmatprep.subr.mxu0 0.0
        %3281 = vmatpush2.xpose.msra.mxu0 0.0
        %3282 = vmatprep.subr.mxu0 0.0
        %3283 = vmatpush2.xpose.msra.mxu0 0.0
        %3284 = vmatprep.subr.mxu0 0.0
        %3285 = vmatpush2.xpose.msra.mxu0 0.0
        %3286 = vmatprep.subr.mxu0 0.0
        %3287 = vmatpush2.xpose.msra.mxu0 0.0
        %3288 = vmatprep.subr.mxu0 0.0
        %3289 = vmatpush2.xpose.msra.mxu0 0.0
        %3290 = vmatprep.subr.mxu0 0.0
        %3291 = vmatpush2.xpose.msra.mxu0 0.0
        %3292 = vmatprep.mubr.f32.mxu0 0.0
        %3293 = vmatmul.mubr.f32.gmra.mxu0 %v3223
        %v3294 = vpop.f32.mrf.mxu0
        %v3295 = vadd.f32 0.0, %v3294
        %v3296 = vpop.f32.mrf.mxu0
        %3297 = vdwg.mxu0
        %v3299 = vsel %vm2841, %v2726, 0
        %v3302 = vsel %vm2841, %v2619, 0
        %3304 = vmatprep.subr.mxu0 0.0
        %3305 = vmatpush1.xpose.msra.mxu0 0.0
        %3306 = vmatprep.subr.mxu0 0.0
        %3307 = vmatpush1.xpose.msra.mxu0 0.0
        %3308 = vmatprep.subr.mxu0 0.0
        %3309 = vmatpush1.xpose.msra.mxu0 0.0
        %3310 = vmatprep.subr.mxu0 0.0
        %3311 = vmatpush1.xpose.msra.mxu0 0.0
        %3312 = vmatprep.subr.mxu0 0.0
        %3313 = vmatpush1.xpose.msra.mxu0 0.0
        %3314 = vmatprep.subr.mxu0 0.0
        %3315 = vmatpush1.xpose.msra.mxu0 0.0
        %3316 = vmatprep.subr.mxu0 0.0
        %3317 = vmatpush1.xpose.msra.mxu0 0.0
        %3318 = vmatprep.subr.mxu0 0.0
        %3319 = vmatpush1.xpose.msra.mxu0 0.0
        %3320 = vmatprep.subr.mxu0 0.0
        %3321 = vmatpush1.xpose.msra.mxu0 0.0
        %3322 = vmatprep.subr.mxu0 0.0
        %3323 = vmatpush1.xpose.msra.mxu0 0.0
        %3324 = vmatprep.subr.mxu0 0.0
        %3325 = vmatpush1.xpose.msra.mxu0 0.0
        %3326 = vmatprep.subr.mxu0 0.0
        %3327 = vmatpush1.xpose.msra.mxu0 0.0
        %3328 = vmatprep.subr.mxu0 0.0
        %3329 = vmatpush1.xpose.msra.mxu0 0.0
        %3330 = vmatprep.subr.mxu0 0.0
        %3331 = vmatpush1.xpose.msra.mxu0 0.0
        %3332 = vmatprep.subr.mxu0 0.0
        %3333 = vmatpush1.xpose.msra.mxu0 0.0
        %3334 = vmatprep.subr.mxu0 0.0
        %3335 = vmatpush1.xpose.msra.mxu0 %v3302
        %3336 = vmatprep.subr.mxu0 0.0
        %3337 = vmatpush2.xpose.msra.mxu0 0.0
        %3338 = vmatprep.subr.mxu0 0.0
        %3339 = vmatpush2.xpose.msra.mxu0 0.0
        %3340 = vmatprep.subr.mxu0 0.0
        %3341 = vmatpush2.xpose.msra.mxu0 0.0
        %3342 = vmatprep.subr.mxu0 0.0
        %3343 = vmatpush2.xpose.msra.mxu0 0.0
        %3344 = vmatprep.subr.mxu0 0.0
        %3345 = vmatpush2.xpose.msra.mxu0 0.0
        %3346 = vmatprep.subr.mxu0 0.0
        %3347 = vmatpush2.xpose.msra.mxu0 0.0
        %3348 = vmatprep.subr.mxu0 0.0
        %3349 = vmatpush2.xpose.msra.mxu0 0.0
        %3350 = vmatprep.subr.mxu0 0.0
        %3351 = vmatpush2.xpose.msra.mxu0 0.0
        %3352 = vmatprep.subr.mxu0 0.0
        %3353 = vmatpush2.xpose.msra.mxu0 0.0
        %3354 = vmatprep.subr.mxu0 0.0
        %3355 = vmatpush2.xpose.msra.mxu0 0.0
        %3356 = vmatprep.subr.mxu0 0.0
        %3357 = vmatpush2.xpose.msra.mxu0 0.0
        %3358 = vmatprep.subr.mxu0 0.0
        %3359 = vmatpush2.xpose.msra.mxu0 0.0
        %3360 = vmatprep.subr.mxu0 0.0
        %3361 = vmatpush2.xpose.msra.mxu0 0.0
        %3362 = vmatprep.subr.mxu0 0.0
        %3363 = vmatpush2.xpose.msra.mxu0 0.0
        %3364 = vmatprep.subr.mxu0 0.0
        %3365 = vmatpush2.xpose.msra.mxu0 0.0
        %3366 = vmatprep.subr.mxu0 0.0
        %3367 = vmatpush2.xpose.msra.mxu0 0.0
        %3368 = vmatprep.mubr.f32.mxu0 0.0
        %3369 = vmatmul.mubr.f32.gmra.mxu0 %v3299
        %v3370 = vpop.f32.mrf.mxu0
        %v3371 = vadd.f32 0.0, %v3370
        %v3372 = vpop.f32.mrf.mxu0
        %3373 = vdwg.mxu0
        %v3375 = vsel %vm2841, %v2731, 0
        %v3378 = vsel %vm2841, %v2624, 0
        %3380 = vmatprep.subr.mxu0 0.0
        %3381 = vmatpush1.xpose.msra.mxu0 0.0
        %3382 = vmatprep.subr.mxu0 0.0
        %3383 = vmatpush1.xpose.msra.mxu0 0.0
        %3384 = vmatprep.subr.mxu0 0.0
        %3385 = vmatpush1.xpose.msra.mxu0 0.0
        %3386 = vmatprep.subr.mxu0 0.0
        %3387 = vmatpush1.xpose.msra.mxu0 0.0
        %3388 = vmatprep.subr.mxu0 0.0
        %3389 = vmatpush1.xpose.msra.mxu0 0.0
        %3390 = vmatprep.subr.mxu0 0.0
        %3391 = vmatpush1.xpose.msra.mxu0 0.0
        %3392 = vmatprep.subr.mxu0 0.0
        %3393 = vmatpush1.xpose.msra.mxu0 0.0
        %3394 = vmatprep.subr.mxu0 0.0
        %3395 = vmatpush1.xpose.msra.mxu0 0.0
        %3396 = vmatprep.subr.mxu0 0.0
        %3397 = vmatpush1.xpose.msra.mxu0 0.0
        %3398 = vmatprep.subr.mxu0 0.0
        %3399 = vmatpush1.xpose.msra.mxu0 0.0
        %3400 = vmatprep.subr.mxu0 0.0
        %3401 = vmatpush1.xpose.msra.mxu0 0.0
        %3402 = vmatprep.subr.mxu0 0.0
        %3403 = vmatpush1.xpose.msra.mxu0 0.0
        %3404 = vmatprep.subr.mxu0 0.0
        %3405 = vmatpush1.xpose.msra.mxu0 0.0
        %3406 = vmatprep.subr.mxu0 0.0
        %3407 = vmatpush1.xpose.msra.mxu0 0.0
        %3408 = vmatprep.subr.mxu0 0.0
        %3409 = vmatpush1.xpose.msra.mxu0 0.0
        %3410 = vmatprep.subr.mxu0 0.0
        %3411 = vmatpush1.xpose.msra.mxu0 %v3378
        %3412 = vmatprep.subr.mxu0 0.0
        %3413 = vmatpush2.xpose.msra.mxu0 0.0
        %3414 = vmatprep.subr.mxu0 0.0
        %3415 = vmatpush2.xpose.msra.mxu0 0.0
        %3416 = vmatprep.subr.mxu0 0.0
        %3417 = vmatpush2.xpose.msra.mxu0 0.0
        %3418 = vmatprep.subr.mxu0 0.0
        %3419 = vmatpush2.xpose.msra.mxu0 0.0
        %3420 = vmatprep.subr.mxu0 0.0
        %3421 = vmatpush2.xpose.msra.mxu0 0.0
        %3422 = vmatprep.subr.mxu0 0.0
        %3423 = vmatpush2.xpose.msra.mxu0 0.0
        %3424 = vmatprep.subr.mxu0 0.0
        %3425 = vmatpush2.xpose.msra.mxu0 0.0
        %3426 = vmatprep.subr.mxu0 0.0
        %3427 = vmatpush2.xpose.msra.mxu0 0.0
        %3428 = vmatprep.subr.mxu0 0.0
        %3429 = vmatpush2.xpose.msra.mxu0 0.0
        %3430 = vmatprep.subr.mxu0 0.0
        %3431 = vmatpush2.xpose.msra.mxu0 0.0
        %3432 = vmatprep.subr.mxu0 0.0
        %3433 = vmatpush2.xpose.msra.mxu0 0.0
        %3434 = vmatprep.subr.mxu0 0.0
        %3435 = vmatpush2.xpose.msra.mxu0 0.0
        %3436 = vmatprep.subr.mxu0 0.0
        %3437 = vmatpush2.xpose.msra.mxu0 0.0
        %3438 = vmatprep.subr.mxu0 0.0
        %3439 = vmatpush2.xpose.msra.mxu0 0.0
        %3440 = vmatprep.subr.mxu0 0.0
        %3441 = vmatpush2.xpose.msra.mxu0 0.0
        %3442 = vmatprep.subr.mxu0 0.0
        %3443 = vmatpush2.xpose.msra.mxu0 0.0
        %3444 = vmatprep.mubr.f32.mxu0 0.0
        %3445 = vmatmul.mubr.f32.gmra.mxu0 %v3375
        %v3446 = vpop.f32.mrf.mxu0
        %v3447 = vadd.f32 0.0, %v3446
        %v3448 = vpop.f32.mrf.mxu0
        %3449 = vdwg.mxu0
        %v3450 = vsel %vm2841, %v2915, -inf
        %3451 = vmax.xlane.f32.xlu0 %v3450
        %v3452 = vpop.xlane.xlu0 %3451
        %v3453 = vsel %vm2841, %v2991, -inf
        %3454 = vmax.xlane.f32.xlu0 %v3453
        %v3455 = vpop.xlane.xlu0 %3454
        %v3456 = vsel %vm2841, %v3067, -inf
        %3457 = vmax.xlane.f32.xlu0 %v3456
        %v3458 = vpop.xlane.xlu0 %3457
        %v3459 = vsel %vm2841, %v3143, -inf
        %3460 = vmax.xlane.f32.xlu0 %v3459
        %v3461 = vpop.xlane.xlu0 %3460
        %v3462 = vsel %vm2841, %v3219, -inf
        %3463 = vmax.xlane.f32.xlu0 %v3462
        %v3464 = vpop.xlane.xlu0 %3463
        %v3465 = vsel %vm2841, %v3295, -inf
        %3466 = vmax.xlane.f32.xlu0 %v3465
        %v3467 = vpop.xlane.xlu0 %3466
        %v3468 = vsel %vm2841, %v3371, -inf
        %3469 = vmax.xlane.f32.xlu0 %v3468
        %v3470 = vpop.xlane.xlu0 %3469
        %v3471 = vsel %vm2841, %v3447, -inf
        %3472 = vmax.xlane.f32.xlu0 %v3471
        %v3473 = vpop.xlane.xlu0 %3472
        %v3474 = vsub.f32 %v2915, %v3452
        %v3475 = vsub.f32 %v2991, %v3455
        %v3476 = vsub.f32 %v3067, %v3458
        %v3477 = vsub.f32 %v3143, %v3461
        %v3478 = vsub.f32 %v3219, %v3464
        %v3479 = vsub.f32 %v3295, %v3467
        %v3480 = vsub.f32 %v3371, %v3470
        %v3481 = vsub.f32 %v3447, %v3473
        %v3482 = vmul.f32 %v3474, 1.442695
        %v3483 = vpow.pop %v3482
        %v3484 = vmul.f32 %v3475, 1.442695
        %v3485 = vpow.pop %v3484
        %v3486 = vmul.f32 %v3476, 1.442695
        %v3487 = vpow.pop %v3486
        %v3488 = vmul.f32 %v3477, 1.442695
        %v3489 = vpow.pop %v3488
        %v3490 = vmul.f32 %v3478, 1.442695
        %v3491 = vpow.pop %v3490
        %v3492 = vmul.f32 %v3479, 1.442695
        %v3493 = vpow.pop %v3492
        %v3494 = vmul.f32 %v3480, 1.442695
        %v3495 = vpow.pop %v3494
        %v3496 = vmul.f32 %v3481, 1.442695
        %v3497 = vpow.pop %v3496
        %v3498 = vsel %vm2841, %v3483, 0.0
        %3499 = vadd.xlane.f32.xlu0 %v3498
        %v3500 = vpop.xlane.xlu0 %3499
        %v3501 = vsel %vm2841, %v3485, 0.0
        %3502 = vadd.xlane.f32.xlu0 %v3501
        %v3503 = vpop.xlane.xlu0 %3502
        %v3504 = vsel %vm2841, %v3487, 0.0
        %3505 = vadd.xlane.f32.xlu0 %v3504
        %v3506 = vpop.xlane.xlu0 %3505
        %v3507 = vsel %vm2841, %v3489, 0.0
        %3508 = vadd.xlane.f32.xlu0 %v3507
        %v3509 = vpop.xlane.xlu0 %3508
        %v3510 = vsel %vm2841, %v3491, 0.0
        %3511 = vadd.xlane.f32.xlu0 %v3510
        %v3512 = vpop.xlane.xlu0 %3511
        %v3513 = vsel %vm2841, %v3493, 0.0
        %3514 = vadd.xlane.f32.xlu0 %v3513
        %v3515 = vpop.xlane.xlu0 %3514
        %v3516 = vsel %vm2841, %v3495, 0.0
        %3517 = vadd.xlane.f32.xlu0 %v3516
        %v3518 = vpop.xlane.xlu0 %3517
        %v3519 = vsel %vm2841, %v3497, 0.0
        %3520 = vadd.xlane.f32.xlu0 %v3519
        %v3521 = vpop.xlane.xlu0 %3520
        %v3522 = vrcp.pop %v3500
        %v3523 = vrcp.pop %v3503
        %v3524 = vrcp.pop %v3506
        %v3525 = vrcp.pop %v3509
        %v3526 = vrcp.pop %v3512
        %v3527 = vrcp.pop %v3515
        %v3528 = vrcp.pop %v3518
        %v3529 = vrcp.pop %v3521
        %v3530 = vmul.f32 %v3483, %v3522
        %v3531 = vmul.f32 %v3485, %v3523
        %v3532 = vmul.f32 %v3487, %v3524
        %v3533 = vmul.f32 %v3489, %v3525
        %v3534 = vmul.f32 %v3491, %v3526
        %v3535 = vmul.f32 %v3493, %v3527
        %v3536 = vmul.f32 %v3495, %v3528
        %v3537 = vmul.f32 %v3497, %v3529
        %v3539 = vsel %vm2841, %v3530, 0
        %3541 = vmatprep.subr.mxu0 0.0
        %3542 = vmatpush1.msra.mxu0 0.0
        %3543 = vmatprep.subr.mxu0 0.0
        %3544 = vmatpush1.msra.mxu0 0.0
        %3545 = vmatprep.subr.mxu0 0.0
        %3546 = vmatpush1.msra.mxu0 0.0
        %3547 = vmatprep.subr.mxu0 0.0
        %3548 = vmatpush1.msra.mxu0 0.0
        %3549 = vmatprep.subr.mxu0 0.0
        %3550 = vmatpush1.msra.mxu0 0.0
        %3551 = vmatprep.subr.mxu0 0.0
        %3552 = vmatpush1.msra.mxu0 0.0
        %3553 = vmatprep.subr.mxu0 0.0
        %3554 = vmatpush1.msra.mxu0 0.0
        %3555 = vmatprep.subr.mxu0 0.0
        %3556 = vmatpush1.msra.mxu0 0.0
        %3557 = vmatprep.subr.mxu0 0.0
        %3558 = vmatpush1.msra.mxu0 0.0
        %3559 = vmatprep.subr.mxu0 0.0
        %3560 = vmatpush1.msra.mxu0 0.0
        %3561 = vmatprep.subr.mxu0 0.0
        %3562 = vmatpush1.msra.mxu0 0.0
        %3563 = vmatprep.subr.mxu0 0.0
        %3564 = vmatpush1.msra.mxu0 0.0
        %3565 = vmatprep.subr.mxu0 0.0
        %3566 = vmatpush1.msra.mxu0 0.0
        %3567 = vmatprep.subr.mxu0 0.0
        %3568 = vmatpush1.msra.mxu0 0.0
        %3569 = vmatprep.subr.mxu0 0.0
        %3570 = vmatpush1.msra.mxu0 0.0
        %3571 = vmatprep.subr.mxu0 0.0
        %3572 = vmatpush1.msra.mxu0 %v2803
        %3573 = vmatprep.subr.mxu0 0.0
        %3574 = vmatpush2.msra.mxu0 0.0
        %3575 = vmatprep.subr.mxu0 0.0
        %3576 = vmatpush2.msra.mxu0 0.0
        %3577 = vmatprep.subr.mxu0 0.0
        %3578 = vmatpush2.msra.mxu0 0.0
        %3579 = vmatprep.subr.mxu0 0.0
        %3580 = vmatpush2.msra.mxu0 0.0
        %3581 = vmatprep.subr.mxu0 0.0
        %3582 = vmatpush2.msra.mxu0 0.0
        %3583 = vmatprep.subr.mxu0 0.0
        %3584 = vmatpush2.msra.mxu0 0.0
        %3585 = vmatprep.subr.mxu0 0.0
        %3586 = vmatpush2.msra.mxu0 0.0
        %3587 = vmatprep.subr.mxu0 0.0
        %3588 = vmatpush2.msra.mxu0 0.0
        %3589 = vmatprep.subr.mxu0 0.0
        %3590 = vmatpush2.msra.mxu0 0.0
        %3591 = vmatprep.subr.mxu0 0.0
        %3592 = vmatpush2.msra.mxu0 0.0
        %3593 = vmatprep.subr.mxu0 0.0
        %3594 = vmatpush2.msra.mxu0 0.0
        %3595 = vmatprep.subr.mxu0 0.0
        %3596 = vmatpush2.msra.mxu0 0.0
        %3597 = vmatprep.subr.mxu0 0.0
        %3598 = vmatpush2.msra.mxu0 0.0
        %3599 = vmatprep.subr.mxu0 0.0
        %3600 = vmatpush2.msra.mxu0 0.0
        %3601 = vmatprep.subr.mxu0 0.0
        %3602 = vmatpush2.msra.mxu0 0.0
        %3603 = vmatprep.subr.mxu0 0.0
        %3604 = vmatpush2.msra.mxu0 0.0
        %3605 = vmatprep.mubr.f32.mxu0 0.0
        %3606 = vmatmul.mubr.f32.gmra.mxu0 %v3539
        %v3607 = vpop.f32.mrf.mxu0
        %v3608 = vadd.f32 0.0, %v3607
        %v3609 = vpop.f32.mrf.mxu0
        %3610 = vdwg.mxu0
        %v3612 = vsel %vm2841, %v3531, 0
        %3614 = vmatprep.subr.mxu0 0.0
        %3615 = vmatpush1.msra.mxu0 0.0
        %3616 = vmatprep.subr.mxu0 0.0
        %3617 = vmatpush1.msra.mxu0 0.0
        %3618 = vmatprep.subr.mxu0 0.0
        %3619 = vmatpush1.msra.mxu0 0.0
        %3620 = vmatprep.subr.mxu0 0.0
        %3621 = vmatpush1.msra.mxu0 0.0
        %3622 = vmatprep.subr.mxu0 0.0
        %3623 = vmatpush1.msra.mxu0 0.0
        %3624 = vmatprep.subr.mxu0 0.0
        %3625 = vmatpush1.msra.mxu0 0.0
        %3626 = vmatprep.subr.mxu0 0.0
        %3627 = vmatpush1.msra.mxu0 0.0
        %3628 = vmatprep.subr.mxu0 0.0
        %3629 = vmatpush1.msra.mxu0 0.0
        %3630 = vmatprep.subr.mxu0 0.0
        %3631 = vmatpush1.msra.mxu0 0.0
        %3632 = vmatprep.subr.mxu0 0.0
        %3633 = vmatpush1.msra.mxu0 0.0
        %3634 = vmatprep.subr.mxu0 0.0
        %3635 = vmatpush1.msra.mxu0 0.0
        %3636 = vmatprep.subr.mxu0 0.0
        %3637 = vmatpush1.msra.mxu0 0.0
        %3638 = vmatprep.subr.mxu0 0.0
        %3639 = vmatpush1.msra.mxu0 0.0
        %3640 = vmatprep.subr.mxu0 0.0
        %3641 = vmatpush1.msra.mxu0 0.0
        %3642 = vmatprep.subr.mxu0 0.0
        %3643 = vmatpush1.msra.mxu0 0.0
        %3644 = vmatprep.subr.mxu0 0.0
        %3645 = vmatpush1.msra.mxu0 %v2808
        %3646 = vmatprep.subr.mxu0 0.0
        %3647 = vmatpush2.msra.mxu0 0.0
        %3648 = vmatprep.subr.mxu0 0.0
        %3649 = vmatpush2.msra.mxu0 0.0
        %3650 = vmatprep.subr.mxu0 0.0
        %3651 = vmatpush2.msra.mxu0 0.0
        %3652 = vmatprep.subr.mxu0 0.0
        %3653 = vmatpush2.msra.mxu0 0.0
        %3654 = vmatprep.subr.mxu0 0.0
        %3655 = vmatpush2.msra.mxu0 0.0
        %3656 = vmatprep.subr.mxu0 0.0
        %3657 = vmatpush2.msra.mxu0 0.0
        %3658 = vmatprep.subr.mxu0 0.0
        %3659 = vmatpush2.msra.mxu0 0.0
        %3660 = vmatprep.subr.mxu0 0.0
        %3661 = vmatpush2.msra.mxu0 0.0
        %3662 = vmatprep.subr.mxu0 0.0
        %3663 = vmatpush2.msra.mxu0 0.0
        %3664 = vmatprep.subr.mxu0 0.0
        %3665 = vmatpush2.msra.mxu0 0.0
        %3666 = vmatprep.subr.mxu0 0.0
        %3667 = vmatpush2.msra.mxu0 0.0
        %3668 = vmatprep.subr.mxu0 0.0
        %3669 = vmatpush2.msra.mxu0 0.0
        %3670 = vmatprep.subr.mxu0 0.0
        %3671 = vmatpush2.msra.mxu0 0.0
        %3672 = vmatprep.subr.mxu0 0.0
        %3673 = vmatpush2.msra.mxu0 0.0
        %3674 = vmatprep.subr.mxu0 0.0
        %3675 = vmatpush2.msra.mxu0 0.0
        %3676 = vmatprep.subr.mxu0 0.0
        %3677 = vmatpush2.msra.mxu0 0.0
        %3678 = vmatprep.mubr.f32.mxu0 0.0
        %3679 = vmatmul.mubr.f32.gmra.mxu0 %v3612
        %v3680 = vpop.f32.mrf.mxu0
        %v3681 = vadd.f32 0.0, %v3680
        %v3682 = vpop.f32.mrf.mxu0
        %3683 = vdwg.mxu0
        %v3685 = vsel %vm2841, %v3532, 0
        %3687 = vmatprep.subr.mxu0 0.0
        %3688 = vmatpush1.msra.mxu0 0.0
        %3689 = vmatprep.subr.mxu0 0.0
        %3690 = vmatpush1.msra.mxu0 0.0
        %3691 = vmatprep.subr.mxu0 0.0
        %3692 = vmatpush1.msra.mxu0 0.0
        %3693 = vmatprep.subr.mxu0 0.0
        %3694 = vmatpush1.msra.mxu0 0.0
        %3695 = vmatprep.subr.mxu0 0.0
        %3696 = vmatpush1.msra.mxu0 0.0
        %3697 = vmatprep.subr.mxu0 0.0
        %3698 = vmatpush1.msra.mxu0 0.0
        %3699 = vmatprep.subr.mxu0 0.0
        %3700 = vmatpush1.msra.mxu0 0.0
        %3701 = vmatprep.subr.mxu0 0.0
        %3702 = vmatpush1.msra.mxu0 0.0
        %3703 = vmatprep.subr.mxu0 0.0
        %3704 = vmatpush1.msra.mxu0 0.0
        %3705 = vmatprep.subr.mxu0 0.0
        %3706 = vmatpush1.msra.mxu0 0.0
        %3707 = vmatprep.subr.mxu0 0.0
        %3708 = vmatpush1.msra.mxu0 0.0
        %3709 = vmatprep.subr.mxu0 0.0
        %3710 = vmatpush1.msra.mxu0 0.0
        %3711 = vmatprep.subr.mxu0 0.0
        %3712 = vmatpush1.msra.mxu0 0.0
        %3713 = vmatprep.subr.mxu0 0.0
        %3714 = vmatpush1.msra.mxu0 0.0
        %3715 = vmatprep.subr.mxu0 0.0
        %3716 = vmatpush1.msra.mxu0 0.0
        %3717 = vmatprep.subr.mxu0 0.0
        %3718 = vmatpush1.msra.mxu0 %v2813
        %3719 = vmatprep.subr.mxu0 0.0
        %3720 = vmatpush2.msra.mxu0 0.0
        %3721 = vmatprep.subr.mxu0 0.0
        %3722 = vmatpush2.msra.mxu0 0.0
        %3723 = vmatprep.subr.mxu0 0.0
        %3724 = vmatpush2.msra.mxu0 0.0
        %3725 = vmatprep.subr.mxu0 0.0
        %3726 = vmatpush2.msra.mxu0 0.0
        %3727 = vmatprep.subr.mxu0 0.0
        %3728 = vmatpush2.msra.mxu0 0.0
        %3729 = vmatprep.subr.mxu0 0.0
        %3730 = vmatpush2.msra.mxu0 0.0
        %3731 = vmatprep.subr.mxu0 0.0
        %3732 = vmatpush2.msra.mxu0 0.0
        %3733 = vmatprep.subr.mxu0 0.0
        %3734 = vmatpush2.msra.mxu0 0.0
        %3735 = vmatprep.subr.mxu0 0.0
        %3736 = vmatpush2.msra.mxu0 0.0
        %3737 = vmatprep.subr.mxu0 0.0
        %3738 = vmatpush2.msra.mxu0 0.0
        %3739 = vmatprep.subr.mxu0 0.0
        %3740 = vmatpush2.msra.mxu0 0.0
        %3741 = vmatprep.subr.mxu0 0.0
        %3742 = vmatpush2.msra.mxu0 0.0
        %3743 = vmatprep.subr.mxu0 0.0
        %3744 = vmatpush2.msra.mxu0 0.0
        %3745 = vmatprep.subr.mxu0 0.0
        %3746 = vmatpush2.msra.mxu0 0.0
        %3747 = vmatprep.subr.mxu0 0.0
        %3748 = vmatpush2.msra.mxu0 0.0
        %3749 = vmatprep.subr.mxu0 0.0
        %3750 = vmatpush2.msra.mxu0 0.0
        %3751 = vmatprep.mubr.f32.mxu0 0.0
        %3752 = vmatmul.mubr.f32.gmra.mxu0 %v3685
        %v3753 = vpop.f32.mrf.mxu0
        %v3754 = vadd.f32 0.0, %v3753
        %v3755 = vpop.f32.mrf.mxu0
        %3756 = vdwg.mxu0
        %v3758 = vsel %vm2841, %v3533, 0
        %3760 = vmatprep.subr.mxu0 0.0
        %3761 = vmatpush1.msra.mxu0 0.0
        %3762 = vmatprep.subr.mxu0 0.0
        %3763 = vmatpush1.msra.mxu0 0.0
        %3764 = vmatprep.subr.mxu0 0.0
        %3765 = vmatpush1.msra.mxu0 0.0
        %3766 = vmatprep.subr.mxu0 0.0
        %3767 = vmatpush1.msra.mxu0 0.0
        %3768 = vmatprep.subr.mxu0 0.0
        %3769 = vmatpush1.msra.mxu0 0.0
        %3770 = vmatprep.subr.mxu0 0.0
        %3771 = vmatpush1.msra.mxu0 0.0
        %3772 = vmatprep.subr.mxu0 0.0
        %3773 = vmatpush1.msra.mxu0 0.0
        %3774 = vmatprep.subr.mxu0 0.0
        %3775 = vmatpush1.msra.mxu0 0.0
        %3776 = vmatprep.subr.mxu0 0.0
        %3777 = vmatpush1.msra.mxu0 0.0
        %3778 = vmatprep.subr.mxu0 0.0
        %3779 = vmatpush1.msra.mxu0 0.0
        %3780 = vmatprep.subr.mxu0 0.0
        %3781 = vmatpush1.msra.mxu0 0.0
        %3782 = vmatprep.subr.mxu0 0.0
        %3783 = vmatpush1.msra.mxu0 0.0
        %3784 = vmatprep.subr.mxu0 0.0
        %3785 = vmatpush1.msra.mxu0 0.0
        %3786 = vmatprep.subr.mxu0 0.0
        %3787 = vmatpush1.msra.mxu0 0.0
        %3788 = vmatprep.subr.mxu0 0.0
        %3789 = vmatpush1.msra.mxu0 0.0
        %3790 = vmatprep.subr.mxu0 0.0
        %3791 = vmatpush1.msra.mxu0 %v2818
        %3792 = vmatprep.subr.mxu0 0.0
        %3793 = vmatpush2.msra.mxu0 0.0
        %3794 = vmatprep.subr.mxu0 0.0
        %3795 = vmatpush2.msra.mxu0 0.0
        %3796 = vmatprep.subr.mxu0 0.0
        %3797 = vmatpush2.msra.mxu0 0.0
        %3798 = vmatprep.subr.mxu0 0.0
        %3799 = vmatpush2.msra.mxu0 0.0
        %3800 = vmatprep.subr.mxu0 0.0
        %3801 = vmatpush2.msra.mxu0 0.0
        %3802 = vmatprep.subr.mxu0 0.0
        %3803 = vmatpush2.msra.mxu0 0.0
        %3804 = vmatprep.subr.mxu0 0.0
        %3805 = vmatpush2.msra.mxu0 0.0
        %3806 = vmatprep.subr.mxu0 0.0
        %3807 = vmatpush2.msra.mxu0 0.0
        %3808 = vmatprep.subr.mxu0 0.0
        %3809 = vmatpush2.msra.mxu0 0.0
        %3810 = vmatprep.subr.mxu0 0.0
        %3811 = vmatpush2.msra.mxu0 0.0
        %3812 = vmatprep.subr.mxu0 0.0
        %3813 = vmatpush2.msra.mxu0 0.0
        %3814 = vmatprep.subr.mxu0 0.0
        %3815 = vmatpush2.msra.mxu0 0.0
        %3816 = vmatprep.subr.mxu0 0.0
        %3817 = vmatpush2.msra.mxu0 0.0
        %3818 = vmatprep.subr.mxu0 0.0
        %3819 = vmatpush2.msra.mxu0 0.0
        %3820 = vmatprep.subr.mxu0 0.0
        %3821 = vmatpush2.msra.mxu0 0.0
        %3822 = vmatprep.subr.mxu0 0.0
        %3823 = vmatpush2.msra.mxu0 0.0
        %3824 = vmatprep.mubr.f32.mxu0 0.0
        %3825 = vmatmul.mubr.f32.gmra.mxu0 %v3758
        %v3826 = vpop.f32.mrf.mxu0
        %v3827 = vadd.f32 0.0, %v3826
        %v3828 = vpop.f32.mrf.mxu0
        %3829 = vdwg.mxu0
        %v3831 = vsel %vm2841, %v3534, 0
        %3833 = vmatprep.subr.mxu0 0.0
        %3834 = vmatpush1.msra.mxu0 0.0
        %3835 = vmatprep.subr.mxu0 0.0
        %3836 = vmatpush1.msra.mxu0 0.0
        %3837 = vmatprep.subr.mxu0 0.0
        %3838 = vmatpush1.msra.mxu0 0.0
        %3839 = vmatprep.subr.mxu0 0.0
        %3840 = vmatpush1.msra.mxu0 0.0
        %3841 = vmatprep.subr.mxu0 0.0
        %3842 = vmatpush1.msra.mxu0 0.0
        %3843 = vmatprep.subr.mxu0 0.0
        %3844 = vmatpush1.msra.mxu0 0.0
        %3845 = vmatprep.subr.mxu0 0.0
        %3846 = vmatpush1.msra.mxu0 0.0
        %3847 = vmatprep.subr.mxu0 0.0
        %3848 = vmatpush1.msra.mxu0 0.0
        %3849 = vmatprep.subr.mxu0 0.0
        %3850 = vmatpush1.msra.mxu0 0.0
        %3851 = vmatprep.subr.mxu0 0.0
        %3852 = vmatpush1.msra.mxu0 0.0
        %3853 = vmatprep.subr.mxu0 0.0
        %3854 = vmatpush1.msra.mxu0 0.0
        %3855 = vmatprep.subr.mxu0 0.0
        %3856 = vmatpush1.msra.mxu0 0.0
        %3857 = vmatprep.subr.mxu0 0.0
        %3858 = vmatpush1.msra.mxu0 0.0
        %3859 = vmatprep.subr.mxu0 0.0
        %3860 = vmatpush1.msra.mxu0 0.0
        %3861 = vmatprep.subr.mxu0 0.0
        %3862 = vmatpush1.msra.mxu0 0.0
        %3863 = vmatprep.subr.mxu0 0.0
        %3864 = vmatpush1.msra.mxu0 %v2823
        %3865 = vmatprep.subr.mxu0 0.0
        %3866 = vmatpush2.msra.mxu0 0.0
        %3867 = vmatprep.subr.mxu0 0.0
        %3868 = vmatpush2.msra.mxu0 0.0
        %3869 = vmatprep.subr.mxu0 0.0
        %3870 = vmatpush2.msra.mxu0 0.0
        %3871 = vmatprep.subr.mxu0 0.0
        %3872 = vmatpush2.msra.mxu0 0.0
        %3873 = vmatprep.subr.mxu0 0.0
        %3874 = vmatpush2.msra.mxu0 0.0
        %3875 = vmatprep.subr.mxu0 0.0
        %3876 = vmatpush2.msra.mxu0 0.0
        %3877 = vmatprep.subr.mxu0 0.0
        %3878 = vmatpush2.msra.mxu0 0.0
        %3879 = vmatprep.subr.mxu0 0.0
        %3880 = vmatpush2.msra.mxu0 0.0
        %3881 = vmatprep.subr.mxu0 0.0
        %3882 = vmatpush2.msra.mxu0 0.0
        %3883 = vmatprep.subr.mxu0 0.0
        %3884 = vmatpush2.msra.mxu0 0.0
        %3885 = vmatprep.subr.mxu0 0.0
        %3886 = vmatpush2.msra.mxu0 0.0
        %3887 = vmatprep.subr.mxu0 0.0
        %3888 = vmatpush2.msra.mxu0 0.0
        %3889 = vmatprep.subr.mxu0 0.0
        %3890 = vmatpush2.msra.mxu0 0.0
        %3891 = vmatprep.subr.mxu0 0.0
        %3892 = vmatpush2.msra.mxu0 0.0
        %3893 = vmatprep.subr.mxu0 0.0
        %3894 = vmatpush2.msra.mxu0 0.0
        %3895 = vmatprep.subr.mxu0 0.0
        %3896 = vmatpush2.msra.mxu0 0.0
        %3897 = vmatprep.mubr.f32.mxu0 0.0
        %3898 = vmatmul.mubr.f32.gmra.mxu0 %v3831
        %v3899 = vpop.f32.mrf.mxu0
        %v3900 = vadd.f32 0.0, %v3899
        %v3901 = vpop.f32.mrf.mxu0
        %3902 = vdwg.mxu0
        %v3904 = vsel %vm2841, %v3535, 0
        %3906 = vmatprep.subr.mxu0 0.0
        %3907 = vmatpush1.msra.mxu0 0.0
        %3908 = vmatprep.subr.mxu0 0.0
        %3909 = vmatpush1.msra.mxu0 0.0
        %3910 = vmatprep.subr.mxu0 0.0
        %3911 = vmatpush1.msra.mxu0 0.0
        %3912 = vmatprep.subr.mxu0 0.0
        %3913 = vmatpush1.msra.mxu0 0.0
        %3914 = vmatprep.subr.mxu0 0.0
        %3915 = vmatpush1.msra.mxu0 0.0
        %3916 = vmatprep.subr.mxu0 0.0
        %3917 = vmatpush1.msra.mxu0 0.0
        %3918 = vmatprep.subr.mxu0 0.0
        %3919 = vmatpush1.msra.mxu0 0.0
        %3920 = vmatprep.subr.mxu0 0.0
        %3921 = vmatpush1.msra.mxu0 0.0
        %3922 = vmatprep.subr.mxu0 0.0
        %3923 = vmatpush1.msra.mxu0 0.0
        %3924 = vmatprep.subr.mxu0 0.0
        %3925 = vmatpush1.msra.mxu0 0.0
        %3926 = vmatprep.subr.mxu0 0.0
        %3927 = vmatpush1.msra.mxu0 0.0
        %3928 = vmatprep.subr.mxu0 0.0
        %3929 = vmatpush1.msra.mxu0 0.0
        %3930 = vmatprep.subr.mxu0 0.0
        %3931 = vmatpush1.msra.mxu0 0.0
        %3932 = vmatprep.subr.mxu0 0.0
        %3933 = vmatpush1.msra.mxu0 0.0
        %3934 = vmatprep.subr.mxu0 0.0
        %3935 = vmatpush1.msra.mxu0 0.0
        %3936 = vmatprep.subr.mxu0 0.0
        %3937 = vmatpush1.msra.mxu0 %v2828
        %3938 = vmatprep.subr.mxu0 0.0
        %3939 = vmatpush2.msra.mxu0 0.0
        %3940 = vmatprep.subr.mxu0 0.0
        %3941 = vmatpush2.msra.mxu0 0.0
        %3942 = vmatprep.subr.mxu0 0.0
        %3943 = vmatpush2.msra.mxu0 0.0
        %3944 = vmatprep.subr.mxu0 0.0
        %3945 = vmatpush2.msra.mxu0 0.0
        %3946 = vmatprep.subr.mxu0 0.0
        %3947 = vmatpush2.msra.mxu0 0.0
        %3948 = vmatprep.subr.mxu0 0.0
        %3949 = vmatpush2.msra.mxu0 0.0
        %3950 = vmatprep.subr.mxu0 0.0
        %3951 = vmatpush2.msra.mxu0 0.0
        %3952 = vmatprep.subr.mxu0 0.0
        %3953 = vmatpush2.msra.mxu0 0.0
        %3954 = vmatprep.subr.mxu0 0.0
        %3955 = vmatpush2.msra.mxu0 0.0
        %3956 = vmatprep.subr.mxu0 0.0
        %3957 = vmatpush2.msra.mxu0 0.0
        %3958 = vmatprep.subr.mxu0 0.0
        %3959 = vmatpush2.msra.mxu0 0.0
        %3960 = vmatprep.subr.mxu0 0.0
        %3961 = vmatpush2.msra.mxu0 0.0
        %3962 = vmatprep.subr.mxu0 0.0
        %3963 = vmatpush2.msra.mxu0 0.0
        %3964 = vmatprep.subr.mxu0 0.0
        %3965 = vmatpush2.msra.mxu0 0.0
        %3966 = vmatprep.subr.mxu0 0.0
        %3967 = vmatpush2.msra.mxu0 0.0
        %3968 = vmatprep.subr.mxu0 0.0
        %3969 = vmatpush2.msra.mxu0 0.0
        %3970 = vmatprep.mubr.f32.mxu0 0.0
        %3971 = vmatmul.mubr.f32.gmra.mxu0 %v3904
        %v3972 = vpop.f32.mrf.mxu0
        %v3973 = vadd.f32 0.0, %v3972
        %v3974 = vpop.f32.mrf.mxu0
        %3975 = vdwg.mxu0
        %v3977 = vsel %vm2841, %v3536, 0
        %3979 = vmatprep.subr.mxu0 0.0
        %3980 = vmatpush1.msra.mxu0 0.0
        %3981 = vmatprep.subr.mxu0 0.0
        %3982 = vmatpush1.msra.mxu0 0.0
        %3983 = vmatprep.subr.mxu0 0.0
        %3984 = vmatpush1.msra.mxu0 0.0
        %3985 = vmatprep.subr.mxu0 0.0
        %3986 = vmatpush1.msra.mxu0 0.0
        %3987 = vmatprep.subr.mxu0 0.0
        %3988 = vmatpush1.msra.mxu0 0.0
        %3989 = vmatprep.subr.mxu0 0.0
        %3990 = vmatpush1.msra.mxu0 0.0
        %3991 = vmatprep.subr.mxu0 0.0
        %3992 = vmatpush1.msra.mxu0 0.0
        %3993 = vmatprep.subr.mxu0 0.0
        %3994 = vmatpush1.msra.mxu0 0.0
        %3995 = vmatprep.subr.mxu0 0.0
        %3996 = vmatpush1.msra.mxu0 0.0
        %3997 = vmatprep.subr.mxu0 0.0
        %3998 = vmatpush1.msra.mxu0 0.0
        %3999 = vmatprep.subr.mxu0 0.0
        %4000 = vmatpush1.msra.mxu0 0.0
        %4001 = vmatprep.subr.mxu0 0.0
        %4002 = vmatpush1.msra.mxu0 0.0
        %4003 = vmatprep.subr.mxu0 0.0
        %4004 = vmatpush1.msra.mxu0 0.0
        %4005 = vmatprep.subr.mxu0 0.0
        %4006 = vmatpush1.msra.mxu0 0.0
        %4007 = vmatprep.subr.mxu0 0.0
        %4008 = vmatpush1.msra.mxu0 0.0
        %4009 = vmatprep.subr.mxu0 0.0
        %4010 = vmatpush1.msra.mxu0 %v2833
        %4011 = vmatprep.subr.mxu0 0.0
        %4012 = vmatpush2.msra.mxu0 0.0
        %4013 = vmatprep.subr.mxu0 0.0
        %4014 = vmatpush2.msra.mxu0 0.0
        %4015 = vmatprep.subr.mxu0 0.0
        %4016 = vmatpush2.msra.mxu0 0.0
        %4017 = vmatprep.subr.mxu0 0.0
        %4018 = vmatpush2.msra.mxu0 0.0
        %4019 = vmatprep.subr.mxu0 0.0
        %4020 = vmatpush2.msra.mxu0 0.0
        %4021 = vmatprep.subr.mxu0 0.0
        %4022 = vmatpush2.msra.mxu0 0.0
        %4023 = vmatprep.subr.mxu0 0.0
        %4024 = vmatpush2.msra.mxu0 0.0
        %4025 = vmatprep.subr.mxu0 0.0
        %4026 = vmatpush2.msra.mxu0 0.0
        %4027 = vmatprep.subr.mxu0 0.0
        %4028 = vmatpush2.msra.mxu0 0.0
        %4029 = vmatprep.subr.mxu0 0.0
        %4030 = vmatpush2.msra.mxu0 0.0
        %4031 = vmatprep.subr.mxu0 0.0
        %4032 = vmatpush2.msra.mxu0 0.0
        %4033 = vmatprep.subr.mxu0 0.0
        %4034 = vmatpush2.msra.mxu0 0.0
        %4035 = vmatprep.subr.mxu0 0.0
        %4036 = vmatpush2.msra.mxu0 0.0
        %4037 = vmatprep.subr.mxu0 0.0
        %4038 = vmatpush2.msra.mxu0 0.0
        %4039 = vmatprep.subr.mxu0 0.0
        %4040 = vmatpush2.msra.mxu0 0.0
        %4041 = vmatprep.subr.mxu0 0.0
        %4042 = vmatpush2.msra.mxu0 0.0
        %4043 = vmatprep.mubr.f32.mxu0 0.0
        %4044 = vmatmul.mubr.f32.gmra.mxu0 %v3977
        %v4045 = vpop.f32.mrf.mxu0
        %v4046 = vadd.f32 0.0, %v4045
        %v4047 = vpop.f32.mrf.mxu0
        %4048 = vdwg.mxu0
        %v4050 = vsel %vm2841, %v3537, 0
        %4052 = vmatprep.subr.mxu0 0.0
        %4053 = vmatpush1.msra.mxu0 0.0
        %4054 = vmatprep.subr.mxu0 0.0
        %4055 = vmatpush1.msra.mxu0 0.0
        %4056 = vmatprep.subr.mxu0 0.0
        %4057 = vmatpush1.msra.mxu0 0.0
        %4058 = vmatprep.subr.mxu0 0.0
        %4059 = vmatpush1.msra.mxu0 0.0
        %4060 = vmatprep.subr.mxu0 0.0
        %4061 = vmatpush1.msra.mxu0 0.0
        %4062 = vmatprep.subr.mxu0 0.0
        %4063 = vmatpush1.msra.mxu0 0.0
        %4064 = vmatprep.subr.mxu0 0.0
        %4065 = vmatpush1.msra.mxu0 0.0
        %4066 = vmatprep.subr.mxu0 0.0
        %4067 = vmatpush1.msra.mxu0 0.0
        %4068 = vmatprep.subr.mxu0 0.0
        %4069 = vmatpush1.msra.mxu0 0.0
        %4070 = vmatprep.subr.mxu0 0.0
        %4071 = vmatpush1.msra.mxu0 0.0
        %4072 = vmatprep.subr.mxu0 0.0
        %4073 = vmatpush1.msra.mxu0 0.0
        %4074 = vmatprep.subr.mxu0 0.0
        %4075 = vmatpush1.msra.mxu0 0.0
        %4076 = vmatprep.subr.mxu0 0.0
        %4077 = vmatpush1.msra.mxu0 0.0
        %4078 = vmatprep.subr.mxu0 0.0
        %4079 = vmatpush1.msra.mxu0 0.0
        %4080 = vmatprep.subr.mxu0 0.0
        %4081 = vmatpush1.msra.mxu0 0.0
        %4082 = vmatprep.subr.mxu0 0.0
        %4083 = vmatpush1.msra.mxu0 %v2838
        %4084 = vmatprep.subr.mxu0 0.0
        %4085 = vmatpush2.msra.mxu0 0.0
        %4086 = vmatprep.subr.mxu0 0.0
        %4087 = vmatpush2.msra.mxu0 0.0
        %4088 = vmatprep.subr.mxu0 0.0
        %4089 = vmatpush2.msra.mxu0 0.0
        %4090 = vmatprep.subr.mxu0 0.0
        %4091 = vmatpush2.msra.mxu0 0.0
        %4092 = vmatprep.subr.mxu0 0.0
        %4093 = vmatpush2.msra.mxu0 0.0
        %4094 = vmatprep.subr.mxu0 0.0
        %4095 = vmatpush2.msra.mxu0 0.0
        %4096 = vmatprep.subr.mxu0 0.0
        %4097 = vmatpush2.msra.mxu0 0.0
        %4098 = vmatprep.subr.mxu0 0.0
        %4099 = vmatpush2.msra.mxu0 0.0
        %4100 = vmatprep.subr.mxu0 0.0
        %4101 = vmatpush2.msra.mxu0 0.0
        %4102 = vmatprep.subr.mxu0 0.0
        %4103 = vmatpush2.msra.mxu0 0.0
        %4104 = vmatprep.subr.mxu0 0.0
        %4105 = vmatpush2.msra.mxu0 0.0
        %4106 = vmatprep.subr.mxu0 0.0
        %4107 = vmatpush2.msra.mxu0 0.0
        %4108 = vmatprep.subr.mxu0 0.0
        %4109 = vmatpush2.msra.mxu0 0.0
        %4110 = vmatprep.subr.mxu0 0.0
        %4111 = vmatpush2.msra.mxu0 0.0
        %4112 = vmatprep.subr.mxu0 0.0
        %4113 = vmatpush2.msra.mxu0 0.0
        %4114 = vmatprep.subr.mxu0 0.0
        %4115 = vmatpush2.msra.mxu0 0.0
        %4116 = vmatprep.mubr.f32.mxu0 0.0
        %4117 = vmatmul.mubr.f32.gmra.mxu0 %v4050
        %v4118 = vpop.f32.mrf.mxu0
        %v4119 = vadd.f32 0.0, %v4118
        %v4120 = vpop.f32.mrf.mxu0
        %4121 = vdwg.mxu0
        %s4122 = sld [smem:[#allocation2]]
        %v4123 = vstv %s4122
        %v4124 = vmul.f32 %v4123, %v3608
        %v4125 = vmul.f32 %v4123, %v3681
        %v4126 = vmul.f32 %v4123, %v3754
        %v4127 = vmul.f32 %v4123, %v3827
        %v4128 = vmul.f32 %v4123, %v3900
        %v4129 = vmul.f32 %v4123, %v3973
        %v4130 = vmul.f32 %v4123, %v4046
        %v4131 = vmul.f32 %v4123, %v4119
        %v4132 = vadd.f32 %v4124, %v2488
        %v4133 = vadd.f32 %v4125, %v2489
        %v4134 = vadd.f32 %v4126, %v2490
        %v4135 = vadd.f32 %v4127, %v2491
        %v4136 = vadd.f32 %v4128, %v2492
        %v4137 = vadd.f32 %v4129, %v2493
        %v4138 = vadd.f32 %v4130, %v2494
        %v4139 = vadd.f32 %v4131, %v2495
        %v4140 = vld [vmem:[%s1] sm:$0xff]
        %v4141 = vld [vmem:[%s1 + $0x8] sm:$0xff]
        %v4142 = vld [vmem:[%s1 + $0x10] sm:$0xff]
        %v4143 = vld [vmem:[%s1 + $0x18] sm:$0xff]
        %v4144 = vld [vmem:[%s1 + $0x20] sm:$0xff]
        %v4145 = vld [vmem:[%s1 + $0x28] sm:$0xff]
        %v4146 = vld [vmem:[%s1 + $0x30] sm:$0xff]
        %v4147 = vld [vmem:[%s1 + $0x38] sm:$0xff]
        %vm4148 = vcmask 523264
        %v4150 = vsel %vm4148, %v4140, 0
        %v4153 = vsel %vm4148, %v4141, 0
        %v4156 = vsel %vm4148, %v4142, 0
        %v4159 = vsel %vm4148, %v4143, 0
        %v4162 = vsel %vm4148, %v4144, 0
        %v4165 = vsel %vm4148, %v4145, 0
        %v4168 = vsel %vm4148, %v4146, 0
        %v4171 = vsel %vm4148, %v4147, 0
        %4173 = vmatprep.subr.mxu0 0.0
        %4174 = vmatpush1.msra.mxu0 0.0
        %4175 = vmatprep.subr.mxu0 0.0
        %4176 = vmatpush1.msra.mxu0 0.0
        %4177 = vmatprep.subr.mxu0 0.0
        %4178 = vmatpush1.msra.mxu0 0.0
        %4179 = vmatprep.subr.mxu0 0.0
        %4180 = vmatpush1.msra.mxu0 0.0
        %4181 = vmatprep.subr.mxu0 0.0
        %4182 = vmatpush1.msra.mxu0 0.0
        %4183 = vmatprep.subr.mxu0 0.0
        %4184 = vmatpush1.msra.mxu0 0.0
        %4185 = vmatprep.subr.mxu0 0.0
        %4186 = vmatpush1.msra.mxu0 0.0
        %4187 = vmatprep.subr.mxu0 0.0
        %4188 = vmatpush1.msra.mxu0 0.0
        %4189 = vmatprep.subr.mxu0 0.0
        %4190 = vmatpush1.msra.mxu0 %v4139
        %4191 = vmatprep.subr.mxu0 0.0
        %4192 = vmatpush1.msra.mxu0 %v4138
        %4193 = vmatprep.subr.mxu0 0.0
        %4194 = vmatpush1.msra.mxu0 %v4137
        %4195 = vmatprep.subr.mxu0 0.0
        %4196 = vmatpush1.msra.mxu0 %v4136
        %4197 = vmatprep.subr.mxu0 0.0
        %4198 = vmatpush1.msra.mxu0 %v4135
        %4199 = vmatprep.subr.mxu0 0.0
        %4200 = vmatpush1.msra.mxu0 %v4134
        %4201 = vmatprep.subr.mxu0 0.0
        %4202 = vmatpush1.msra.mxu0 %v4133
        %4203 = vmatprep.subr.mxu0 0.0
        %4204 = vmatpush1.msra.mxu0 %v4132
        %4205 = vmatprep.subr.mxu0 0.0
        %4206 = vmatpush2.msra.mxu0 0.0
        %4207 = vmatprep.subr.mxu0 0.0
        %4208 = vmatpush2.msra.mxu0 0.0
        %4209 = vmatprep.subr.mxu0 0.0
        %4210 = vmatpush2.msra.mxu0 0.0
        %4211 = vmatprep.subr.mxu0 0.0
        %4212 = vmatpush2.msra.mxu0 0.0
        %4213 = vmatprep.subr.mxu0 0.0
        %4214 = vmatpush2.msra.mxu0 0.0
        %4215 = vmatprep.subr.mxu0 0.0
        %4216 = vmatpush2.msra.mxu0 0.0
        %4217 = vmatprep.subr.mxu0 0.0
        %4218 = vmatpush2.msra.mxu0 0.0
        %4219 = vmatprep.subr.mxu0 0.0
        %4220 = vmatpush2.msra.mxu0 0.0
        %4221 = vmatprep.subr.mxu0 0.0
        %4222 = vmatpush2.msra.mxu0 0.0
        %4223 = vmatprep.subr.mxu0 0.0
        %4224 = vmatpush2.msra.mxu0 0.0
        %4225 = vmatprep.subr.mxu0 0.0
        %4226 = vmatpush2.msra.mxu0 0.0
        %4227 = vmatprep.subr.mxu0 0.0
        %4228 = vmatpush2.msra.mxu0 0.0
        %4229 = vmatprep.subr.mxu0 0.0
        %4230 = vmatpush2.msra.mxu0 0.0
        %4231 = vmatprep.subr.mxu0 0.0
        %4232 = vmatpush2.msra.mxu0 0.0
        %4233 = vmatprep.subr.mxu0 0.0
        %4234 = vmatpush2.msra.mxu0 0.0
        %4235 = vmatprep.subr.mxu0 0.0
        %4236 = vmatpush2.msra.mxu0 0.0
        %4237 = vmatprep.mubr.f32.mxu0 0.0
        %4238 = vmatmul.mubr.f32.gmra.mxu0 %v4150
        %v4239 = vpop.f32.mrf.mxu0
        %v4240 = vadd.f32 0.0, %v4239
        %v4241 = vpop.f32.mrf.mxu0
        %4242 = vmatprep.mubr.f32.mxu0 0.0
        %4243 = vmatmul.mubr.f32.gmra.mxu0 %v4153
        %v4244 = vpop.f32.mrf.mxu0
        %v4245 = vadd.f32 0.0, %v4244
        %v4246 = vpop.f32.mrf.mxu0
        %4247 = vmatprep.mubr.f32.mxu0 0.0
        %4248 = vmatmul.mubr.f32.gmra.mxu0 %v4156
        %v4249 = vpop.f32.mrf.mxu0
        %v4250 = vadd.f32 0.0, %v4249
        %v4251 = vpop.f32.mrf.mxu0
        %4252 = vmatprep.mubr.f32.mxu0 0.0
        %4253 = vmatmul.mubr.f32.gmra.mxu0 %v4159
        %v4254 = vpop.f32.mrf.mxu0
        %v4255 = vadd.f32 0.0, %v4254
        %v4256 = vpop.f32.mrf.mxu0
        %4257 = vmatprep.mubr.f32.mxu0 0.0
        %4258 = vmatmul.mubr.f32.gmra.mxu0 %v4162
        %v4259 = vpop.f32.mrf.mxu0
        %v4260 = vadd.f32 0.0, %v4259
        %v4261 = vpop.f32.mrf.mxu0
        %4262 = vmatprep.mubr.f32.mxu0 0.0
        %4263 = vmatmul.mubr.f32.gmra.mxu0 %v4165
        %v4264 = vpop.f32.mrf.mxu0
        %v4265 = vadd.f32 0.0, %v4264
        %v4266 = vpop.f32.mrf.mxu0
        %4267 = vmatprep.mubr.f32.mxu0 0.0
        %4268 = vmatmul.mubr.f32.gmra.mxu0 %v4168
        %v4269 = vpop.f32.mrf.mxu0
        %v4270 = vadd.f32 0.0, %v4269
        %v4271 = vpop.f32.mrf.mxu0
        %4272 = vmatprep.mubr.f32.mxu0 0.0
        %4273 = vmatmul.mubr.f32.gmra.mxu0 %v4171
        %v4274 = vpop.f32.mrf.mxu0
        %v4275 = vadd.f32 0.0, %v4274
        %v4276 = vpop.f32.mrf.mxu0
        %4277 = vdwg.mxu0
        %v4278 = vld [vmem:[%s14] sm:$0xff]
        %v4279 = vld [vmem:[%s14 + $0x8] sm:$0xff]
        %v4280 = vld [vmem:[%s14 + $0x10] sm:$0xff]
        %v4281 = vld [vmem:[%s14 + $0x18] sm:$0xff]
        %v4282 = vld [vmem:[%s14 + $0x20] sm:$0xff]
        %v4283 = vld [vmem:[%s14 + $0x28] sm:$0xff]
        %v4284 = vld [vmem:[%s14 + $0x30] sm:$0xff]
        %v4285 = vld [vmem:[%s14 + $0x38] sm:$0xff]
        %v4286 = vld [vmem:[%s14 + $0x40] sm:$0xff]
        %v4287 = vld [vmem:[%s14 + $0x48] sm:$0xff]
        %v4288 = vld [vmem:[%s14 + $0x50] sm:$0xff]
        %v4289 = vld [vmem:[%s14 + $0x58] sm:$0xff]
        %v4290 = vld [vmem:[%s14 + $0x60] sm:$0xff]
        %v4291 = vld [vmem:[%s14 + $0x68] sm:$0xff]
        %v4292 = vld [vmem:[%s14 + $0x70] sm:$0xff]
        %v4293 = vld [vmem:[%s14 + $0x78] sm:$0xff]
        %v4295 = vsel %vm1222, %v4240, 0
        %4297 = vmatprep.subr.mxu0 0.0
        %4298 = vmatpush1.msra.mxu0 0.0
        %4299 = vmatprep.subr.mxu0 0.0
        %4300 = vmatpush1.msra.mxu0 0.0
        %4301 = vmatprep.subr.mxu0 0.0
        %4302 = vmatpush1.msra.mxu0 0.0
        %4303 = vmatprep.subr.mxu0 0.0
        %4304 = vmatpush1.msra.mxu0 0.0
        %4305 = vmatprep.subr.mxu0 0.0
        %4306 = vmatpush1.msra.mxu0 0.0
        %4307 = vmatprep.subr.mxu0 0.0
        %4308 = vmatpush1.msra.mxu0 0.0
        %4309 = vmatprep.subr.mxu0 0.0
        %4310 = vmatpush1.msra.mxu0 0.0
        %4311 = vmatprep.subr.mxu0 0.0
        %4312 = vmatpush1.msra.mxu0 0.0
        %4313 = vmatprep.subr.mxu0 0.0
        %4314 = vmatpush1.msra.mxu0 0.0
        %4315 = vmatprep.subr.mxu0 0.0
        %4316 = vmatpush1.msra.mxu0 0.0
        %4317 = vmatprep.subr.mxu0 0.0
        %4318 = vmatpush1.msra.mxu0 0.0
        %4319 = vmatprep.subr.mxu0 0.0
        %4320 = vmatpush1.msra.mxu0 0.0
        %4321 = vmatprep.subr.mxu0 0.0
        %4322 = vmatpush1.msra.mxu0 0.0
        %4323 = vmatprep.subr.mxu0 0.0
        %4324 = vmatpush1.msra.mxu0 0.0
        %4325 = vmatprep.subr.mxu0 0.0
        %4326 = vmatpush1.msra.mxu0 %v4279
        %4327 = vmatprep.subr.mxu0 0.0
        %4328 = vmatpush1.msra.mxu0 %v4278
        %4329 = vmatprep.subr.mxu0 0.0
        %4330 = vmatpush2.msra.mxu0 0.0
        %4331 = vmatprep.subr.mxu0 0.0
        %4332 = vmatpush2.msra.mxu0 0.0
        %4333 = vmatprep.subr.mxu0 0.0
        %4334 = vmatpush2.msra.mxu0 0.0
        %4335 = vmatprep.subr.mxu0 0.0
        %4336 = vmatpush2.msra.mxu0 0.0
        %4337 = vmatprep.subr.mxu0 0.0
        %4338 = vmatpush2.msra.mxu0 0.0
        %4339 = vmatprep.subr.mxu0 0.0
        %4340 = vmatpush2.msra.mxu0 0.0
        %4341 = vmatprep.subr.mxu0 0.0
        %4342 = vmatpush2.msra.mxu0 0.0
        %4343 = vmatprep.subr.mxu0 0.0
        %4344 = vmatpush2.msra.mxu0 0.0
        %4345 = vmatprep.subr.mxu0 0.0
        %4346 = vmatpush2.msra.mxu0 0.0
        %4347 = vmatprep.subr.mxu0 0.0
        %4348 = vmatpush2.msra.mxu0 0.0
        %4349 = vmatprep.subr.mxu0 0.0
        %4350 = vmatpush2.msra.mxu0 0.0
        %4351 = vmatprep.subr.mxu0 0.0
        %4352 = vmatpush2.msra.mxu0 0.0
        %4353 = vmatprep.subr.mxu0 0.0
        %4354 = vmatpush2.msra.mxu0 0.0
        %4355 = vmatprep.subr.mxu0 0.0
        %4356 = vmatpush2.msra.mxu0 0.0
        %4357 = vmatprep.subr.mxu0 0.0
        %4358 = vmatpush2.msra.mxu0 0.0
        %4359 = vmatprep.subr.mxu0 0.0
        %4360 = vmatpush2.msra.mxu0 0.0
        %4361 = vmatprep.mubr.f32.mxu0 0.0
        %4362 = vmatmul.mubr.f32.gmra.mxu0 %v4295
        %v4363 = vpop.f32.mrf.mxu0
        %v4364 = vadd.f32 0.0, %v4363
        %v4365 = vpop.f32.mrf.mxu0
        %4366 = vdwg.mxu0
        %v4368 = vsel %vm1222, %v4245, 0
        %4370 = vmatprep.subr.mxu0 0.0
        %4371 = vmatpush1.msra.mxu0 0.0
        %4372 = vmatprep.subr.mxu0 0.0
        %4373 = vmatpush1.msra.mxu0 0.0
        %4374 = vmatprep.subr.mxu0 0.0
        %4375 = vmatpush1.msra.mxu0 0.0
        %4376 = vmatprep.subr.mxu0 0.0
        %4377 = vmatpush1.msra.mxu0 0.0
        %4378 = vmatprep.subr.mxu0 0.0
        %4379 = vmatpush1.msra.mxu0 0.0
        %4380 = vmatprep.subr.mxu0 0.0
        %4381 = vmatpush1.msra.mxu0 0.0
        %4382 = vmatprep.subr.mxu0 0.0
        %4383 = vmatpush1.msra.mxu0 0.0
        %4384 = vmatprep.subr.mxu0 0.0
        %4385 = vmatpush1.msra.mxu0 0.0
        %4386 = vmatprep.subr.mxu0 0.0
        %4387 = vmatpush1.msra.mxu0 0.0
        %4388 = vmatprep.subr.mxu0 0.0
        %4389 = vmatpush1.msra.mxu0 0.0
        %4390 = vmatprep.subr.mxu0 0.0
        %4391 = vmatpush1.msra.mxu0 0.0
        %4392 = vmatprep.subr.mxu0 0.0
        %4393 = vmatpush1.msra.mxu0 0.0
        %4394 = vmatprep.subr.mxu0 0.0
        %4395 = vmatpush1.msra.mxu0 0.0
        %4396 = vmatprep.subr.mxu0 0.0
        %4397 = vmatpush1.msra.mxu0 0.0
        %4398 = vmatprep.subr.mxu0 0.0
        %4399 = vmatpush1.msra.mxu0 %v4281
        %4400 = vmatprep.subr.mxu0 0.0
        %4401 = vmatpush1.msra.mxu0 %v4280
        %4402 = vmatprep.subr.mxu0 0.0
        %4403 = vmatpush2.msra.mxu0 0.0
        %4404 = vmatprep.subr.mxu0 0.0
        %4405 = vmatpush2.msra.mxu0 0.0
        %4406 = vmatprep.subr.mxu0 0.0
        %4407 = vmatpush2.msra.mxu0 0.0
        %4408 = vmatprep.subr.mxu0 0.0
        %4409 = vmatpush2.msra.mxu0 0.0
        %4410 = vmatprep.subr.mxu0 0.0
        %4411 = vmatpush2.msra.mxu0 0.0
        %4412 = vmatprep.subr.mxu0 0.0
        %4413 = vmatpush2.msra.mxu0 0.0
        %4414 = vmatprep.subr.mxu0 0.0
        %4415 = vmatpush2.msra.mxu0 0.0
        %4416 = vmatprep.subr.mxu0 0.0
        %4417 = vmatpush2.msra.mxu0 0.0
        %4418 = vmatprep.subr.mxu0 0.0
        %4419 = vmatpush2.msra.mxu0 0.0
        %4420 = vmatprep.subr.mxu0 0.0
        %4421 = vmatpush2.msra.mxu0 0.0
        %4422 = vmatprep.subr.mxu0 0.0
        %4423 = vmatpush2.msra.mxu0 0.0
        %4424 = vmatprep.subr.mxu0 0.0
        %4425 = vmatpush2.msra.mxu0 0.0
        %4426 = vmatprep.subr.mxu0 0.0
        %4427 = vmatpush2.msra.mxu0 0.0
        %4428 = vmatprep.subr.mxu0 0.0
        %4429 = vmatpush2.msra.mxu0 0.0
        %4430 = vmatprep.subr.mxu0 0.0
        %4431 = vmatpush2.msra.mxu0 0.0
        %4432 = vmatprep.subr.mxu0 0.0
        %4433 = vmatpush2.msra.mxu0 0.0
        %4434 = vmatprep.mubr.f32.mxu0 0.0
        %4435 = vmatmul.mubr.f32.gmra.mxu0 %v4368
        %v4436 = vpop.f32.mrf.mxu0
        %v4437 = vadd.f32 0.0, %v4436
        %v4438 = vpop.f32.mrf.mxu0
        %4439 = vdwg.mxu0
        %v4441 = vsel %vm1222, %v4250, 0
        %4443 = vmatprep.subr.mxu0 0.0
        %4444 = vmatpush1.msra.mxu0 0.0
        %4445 = vmatprep.subr.mxu0 0.0
        %4446 = vmatpush1.msra.mxu0 0.0
        %4447 = vmatprep.subr.mxu0 0.0
        %4448 = vmatpush1.msra.mxu0 0.0
        %4449 = vmatprep.subr.mxu0 0.0
        %4450 = vmatpush1.msra.mxu0 0.0
        %4451 = vmatprep.subr.mxu0 0.0
        %4452 = vmatpush1.msra.mxu0 0.0
        %4453 = vmatprep.subr.mxu0 0.0
        %4454 = vmatpush1.msra.mxu0 0.0
        %4455 = vmatprep.subr.mxu0 0.0
        %4456 = vmatpush1.msra.mxu0 0.0
        %4457 = vmatprep.subr.mxu0 0.0
        %4458 = vmatpush1.msra.mxu0 0.0
        %4459 = vmatprep.subr.mxu0 0.0
        %4460 = vmatpush1.msra.mxu0 0.0
        %4461 = vmatprep.subr.mxu0 0.0
        %4462 = vmatpush1.msra.mxu0 0.0
        %4463 = vmatprep.subr.mxu0 0.0
        %4464 = vmatpush1.msra.mxu0 0.0
        %4465 = vmatprep.subr.mxu0 0.0
        %4466 = vmatpush1.msra.mxu0 0.0
        %4467 = vmatprep.subr.mxu0 0.0
        %4468 = vmatpush1.msra.mxu0 0.0
        %4469 = vmatprep.subr.mxu0 0.0
        %4470 = vmatpush1.msra.mxu0 0.0
        %4471 = vmatprep.subr.mxu0 0.0
        %4472 = vmatpush1.msra.mxu0 %v4283
        %4473 = vmatprep.subr.mxu0 0.0
        %4474 = vmatpush1.msra.mxu0 %v4282
        %4475 = vmatprep.subr.mxu0 0.0
        %4476 = vmatpush2.msra.mxu0 0.0
        %4477 = vmatprep.subr.mxu0 0.0
        %4478 = vmatpush2.msra.mxu0 0.0
        %4479 = vmatprep.subr.mxu0 0.0
        %4480 = vmatpush2.msra.mxu0 0.0
        %4481 = vmatprep.subr.mxu0 0.0
        %4482 = vmatpush2.msra.mxu0 0.0
        %4483 = vmatprep.subr.mxu0 0.0
        %4484 = vmatpush2.msra.mxu0 0.0
        %4485 = vmatprep.subr.mxu0 0.0
        %4486 = vmatpush2.msra.mxu0 0.0
        %4487 = vmatprep.subr.mxu0 0.0
        %4488 = vmatpush2.msra.mxu0 0.0
        %4489 = vmatprep.subr.mxu0 0.0
        %4490 = vmatpush2.msra.mxu0 0.0
        %4491 = vmatprep.subr.mxu0 0.0
        %4492 = vmatpush2.msra.mxu0 0.0
        %4493 = vmatprep.subr.mxu0 0.0
        %4494 = vmatpush2.msra.mxu0 0.0
        %4495 = vmatprep.subr.mxu0 0.0
        %4496 = vmatpush2.msra.mxu0 0.0
        %4497 = vmatprep.subr.mxu0 0.0
        %4498 = vmatpush2.msra.mxu0 0.0
        %4499 = vmatprep.subr.mxu0 0.0
        %4500 = vmatpush2.msra.mxu0 0.0
        %4501 = vmatprep.subr.mxu0 0.0
        %4502 = vmatpush2.msra.mxu0 0.0
        %4503 = vmatprep.subr.mxu0 0.0
        %4504 = vmatpush2.msra.mxu0 0.0
        %4505 = vmatprep.subr.mxu0 0.0
        %4506 = vmatpush2.msra.mxu0 0.0
        %4507 = vmatprep.mubr.f32.mxu0 0.0
        %4508 = vmatmul.mubr.f32.gmra.mxu0 %v4441
        %v4509 = vpop.f32.mrf.mxu0
        %v4510 = vadd.f32 0.0, %v4509
        %v4511 = vpop.f32.mrf.mxu0
        %4512 = vdwg.mxu0
        %v4514 = vsel %vm1222, %v4255, 0
        %4516 = vmatprep.subr.mxu0 0.0
        %4517 = vmatpush1.msra.mxu0 0.0
        %4518 = vmatprep.subr.mxu0 0.0
        %4519 = vmatpush1.msra.mxu0 0.0
        %4520 = vmatprep.subr.mxu0 0.0
        %4521 = vmatpush1.msra.mxu0 0.0
        %4522 = vmatprep.subr.mxu0 0.0
        %4523 = vmatpush1.msra.mxu0 0.0
        %4524 = vmatprep.subr.mxu0 0.0
        %4525 = vmatpush1.msra.mxu0 0.0
        %4526 = vmatprep.subr.mxu0 0.0
        %4527 = vmatpush1.msra.mxu0 0.0
        %4528 = vmatprep.subr.mxu0 0.0
        %4529 = vmatpush1.msra.mxu0 0.0
        %4530 = vmatprep.subr.mxu0 0.0
        %4531 = vmatpush1.msra.mxu0 0.0
        %4532 = vmatprep.subr.mxu0 0.0
        %4533 = vmatpush1.msra.mxu0 0.0
        %4534 = vmatprep.subr.mxu0 0.0
        %4535 = vmatpush1.msra.mxu0 0.0
        %4536 = vmatprep.subr.mxu0 0.0
        %4537 = vmatpush1.msra.mxu0 0.0
        %4538 = vmatprep.subr.mxu0 0.0
        %4539 = vmatpush1.msra.mxu0 0.0
        %4540 = vmatprep.subr.mxu0 0.0
        %4541 = vmatpush1.msra.mxu0 0.0
        %4542 = vmatprep.subr.mxu0 0.0
        %4543 = vmatpush1.msra.mxu0 0.0
        %4544 = vmatprep.subr.mxu0 0.0
        %4545 = vmatpush1.msra.mxu0 %v4285
        %4546 = vmatprep.subr.mxu0 0.0
        %4547 = vmatpush1.msra.mxu0 %v4284
        %4548 = vmatprep.subr.mxu0 0.0
        %4549 = vmatpush2.msra.mxu0 0.0
        %4550 = vmatprep.subr.mxu0 0.0
        %4551 = vmatpush2.msra.mxu0 0.0
        %4552 = vmatprep.subr.mxu0 0.0
        %4553 = vmatpush2.msra.mxu0 0.0
        %4554 = vmatprep.subr.mxu0 0.0
        %4555 = vmatpush2.msra.mxu0 0.0
        %4556 = vmatprep.subr.mxu0 0.0
        %4557 = vmatpush2.msra.mxu0 0.0
        %4558 = vmatprep.subr.mxu0 0.0
        %4559 = vmatpush2.msra.mxu0 0.0
        %4560 = vmatprep.subr.mxu0 0.0
        %4561 = vmatpush2.msra.mxu0 0.0
        %4562 = vmatprep.subr.mxu0 0.0
        %4563 = vmatpush2.msra.mxu0 0.0
        %4564 = vmatprep.subr.mxu0 0.0
        %4565 = vmatpush2.msra.mxu0 0.0
        %4566 = vmatprep.subr.mxu0 0.0
        %4567 = vmatpush2.msra.mxu0 0.0
        %4568 = vmatprep.subr.mxu0 0.0
        %4569 = vmatpush2.msra.mxu0 0.0
        %4570 = vmatprep.subr.mxu0 0.0
        %4571 = vmatpush2.msra.mxu0 0.0
        %4572 = vmatprep.subr.mxu0 0.0
        %4573 = vmatpush2.msra.mxu0 0.0
        %4574 = vmatprep.subr.mxu0 0.0
        %4575 = vmatpush2.msra.mxu0 0.0
        %4576 = vmatprep.subr.mxu0 0.0
        %4577 = vmatpush2.msra.mxu0 0.0
        %4578 = vmatprep.subr.mxu0 0.0
        %4579 = vmatpush2.msra.mxu0 0.0
        %4580 = vmatprep.mubr.f32.mxu0 0.0
        %4581 = vmatmul.mubr.f32.gmra.mxu0 %v4514
        %v4582 = vpop.f32.mrf.mxu0
        %v4583 = vadd.f32 0.0, %v4582
        %v4584 = vpop.f32.mrf.mxu0
        %4585 = vdwg.mxu0
        %v4587 = vsel %vm1222, %v4260, 0
        %4589 = vmatprep.subr.mxu0 0.0
        %4590 = vmatpush1.msra.mxu0 0.0
        %4591 = vmatprep.subr.mxu0 0.0
        %4592 = vmatpush1.msra.mxu0 0.0
        %4593 = vmatprep.subr.mxu0 0.0
        %4594 = vmatpush1.msra.mxu0 0.0
        %4595 = vmatprep.subr.mxu0 0.0
        %4596 = vmatpush1.msra.mxu0 0.0
        %4597 = vmatprep.subr.mxu0 0.0
        %4598 = vmatpush1.msra.mxu0 0.0
        %4599 = vmatprep.subr.mxu0 0.0
        %4600 = vmatpush1.msra.mxu0 0.0
        %4601 = vmatprep.subr.mxu0 0.0
        %4602 = vmatpush1.msra.mxu0 0.0
        %4603 = vmatprep.subr.mxu0 0.0
        %4604 = vmatpush1.msra.mxu0 0.0
        %4605 = vmatprep.subr.mxu0 0.0
        %4606 = vmatpush1.msra.mxu0 0.0
        %4607 = vmatprep.subr.mxu0 0.0
        %4608 = vmatpush1.msra.mxu0 0.0
        %4609 = vmatprep.subr.mxu0 0.0
        %4610 = vmatpush1.msra.mxu0 0.0
        %4611 = vmatprep.subr.mxu0 0.0
        %4612 = vmatpush1.msra.mxu0 0.0
        %4613 = vmatprep.subr.mxu0 0.0
        %4614 = vmatpush1.msra.mxu0 0.0
        %4615 = vmatprep.subr.mxu0 0.0
        %4616 = vmatpush1.msra.mxu0 0.0
        %4617 = vmatprep.subr.mxu0 0.0
        %4618 = vmatpush1.msra.mxu0 %v4287
        %4619 = vmatprep.subr.mxu0 0.0
        %4620 = vmatpush1.msra.mxu0 %v4286
        %4621 = vmatprep.subr.mxu0 0.0
        %4622 = vmatpush2.msra.mxu0 0.0
        %4623 = vmatprep.subr.mxu0 0.0
        %4624 = vmatpush2.msra.mxu0 0.0
        %4625 = vmatprep.subr.mxu0 0.0
        %4626 = vmatpush2.msra.mxu0 0.0
        %4627 = vmatprep.subr.mxu0 0.0
        %4628 = vmatpush2.msra.mxu0 0.0
        %4629 = vmatprep.subr.mxu0 0.0
        %4630 = vmatpush2.msra.mxu0 0.0
        %4631 = vmatprep.subr.mxu0 0.0
        %4632 = vmatpush2.msra.mxu0 0.0
        %4633 = vmatprep.subr.mxu0 0.0
        %4634 = vmatpush2.msra.mxu0 0.0
        %4635 = vmatprep.subr.mxu0 0.0
        %4636 = vmatpush2.msra.mxu0 0.0
        %4637 = vmatprep.subr.mxu0 0.0
        %4638 = vmatpush2.msra.mxu0 0.0
        %4639 = vmatprep.subr.mxu0 0.0
        %4640 = vmatpush2.msra.mxu0 0.0
        %4641 = vmatprep.subr.mxu0 0.0
        %4642 = vmatpush2.msra.mxu0 0.0
        %4643 = vmatprep.subr.mxu0 0.0
        %4644 = vmatpush2.msra.mxu0 0.0
        %4645 = vmatprep.subr.mxu0 0.0
        %4646 = vmatpush2.msra.mxu0 0.0
        %4647 = vmatprep.subr.mxu0 0.0
        %4648 = vmatpush2.msra.mxu0 0.0
        %4649 = vmatprep.subr.mxu0 0.0
        %4650 = vmatpush2.msra.mxu0 0.0
        %4651 = vmatprep.subr.mxu0 0.0
        %4652 = vmatpush2.msra.mxu0 0.0
        %4653 = vmatprep.mubr.f32.mxu0 0.0
        %4654 = vmatmul.mubr.f32.gmra.mxu0 %v4587
        %v4655 = vpop.f32.mrf.mxu0
        %v4656 = vadd.f32 0.0, %v4655
        %v4657 = vpop.f32.mrf.mxu0
        %4658 = vdwg.mxu0
        %v4660 = vsel %vm1222, %v4265, 0
        %4662 = vmatprep.subr.mxu0 0.0
        %4663 = vmatpush1.msra.mxu0 0.0
        %4664 = vmatprep.subr.mxu0 0.0
        %4665 = vmatpush1.msra.mxu0 0.0
        %4666 = vmatprep.subr.mxu0 0.0
        %4667 = vmatpush1.msra.mxu0 0.0
        %4668 = vmatprep.subr.mxu0 0.0
        %4669 = vmatpush1.msra.mxu0 0.0
        %4670 = vmatprep.subr.mxu0 0.0
        %4671 = vmatpush1.msra.mxu0 0.0
        %4672 = vmatprep.subr.mxu0 0.0
        %4673 = vmatpush1.msra.mxu0 0.0
        %4674 = vmatprep.subr.mxu0 0.0
        %4675 = vmatpush1.msra.mxu0 0.0
        %4676 = vmatprep.subr.mxu0 0.0
        %4677 = vmatpush1.msra.mxu0 0.0
        %4678 = vmatprep.subr.mxu0 0.0
        %4679 = vmatpush1.msra.mxu0 0.0
        %4680 = vmatprep.subr.mxu0 0.0
        %4681 = vmatpush1.msra.mxu0 0.0
        %4682 = vmatprep.subr.mxu0 0.0
        %4683 = vmatpush1.msra.mxu0 0.0
        %4684 = vmatprep.subr.mxu0 0.0
        %4685 = vmatpush1.msra.mxu0 0.0
        %4686 = vmatprep.subr.mxu0 0.0
        %4687 = vmatpush1.msra.mxu0 0.0
        %4688 = vmatprep.subr.mxu0 0.0
        %4689 = vmatpush1.msra.mxu0 0.0
        %4690 = vmatprep.subr.mxu0 0.0
        %4691 = vmatpush1.msra.mxu0 %v4289
        %4692 = vmatprep.subr.mxu0 0.0
        %4693 = vmatpush1.msra.mxu0 %v4288
        %4694 = vmatprep.subr.mxu0 0.0
        %4695 = vmatpush2.msra.mxu0 0.0
        %4696 = vmatprep.subr.mxu0 0.0
        %4697 = vmatpush2.msra.mxu0 0.0
        %4698 = vmatprep.subr.mxu0 0.0
        %4699 = vmatpush2.msra.mxu0 0.0
        %4700 = vmatprep.subr.mxu0 0.0
        %4701 = vmatpush2.msra.mxu0 0.0
        %4702 = vmatprep.subr.mxu0 0.0
        %4703 = vmatpush2.msra.mxu0 0.0
        %4704 = vmatprep.subr.mxu0 0.0
        %4705 = vmatpush2.msra.mxu0 0.0
        %4706 = vmatprep.subr.mxu0 0.0
        %4707 = vmatpush2.msra.mxu0 0.0
        %4708 = vmatprep.subr.mxu0 0.0
        %4709 = vmatpush2.msra.mxu0 0.0
        %4710 = vmatprep.subr.mxu0 0.0
        %4711 = vmatpush2.msra.mxu0 0.0
        %4712 = vmatprep.subr.mxu0 0.0
        %4713 = vmatpush2.msra.mxu0 0.0
        %4714 = vmatprep.subr.mxu0 0.0
        %4715 = vmatpush2.msra.mxu0 0.0
        %4716 = vmatprep.subr.mxu0 0.0
        %4717 = vmatpush2.msra.mxu0 0.0
        %4718 = vmatprep.subr.mxu0 0.0
        %4719 = vmatpush2.msra.mxu0 0.0
        %4720 = vmatprep.subr.mxu0 0.0
        %4721 = vmatpush2.msra.mxu0 0.0
        %4722 = vmatprep.subr.mxu0 0.0
        %4723 = vmatpush2.msra.mxu0 0.0
        %4724 = vmatprep.subr.mxu0 0.0
        %4725 = vmatpush2.msra.mxu0 0.0
        %4726 = vmatprep.mubr.f32.mxu0 0.0
        %4727 = vmatmul.mubr.f32.gmra.mxu0 %v4660
        %v4728 = vpop.f32.mrf.mxu0
        %v4729 = vadd.f32 0.0, %v4728
        %v4730 = vpop.f32.mrf.mxu0
        %4731 = vdwg.mxu0
        %v4733 = vsel %vm1222, %v4270, 0
        %4735 = vmatprep.subr.mxu0 0.0
        %4736 = vmatpush1.msra.mxu0 0.0
        %4737 = vmatprep.subr.mxu0 0.0
        %4738 = vmatpush1.msra.mxu0 0.0
        %4739 = vmatprep.subr.mxu0 0.0
        %4740 = vmatpush1.msra.mxu0 0.0
        %4741 = vmatprep.subr.mxu0 0.0
        %4742 = vmatpush1.msra.mxu0 0.0
        %4743 = vmatprep.subr.mxu0 0.0
        %4744 = vmatpush1.msra.mxu0 0.0
        %4745 = vmatprep.subr.mxu0 0.0
        %4746 = vmatpush1.msra.mxu0 0.0
        %4747 = vmatprep.subr.mxu0 0.0
        %4748 = vmatpush1.msra.mxu0 0.0
        %4749 = vmatprep.subr.mxu0 0.0
        %4750 = vmatpush1.msra.mxu0 0.0
        %4751 = vmatprep.subr.mxu0 0.0
        %4752 = vmatpush1.msra.mxu0 0.0
        %4753 = vmatprep.subr.mxu0 0.0
        %4754 = vmatpush1.msra.mxu0 0.0
        %4755 = vmatprep.subr.mxu0 0.0
        %4756 = vmatpush1.msra.mxu0 0.0
        %4757 = vmatprep.subr.mxu0 0.0
        %4758 = vmatpush1.msra.mxu0 0.0
        %4759 = vmatprep.subr.mxu0 0.0
        %4760 = vmatpush1.msra.mxu0 0.0
        %4761 = vmatprep.subr.mxu0 0.0
        %4762 = vmatpush1.msra.mxu0 0.0
        %4763 = vmatprep.subr.mxu0 0.0
        %4764 = vmatpush1.msra.mxu0 %v4291
        %4765 = vmatprep.subr.mxu0 0.0
        %4766 = vmatpush1.msra.mxu0 %v4290
        %4767 = vmatprep.subr.mxu0 0.0
        %4768 = vmatpush2.msra.mxu0 0.0
        %4769 = vmatprep.subr.mxu0 0.0
        %4770 = vmatpush2.msra.mxu0 0.0
        %4771 = vmatprep.subr.mxu0 0.0
        %4772 = vmatpush2.msra.mxu0 0.0
        %4773 = vmatprep.subr.mxu0 0.0
        %4774 = vmatpush2.msra.mxu0 0.0
        %4775 = vmatprep.subr.mxu0 0.0
        %4776 = vmatpush2.msra.mxu0 0.0
        %4777 = vmatprep.subr.mxu0 0.0
        %4778 = vmatpush2.msra.mxu0 0.0
        %4779 = vmatprep.subr.mxu0 0.0
        %4780 = vmatpush2.msra.mxu0 0.0
        %4781 = vmatprep.subr.mxu0 0.0
        %4782 = vmatpush2.msra.mxu0 0.0
        %4783 = vmatprep.subr.mxu0 0.0
        %4784 = vmatpush2.msra.mxu0 0.0
        %4785 = vmatprep.subr.mxu0 0.0
        %4786 = vmatpush2.msra.mxu0 0.0
        %4787 = vmatprep.subr.mxu0 0.0
        %4788 = vmatpush2.msra.mxu0 0.0
        %4789 = vmatprep.subr.mxu0 0.0
        %4790 = vmatpush2.msra.mxu0 0.0
        %4791 = vmatprep.subr.mxu0 0.0
        %4792 = vmatpush2.msra.mxu0 0.0
        %4793 = vmatprep.subr.mxu0 0.0
        %4794 = vmatpush2.msra.mxu0 0.0
        %4795 = vmatprep.subr.mxu0 0.0
        %4796 = vmatpush2.msra.mxu0 0.0
        %4797 = vmatprep.subr.mxu0 0.0
        %4798 = vmatpush2.msra.mxu0 0.0
        %4799 = vmatprep.mubr.f32.mxu0 0.0
        %4800 = vmatmul.mubr.f32.gmra.mxu0 %v4733
        %v4801 = vpop.f32.mrf.mxu0
        %v4802 = vadd.f32 0.0, %v4801
        %v4803 = vpop.f32.mrf.mxu0
        %4804 = vdwg.mxu0
        %v4806 = vsel %vm1222, %v4275, 0
        %4808 = vmatprep.subr.mxu0 0.0
        %4809 = vmatpush1.msra.mxu0 0.0
        %4810 = vmatprep.subr.mxu0 0.0
        %4811 = vmatpush1.msra.mxu0 0.0
        %4812 = vmatprep.subr.mxu0 0.0
        %4813 = vmatpush1.msra.mxu0 0.0
        %4814 = vmatprep.subr.mxu0 0.0
        %4815 = vmatpush1.msra.mxu0 0.0
        %4816 = vmatprep.subr.mxu0 0.0
        %4817 = vmatpush1.msra.mxu0 0.0
        %4818 = vmatprep.subr.mxu0 0.0
        %4819 = vmatpush1.msra.mxu0 0.0
        %4820 = vmatprep.subr.mxu0 0.0
        %4821 = vmatpush1.msra.mxu0 0.0
        %4822 = vmatprep.subr.mxu0 0.0
        %4823 = vmatpush1.msra.mxu0 0.0
        %4824 = vmatprep.subr.mxu0 0.0
        %4825 = vmatpush1.msra.mxu0 0.0
        %4826 = vmatprep.subr.mxu0 0.0
        %4827 = vmatpush1.msra.mxu0 0.0
        %4828 = vmatprep.subr.mxu0 0.0
        %4829 = vmatpush1.msra.mxu0 0.0
        %4830 = vmatprep.subr.mxu0 0.0
        %4831 = vmatpush1.msra.mxu0 0.0
        %4832 = vmatprep.subr.mxu0 0.0
        %4833 = vmatpush1.msra.mxu0 0.0
        %4834 = vmatprep.subr.mxu0 0.0
        %4835 = vmatpush1.msra.mxu0 0.0
        %4836 = vmatprep.subr.mxu0 0.0
        %4837 = vmatpush1.msra.mxu0 %v4293
        %4838 = vmatprep.subr.mxu0 0.0
        %4839 = vmatpush1.msra.mxu0 %v4292
        %4840 = vmatprep.subr.mxu0 0.0
        %4841 = vmatpush2.msra.mxu0 0.0
        %4842 = vmatprep.subr.mxu0 0.0
        %4843 = vmatpush2.msra.mxu0 0.0
        %4844 = vmatprep.subr.mxu0 0.0
        %4845 = vmatpush2.msra.mxu0 0.0
        %4846 = vmatprep.subr.mxu0 0.0
        %4847 = vmatpush2.msra.mxu0 0.0
        %4848 = vmatprep.subr.mxu0 0.0
        %4849 = vmatpush2.msra.mxu0 0.0
        %4850 = vmatprep.subr.mxu0 0.0
        %4851 = vmatpush2.msra.mxu0 0.0
        %4852 = vmatprep.subr.mxu0 0.0
        %4853 = vmatpush2.msra.mxu0 0.0
        %4854 = vmatprep.subr.mxu0 0.0
        %4855 = vmatpush2.msra.mxu0 0.0
        %4856 = vmatprep.subr.mxu0 0.0
        %4857 = vmatpush2.msra.mxu0 0.0
        %4858 = vmatprep.subr.mxu0 0.0
        %4859 = vmatpush2.msra.mxu0 0.0
        %4860 = vmatprep.subr.mxu0 0.0
        %4861 = vmatpush2.msra.mxu0 0.0
        %4862 = vmatprep.subr.mxu0 0.0
        %4863 = vmatpush2.msra.mxu0 0.0
        %4864 = vmatprep.subr.mxu0 0.0
        %4865 = vmatpush2.msra.mxu0 0.0
        %4866 = vmatprep.subr.mxu0 0.0
        %4867 = vmatpush2.msra.mxu0 0.0
        %4868 = vmatprep.subr.mxu0 0.0
        %4869 = vmatpush2.msra.mxu0 0.0
        %4870 = vmatprep.subr.mxu0 0.0
        %4871 = vmatpush2.msra.mxu0 0.0
        %4872 = vmatprep.mubr.f32.mxu0 0.0
        %4873 = vmatmul.mubr.f32.gmra.mxu0 %v4806
        %v4874 = vpop.f32.mrf.mxu0
        %v4875 = vadd.f32 0.0, %v4874
        %v4876 = vpop.f32.mrf.mxu0
        %4877 = vdwg.mxu0
        %vm4878 = vcmask 785408
        %v4879 = vsel %vm4878, %v4364, 0.0
        %v4880 = vsel %vm4878, %v4437, 0.0
        %v4881 = vadd.f32 %v4879, %v4880
        %v4882 = vsel %vm4878, %v4510, 0.0
        %v4883 = vadd.f32 %v4881, %v4882
        %v4884 = vsel %vm4878, %v4583, 0.0
        %v4885 = vadd.f32 %v4883, %v4884
        %v4886 = vsel %vm4878, %v4656, 0.0
        %v4887 = vadd.f32 %v4885, %v4886
        %v4888 = vsel %vm4878, %v4729, 0.0
        %v4889 = vadd.f32 %v4887, %v4888
        %v4890 = vsel %vm4878, %v4802, 0.0
        %v4891 = vadd.f32 %v4889, %v4890
        %v4892 = vsel %vm4878, %v4875, 0.0
        %v4893 = vadd.f32 %v4891, %v4892
        %v4894 = vld [vmem:[%s16] sm:$0x1]
        %v4896 = vlaneseq
        %v4897 = vshrl.u32 %v4896, 7
        %v4898 = vsub.s32 0, %v4897
        %v4899 = vrot.slane %v4894, %v4898
        %v4901 = vadd.f32 %v4893, %v4899
        %v4902 = vld [vmem:[%s15] sm:$0xff]
        %v4903 = vld [vmem:[%s15 + $0x8] sm:$0xff]
        %v4904 = vld [vmem:[%s15 + $0x10] sm:$0xff]
        %v4905 = vld [vmem:[%s15 + $0x18] sm:$0xff]
        %v4906 = vld [vmem:[%s17] sm:$0x1]
        %vm4907 = vcmask 261120
        %v4909 = vsel %vm4907, 0.0, 0
        %4911 = vmatprep.subr.mxu0 0.0
        %4912 = vmatpush1.msra.mxu0 0.0
        %4913 = vmatprep.subr.mxu0 0.0
        %4914 = vmatpush1.msra.mxu0 0.0
        %4915 = vmatprep.subr.mxu0 0.0
        %4916 = vmatpush1.msra.mxu0 0.0
        %4917 = vmatprep.subr.mxu0 0.0
        %4918 = vmatpush1.msra.mxu0 0.0
        %4919 = vmatprep.subr.mxu0 0.0
        %4920 = vmatpush1.msra.mxu0 0.0
        %4921 = vmatprep.subr.mxu0 0.0
        %4922 = vmatpush1.msra.mxu0 0.0
        %4923 = vmatprep.subr.mxu0 0.0
        %4924 = vmatpush1.msra.mxu0 0.0
        %4925 = vmatprep.subr.mxu0 0.0
        %4926 = vmatpush1.msra.mxu0 0.0
        %4927 = vmatprep.subr.mxu0 0.0
        %4928 = vmatpush1.msra.mxu0 0.0
        %4929 = vmatprep.subr.mxu0 0.0
        %4930 = vmatpush1.msra.mxu0 0.0
        %4931 = vmatprep.subr.mxu0 0.0
        %4932 = vmatpush1.msra.mxu0 0.0
        %4933 = vmatprep.subr.mxu0 0.0
        %4934 = vmatpush1.msra.mxu0 0.0
        %4935 = vmatprep.subr.mxu0 0.0
        %4936 = vmatpush1.msra.mxu0 %v4905
        %4937 = vmatprep.subr.mxu0 0.0
        %4938 = vmatpush1.msra.mxu0 %v4904
        %4939 = vmatprep.subr.mxu0 0.0
        %4940 = vmatpush1.msra.mxu0 %v4903
        %4941 = vmatprep.subr.mxu0 0.0
        %4942 = vmatpush1.msra.mxu0 %v4902
        %4943 = vmatprep.subr.mxu0 0.0
        %4944 = vmatpush2.msra.mxu0 0.0
        %4945 = vmatprep.subr.mxu0 0.0
        %4946 = vmatpush2.msra.mxu0 0.0
        %4947 = vmatprep.subr.mxu0 0.0
        %4948 = vmatpush2.msra.mxu0 0.0
        %4949 = vmatprep.subr.mxu0 0.0
        %4950 = vmatpush2.msra.mxu0 0.0
        %4951 = vmatprep.subr.mxu0 0.0
        %4952 = vmatpush2.msra.mxu0 0.0
        %4953 = vmatprep.subr.mxu0 0.0
        %4954 = vmatpush2.msra.mxu0 0.0
        %4955 = vmatprep.subr.mxu0 0.0
        %4956 = vmatpush2.msra.mxu0 0.0
        %4957 = vmatprep.subr.mxu0 0.0
        %4958 = vmatpush2.msra.mxu0 0.0
        %4959 = vmatprep.subr.mxu0 0.0
        %4960 = vmatpush2.msra.mxu0 0.0
        %4961 = vmatprep.subr.mxu0 0.0
        %4962 = vmatpush2.msra.mxu0 0.0
        %4963 = vmatprep.subr.mxu0 0.0
        %4964 = vmatpush2.msra.mxu0 0.0
        %4965 = vmatprep.subr.mxu0 0.0
        %4966 = vmatpush2.msra.mxu0 0.0
        %4967 = vmatprep.subr.mxu0 0.0
        %4968 = vmatpush2.msra.mxu0 0.0
        %4969 = vmatprep.subr.mxu0 0.0
        %4970 = vmatpush2.msra.mxu0 0.0
        %4971 = vmatprep.subr.mxu0 0.0
        %4972 = vmatpush2.msra.mxu0 0.0
        %4973 = vmatprep.subr.mxu0 0.0
        %4974 = vmatpush2.msra.mxu0 0.0
        %4975 = vmatprep.mubr.f32.mxu0 0.0
        %4976 = vmatmul.mubr.f32.gmra.mxu0 %v4909
        %v4977 = vpop.f32.mrf.mxu0
        %v4978 = vadd.f32 %v4906, %v4977
        %v4979 = vpop.f32.mrf.mxu0
        %4980 = vdwg.mxu0
        %v4981 = vadd.f32 %v4901, %v4978
        %v4982 = vxor.u32 %v4981, 2147483648
        %v4983 = vmul.f32 %v4982, 1.442695
        %v4984 = vpow.pop %v4983
        %v4985 = vadd.f32 %v4984, 1.0
        %v4986 = vrcp.pop %v4985
        %v4987 = vmul.f32 1.0, %v4986
        %4989 = vrot.lane.b32.xlu0 %v4978, 64
        %v4990 = vpop.permute.xlu0 %4989
        %v4992 = vmul.f32 %v4987, %v4990
        %4994 = vrot.lane.b32.xlu0 %v4992, 64
        %v4995 = vpop.permute.xlu0 %4994
        %v4997 = vadd.f32 %v4901, %v4995
        %v4998 = vtanh.pop %v4997
        %v4999 = vsub.f32 1.0, %v4987
        %5001 = vrot.lane.b32.xlu0 %v4998, 96
        %v5002 = vpop.permute.xlu0 %5001
        %v5004 = vmul.f32 %v4999, %v5002
        %v5005 = vmul.f32 %v4987, 0.0
        %v5006 = vadd.f32 %v5004, %v5005
        %5008 = vrot.lane.b32.xlu0 %v5006, 96
        %v5009 = vpop.permute.xlu0 %5008
        %v5010 = vsel %vm4907, %v5009, 0
        %5012 = vmatprep.subr.mxu0 0.0
        %5013 = vmatpush1.msra.mxu0 0.0
        %5014 = vmatprep.subr.mxu0 0.0
        %5015 = vmatpush1.msra.mxu0 0.0
        %5016 = vmatprep.subr.mxu0 0.0
        %5017 = vmatpush1.msra.mxu0 0.0
        %5018 = vmatprep.subr.mxu0 0.0
        %5019 = vmatpush1.msra.mxu0 0.0
        %5020 = vmatprep.subr.mxu0 0.0
        %5021 = vmatpush1.msra.mxu0 0.0
        %5022 = vmatprep.subr.mxu0 0.0
        %5023 = vmatpush1.msra.mxu0 0.0
        %5024 = vmatprep.subr.mxu0 0.0
        %5025 = vmatpush1.msra.mxu0 0.0
        %5026 = vmatprep.subr.mxu0 0.0
        %5027 = vmatpush1.msra.mxu0 0.0
        %5028 = vmatprep.subr.mxu0 0.0
        %5029 = vmatpush1.msra.mxu0 0.0
        %5030 = vmatprep.subr.mxu0 0.0
        %5031 = vmatpush1.msra.mxu0 0.0
        %5032 = vmatprep.subr.mxu0 0.0
        %5033 = vmatpush1.msra.mxu0 0.0
        %5034 = vmatprep.subr.mxu0 0.0
        %5035 = vmatpush1.msra.mxu0 0.0
        %5036 = vmatprep.subr.mxu0 0.0
        %5037 = vmatpush1.msra.mxu0 %v4905
        %5038 = vmatprep.subr.mxu0 0.0
        %5039 = vmatpush1.msra.mxu0 %v4904
        %5040 = vmatprep.subr.mxu0 0.0
        %5041 = vmatpush1.msra.mxu0 %v4903
        %5042 = vmatprep.subr.mxu0 0.0
        %5043 = vmatpush1.msra.mxu0 %v4902
        %5044 = vmatprep.subr.mxu0 0.0
        %5045 = vmatpush2.msra.mxu0 0.0
        %5046 = vmatprep.subr.mxu0 0.0
        %5047 = vmatpush2.msra.mxu0 0.0
        %5048 = vmatprep.subr.mxu0 0.0
        %5049 = vmatpush2.msra.mxu0 0.0
        %5050 = vmatprep.subr.mxu0 0.0
        %5051 = vmatpush2.msra.mxu0 0.0
        %5052 = vmatprep.subr.mxu0 0.0
        %5053 = vmatpush2.msra.mxu0 0.0
        %5054 = vmatprep.subr.mxu0 0.0
        %5055 = vmatpush2.msra.mxu0 0.0
        %5056 = vmatprep.subr.mxu0 0.0
        %5057 = vmatpush2.msra.mxu0 0.0
        %5058 = vmatprep.subr.mxu0 0.0
        %5059 = vmatpush2.msra.mxu0 0.0
        %5060 = vmatprep.subr.mxu0 0.0
        %5061 = vmatpush2.msra.mxu0 0.0
        %5062 = vmatprep.subr.mxu0 0.0
        %5063 = vmatpush2.msra.mxu0 0.0
        %5064 = vmatprep.subr.mxu0 0.0
        %5065 = vmatpush2.msra.mxu0 0.0
        %5066 = vmatprep.subr.mxu0 0.0
        %5067 = vmatpush2.msra.mxu0 0.0
        %5068 = vmatprep.subr.mxu0 0.0
        %5069 = vmatpush2.msra.mxu0 0.0
        %5070 = vmatprep.subr.mxu0 0.0
        %5071 = vmatpush2.msra.mxu0 0.0
        %5072 = vmatprep.subr.mxu0 0.0
        %5073 = vmatpush2.msra.mxu0 0.0
        %5074 = vmatprep.subr.mxu0 0.0
        %5075 = vmatpush2.msra.mxu0 0.0
        %5076 = vmatprep.mubr.f32.mxu0 0.0
        %5077 = vmatmul.mubr.f32.gmra.mxu0 %v5010
        %v5078 = vpop.f32.mrf.mxu0
        %v5079 = vadd.f32 %v4906, %v5078
        %v5080 = vpop.f32.mrf.mxu0
        %5081 = vdwg.mxu0
        %v5083 = vrot.slane %v5079, 7
        %v5085 = vadd.f32 %v4901, %v5083
        %v5086 = vxor.u32 %v5085, 2147483648
        %v5087 = vmul.f32 %v5086, 1.442695
        %v5088 = vpow.pop %v5087
        %v5089 = vadd.f32 %v5088, 1.0
        %v5090 = vrcp.pop %v5089
        %v5091 = vmul.f32 1.0, %v5090
        %5092 = vrot.lane.b32.xlu0 %v5083, 64
        %v5093 = vpop.permute.xlu0 %5092
        %v5095 = vmul.f32 %v5091, %v5093
        %5097 = vrot.lane.b32.xlu0 %v5095, 64
        %v5098 = vpop.permute.xlu0 %5097
        %v5100 = vadd.f32 %v4901, %v5098
        %v5101 = vtanh.pop %v5100
        %v5102 = vsub.f32 1.0, %v5091
        %5104 = vrot.lane.b32.xlu0 %v5101, 96
        %v5105 = vpop.permute.xlu0 %5104
        %v5107 = vmul.f32 %v5102, %v5105
        %v5108 = vrot.slane %v5006, 7
        %v5110 = vmul.f32 %v5091, %v5108
        %v5111 = vadd.f32 %v5107, %v5110
        %v5113 = vrot.slane %v5111, 1
        %5114 = vrot.lane.b32.xlu0 %v5113, 96
        %v5115 = vpop.permute.xlu0 %5114
        %v5116 = vsel %vm4907, %v5115, 0
        %5118 = vmatprep.subr.mxu0 0.0
        %5119 = vmatpush1.msra.mxu0 0.0
        %5120 = vmatprep.subr.mxu0 0.0
        %5121 = vmatpush1.msra.mxu0 0.0
        %5122 = vmatprep.subr.mxu0 0.0
        %5123 = vmatpush1.msra.mxu0 0.0
        %5124 = vmatprep.subr.mxu0 0.0
        %5125 = vmatpush1.msra.mxu0 0.0
        %5126 = vmatprep.subr.mxu0 0.0
        %5127 = vmatpush1.msra.mxu0 0.0
        %5128 = vmatprep.subr.mxu0 0.0
        %5129 = vmatpush1.msra.mxu0 0.0
        %5130 = vmatprep.subr.mxu0 0.0
        %5131 = vmatpush1.msra.mxu0 0.0
        %5132 = vmatprep.subr.mxu0 0.0
        %5133 = vmatpush1.msra.mxu0 0.0
        %5134 = vmatprep.subr.mxu0 0.0
        %5135 = vmatpush1.msra.mxu0 0.0
        %5136 = vmatprep.subr.mxu0 0.0
        %5137 = vmatpush1.msra.mxu0 0.0
        %5138 = vmatprep.subr.mxu0 0.0
        %5139 = vmatpush1.msra.mxu0 0.0
        %5140 = vmatprep.subr.mxu0 0.0
        %5141 = vmatpush1.msra.mxu0 0.0
        %5142 = vmatprep.subr.mxu0 0.0
        %5143 = vmatpush1.msra.mxu0 %v4905
        %5144 = vmatprep.subr.mxu0 0.0
        %5145 = vmatpush1.msra.mxu0 %v4904
        %5146 = vmatprep.subr.mxu0 0.0
        %5147 = vmatpush1.msra.mxu0 %v4903
        %5148 = vmatprep.subr.mxu0 0.0
        %5149 = vmatpush1.msra.mxu0 %v4902
        %5150 = vmatprep.subr.mxu0 0.0
        %5151 = vmatpush2.msra.mxu0 0.0
        %5152 = vmatprep.subr.mxu0 0.0
        %5153 = vmatpush2.msra.mxu0 0.0
        %5154 = vmatprep.subr.mxu0 0.0
        %5155 = vmatpush2.msra.mxu0 0.0
        %5156 = vmatprep.subr.mxu0 0.0
        %5157 = vmatpush2.msra.mxu0 0.0
        %5158 = vmatprep.subr.mxu0 0.0
        %5159 = vmatpush2.msra.mxu0 0.0
        %5160 = vmatprep.subr.mxu0 0.0
        %5161 = vmatpush2.msra.mxu0 0.0
        %5162 = vmatprep.subr.mxu0 0.0
        %5163 = vmatpush2.msra.mxu0 0.0
        %5164 = vmatprep.subr.mxu0 0.0
        %5165 = vmatpush2.msra.mxu0 0.0
        %5166 = vmatprep.subr.mxu0 0.0
        %5167 = vmatpush2.msra.mxu0 0.0
        %5168 = vmatprep.subr.mxu0 0.0
        %5169 = vmatpush2.msra.mxu0 0.0
        %5170 = vmatprep.subr.mxu0 0.0
        %5171 = vmatpush2.msra.mxu0 0.0
        %5172 = vmatprep.subr.mxu0 0.0
        %5173 = vmatpush2.msra.mxu0 0.0
        %5174 = vmatprep.subr.mxu0 0.0
        %5175 = vmatpush2.msra.mxu0 0.0
        %5176 = vmatprep.subr.mxu0 0.0
        %5177 = vmatpush2.msra.mxu0 0.0
        %5178 = vmatprep.subr.mxu0 0.0
        %5179 = vmatpush2.msra.mxu0 0.0
        %5180 = vmatprep.subr.mxu0 0.0
        %5181 = vmatpush2.msra.mxu0 0.0
        %5182 = vmatprep.mubr.f32.mxu0 0.0
        %5183 = vmatmul.mubr.f32.gmra.mxu0 %v5116
        %v5184 = vpop.f32.mrf.mxu0
        %v5185 = vadd.f32 %v4906, %v5184
        %v5186 = vpop.f32.mrf.mxu0
        %5187 = vdwg.mxu0
        %v5189 = vrot.slane %v5185, 6
        %v5191 = vadd.f32 %v4901, %v5189
        %v5192 = vxor.u32 %v5191, 2147483648
        %v5193 = vmul.f32 %v5192, 1.442695
        %v5194 = vpow.pop %v5193
        %v5195 = vadd.f32 %v5194, 1.0
        %v5196 = vrcp.pop %v5195
        %v5197 = vmul.f32 1.0, %v5196
        %5198 = vrot.lane.b32.xlu0 %v5189, 64
        %v5199 = vpop.permute.xlu0 %5198
        %v5201 = vmul.f32 %v5197, %v5199
        %5203 = vrot.lane.b32.xlu0 %v5201, 64
        %v5204 = vpop.permute.xlu0 %5203
        %v5206 = vadd.f32 %v4901, %v5204
        %v5207 = vtanh.pop %v5206
        %v5208 = vsub.f32 1.0, %v5197
        %5210 = vrot.lane.b32.xlu0 %v5207, 96
        %v5211 = vpop.permute.xlu0 %5210
        %v5213 = vmul.f32 %v5208, %v5211
        %v5214 = vrot.slane %v5111, 7
        %v5216 = vmul.f32 %v5197, %v5214
        %v5217 = vadd.f32 %v5213, %v5216
        %v5219 = vrot.slane %v5217, 2
        %5220 = vrot.lane.b32.xlu0 %v5219, 96
        %v5221 = vpop.permute.xlu0 %5220
        %v5222 = vsel %vm4907, %v5221, 0
        %5224 = vmatprep.subr.mxu0 0.0
        %5225 = vmatpush1.msra.mxu0 0.0
        %5226 = vmatprep.subr.mxu0 0.0
        %5227 = vmatpush1.msra.mxu0 0.0
        %5228 = vmatprep.subr.mxu0 0.0
        %5229 = vmatpush1.msra.mxu0 0.0
        %5230 = vmatprep.subr.mxu0 0.0
        %5231 = vmatpush1.msra.mxu0 0.0
        %5232 = vmatprep.subr.mxu0 0.0
        %5233 = vmatpush1.msra.mxu0 0.0
        %5234 = vmatprep.subr.mxu0 0.0
        %5235 = vmatpush1.msra.mxu0 0.0
        %5236 = vmatprep.subr.mxu0 0.0
        %5237 = vmatpush1.msra.mxu0 0.0
        %5238 = vmatprep.subr.mxu0 0.0
        %5239 = vmatpush1.msra.mxu0 0.0
        %5240 = vmatprep.subr.mxu0 0.0
        %5241 = vmatpush1.msra.mxu0 0.0
        %5242 = vmatprep.subr.mxu0 0.0
        %5243 = vmatpush1.msra.mxu0 0.0
        %5244 = vmatprep.subr.mxu0 0.0
        %5245 = vmatpush1.msra.mxu0 0.0
        %5246 = vmatprep.subr.mxu0 0.0
        %5247 = vmatpush1.msra.mxu0 0.0
        %5248 = vmatprep.subr.mxu0 0.0
        %5249 = vmatpush1.msra.mxu0 %v4905
        %5250 = vmatprep.subr.mxu0 0.0
        %5251 = vmatpush1.msra.mxu0 %v4904
        %5252 = vmatprep.subr.mxu0 0.0
        %5253 = vmatpush1.msra.mxu0 %v4903
        %5254 = vmatprep.subr.mxu0 0.0
        %5255 = vmatpush1.msra.mxu0 %v4902
        %5256 = vmatprep.subr.mxu0 0.0
        %5257 = vmatpush2.msra.mxu0 0.0
        %5258 = vmatprep.subr.mxu0 0.0
        %5259 = vmatpush2.msra.mxu0 0.0
        %5260 = vmatprep.subr.mxu0 0.0
        %5261 = vmatpush2.msra.mxu0 0.0
        %5262 = vmatprep.subr.mxu0 0.0
        %5263 = vmatpush2.msra.mxu0 0.0
        %5264 = vmatprep.subr.mxu0 0.0
        %5265 = vmatpush2.msra.mxu0 0.0
        %5266 = vmatprep.subr.mxu0 0.0
        %5267 = vmatpush2.msra.mxu0 0.0
        %5268 = vmatprep.subr.mxu0 0.0
        %5269 = vmatpush2.msra.mxu0 0.0
        %5270 = vmatprep.subr.mxu0 0.0
        %5271 = vmatpush2.msra.mxu0 0.0
        %5272 = vmatprep.subr.mxu0 0.0
        %5273 = vmatpush2.msra.mxu0 0.0
        %5274 = vmatprep.subr.mxu0 0.0
        %5275 = vmatpush2.msra.mxu0 0.0
        %5276 = vmatprep.subr.mxu0 0.0
        %5277 = vmatpush2.msra.mxu0 0.0
        %5278 = vmatprep.subr.mxu0 0.0
        %5279 = vmatpush2.msra.mxu0 0.0
        %5280 = vmatprep.subr.mxu0 0.0
        %5281 = vmatpush2.msra.mxu0 0.0
        %5282 = vmatprep.subr.mxu0 0.0
        %5283 = vmatpush2.msra.mxu0 0.0
        %5284 = vmatprep.subr.mxu0 0.0
        %5285 = vmatpush2.msra.mxu0 0.0
        %5286 = vmatprep.subr.mxu0 0.0
        %5287 = vmatpush2.msra.mxu0 0.0
        %5288 = vmatprep.mubr.f32.mxu0 0.0
        %5289 = vmatmul.mubr.f32.gmra.mxu0 %v5222
        %v5290 = vpop.f32.mrf.mxu0
        %v5291 = vadd.f32 %v4906, %v5290
        %v5292 = vpop.f32.mrf.mxu0
        %5293 = vdwg.mxu0
        %v5295 = vrot.slane %v5291, 5
        %v5297 = vadd.f32 %v4901, %v5295
        %v5298 = vxor.u32 %v5297, 2147483648
        %v5299 = vmul.f32 %v5298, 1.442695
        %v5300 = vpow.pop %v5299
        %v5301 = vadd.f32 %v5300, 1.0
        %v5302 = vrcp.pop %v5301
        %v5303 = vmul.f32 1.0, %v5302
        %5304 = vrot.lane.b32.xlu0 %v5295, 64
        %v5305 = vpop.permute.xlu0 %5304
        %v5307 = vmul.f32 %v5303, %v5305
        %5309 = vrot.lane.b32.xlu0 %v5307, 64
        %v5310 = vpop.permute.xlu0 %5309
        %v5312 = vadd.f32 %v4901, %v5310
        %v5313 = vtanh.pop %v5312
        %v5314 = vsub.f32 1.0, %v5303
        %5316 = vrot.lane.b32.xlu0 %v5313, 96
        %v5317 = vpop.permute.xlu0 %5316
        %v5319 = vmul.f32 %v5314, %v5317
        %v5320 = vrot.slane %v5217, 7
        %v5322 = vmul.f32 %v5303, %v5320
        %v5323 = vadd.f32 %v5319, %v5322
        %v5325 = vrot.slane %v5323, 3
        %5326 = vrot.lane.b32.xlu0 %v5325, 96
        %v5327 = vpop.permute.xlu0 %5326
        %v5328 = vsel %vm4907, %v5327, 0
        %5330 = vmatprep.subr.mxu0 0.0
        %5331 = vmatpush1.msra.mxu0 0.0
        %5332 = vmatprep.subr.mxu0 0.0
        %5333 = vmatpush1.msra.mxu0 0.0
        %5334 = vmatprep.subr.mxu0 0.0
        %5335 = vmatpush1.msra.mxu0 0.0
        %5336 = vmatprep.subr.mxu0 0.0
        %5337 = vmatpush1.msra.mxu0 0.0
        %5338 = vmatprep.subr.mxu0 0.0
        %5339 = vmatpush1.msra.mxu0 0.0
        %5340 = vmatprep.subr.mxu0 0.0
        %5341 = vmatpush1.msra.mxu0 0.0
        %5342 = vmatprep.subr.mxu0 0.0
        %5343 = vmatpush1.msra.mxu0 0.0
        %5344 = vmatprep.subr.mxu0 0.0
        %5345 = vmatpush1.msra.mxu0 0.0
        %5346 = vmatprep.subr.mxu0 0.0
        %5347 = vmatpush1.msra.mxu0 0.0
        %5348 = vmatprep.subr.mxu0 0.0
        %5349 = vmatpush1.msra.mxu0 0.0
        %5350 = vmatprep.subr.mxu0 0.0
        %5351 = vmatpush1.msra.mxu0 0.0
        %5352 = vmatprep.subr.mxu0 0.0
        %5353 = vmatpush1.msra.mxu0 0.0
        %5354 = vmatprep.subr.mxu0 0.0
        %5355 = vmatpush1.msra.mxu0 %v4905
        %5356 = vmatprep.subr.mxu0 0.0
        %5357 = vmatpush1.msra.mxu0 %v4904
        %5358 = vmatprep.subr.mxu0 0.0
        %5359 = vmatpush1.msra.mxu0 %v4903
        %5360 = vmatprep.subr.mxu0 0.0
        %5361 = vmatpush1.msra.mxu0 %v4902
        %5362 = vmatprep.subr.mxu0 0.0
        %5363 = vmatpush2.msra.mxu0 0.0
        %5364 = vmatprep.subr.mxu0 0.0
        %5365 = vmatpush2.msra.mxu0 0.0
        %5366 = vmatprep.subr.mxu0 0.0
        %5367 = vmatpush2.msra.mxu0 0.0
        %5368 = vmatprep.subr.mxu0 0.0
        %5369 = vmatpush2.msra.mxu0 0.0
        %5370 = vmatprep.subr.mxu0 0.0
        %5371 = vmatpush2.msra.mxu0 0.0
        %5372 = vmatprep.subr.mxu0 0.0
        %5373 = vmatpush2.msra.mxu0 0.0
        %5374 = vmatprep.subr.mxu0 0.0
        %5375 = vmatpush2.msra.mxu0 0.0
        %5376 = vmatprep.subr.mxu0 0.0
        %5377 = vmatpush2.msra.mxu0 0.0
        %5378 = vmatprep.subr.mxu0 0.0
        %5379 = vmatpush2.msra.mxu0 0.0
        %5380 = vmatprep.subr.mxu0 0.0
        %5381 = vmatpush2.msra.mxu0 0.0
        %5382 = vmatprep.subr.mxu0 0.0
        %5383 = vmatpush2.msra.mxu0 0.0
        %5384 = vmatprep.subr.mxu0 0.0
        %5385 = vmatpush2.msra.mxu0 0.0
        %5386 = vmatprep.subr.mxu0 0.0
        %5387 = vmatpush2.msra.mxu0 0.0
        %5388 = vmatprep.subr.mxu0 0.0
        %5389 = vmatpush2.msra.mxu0 0.0
        %5390 = vmatprep.subr.mxu0 0.0
        %5391 = vmatpush2.msra.mxu0 0.0
        %5392 = vmatprep.subr.mxu0 0.0
        %5393 = vmatpush2.msra.mxu0 0.0
        %5394 = vmatprep.mubr.f32.mxu0 0.0
        %5395 = vmatmul.mubr.f32.gmra.mxu0 %v5328
        %v5396 = vpop.f32.mrf.mxu0
        %v5397 = vadd.f32 %v4906, %v5396
        %v5398 = vpop.f32.mrf.mxu0
        %5399 = vdwg.mxu0
        %v5401 = vrot.slane %v5397, 4
        %v5403 = vadd.f32 %v4901, %v5401
        %v5404 = vxor.u32 %v5403, 2147483648
        %v5405 = vmul.f32 %v5404, 1.442695
        %v5406 = vpow.pop %v5405
        %v5407 = vadd.f32 %v5406, 1.0
        %v5408 = vrcp.pop %v5407
        %v5409 = vmul.f32 1.0, %v5408
        %5410 = vrot.lane.b32.xlu0 %v5401, 64
        %v5411 = vpop.permute.xlu0 %5410
        %v5413 = vmul.f32 %v5409, %v5411
        %5415 = vrot.lane.b32.xlu0 %v5413, 64
        %v5416 = vpop.permute.xlu0 %5415
        %v5418 = vadd.f32 %v4901, %v5416
        %v5419 = vtanh.pop %v5418
        %v5420 = vsub.f32 1.0, %v5409
        %5422 = vrot.lane.b32.xlu0 %v5419, 96
        %v5423 = vpop.permute.xlu0 %5422
        %v5425 = vmul.f32 %v5420, %v5423
        %v5426 = vrot.slane %v5323, 7
        %v5428 = vmul.f32 %v5409, %v5426
        %v5429 = vadd.f32 %v5425, %v5428
        %v5431 = vrot.slane %v5429, 4
        %5432 = vrot.lane.b32.xlu0 %v5431, 96
        %v5433 = vpop.permute.xlu0 %5432
        %v5434 = vsel %vm4907, %v5433, 0
        %5436 = vmatprep.subr.mxu0 0.0
        %5437 = vmatpush1.msra.mxu0 0.0
        %5438 = vmatprep.subr.mxu0 0.0
        %5439 = vmatpush1.msra.mxu0 0.0
        %5440 = vmatprep.subr.mxu0 0.0
        %5441 = vmatpush1.msra.mxu0 0.0
        %5442 = vmatprep.subr.mxu0 0.0
        %5443 = vmatpush1.msra.mxu0 0.0
        %5444 = vmatprep.subr.mxu0 0.0
        %5445 = vmatpush1.msra.mxu0 0.0
        %5446 = vmatprep.subr.mxu0 0.0
        %5447 = vmatpush1.msra.mxu0 0.0
        %5448 = vmatprep.subr.mxu0 0.0
        %5449 = vmatpush1.msra.mxu0 0.0
        %5450 = vmatprep.subr.mxu0 0.0
        %5451 = vmatpush1.msra.mxu0 0.0
        %5452 = vmatprep.subr.mxu0 0.0
        %5453 = vmatpush1.msra.mxu0 0.0
        %5454 = vmatprep.subr.mxu0 0.0
        %5455 = vmatpush1.msra.mxu0 0.0
        %5456 = vmatprep.subr.mxu0 0.0
        %5457 = vmatpush1.msra.mxu0 0.0
        %5458 = vmatprep.subr.mxu0 0.0
        %5459 = vmatpush1.msra.mxu0 0.0
        %5460 = vmatprep.subr.mxu0 0.0
        %5461 = vmatpush1.msra.mxu0 %v4905
        %5462 = vmatprep.subr.mxu0 0.0
        %5463 = vmatpush1.msra.mxu0 %v4904
        %5464 = vmatprep.subr.mxu0 0.0
        %5465 = vmatpush1.msra.mxu0 %v4903
        %5466 = vmatprep.subr.mxu0 0.0
        %5467 = vmatpush1.msra.mxu0 %v4902
        %5468 = vmatprep.subr.mxu0 0.0
        %5469 = vmatpush2.msra.mxu0 0.0
        %5470 = vmatprep.subr.mxu0 0.0
        %5471 = vmatpush2.msra.mxu0 0.0
        %5472 = vmatprep.subr.mxu0 0.0
        %5473 = vmatpush2.msra.mxu0 0.0
        %5474 = vmatprep.subr.mxu0 0.0
        %5475 = vmatpush2.msra.mxu0 0.0
        %5476 = vmatprep.subr.mxu0 0.0
        %5477 = vmatpush2.msra.mxu0 0.0
        %5478 = vmatprep.subr.mxu0 0.0
        %5479 = vmatpush2.msra.mxu0 0.0
        %5480 = vmatprep.subr.mxu0 0.0
        %5481 = vmatpush2.msra.mxu0 0.0
        %5482 = vmatprep.subr.mxu0 0.0
        %5483 = vmatpush2.msra.mxu0 0.0
        %5484 = vmatprep.subr.mxu0 0.0
        %5485 = vmatpush2.msra.mxu0 0.0
        %5486 = vmatprep.subr.mxu0 0.0
        %5487 = vmatpush2.msra.mxu0 0.0
        %5488 = vmatprep.subr.mxu0 0.0
        %5489 = vmatpush2.msra.mxu0 0.0
        %5490 = vmatprep.subr.mxu0 0.0
        %5491 = vmatpush2.msra.mxu0 0.0
        %5492 = vmatprep.subr.mxu0 0.0
        %5493 = vmatpush2.msra.mxu0 0.0
        %5494 = vmatprep.subr.mxu0 0.0
        %5495 = vmatpush2.msra.mxu0 0.0
        %5496 = vmatprep.subr.mxu0 0.0
        %5497 = vmatpush2.msra.mxu0 0.0
        %5498 = vmatprep.subr.mxu0 0.0
        %5499 = vmatpush2.msra.mxu0 0.0
        %5500 = vmatprep.mubr.f32.mxu0 0.0
        %5501 = vmatmul.mubr.f32.gmra.mxu0 %v5434
        %v5502 = vpop.f32.mrf.mxu0
        %v5503 = vadd.f32 %v4906, %v5502
        %v5504 = vpop.f32.mrf.mxu0
        %5505 = vdwg.mxu0
        %v5507 = vrot.slane %v5503, 3
        %v5509 = vadd.f32 %v4901, %v5507
        %v5510 = vxor.u32 %v5509, 2147483648
        %v5511 = vmul.f32 %v5510, 1.442695
        %v5512 = vpow.pop %v5511
        %v5513 = vadd.f32 %v5512, 1.0
        %v5514 = vrcp.pop %v5513
        %v5515 = vmul.f32 1.0, %v5514
        %5516 = vrot.lane.b32.xlu0 %v5507, 64
        %v5517 = vpop.permute.xlu0 %5516
        %v5519 = vmul.f32 %v5515, %v5517
        %5521 = vrot.lane.b32.xlu0 %v5519, 64
        %v5522 = vpop.permute.xlu0 %5521
        %v5524 = vadd.f32 %v4901, %v5522
        %v5525 = vtanh.pop %v5524
        %v5526 = vsub.f32 1.0, %v5515
        %5528 = vrot.lane.b32.xlu0 %v5525, 96
        %v5529 = vpop.permute.xlu0 %5528
        %v5531 = vmul.f32 %v5526, %v5529
        %v5532 = vrot.slane %v5429, 7
        %v5534 = vmul.f32 %v5515, %v5532
        %v5535 = vadd.f32 %v5531, %v5534
        %v5537 = vrot.slane %v5535, 5
        %5538 = vrot.lane.b32.xlu0 %v5537, 96
        %v5539 = vpop.permute.xlu0 %5538
        %v5540 = vsel %vm4907, %v5539, 0
        %5542 = vmatprep.subr.mxu0 0.0
        %5543 = vmatpush1.msra.mxu0 0.0
        %5544 = vmatprep.subr.mxu0 0.0
        %5545 = vmatpush1.msra.mxu0 0.0
        %5546 = vmatprep.subr.mxu0 0.0
        %5547 = vmatpush1.msra.mxu0 0.0
        %5548 = vmatprep.subr.mxu0 0.0
        %5549 = vmatpush1.msra.mxu0 0.0
        %5550 = vmatprep.subr.mxu0 0.0
        %5551 = vmatpush1.msra.mxu0 0.0
        %5552 = vmatprep.subr.mxu0 0.0
        %5553 = vmatpush1.msra.mxu0 0.0
        %5554 = vmatprep.subr.mxu0 0.0
        %5555 = vmatpush1.msra.mxu0 0.0
        %5556 = vmatprep.subr.mxu0 0.0
        %5557 = vmatpush1.msra.mxu0 0.0
        %5558 = vmatprep.subr.mxu0 0.0
        %5559 = vmatpush1.msra.mxu0 0.0
        %5560 = vmatprep.subr.mxu0 0.0
        %5561 = vmatpush1.msra.mxu0 0.0
        %5562 = vmatprep.subr.mxu0 0.0
        %5563 = vmatpush1.msra.mxu0 0.0
        %5564 = vmatprep.subr.mxu0 0.0
        %5565 = vmatpush1.msra.mxu0 0.0
        %5566 = vmatprep.subr.mxu0 0.0
        %5567 = vmatpush1.msra.mxu0 %v4905
        %5568 = vmatprep.subr.mxu0 0.0
        %5569 = vmatpush1.msra.mxu0 %v4904
        %5570 = vmatprep.subr.mxu0 0.0
        %5571 = vmatpush1.msra.mxu0 %v4903
        %5572 = vmatprep.subr.mxu0 0.0
        %5573 = vmatpush1.msra.mxu0 %v4902
        %5574 = vmatprep.subr.mxu0 0.0
        %5575 = vmatpush2.msra.mxu0 0.0
        %5576 = vmatprep.subr.mxu0 0.0
        %5577 = vmatpush2.msra.mxu0 0.0
        %5578 = vmatprep.subr.mxu0 0.0
        %5579 = vmatpush2.msra.mxu0 0.0
        %5580 = vmatprep.subr.mxu0 0.0
        %5581 = vmatpush2.msra.mxu0 0.0
        %5582 = vmatprep.subr.mxu0 0.0
        %5583 = vmatpush2.msra.mxu0 0.0
        %5584 = vmatprep.subr.mxu0 0.0
        %5585 = vmatpush2.msra.mxu0 0.0
        %5586 = vmatprep.subr.mxu0 0.0
        %5587 = vmatpush2.msra.mxu0 0.0
        %5588 = vmatprep.subr.mxu0 0.0
        %5589 = vmatpush2.msra.mxu0 0.0
        %5590 = vmatprep.subr.mxu0 0.0
        %5591 = vmatpush2.msra.mxu0 0.0
        %5592 = vmatprep.subr.mxu0 0.0
        %5593 = vmatpush2.msra.mxu0 0.0
        %5594 = vmatprep.subr.mxu0 0.0
        %5595 = vmatpush2.msra.mxu0 0.0
        %5596 = vmatprep.subr.mxu0 0.0
        %5597 = vmatpush2.msra.mxu0 0.0
        %5598 = vmatprep.subr.mxu0 0.0
        %5599 = vmatpush2.msra.mxu0 0.0
        %5600 = vmatprep.subr.mxu0 0.0
        %5601 = vmatpush2.msra.mxu0 0.0
        %5602 = vmatprep.subr.mxu0 0.0
        %5603 = vmatpush2.msra.mxu0 0.0
        %5604 = vmatprep.subr.mxu0 0.0
        %5605 = vmatpush2.msra.mxu0 0.0
        %5606 = vmatprep.mubr.f32.mxu0 0.0
        %5607 = vmatmul.mubr.f32.gmra.mxu0 %v5540
        %v5608 = vpop.f32.mrf.mxu0
        %v5609 = vadd.f32 %v4906, %v5608
        %v5610 = vpop.f32.mrf.mxu0
        %5611 = vdwg.mxu0
        %v5613 = vrot.slane %v5609, 2
        %v5615 = vadd.f32 %v4901, %v5613
        %v5616 = vxor.u32 %v5615, 2147483648
        %v5617 = vmul.f32 %v5616, 1.442695
        %v5618 = vpow.pop %v5617
        %v5619 = vadd.f32 %v5618, 1.0
        %v5620 = vrcp.pop %v5619
        %v5621 = vmul.f32 1.0, %v5620
        %5622 = vrot.lane.b32.xlu0 %v5613, 64
        %v5623 = vpop.permute.xlu0 %5622
        %v5625 = vmul.f32 %v5621, %v5623
        %5627 = vrot.lane.b32.xlu0 %v5625, 64
        %v5628 = vpop.permute.xlu0 %5627
        %v5630 = vadd.f32 %v4901, %v5628
        %v5631 = vtanh.pop %v5630
        %v5632 = vsub.f32 1.0, %v5621
        %5634 = vrot.lane.b32.xlu0 %v5631, 96
        %v5635 = vpop.permute.xlu0 %5634
        %v5637 = vmul.f32 %v5632, %v5635
        %v5638 = vrot.slane %v5535, 7
        %v5640 = vmul.f32 %v5621, %v5638
        %v5641 = vadd.f32 %v5637, %v5640
        %v5643 = vrot.slane %v5641, 6
        %5644 = vrot.lane.b32.xlu0 %v5643, 96
        %v5645 = vpop.permute.xlu0 %5644
        %v5646 = vsel %vm4907, %v5645, 0
        %5648 = vmatprep.subr.mxu0 0.0
        %5649 = vmatpush1.msra.mxu0 0.0
        %5650 = vmatprep.subr.mxu0 0.0
        %5651 = vmatpush1.msra.mxu0 0.0
        %5652 = vmatprep.subr.mxu0 0.0
        %5653 = vmatpush1.msra.mxu0 0.0
        %5654 = vmatprep.subr.mxu0 0.0
        %5655 = vmatpush1.msra.mxu0 0.0
        %5656 = vmatprep.subr.mxu0 0.0
        %5657 = vmatpush1.msra.mxu0 0.0
        %5658 = vmatprep.subr.mxu0 0.0
        %5659 = vmatpush1.msra.mxu0 0.0
        %5660 = vmatprep.subr.mxu0 0.0
        %5661 = vmatpush1.msra.mxu0 0.0
        %5662 = vmatprep.subr.mxu0 0.0
        %5663 = vmatpush1.msra.mxu0 0.0
        %5664 = vmatprep.subr.mxu0 0.0
        %5665 = vmatpush1.msra.mxu0 0.0
        %5666 = vmatprep.subr.mxu0 0.0
        %5667 = vmatpush1.msra.mxu0 0.0
        %5668 = vmatprep.subr.mxu0 0.0
        %5669 = vmatpush1.msra.mxu0 0.0
        %5670 = vmatprep.subr.mxu0 0.0
        %5671 = vmatpush1.msra.mxu0 0.0
        %5672 = vmatprep.subr.mxu0 0.0
        %5673 = vmatpush1.msra.mxu0 %v4905
        %5674 = vmatprep.subr.mxu0 0.0
        %5675 = vmatpush1.msra.mxu0 %v4904
        %5676 = vmatprep.subr.mxu0 0.0
        %5677 = vmatpush1.msra.mxu0 %v4903
        %5678 = vmatprep.subr.mxu0 0.0
        %5679 = vmatpush1.msra.mxu0 %v4902
        %5680 = vmatprep.subr.mxu0 0.0
        %5681 = vmatpush2.msra.mxu0 0.0
        %5682 = vmatprep.subr.mxu0 0.0
        %5683 = vmatpush2.msra.mxu0 0.0
        %5684 = vmatprep.subr.mxu0 0.0
        %5685 = vmatpush2.msra.mxu0 0.0
        %5686 = vmatprep.subr.mxu0 0.0
        %5687 = vmatpush2.msra.mxu0 0.0
        %5688 = vmatprep.subr.mxu0 0.0
        %5689 = vmatpush2.msra.mxu0 0.0
        %5690 = vmatprep.subr.mxu0 0.0
        %5691 = vmatpush2.msra.mxu0 0.0
        %5692 = vmatprep.subr.mxu0 0.0
        %5693 = vmatpush2.msra.mxu0 0.0
        %5694 = vmatprep.subr.mxu0 0.0
        %5695 = vmatpush2.msra.mxu0 0.0
        %5696 = vmatprep.subr.mxu0 0.0
        %5697 = vmatpush2.msra.mxu0 0.0
        %5698 = vmatprep.subr.mxu0 0.0
        %5699 = vmatpush2.msra.mxu0 0.0
        %5700 = vmatprep.subr.mxu0 0.0
        %5701 = vmatpush2.msra.mxu0 0.0
        %5702 = vmatprep.subr.mxu0 0.0
        %5703 = vmatpush2.msra.mxu0 0.0
        %5704 = vmatprep.subr.mxu0 0.0
        %5705 = vmatpush2.msra.mxu0 0.0
        %5706 = vmatprep.subr.mxu0 0.0
        %5707 = vmatpush2.msra.mxu0 0.0
        %5708 = vmatprep.subr.mxu0 0.0
        %5709 = vmatpush2.msra.mxu0 0.0
        %5710 = vmatprep.subr.mxu0 0.0
        %5711 = vmatpush2.msra.mxu0 0.0
        %5712 = vmatprep.mubr.f32.mxu0 0.0
        %5713 = vmatmul.mubr.f32.gmra.mxu0 %v5646
        %v5714 = vpop.f32.mrf.mxu0
        %v5715 = vadd.f32 %v4906, %v5714
        %v5716 = vpop.f32.mrf.mxu0
        %5717 = vdwg.mxu0
        %v5719 = vrot.slane %v5715, 1
        %v5721 = vadd.f32 %v4901, %v5719
        %v5722 = vxor.u32 %v5721, 2147483648
        %v5723 = vmul.f32 %v5722, 1.442695
        %v5724 = vpow.pop %v5723
        %v5725 = vadd.f32 %v5724, 1.0
        %v5726 = vrcp.pop %v5725
        %v5727 = vmul.f32 1.0, %v5726
        %5728 = vrot.lane.b32.xlu0 %v5719, 64
        %v5729 = vpop.permute.xlu0 %5728
        %v5731 = vmul.f32 %v5727, %v5729
        %5733 = vrot.lane.b32.xlu0 %v5731, 64
        %v5734 = vpop.permute.xlu0 %5733
        %v5736 = vadd.f32 %v4901, %v5734
        %v5737 = vtanh.pop %v5736
        %v5738 = vsub.f32 1.0, %v5727
        %5740 = vrot.lane.b32.xlu0 %v5737, 96
        %v5741 = vpop.permute.xlu0 %5740
        %v5743 = vmul.f32 %v5738, %v5741
        %v5744 = vrot.slane %v5641, 7
        %v5746 = vmul.f32 %v5727, %v5744
        %v5747 = vadd.f32 %v5743, %v5746
        %vm5748 = vcmask 1040384
        %v5749 = vsel %vm5748, %v5006, %v5111
        %vm5750 = vcmask 1041408
        %v5751 = vsel %vm5750, %v5749, %v5217
        %vm5752 = vcmask 1042432
        %v5753 = vsel %vm5752, %v5751, %v5323
        %v5754 = vsel %vm745, %v5753, %v5429
        %vm5755 = vcmask 1044480
        %v5756 = vsel %vm5755, %v5754, %v5535
        %vm5757 = vcmask 1045504
        %v5758 = vsel %vm5757, %v5756, %v5641
        %vm5759 = vcmask 1046528
        %v5760 = vsel %vm5759, %v5758, %v5747
        %v5761 = vld [vmem:[%s18] sm:$0x1]
        %v5763 = vlaneseq
        %v5764 = vshrl.u32 %v5763, 7
        %v5765 = vsub.s32 0, %v5764
        %v5766 = vrot.slane %v5761, %v5765
        %5767 = vrot.lane.b32.xlu0 %v5766, 32
        %v5768 = vpop.permute.xlu0 %5767
        %v5770 = vmul.f32 %v5760, %v5768
        %5772 = vrot.lane.b32.xlu0 %v5770, 96
        %v5773 = vpop.permute.xlu0 %5772
        %v5775 = vsel %vm4907, %v5773, 0.0
        %5776 = vadd.xlane.f32.xlu0 %v5775
        %v5777 = vpop.xlane.xlu0 %5776
        %s5778 = sld [smem:[#allocation3]]
        %v5779 = vstv %s5778
        %v5780 = vadd.f32 %v5777, %v5779
        %v5781 = vrot.slane %v5780, 4
        %v5782 = vmax.f32 %v5780, %v5781
        %v5783 = vrot.slane %v5782, 2
        %v5784 = vmax.f32 %v5782, %v5783
        %v5785 = vrot.slane %v5784, 1
        %v5786 = vmax.f32 %v5784, %v5785
        %v5787 = vsub.f32 %v5780, %v5786
        %v5788 = vmul.f32 %v5787, 1.442695
        %v5789 = vpow.pop %v5788
        %v5790 = vrot.slane %v5789, 4
        %v5791 = vadd.f32 %v5789, %v5790
        %v5792 = vrot.slane %v5791, 2
        %v5793 = vadd.f32 %v5791, %v5792
        %v5794 = vrot.slane %v5793, 1
        %v5795 = vadd.f32 %v5793, %v5794
        %v5796 = vrcp.pop %v5795
        %v5797 = vmul.f32 %v5789, %v5796
        %v5798 = vmul.f32 %v5797, %v5760
        %vm5799 = vcmask 523520
        %v5800 = vsel %vm5799, %v5798, 0.0
        %v5801 = vrot.slane %v5800, 4
        %v5802 = vadd.f32 %v5800, %v5801
        %v5803 = vrot.slane %v5802, 2
        %v5804 = vadd.f32 %v5802, %v5803
        %v5805 = vrot.slane %v5804, 1
        %v5806 = vadd.f32 %v5804, %v5805
        %v5807 = vld [vmem:[%s20] sm:$0xff]
        %v5808 = vld [vmem:[%s20 + $0x8] sm:$0xff]
        %v5809 = vld [vmem:[%s20 + $0x10] sm:$0xff]
        %v5810 = vld [vmem:[%s20 + $0x18] sm:$0xff]
        %v5811 = vld [vmem:[%s21] sm:$0x1]
        %5813 = vrot.lane.b32.xlu0 %v5806, 96
        %v5814 = vpop.permute.xlu0 %5813
        %v5815 = vsel %vm4907, %v5814, 0
        %5817 = vmatprep.subr.mxu0 0.0
        %5818 = vmatpush1.msra.mxu0 0.0
        %5819 = vmatprep.subr.mxu0 0.0
        %5820 = vmatpush1.msra.mxu0 0.0
        %5821 = vmatprep.subr.mxu0 0.0
        %5822 = vmatpush1.msra.mxu0 0.0
        %5823 = vmatprep.subr.mxu0 0.0
        %5824 = vmatpush1.msra.mxu0 0.0
        %5825 = vmatprep.subr.mxu0 0.0
        %5826 = vmatpush1.msra.mxu0 0.0
        %5827 = vmatprep.subr.mxu0 0.0
        %5828 = vmatpush1.msra.mxu0 0.0
        %5829 = vmatprep.subr.mxu0 0.0
        %5830 = vmatpush1.msra.mxu0 0.0
        %5831 = vmatprep.subr.mxu0 0.0
        %5832 = vmatpush1.msra.mxu0 0.0
        %5833 = vmatprep.subr.mxu0 0.0
        %5834 = vmatpush1.msra.mxu0 0.0
        %5835 = vmatprep.subr.mxu0 0.0
        %5836 = vmatpush1.msra.mxu0 0.0
        %5837 = vmatprep.subr.mxu0 0.0
        %5838 = vmatpush1.msra.mxu0 0.0
        %5839 = vmatprep.subr.mxu0 0.0
        %5840 = vmatpush1.msra.mxu0 0.0
        %5841 = vmatprep.subr.mxu0 0.0
        %5842 = vmatpush1.msra.mxu0 %v5810
        %5843 = vmatprep.subr.mxu0 0.0
        %5844 = vmatpush1.msra.mxu0 %v5809
        %5845 = vmatprep.subr.mxu0 0.0
        %5846 = vmatpush1.msra.mxu0 %v5808
        %5847 = vmatprep.subr.mxu0 0.0
        %5848 = vmatpush1.msra.mxu0 %v5807
        %5849 = vmatprep.subr.mxu0 0.0
        %5850 = vmatpush2.msra.mxu0 0.0
        %5851 = vmatprep.subr.mxu0 0.0
        %5852 = vmatpush2.msra.mxu0 0.0
        %5853 = vmatprep.subr.mxu0 0.0
        %5854 = vmatpush2.msra.mxu0 0.0
        %5855 = vmatprep.subr.mxu0 0.0
        %5856 = vmatpush2.msra.mxu0 0.0
        %5857 = vmatprep.subr.mxu0 0.0
        %5858 = vmatpush2.msra.mxu0 0.0
        %5859 = vmatprep.subr.mxu0 0.0
        %5860 = vmatpush2.msra.mxu0 0.0
        %5861 = vmatprep.subr.mxu0 0.0
        %5862 = vmatpush2.msra.mxu0 0.0
        %5863 = vmatprep.subr.mxu0 0.0
        %5864 = vmatpush2.msra.mxu0 0.0
        %5865 = vmatprep.subr.mxu0 0.0
        %5866 = vmatpush2.msra.mxu0 0.0
        %5867 = vmatprep.subr.mxu0 0.0
        %5868 = vmatpush2.msra.mxu0 0.0
        %5869 = vmatprep.subr.mxu0 0.0
        %5870 = vmatpush2.msra.mxu0 0.0
        %5871 = vmatprep.subr.mxu0 0.0
        %5872 = vmatpush2.msra.mxu0 0.0
        %5873 = vmatprep.subr.mxu0 0.0
        %5874 = vmatpush2.msra.mxu0 0.0
        %5875 = vmatprep.subr.mxu0 0.0
        %5876 = vmatpush2.msra.mxu0 0.0
        %5877 = vmatprep.subr.mxu0 0.0
        %5878 = vmatpush2.msra.mxu0 0.0
        %5879 = vmatprep.subr.mxu0 0.0
        %5880 = vmatpush2.msra.mxu0 0.0
        %5881 = vmatprep.mubr.f32.mxu0 0.0
        %5882 = vmatmul.mubr.f32.gmra.mxu0 %v5815
        %v5883 = vpop.f32.mrf.mxu0
        %v5884 = vadd.f32 %v5811, %v5883
        %v5885 = vpop.f32.mrf.mxu0
        %5886 = vdwg.mxu0
        %vm5887 = vcmask 40960
        %5888 = vst.msk [vmem:[%s677] sm:$0x1] %vm5887, %v5884
        %s5889 = sand.u32 %s513, 1
        %s5890 = scalar_lea.sflag [#allocation5], %s5889
        %s5891 = sand.u32 %s513, 1
        %s5892 = scalar_lea.vmem [#allocation4], %s5891
        // Predicated region
        $region109: #{attend_discriminate_forward.1} parent=107 // pred_check
          %p5893 = pneg %p523
        $region110: #{attend_discriminate_forward.1} parent=107 // pred_check_branch
          %5895 = sbr.rel (%p5893) target = $region112
        $region111: #{attend_discriminate_forward.1} parent=107 // pred_region
          %s5897 = ssub.s32 16, 16
          %5898 = vsyncadd %s5890, %s5897
          %s5899 = smul.addr %s38, 16
          %s5900 = scalar_lea.hbm %s22, %s5899
          %s5902 = sshll.u32 %s5892, 4
          %s5903 = int_to_ptr.vmem [resolvable:$true] %s5902
          %5905 = dma.vmem_to_hbm [thread:$0]  %s5903, 16, %s5900, %s5890
        $region112: #{attend_discriminate_forward.1} parent=107 // pred_fallthru
          _
      $region108: #{attend_discriminate_forward.1} parent=5 // pred_fallthru
        _
      %p5906 = scmp.le.s32.totalorder 2, %s33
      // Predicated region
      $region113: #{attend_discriminate_forward.1} parent=5 // pred_check
        %p5907 = pneg %p5906
      $region114: #{attend_discriminate_forward.1} parent=5 // pred_check_branch
        %5909 = sbr.rel (%p5907) target = $region116
      $region115: #{attend_discriminate_forward.1} parent=5 // pred_region
        %s5910 = ssub.s32 %s33, 2
        // Predicated region
        $region117: #{attend_discriminate_forward.1} parent=115 // pred_check
          %p5911 = pneg %p529
        $region118: #{attend_discriminate_forward.1} parent=115 // pred_check_branch
          %5913 = sbr.rel (%p5911) target = $region120
        $region119: #{attend_discriminate_forward.1} parent=115 // pred_region
          %s5914 = sand.u32 %s514, 1
          %s5915 = scalar_lea.sflag [#allocation5], %s5914
          %s5916 = sand.u32 %s514, 1
          %s5917 = scalar_lea.vmem [#allocation4], %s5916
          %5918 = dma.done %s5915, 16
        $region120: #{attend_discriminate_forward.1} parent=115 // pred_fallthru
          _
      $region116: #{attend_discriminate_forward.1} parent=5 // pred_fallthru
        _
    $region6: #{attend_discriminate_forward.1} parent=1 // loop_footer
      %s37 = sadd.s32 1, %s33
    $region7: #{attend_discriminate_forward.1} parent=1 // loop_footer_branch
      %32 = sbr.rel target = $region3
    $region8: #{attend_discriminate_forward.1} parent=1 // loop_exit
      _
    %5919 = vsyncpa [#allocation5], 1
    %s5920 = scalar_lea.sflag [#allocation5], 1
    %5921 = vsyncpa %s5920, 1

</llo_original>
